<compile_context>
chip_gen: v7x
topology: tpu7x:2x2x1
jax: 0.10.0
libtpu: 0.0.40
codegen_flags: <defaults>
</compile_context>

<pallas_src>
import math
import numpy as np
import jax
import jax.numpy as jnp
from jax import lax
from jax.experimental import pallas as pl
from jax.experimental.pallas import tpu as pltpu

# ----------------------------- configuration -----------------------------------
B = 2
DIM = 32                      # C
NUM_HEADS = 4
HEAD_DIM = DIM // NUM_HEADS
H = W = 8                     # == trained input_resolution
N = H * W
WINDOW = 3
LOCAL_LEN = WINDOW * WINDOW
SR_RATIO = 2
POOL_H, POOL_W = H // SR_RATIO, W // SR_RATIO
POOL_LEN = POOL_H * POOL_W
MLP_RATIO = 3.0
MLP_HIDDEN = int(DIM * MLP_RATIO)
HIDDEN = int(2 * MLP_HIDDEN / 3)        # ConvolutionalGLU hidden_features (= 64 here)
CPB_HIDDEN = 512
TABLE = (2 * H - 1) * (2 * W - 1)       # rows of relative_coords_table
HIGHEST = jax.lax.Precision.HIGHEST     # only used by the pure-JAX reference / precompute
TAP_CHUNK = 3                           # taps per chunked shift matmul (bounds live vregs)
SBUF_COLS = max(2 * DIM, HIDDEN)        # scratch width shared by attention / dwconv taps


# ----------------------------- shared helpers (reference path) ------------------
def l2norm(z):
    return z / jnp.maximum(jnp.linalg.norm(z, axis=-1, keepdims=True), 1e-12)


def gelu_ref(z):
    return jax.nn.gelu(z, approximate=False)   # PyTorch nn.GELU() default (erf)


# ================================ fused Pallas kernel ============================
def _block_kernel(x_ref, wqkv_ref, bqkv_ref, kvw_ref, kvb_ref, norms_ref,
                  projw_ref, projb_ref, fc1w_ref, fc1b_ref, dww_ref, dwb_ref,
                  fc2w_ref, fc2b_ref, ts_ref, ets_ref, ltbd_ref, lbias_ref,
                  alinit_ref, poolb_ref, shifts_ref, sel_ref, eexp_ref,
                  b100_ref, poolmat_ref, g64_ref, g32_ref, hmask_ref,
                  o_ref, sbuf):
    f32 = jnp.float32
    norms = norms_ref[...]             # (6, C): n1_g, n1_b, np_g, np_b, n2_g, n2_b

    def ln(z, g, b):
        mu = jnp.mean(z, axis=-1, keepdims=True)
        var = jnp.mean((z - mu) ** 2, axis=-1, keepdims=True)
        return (z - mu) * lax.rsqrt(var + 1e-5) * g + b

    def gelu(z):
        # exact-erf GELU via Abramowitz&Stegun 7.1.26 (|erf error| < ~3e-4 with the
        # EUP approximate reciprocal); only exp/mul so it always lowers on Mosaic.
        a = jnp.abs(z) * 0.7071067811865476
        t = pl.reciprocal(1.0 + 0.3275911 * a, approx=True)
        poly = t * (0.254829592 + t * (-0.284496736 + t * (1.421413741
                    + t * (-1.453152027 + t * 1.061405429))))
        erf_abs = 1.0 - poly * jnp.exp(-a * a)
        erf = jnp.where(z >= 0.0, erf_abs, -erf_abs)
        return 0.5 * z * (1.0 + erf)

    # ---------------- AggregatedAttention ----------------
    y = ln(x_ref[0], norms[0:1, :], norms[1:2, :])
    # fused q|k|v|sr projection: one lane-dense (N,32)@(32,128) matmul
    qkvs = jnp.dot(y, wqkv_ref[...], preferred_element_type=f32) + bqkv_ref[...]
    qkl = qkvs[:, 0:2 * DIM]
    vl = qkvs[:, 2 * DIM:3 * DIM]
    srv = qkvs[:, 3 * DIM:4 * DIM]

    # per-head L2 normalize q and k_local together: one block-diag head-sum matmul,
    # rsqrt on the EUP instead of sqrt + divide.
    ssq = jnp.dot(qkl * qkl, g64_ref[...], preferred_element_type=f32)
    qkl_n = qkl * lax.rsqrt(jnp.maximum(ssq, 1e-24))
    qn = qkl_n[:, 0:DIM]
    kn = qkl_n[:, DIM:2 * DIM]
    qs = qn * ts_ref[...] + ets_ref[...]       # (q_norm + emb) * softplus(T) * seq_scale

    # ONE batched 0/1 shift matmul for every 3x3 tap of [k_local | v_local] (zero at
    # invalid taps), streamed into VMEM scratch in chunks to bound live vregs.
    kn_vl = jnp.concatenate([kn, vl], axis=1)                  # (N, 2C)
    for g in range(0, LOCAL_LEN, TAP_CHUNK):
        sbuf[g * N:(g + TAP_CHUNK) * N, 0:2 * DIM] = jnp.dot(
            shifts_ref[g * N:(g + TAP_CHUNK) * N, :], kn_vl,
            preferred_element_type=f32)

    # pooled branch: GELU(sr) -> 2x2 avg pool (matmul) -> LN -> kv -> block-diag logits;
    # computed & consumed before the local-tap phase (short live ranges).
    xp = ln(jnp.dot(poolmat_ref[...], gelu(srv), preferred_element_type=f32),
            norms[2:3, :], norms[3:4, :])                                   # (P, C)
    kvp = jnp.dot(xp, kvw_ref[...], preferred_element_type=f32) + kvb_ref[...]
    kp = kvp[:, 0:DIM]
    kp = kp * lax.rsqrt(jnp.maximum(
        jnp.dot(kp * kp, g32_ref[...], preferred_element_type=f32), 1e-24))
    vp = kvp[:, DIM:2 * DIM]
    hmask = hmask_ref[...]                                      # (nH*P, C) head mask
    kp_bd = jnp.concatenate([kp] * NUM_HEADS, axis=0) * hmask   # block-diag per head
    vp_bd = jnp.concatenate([vp] * NUM_HEADS, axis=0) * hmask
    ap = lax.dot_general(qs, kp_bd, (((1,), (1,)), ((), ())),
                         preferred_element_type=f32) + poolb_ref[...]       # (N, nH*P)

    # local logits: per-tap elementwise q * k_shifted, then ONE 0/1 head-sum matmul.
    # al_init already holds rel_bias_local + the additive -inf padding mask.
    prod_all = jnp.concatenate(
        [qs * sbuf[l * N:(l + 1) * N, 0:DIM] for l in range(LOCAL_LEN)], axis=1)
    al = alinit_ref[...] + jnp.dot(prod_all, sel_ref[...],
                                   preferred_element_type=f32)              # (N, nH*9)

    # joint softmax over [local(9) | pool(16)] per head: shared per-row max (softmax is
    # shift-invariant), ONE denominator matmul and ONE EUP approximate reciprocal.
    m = jnp.maximum(jnp.max(al, axis=-1, keepdims=True),
                    jnp.max(ap, axis=-1, keepdims=True))
    el = jnp.exp(al - m)
    ep = jnp.exp(ap - m)
    e = jnp.concatenate([el, ep], axis=1)                                   # (N, 100)
    inv = pl.reciprocal(jnp.dot(e, b100_ref[...], preferred_element_type=f32),
                        approx=True)
    a_loc = el * inv[:, 0:NUM_HEADS * LOCAL_LEN]
    a_poo = ep * inv[:, NUM_HEADS * LOCAL_LEN:]

    # aggregation: learnable-token coefficients expanded for all taps with ONE 0/1
    # matmul, then 9 VPU multiply-adds against the shifted v taps + one pooled matmul.
    coef = (jnp.dot(qn, ltbd_ref[...], preferred_element_type=f32)
            + lbias_ref[...] + a_loc)                                       # (N, nH*9)
    ce_all = jnp.dot(coef, eexp_ref[...], preferred_element_type=f32)       # (N, 9*C)
    x_att = jnp.dot(a_poo, vp_bd, preferred_element_type=f32)               # pooled part
    for l in range(LOCAL_LEN):
        x_att = x_att + (ce_all[:, l * DIM:(l + 1) * DIM]
                         * sbuf[l * N:(l + 1) * N, DIM:2 * DIM])
    x1 = x_ref[0] + jnp.dot(x_att, projw_ref[...],
                            preferred_element_type=f32) + projb_ref[...]

    # ---------------- ConvolutionalGLU ----------------
    y2 = ln(x1, norms[4:5, :], norms[5:6, :])
    h12 = jnp.dot(y2, fc1w_ref[...], preferred_element_type=f32) + fc1b_ref[...]
    xg = h12[:, 0:HIDDEN]
    vg = h12[:, HIDDEN:2 * HIDDEN]
    # depthwise 3x3 conv: reuse the batched 0/1 shift matmul (zero padding folded in),
    # then 9 VPU multiply-adds with the per-tap depthwise weights.
    # TODO(synk): if a bundle dump shows the MXU slot still binding, switch these taps
    # to pltpu.roll(xg, ..., axis=0) * per-tap validity to move them onto the XLU.
    for g in range(0, LOCAL_LEN, TAP_CHUNK):
        sbuf[g * N:(g + TAP_CHUNK) * N, 0:HIDDEN] = jnp.dot(
            shifts_ref[g * N:(g + TAP_CHUNK) * N, :], xg, preferred_element_type=f32)
    dww = dww_ref[...]
    dw = jnp.zeros((N, HIDDEN), f32) + dwb_ref[...]
    for l in range(LOCAL_LEN):
        dw = dw + sbuf[l * N:(l + 1) * N, 0:HIDDEN] * dww[l:l + 1, :]
    mlp = jnp.dot(gelu(dw) * vg, fc2w_ref[...], preferred_element_type=f32) + fc2b_ref[...]
    o_ref[...] = (x1 + mlp)[None]


_CONST_NAMES = ('w_qkvsr', 'b_qkvsr', 'kv_w', 'kv_b', 'norms', 'proj_w', 'proj_b',
                'fc1_w', 'fc1_b', 'dw_w', 'dw_b', 'fc2_w', 'fc2_b', 'ts', 'ets',
                'ltbd', 'lbias', 'al_init', 'poolb', 'shifts', 'sel', 'eexp',
                'b100', 'poolmat', 'g64', 'g32', 'hmask')


def precompute_block_constants(p, rpi, rct, seq_scale, pad_mask):
    """Everything that does not depend on x: fused weights, packed per-head params,
    the CPB pool bias, and the structural 0/1 matrices used inside the kernel."""
    nH, hd, C, L, P, Nn = NUM_HEADS, HEAD_DIM, DIM, LOCAL_LEN, POOL_LEN, N
    f32 = jnp.float32
    c = {}

    # fused q / kv / sr projection (lane-dense (32,128))
    c['w_qkvsr'] = jnp.concatenate([p['q_w'], p['kv_w'], p['sr_w']], axis=1)
    c['b_qkvsr'] = jnp.concatenate([p['q_b'], p['kv_b'], p['sr_b']])[None, :]
    c['kv_w'] = p['kv_w']
    c['kv_b'] = p['kv_b'][None, :]
    c['norms'] = jnp.stack([p['norm1_g'], p['norm1_b'], p['norm_g'], p['norm_b'],
                            p['norm2_g'], p['norm2_b']])
    c['proj_w'] = p['proj_w']; c['proj_b'] = p['proj_b'][None, :]
    c['fc1_w'] = p['fc1_w'];   c['fc1_b'] = p['fc1_b'][None, :]
    c['dw_w'] = p['dw_w'];     c['dw_b'] = p['dw_b'][None, :]
    c['fc2_w'] = p['fc2_w'];   c['fc2_b'] = p['fc2_b'][None, :]

    # per-token, per-head scale for q: softplus(temperature) * seq_length_scale
    sp = jax.nn.softplus(p['temperature']).reshape(nH)
    ts = seq_scale.reshape(Nn, 1) * jnp.repeat(sp, hd)[None, :]            # (N, C)
    c['ts'] = ts
    c['ets'] = p['query_embedding'].reshape(1, C) * ts                     # (N, C)

    # learnable tokens / bias packed head-major
    c['ltbd'] = jax.scipy.linalg.block_diag(
        *[p['learnable_tokens'][h] for h in range(nH)])                    # (C, nH*L)
    c['lbias'] = p['learnable_bias'].reshape(1, nH * L)

    # rel bias + additive -inf padding mask folded into ONE constant
    valid = 1.0 - pad_mask.astype(f32)                                     # (N, L)
    c['al_init'] = (jnp.tile(p['rel_bias_local'].reshape(1, nH * L), (Nn, 1))
                    + jnp.tile(valid - 1.0, (1, nH)) * 1e30)               # (N, nH*L)

    # continuous position bias: depends only on resolution + params -> precompute once.
    # TODO(synk): general H,W != trained resolution needs the two bilinear interpolations.
    cpb = jnp.maximum(jnp.dot(rct, p['cpb1_w'], precision=HIGHEST) + p['cpb1_b'], 0.0)
    cpb = jnp.dot(cpb, p['cpb2_w'], precision=HIGHEST) + p['cpb2_b']       # (T, nH)
    pool_bias = cpb.T[:, rpi.reshape(-1)].reshape(nH, Nn, P)
    c['poolb'] = jnp.transpose(pool_bias, (1, 0, 2)).reshape(Nn, nH * P)   # (N, nH*P)

    # ---- structural 0/1 matrices (built once with numpy) ----
    offs = [dy * W + dx for dy in (-1, 0, 1) for dx in (-1, 0, 1)]
    pm = np.asarray(pad_mask)
    shift_all = np.zeros((L * Nn, Nn), np.float32)          # shift-with-zero-pad taps
    for l, off in enumerate(offs):
        for n in range(Nn):
            if not pm[n, l]:
                shift_all[l * Nn + n, n + off] = 1.0
    sel = np.zeros((L * C, nH * L), np.float32)              # per-head channel-sum
    for l in range(L):
        for h in range(nH):
            sel[l * C + h * hd:l * C + (h + 1) * hd, h * L + l] = 1.0
    heads100 = np.concatenate([np.repeat(np.arange(nH), L), np.repeat(np.arange(nH), P)])
    cols_heads = np.concatenate([np.arange(nH * L) // L, np.arange(nH * P) // P])
    b100 = (heads100[:, None] == cols_heads[None, :]).astype(np.float32)   # (100, 100)
    poolmat = np.zeros((P, Nn), np.float32)                   # 2x2 average pooling
    for n in range(Nn):
        poolmat[(n // W // SR_RATIO) * POOL_W + (n % W) // SR_RATIO, n] = \
            1.0 / (SR_RATIO * SR_RATIO)
    hmask = np.zeros((nH * P, C), np.float32)                 # pooled block-diag mask
    for h in range(nH):
        hmask[h * P:(h + 1) * P, h * hd:(h + 1) * hd] = 1.0
    c['shifts'] = jnp.asarray(shift_all)
    c['sel'] = jnp.asarray(sel)
    c['eexp'] = jnp.asarray(np.ascontiguousarray(sel.T))
    c['b100'] = jnp.asarray(b100)
    c['poolmat'] = jnp.asarray(poolmat)
    c['g64'] = jnp.asarray(np.kron(np.eye(2 * nH, dtype=np.float32),
                                   np.ones((hd, hd), np.float32)))
    c['g32'] = jnp.asarray(np.kron(np.eye(nH, dtype=np.float32),
                                   np.ones((hd, hd), np.float32)))
    c['hmask'] = jnp.asarray(hmask)
    return c


def block_forward_pallas(consts, x):
    Bb = x.shape[0]
    const_args = [consts[k] for k in _CONST_NAMES]

    def cspec(a):
        nd = a.ndim
        return pl.BlockSpec(a.shape, lambda b, _nd=nd: (0,) * _nd)

    in_specs = [pl.BlockSpec((1, N, DIM), lambda b: (b, 0, 0))] + \
               [cspec(a) for a in const_args]
    return pl.pallas_call(
        _block_kernel,
        out_shape=jax.ShapeDtypeStruct((Bb, N, DIM), jnp.float32),
        grid=(Bb,),
        in_specs=in_specs,
        out_specs=pl.BlockSpec((1, N, DIM), lambda b: (b, 0, 0)),
        scratch_shapes=[pltpu.VMEM((LOCAL_LEN * N, SBUF_COLS), jnp.float32)],
        compiler_params=pltpu.CompilerParams(dimension_semantics=("parallel",)),
    )(x, *const_args)


# ====================== pure-JAX reference (PyTorch-faithful) ====================
def block_forward_ref(p, x, rpi, rct, seq_scale, pad_mask):
    Bb, Nn, C = x.shape
    nH, hd = NUM_HEADS, HEAD_DIM
    sr = SR_RATIO
    pH, pW, P = POOL_H, POOL_W, POOL_LEN

    def ln(z, g, b):
        mu = z.mean(-1, keepdims=True)
        var = ((z - mu) ** 2).mean(-1, keepdims=True)
        return (z - mu) / jnp.sqrt(var + 1e-5) * g + b

    def lin(z, w, b):
        return jnp.dot(z, w, precision=HIGHEST) + b

    y = ln(x, p['norm1_g'], p['norm1_b'])
    q = lin(y, p['q_w'], p['q_b']).reshape(Bb, Nn, nH, hd).transpose(0, 2, 1, 3)
    q_norm = l2norm(q)
    qs = (q_norm + p['query_embedding'][None]) \
        * jax.nn.softplus(p['temperature'])[None] * seq_scale[None, None]

    kv = lin(y, p['kv_w'], p['kv_b'])
    k_l, v_l = kv[..., :C], kv[..., C:]
    k_l = l2norm(k_l.reshape(Bb, Nn, nH, hd)).reshape(Bb, Nn, C)
    kv_img = jnp.concatenate([k_l, v_l], -1).reshape(Bb, H, W, 2 * C)
    padk = jnp.pad(kv_img, ((0, 0), (1, 1), (1, 1), (0, 0)))
    taps = [padk[:, dy:dy + H, dx:dx + W, :].reshape(Bb, Nn, 2 * C)
            for dy in range(3) for dx in range(3)]
    unf = jnp.stack(taps, axis=1).reshape(Bb, LOCAL_LEN, Nn, 2, nH, hd)
    k_loc = unf[:, :, :, 0].transpose(0, 3, 2, 4, 1)      # (B,nH,N,hd,L)
    v_loc = unf[:, :, :, 1].transpose(0, 3, 2, 4, 1)

    attn_local = jnp.einsum('bhnd,bhndl->bhnl', qs, k_loc, precision=HIGHEST) \
        + p['rel_bias_local'][None, :, None, :]
    attn_local = jnp.where(pad_mask[None, None], -jnp.inf, attn_local)

    x_sr = gelu_ref(lin(y, p['sr_w'], p['sr_b']))
    x_img = x_sr.reshape(Bb, pH, sr, pW, sr, C).mean(axis=(2, 4)).reshape(Bb, P, C)
    x_p = ln(x_img, p['norm_g'], p['norm_b'])
    kvp = lin(x_p, p['kv_w'], p['kv_b']).reshape(Bb, P, 2, nH, hd)
    k_pool = kvp[:, :, 0].transpose(0, 2, 1, 3)
    v_pool = kvp[:, :, 1].transpose(0, 2, 1, 3)

    cpb = jnp.maximum(lin(rct, p['cpb1_w'], p['cpb1_b']), 0.0)
    cpb = lin(cpb, p['cpb2_w'], p['cpb2_b'])
    pool_bias = cpb.T[:, rpi.reshape(-1)].reshape(nH, Nn, P)

    attn_pool = jnp.einsum('bhnd,bhpd->bhnp', qs, l2norm(k_pool),
                           precision=HIGHEST) + pool_bias[None]
    attn = jax.nn.softmax(jnp.concatenate([attn_local, attn_pool], -1), axis=-1)
    a_l, a_p = attn[..., :LOCAL_LEN], attn[..., LOCAL_LEN:]
    coef = jnp.einsum('bhnd,hdl->bhnl', q_norm, p['learnable_tokens'],
                      precision=HIGHEST) + p['learnable_bias'][None] + a_l
    x_local = jnp.einsum('bhnl,bhndl->bhnd', coef, v_loc, precision=HIGHEST)
    x_pool = jnp.einsum('bhnp,bhpd->bhnd', a_p, v_pool, precision=HIGHEST)
    attn_out = (x_local + x_pool).transpose(0, 2, 1, 3).reshape(Bb, Nn, C)
    attn_out = lin(attn_out, p['proj_w'], p['proj_b'])
    x = x + attn_out

    y2 = ln(x, p['norm2_g'], p['norm2_b'])
    hcat = lin(y2, p['fc1_w'], p['fc1_b'])
    xg, vg = hcat[..., :HIDDEN], hcat[..., HIDDEN:]
    img = xg.reshape(Bb, H, W, HIDDEN)
    pad2 = jnp.pad(img, ((0, 0), (1, 1), (1, 1), (0, 0)))
    acc = jnp.zeros_like(img)
    for k in range(9):
        dy, dx = divmod(k, 3)
        acc = acc + pad2[:, dy:dy + H, dx:dx + W, :] * p['dw_w'][k]
    dw = acc + p['dw_b']
    xg = gelu_ref(dw.reshape(Bb, Nn, HIDDEN)) * vg
    return x + lin(xg, p['fc2_w'], p['fc2_b'])


# ================================ parameters ====================================
def init_params(key):
    ks = iter(jax.random.split(key, 48))

    def w(shape, std=0.05):
        return std * jax.random.normal(next(ks), shape, jnp.float32)

    p = {}
    p['norm1_g'] = jnp.ones((DIM,), jnp.float32)
    p['norm1_b'] = jnp.zeros((DIM,), jnp.float32)
    p['norm2_g'] = jnp.ones((DIM,), jnp.float32)
    p['norm2_b'] = jnp.zeros((DIM,), jnp.float32)
    # AggregatedAttention
    p['q_w'] = w((DIM, DIM)); p['q_b'] = w((DIM,), 0.01)
    p['kv_w'] = w((DIM, 2 * DIM)); p['kv_b'] = w((2 * DIM,), 0.01)
    p['temperature'] = jnp.full((NUM_HEADS, 1, 1),
                                math.log(math.exp(1.0 / 0.24) - 1.0), jnp.float32)
    p['query_embedding'] = w((NUM_HEADS, 1, HEAD_DIM), 0.02)
    p['rel_bias_local'] = w((NUM_HEADS, LOCAL_LEN), 0.0004)
    p['learnable_tokens'] = w((NUM_HEADS, HEAD_DIM, LOCAL_LEN), 0.02)
    p['learnable_bias'] = jnp.zeros((NUM_HEADS, 1, LOCAL_LEN), jnp.float32)
    p['proj_w'] = w((DIM, DIM)); p['proj_b'] = w((DIM,), 0.01)
    p['sr_w'] = w((DIM, DIM)); p['sr_b'] = w((DIM,), 0.01)       # 1x1 conv == linear
    p['norm_g'] = jnp.ones((DIM,), jnp.float32)
    p['norm_b'] = jnp.zeros((DIM,), jnp.float32)
    p['cpb1_w'] = w((2, CPB_HIDDEN)); p['cpb1_b'] = w((CPB_HIDDEN,), 0.01)
    p['cpb2_w'] = w((CPB_HIDDEN, NUM_HEADS), 0.02); p['cpb2_b'] = w((NUM_HEADS,), 0.01)
    # ConvolutionalGLU
    p['fc1_w'] = w((DIM, 2 * HIDDEN)); p['fc1_b'] = w((2 * HIDDEN,), 0.01)
    p['dw_w'] = w((9, HIDDEN), 0.1)                               # depthwise 3x3, k = dy*3+dx
    p['dw_b'] = w((HIDDEN,), 0.01)
    p['fc2_w'] = w((HIDDEN, DIM)); p['fc2_b'] = w((DIM,), 0.01)
    return p


# =================================== main =======================================
if __name__ == "__main__":
    key = jax.random.PRNGKey(0)
    kp, kx, kt, ki = jax.random.split(key, 4)
    params = init_params(kp)
    x = jax.random.normal(kx, (B, N, DIM), jnp.float32)
    rct = jax.random.uniform(kt, (TABLE, 2), jnp.float32, -1.0, 1.0)
    rpi = jax.random.randint(ki, (N, POOL_LEN), 0, TABLE)

    # padding mask + seq_length_scale (as produced by TransNeXt's get_seqlen_and_mask)
    yy, xx = jnp.meshgrid(jnp.arange(H), jnp.arange(W), indexing='ij')
    tap_masks = []
    for dy in (-1, 0, 1):
        for dx in (-1, 0, 1):
            oob = (yy + dy < 0) | (yy + dy >= H) | (xx + dx < 0) | (xx + dx >= W)
            tap_masks.append(oob.reshape(-1))
    pad_mask = jnp.stack(tap_masks, axis=1)                        # (N, LOCAL_LEN) bool
    valid = LOCAL_LEN - pad_mask.sum(axis=1)
    seq_scale = jnp.log(valid.astype(jnp.float32) + POOL_LEN).reshape(N, 1)

    # one-time precompute (x-independent), then the single fused kernel call
    consts = precompute_block_constants(params, rpi, rct, seq_scale, pad_mask)
    fwd = jax.jit(block_forward_pallas)
    out = jax.block_until_ready(fwd(consts, x))

    ref = block_forward_ref(params, x, rpi, rct, seq_scale, pad_mask)
    err = float(jnp.max(jnp.abs(out - ref)))
    assert out.shape == (B, N, DIM), out.shape
    # DEFAULT-precision MXU (bf16 passes) + EUP approximate reciprocals vs the
    # f32-HIGHEST reference; measured-scale error budget is ~5e-3, so 2e-2 stays
    # a meaningful check.
    assert err < 2e-2, f"max abs err {err}"
    print("KERNEL_OK")
</pallas_src>

<mosaic_0001>
module attributes {stable_mosaic.version = 11 : i64} {
  func.func @_block_kernel(%arg0: i32, %arg1: memref<1x64x32xf32, #tpu.memory_space<vmem>>, %arg2: memref<32x128xf32, #tpu.memory_space<vmem>>, %arg3: memref<1x128xf32, #tpu.memory_space<vmem>>, %arg4: memref<32x64xf32, #tpu.memory_space<vmem>>, %arg5: memref<1x64xf32, #tpu.memory_space<vmem>>, %arg6: memref<6x32xf32, #tpu.memory_space<vmem>>, %arg7: memref<32x32xf32, #tpu.memory_space<vmem>>, %arg8: memref<1x32xf32, #tpu.memory_space<vmem>>, %arg9: memref<32x128xf32, #tpu.memory_space<vmem>>, %arg10: memref<1x128xf32, #tpu.memory_space<vmem>>, %arg11: memref<9x64xf32, #tpu.memory_space<vmem>>, %arg12: memref<1x64xf32, #tpu.memory_space<vmem>>, %arg13: memref<64x32xf32, #tpu.memory_space<vmem>>, %arg14: memref<1x32xf32, #tpu.memory_space<vmem>>, %arg15: memref<64x32xf32, #tpu.memory_space<vmem>>, %arg16: memref<64x32xf32, #tpu.memory_space<vmem>>, %arg17: memref<32x36xf32, #tpu.memory_space<vmem>>, %arg18: memref<1x36xf32, #tpu.memory_space<vmem>>, %arg19: memref<64x36xf32, #tpu.memory_space<vmem>>, %arg20: memref<64x64xf32, #tpu.memory_space<vmem>>, %arg21: memref<576x64xf32, #tpu.memory_space<vmem>>, %arg22: memref<288x36xf32, #tpu.memory_space<vmem>>, %arg23: memref<36x288xf32, #tpu.memory_space<vmem>>, %arg24: memref<100x100xf32, #tpu.memory_space<vmem>>, %arg25: memref<16x64xf32, #tpu.memory_space<vmem>>, %arg26: memref<64x64xf32, #tpu.memory_space<vmem>>, %arg27: memref<32x32xf32, #tpu.memory_space<vmem>>, %arg28: memref<64x32xf32, #tpu.memory_space<vmem>>, %arg29: memref<1x64x32xf32, #tpu.memory_space<vmem>>, %arg30: memref<576x64xf32, #tpu.memory_space<vmem>>) attributes {dimension_semantics = [#tpu.dimension_semantics<parallel>], iteration_bounds = array<i64: 2>, scalar_prefetch = 0 : i64, scratch_operands = 1 : i64, tpu.core_type = #tpu.core_type<tc>, window_params = [{transform_indices = @transform_0, window_bounds = array<i64: 1, 64, 32>}, {pipeline_mode = #tpu.pipeline_mode<synchronous>, transform_indices = @transform_1, window_bounds = array<i64: 32, 128>}, {pipeline_mode = #tpu.pipeline_mode<synchronous>, transform_indices = @transform_2, window_bounds = array<i64: 1, 128>}, {pipeline_mode = #tpu.pipeline_mode<synchronous>, transform_indices = @transform_3, window_bounds = array<i64: 32, 64>}, {pipeline_mode = #tpu.pipeline_mode<synchronous>, transform_indices = @transform_4, window_bounds = array<i64: 1, 64>}, {pipeline_mode = #tpu.pipeline_mode<synchronous>, transform_indices = @transform_5, window_bounds = array<i64: 6, 32>}, {pipeline_mode = #tpu.pipeline_mode<synchronous>, transform_indices = @transform_6, window_bounds = array<i64: 32, 32>}, {pipeline_mode = #tpu.pipeline_mode<synchronous>, transform_indices = @transform_7, window_bounds = array<i64: 1, 32>}, {pipeline_mode = #tpu.pipeline_mode<synchronous>, transform_indices = @transform_8, window_bounds = array<i64: 32, 128>}, {pipeline_mode = #tpu.pipeline_mode<synchronous>, transform_indices = @transform_9, window_bounds = array<i64: 1, 128>}, {pipeline_mode = #tpu.pipeline_mode<synchronous>, transform_indices = @transform_10, window_bounds = array<i64: 9, 64>}, {pipeline_mode = #tpu.pipeline_mode<synchronous>, transform_indices = @transform_11, window_bounds = array<i64: 1, 64>}, {pipeline_mode = #tpu.pipeline_mode<synchronous>, transform_indices = @transform_12, window_bounds = array<i64: 64, 32>}, {pipeline_mode = #tpu.pipeline_mode<synchronous>, transform_indices = @transform_13, window_bounds = array<i64: 1, 32>}, {pipeline_mode = #tpu.pipeline_mode<synchronous>, transform_indices = @transform_14, window_bounds = array<i64: 64, 32>}, {pipeline_mode = #tpu.pipeline_mode<synchronous>, transform_indices = @transform_15, window_bounds = array<i64: 64, 32>}, {pipeline_mode = #tpu.pipeline_mode<synchronous>, transform_indices = @transform_16, window_bounds = array<i64: 32, 36>}, {pipeline_mode = #tpu.pipeline_mode<synchronous>, transform_indices = @transform_17, window_bounds = array<i64: 1, 36>}, {pipeline_mode = #tpu.pipeline_mode<synchronous>, transform_indices = @transform_18, window_bounds = array<i64: 64, 36>}, {pipeline_mode = #tpu.pipeline_mode<synchronous>, transform_indices = @transform_19, window_bounds = array<i64: 64, 64>}, {pipeline_mode = #tpu.pipeline_mode<synchronous>, transform_indices = @transform_20, window_bounds = array<i64: 576, 64>}, {pipeline_mode = #tpu.pipeline_mode<synchronous>, transform_indices = @transform_21, window_bounds = array<i64: 288, 36>}, {pipeline_mode = #tpu.pipeline_mode<synchronous>, transform_indices = @transform_22, window_bounds = array<i64: 36, 288>}, {pipeline_mode = #tpu.pipeline_mode<synchronous>, transform_indices = @transform_23, window_bounds = array<i64: 100, 100>}, {pipeline_mode = #tpu.pipeline_mode<synchronous>, transform_indices = @transform_24, window_bounds = array<i64: 16, 64>}, {pipeline_mode = #tpu.pipeline_mode<synchronous>, transform_indices = @transform_25, window_bounds = array<i64: 64, 64>}, {pipeline_mode = #tpu.pipeline_mode<synchronous>, transform_indices = @transform_26, window_bounds = array<i64: 32, 32>}, {pipeline_mode = #tpu.pipeline_mode<synchronous>, transform_indices = @transform_27, window_bounds = array<i64: 64, 32>}, {transform_indices = @transform_28, window_bounds = array<i64: 1, 64, 32>}]} {
    %c0 = arith.constant 0 : index
    %c0_0 = arith.constant 0 : index
    %0 = vector.load %arg6[%c0, %c0_0] : memref<6x32xf32, #tpu.memory_space<vmem>>, vector<6x32xf32>
    %c0_1 = arith.constant 0 : index
    %c0_2 = arith.constant 0 : index
    %c0_3 = arith.constant 0 : index
    %1 = vector.load %arg1[%c0_1, %c0_2, %c0_3] : memref<1x64x32xf32, #tpu.memory_space<vmem>>, vector<1x64x32xf32>
    %2 = vector.shape_cast %1 : vector<1x64x32xf32> to vector<64x32xf32>
    %3 = vector.extract_strided_slice %0 {offsets = [0, 0], sizes = [1, 32], strides = [1, 1]} : vector<6x32xf32> to vector<1x32xf32>
    %4 = vector.extract_strided_slice %0 {offsets = [1, 0], sizes = [1, 32], strides = [1, 1]} : vector<6x32xf32> to vector<1x32xf32>
    %cst = arith.constant dense<0.000000e+00> : vector<64xf32>
    %5 = vector.multi_reduction <add>, %2, %cst [1] : vector<64x32xf32> to vector<64xf32>
    %6 = vector.shape_cast %5 : vector<64xf32> to vector<64x1xf32>
    %cst_4 = arith.constant 3.200000e+01 : f32
    %7 = vector.broadcast %cst_4 : f32 to vector<64x1xf32>
    %8 = arith.divf %6, %7 : vector<64x1xf32>
    %9 = vector.broadcast %8 : vector<64x1xf32> to vector<64x32xf32>
    %10 = arith.subf %2, %9 : vector<64x32xf32>
    %11 = arith.mulf %10, %10 : vector<64x32xf32>
    %cst_5 = arith.constant dense<0.000000e+00> : vector<64xf32>
    %12 = vector.multi_reduction <add>, %11, %cst_5 [1] : vector<64x32xf32> to vector<64xf32>
    %13 = vector.shape_cast %12 : vector<64xf32> to vector<64x1xf32>
    %cst_6 = arith.constant 3.200000e+01 : f32
    %14 = vector.broadcast %cst_6 : f32 to vector<64x1xf32>
    %15 = arith.divf %13, %14 : vector<64x1xf32>
    %16 = vector.broadcast %8 : vector<64x1xf32> to vector<64x32xf32>
    %17 = arith.subf %2, %16 : vector<64x32xf32>
    %cst_7 = arith.constant 9.99999974E-6 : f32
    %18 = vector.broadcast %cst_7 : f32 to vector<64x1xf32>
    %19 = arith.addf %15, %18 : vector<64x1xf32>
    %20 = math.rsqrt %19 : vector<64x1xf32>
    %21 = vector.broadcast %20 : vector<64x1xf32> to vector<64x32xf32>
    %22 = arith.mulf %17, %21 : vector<64x32xf32>
    %23 = vector.broadcast %3 : vector<1x32xf32> to vector<64x32xf32>
    %24 = arith.mulf %22, %23 : vector<64x32xf32>
    %25 = vector.broadcast %4 : vector<1x32xf32> to vector<64x32xf32>
    %26 = arith.addf %24, %25 : vector<64x32xf32>
    %c0_8 = arith.constant 0 : index
    %c0_9 = arith.constant 0 : index
    %27 = vector.load %arg2[%c0_8, %c0_9] : memref<32x128xf32, #tpu.memory_space<vmem>>, vector<32x128xf32>
    %cst_10 = arith.constant dense<0.000000e+00> : vector<64x128xf32>
    %28 = tpu.matmul %26, %27, %cst_10 {dimension_numbers = #tpu.dot_dimension_numbers<[1], [0], [0], [1], [0, 0, 1, 1], [], []>} : vector<64x32xf32>, vector<32x128xf32>, vector<64x128xf32> -> vector<64x128xf32>
    %c0_11 = arith.constant 0 : index
    %c0_12 = arith.constant 0 : index
    %29 = vector.load %arg3[%c0_11, %c0_12] : memref<1x128xf32, #tpu.memory_space<vmem>>, vector<1x128xf32>
    %30 = vector.broadcast %29 : vector<1x128xf32> to vector<64x128xf32>
    %31 = arith.addf %28, %30 : vector<64x128xf32>
    %32 = vector.extract_strided_slice %31 {offsets = [0, 0], sizes = [64, 64], strides = [1, 1]} : vector<64x128xf32> to vector<64x64xf32>
    %33 = vector.extract_strided_slice %31 {offsets = [0, 64], sizes = [64, 32], strides = [1, 1]} : vector<64x128xf32> to vector<64x32xf32>
    %34 = vector.extract_strided_slice %31 {offsets = [0, 96], sizes = [64, 32], strides = [1, 1]} : vector<64x128xf32> to vector<64x32xf32>
    %35 = arith.mulf %32, %32 : vector<64x64xf32>
    %c0_13 = arith.constant 0 : index
    %c0_14 = arith.constant 0 : index
    %36 = vector.load %arg26[%c0_13, %c0_14] : memref<64x64xf32, #tpu.memory_space<vmem>>, vector<64x64xf32>
    %cst_15 = arith.constant dense<0.000000e+00> : vector<64x64xf32>
    %37 = tpu.matmul %35, %36, %cst_15 {dimension_numbers = #tpu.dot_dimension_numbers<[1], [0], [0], [1], [0, 0, 1, 1], [], []>} : vector<64x64xf32>, vector<64x64xf32>, vector<64x64xf32> -> vector<64x64xf32>
    %cst_16 = arith.constant 1.000000e-24 : f32
    %38 = vector.broadcast %cst_16 : f32 to vector<64x64xf32>
    %39 = arith.maximumf %37, %38 : vector<64x64xf32>
    %40 = math.rsqrt %39 : vector<64x64xf32>
    %41 = arith.mulf %32, %40 : vector<64x64xf32>
    %42 = vector.extract_strided_slice %41 {offsets = [0, 0], sizes = [64, 32], strides = [1, 1]} : vector<64x64xf32> to vector<64x32xf32>
    %43 = vector.extract_strided_slice %41 {offsets = [0, 32], sizes = [64, 32], strides = [1, 1]} : vector<64x64xf32> to vector<64x32xf32>
    %c0_17 = arith.constant 0 : index
    %c0_18 = arith.constant 0 : index
    %44 = vector.load %arg15[%c0_17, %c0_18] : memref<64x32xf32, #tpu.memory_space<vmem>>, vector<64x32xf32>
    %45 = arith.mulf %42, %44 : vector<64x32xf32>
    %c0_19 = arith.constant 0 : index
    %c0_20 = arith.constant 0 : index
    %46 = vector.load %arg16[%c0_19, %c0_20] : memref<64x32xf32, #tpu.memory_space<vmem>>, vector<64x32xf32>
    %47 = arith.addf %45, %46 : vector<64x32xf32>
    %48 = tpu.concatenate %43, %33 in 1 : vector<64x32xf32>, vector<64x32xf32> -> vector<64x64xf32>
    %c0_21 = arith.constant 0 : index
    %c0_22 = arith.constant 0 : index
    %49 = vector.load %arg21[%c0_21, %c0_22] : memref<576x64xf32, #tpu.memory_space<vmem>>, vector<192x64xf32>
    %cst_23 = arith.constant dense<0.000000e+00> : vector<192x64xf32>
    %50 = tpu.matmul %49, %48, %cst_23 {dimension_numbers = #tpu.dot_dimension_numbers<[1], [0], [0], [1], [0, 0, 1, 1], [], []>} : vector<192x64xf32>, vector<64x64xf32>, vector<192x64xf32> -> vector<192x64xf32>
    %c0_24 = arith.constant 0 : index
    %c0_25 = arith.constant 0 : index
    %51 = vector.load %arg30[%c0_24, %c0_25] : memref<576x64xf32, #tpu.memory_space<vmem>>, vector<192x64xf32>
    tpu.vector_store %arg30[%c0_24, %c0_25], %50 {strides = array<i32>} : memref<576x64xf32, #tpu.memory_space<vmem>>, vector<192x64xf32>,
    %c192 = arith.constant 192 : index
    %c0_26 = arith.constant 0 : index
    %52 = vector.load %arg21[%c192, %c0_26] : memref<576x64xf32, #tpu.memory_space<vmem>>, vector<192x64xf32>
    %cst_27 = arith.constant dense<0.000000e+00> : vector<192x64xf32>
    %53 = tpu.matmul %52, %48, %cst_27 {dimension_numbers = #tpu.dot_dimension_numbers<[1], [0], [0], [1], [0, 0, 1, 1], [], []>} : vector<192x64xf32>, vector<64x64xf32>, vector<192x64xf32> -> vector<192x64xf32>
    %c192_28 = arith.constant 192 : index
    %c0_29 = arith.constant 0 : index
    %54 = vector.load %arg30[%c192_28, %c0_29] : memref<576x64xf32, #tpu.memory_space<vmem>>, vector<192x64xf32>
    tpu.vector_store %arg30[%c192_28, %c0_29], %53 {strides = array<i32>} : memref<576x64xf32, #tpu.memory_space<vmem>>, vector<192x64xf32>,
    %c384 = arith.constant 384 : index
    %c0_30 = arith.constant 0 : index
    %55 = vector.load %arg21[%c384, %c0_30] : memref<576x64xf32, #tpu.memory_space<vmem>>, vector<192x64xf32>
    %cst_31 = arith.constant dense<0.000000e+00> : vector<192x64xf32>
    %56 = tpu.matmul %55, %48, %cst_31 {dimension_numbers = #tpu.dot_dimension_numbers<[1], [0], [0], [1], [0, 0, 1, 1], [], []>} : vector<192x64xf32>, vector<64x64xf32>, vector<192x64xf32> -> vector<192x64xf32>
    %c384_32 = arith.constant 384 : index
    %c0_33 = arith.constant 0 : index
    %57 = vector.load %arg30[%c384_32, %c0_33] : memref<576x64xf32, #tpu.memory_space<vmem>>, vector<192x64xf32>
    tpu.vector_store %arg30[%c384_32, %c0_33], %56 {strides = array<i32>} : memref<576x64xf32, #tpu.memory_space<vmem>>, vector<192x64xf32>,
    %c0_34 = arith.constant 0 : index
    %c0_35 = arith.constant 0 : index
    %58 = vector.load %arg25[%c0_34, %c0_35] : memref<16x64xf32, #tpu.memory_space<vmem>>, vector<16x64xf32>
    %59 = math.absf %34 : vector<64x32xf32>
    %cst_36 = arith.constant 0.707106769 : f32
    %60 = vector.broadcast %cst_36 : f32 to vector<64x32xf32>
    %61 = arith.mulf %59, %60 : vector<64x32xf32>
    %cst_37 = arith.constant 0.327591091 : f32
    %62 = vector.broadcast %cst_37 : f32 to vector<64x32xf32>
    %63 = arith.mulf %62, %61 : vector<64x32xf32>
    %cst_38 = arith.constant 1.000000e+00 : f32
    %64 = vector.broadcast %cst_38 : f32 to vector<64x32xf32>
    %65 = arith.addf %64, %63 : vector<64x32xf32>
    %66 = tpu.reciprocal %65 {approx = true} : vector<64x32xf32> -> vector<64x32xf32>
    %cst_39 = arith.constant 1.06140542 : f32
    %67 = vector.broadcast %cst_39 : f32 to vector<64x32xf32>
    %68 = arith.mulf %66, %67 : vector<64x32xf32>
    %cst_40 = arith.constant -1.45315206 : f32
    %69 = vector.broadcast %cst_40 : f32 to vector<64x32xf32>
    %70 = arith.addf %69, %68 : vector<64x32xf32>
    %71 = arith.mulf %66, %70 : vector<64x32xf32>
    %cst_41 = arith.constant 1.42141378 : f32
    %72 = vector.broadcast %cst_41 : f32 to vector<64x32xf32>
    %73 = arith.addf %72, %71 : vector<64x32xf32>
    %74 = arith.mulf %66, %73 : vector<64x32xf32>
    %cst_42 = arith.constant -0.284496725 : f32
    %75 = vector.broadcast %cst_42 : f32 to vector<64x32xf32>
    %76 = arith.addf %75, %74 : vector<64x32xf32>
    %77 = arith.mulf %66, %76 : vector<64x32xf32>
    %cst_43 = arith.constant 0.254829586 : f32
    %78 = vector.broadcast %cst_43 : f32 to vector<64x32xf32>
    %79 = arith.addf %78, %77 : vector<64x32xf32>
    %80 = arith.mulf %66, %79 : vector<64x32xf32>
    %cst_44 = arith.constant 0.000000e+00 : f32
    %81 = vector.broadcast %cst_44 : f32 to vector<64x32xf32>
    %82 = arith.subf %81, %61 : vector<64x32xf32>
    %83 = arith.mulf %82, %61 : vector<64x32xf32>
    %84 = math.exp %83 : vector<64x32xf32>
    %85 = arith.mulf %80, %84 : vector<64x32xf32>
    %cst_45 = arith.constant 1.000000e+00 : f32
    %86 = vector.broadcast %cst_45 : f32 to vector<64x32xf32>
    %87 = arith.subf %86, %85 : vector<64x32xf32>
    %cst_46 = arith.constant 0.000000e+00 : f32
    %88 = vector.broadcast %cst_46 : f32 to vector<64x32xf32>
    %89 = arith.cmpf oge, %34, %88 : vector<64x32xf32>
    %cst_47 = arith.constant 0.000000e+00 : f32
    %90 = vector.broadcast %cst_47 : f32 to vector<64x32xf32>
    %91 = arith.subf %90, %87 : vector<64x32xf32>
    %92 = arith.select %89, %87, %91 : vector<64x32xi1>, vector<64x32xf32>
    %cst_48 = arith.constant 5.000000e-01 : f32
    %93 = vector.broadcast %cst_48 : f32 to vector<64x32xf32>
    %94 = arith.mulf %93, %34 : vector<64x32xf32>
    %cst_49 = arith.constant 1.000000e+00 : f32
    %95 = vector.broadcast %cst_49 : f32 to vector<64x32xf32>
    %96 = arith.addf %95, %92 : vector<64x32xf32>
    %97 = arith.mulf %94, %96 : vector<64x32xf32>
    %cst_50 = arith.constant dense<0.000000e+00> : vector<16x32xf32>
    %98 = tpu.matmul %58, %97, %cst_50 {dimension_numbers = #tpu.dot_dimension_numbers<[1], [0], [0], [1], [0, 0, 1, 1], [], []>} : vector<16x64xf32>, vector<64x32xf32>, vector<16x32xf32> -> vector<16x32xf32>
    %99 = vector.extract_strided_slice %0 {offsets = [2, 0], sizes = [1, 32], strides = [1, 1]} : vector<6x32xf32> to vector<1x32xf32>
    %100 = vector.extract_strided_slice %0 {offsets = [3, 0], sizes = [1, 32], strides = [1, 1]} : vector<6x32xf32> to vector<1x32xf32>
    %cst_51 = arith.constant dense<0.000000e+00> : vector<16xf32>
    %101 = vector.multi_reduction <add>, %98, %cst_51 [1] : vector<16x32xf32> to vector<16xf32>
    %102 = vector.shape_cast %101 : vector<16xf32> to vector<16x1xf32>
    %cst_52 = arith.constant 3.200000e+01 : f32
    %103 = vector.broadcast %cst_52 : f32 to vector<16x1xf32>
    %104 = arith.divf %102, %103 : vector<16x1xf32>
    %105 = vector.broadcast %104 : vector<16x1xf32> to vector<16x32xf32>
    %106 = arith.subf %98, %105 : vector<16x32xf32>
    %107 = arith.mulf %106, %106 : vector<16x32xf32>
    %cst_53 = arith.constant dense<0.000000e+00> : vector<16xf32>
    %108 = vector.multi_reduction <add>, %107, %cst_53 [1] : vector<16x32xf32> to vector<16xf32>
    %109 = vector.shape_cast %108 : vector<16xf32> to vector<16x1xf32>
    %cst_54 = arith.constant 3.200000e+01 : f32
    %110 = vector.broadcast %cst_54 : f32 to vector<16x1xf32>
    %111 = arith.divf %109, %110 : vector<16x1xf32>
    %112 = vector.broadcast %104 : vector<16x1xf32> to vector<16x32xf32>
    %113 = arith.subf %98, %112 : vector<16x32xf32>
    %cst_55 = arith.constant 9.99999974E-6 : f32
    %114 = vector.broadcast %cst_55 : f32 to vector<16x1xf32>
    %115 = arith.addf %111, %114 : vector<16x1xf32>
    %116 = math.rsqrt %115 : vector<16x1xf32>
    %117 = vector.broadcast %116 : vector<16x1xf32> to vector<16x32xf32>
    %118 = arith.mulf %113, %117 : vector<16x32xf32>
    %119 = vector.broadcast %99 : vector<1x32xf32> to vector<16x32xf32>
    %120 = arith.mulf %118, %119 : vector<16x32xf32>
    %121 = vector.broadcast %100 : vector<1x32xf32> to vector<16x32xf32>
    %122 = arith.addf %120, %121 : vector<16x32xf32>
    %c0_56 = arith.constant 0 : index
    %c0_57 = arith.constant 0 : index
    %123 = vector.load %arg4[%c0_56, %c0_57] : memref<32x64xf32, #tpu.memory_space<vmem>>, vector<32x64xf32>
    %cst_58 = arith.constant dense<0.000000e+00> : vector<16x64xf32>
    %124 = tpu.matmul %122, %123, %cst_58 {dimension_numbers = #tpu.dot_dimension_numbers<[1], [0], [0], [1], [0, 0, 1, 1], [], []>} : vector<16x32xf32>, vector<32x64xf32>, vector<16x64xf32> -> vector<16x64xf32>
    %c0_59 = arith.constant 0 : index
    %c0_60 = arith.constant 0 : index
    %125 = vector.load %arg5[%c0_59, %c0_60] : memref<1x64xf32, #tpu.memory_space<vmem>>, vector<1x64xf32>
    %126 = vector.broadcast %125 : vector<1x64xf32> to vector<16x64xf32>
    %127 = arith.addf %124, %126 : vector<16x64xf32>
    %128 = vector.extract_strided_slice %127 {offsets = [0, 0], sizes = [16, 32], strides = [1, 1]} : vector<16x64xf32> to vector<16x32xf32>
    %129 = arith.mulf %128, %128 : vector<16x32xf32>
    %c0_61 = arith.constant 0 : index
    %c0_62 = arith.constant 0 : index
    %130 = vector.load %arg27[%c0_61, %c0_62] : memref<32x32xf32, #tpu.memory_space<vmem>>, vector<32x32xf32>
    %cst_63 = arith.constant dense<0.000000e+00> : vector<16x32xf32>
    %131 = tpu.matmul %129, %130, %cst_63 {dimension_numbers = #tpu.dot_dimension_numbers<[1], [0], [0], [1], [0, 0, 1, 1], [], []>} : vector<16x32xf32>, vector<32x32xf32>, vector<16x32xf32> -> vector<16x32xf32>
    %cst_64 = arith.constant 1.000000e-24 : f32
    %132 = vector.broadcast %cst_64 : f32 to vector<16x32xf32>
    %133 = arith.maximumf %131, %132 : vector<16x32xf32>
    %134 = math.rsqrt %133 : vector<16x32xf32>
    %135 = arith.mulf %128, %134 : vector<16x32xf32>
    %136 = vector.extract_strided_slice %127 {offsets = [0, 32], sizes = [16, 32], strides = [1, 1]} : vector<16x64xf32> to vector<16x32xf32>
    %c0_65 = arith.constant 0 : index
    %c0_66 = arith.constant 0 : index
    %137 = vector.load %arg28[%c0_65, %c0_66] : memref<64x32xf32, #tpu.memory_space<vmem>>, vector<64x32xf32>
    %138 = tpu.concatenate %135, %135, %135, %135 in 0 : vector<16x32xf32>, vector<16x32xf32>, vector<16x32xf32>, vector<16x32xf32> -> vector<64x32xf32>
    %139 = arith.mulf %138, %137 : vector<64x32xf32>
    %140 = tpu.concatenate %136, %136, %136, %136 in 0 : vector<16x32xf32>, vector<16x32xf32>, vector<16x32xf32>, vector<16x32xf32> -> vector<64x32xf32>
    %141 = arith.mulf %140, %137 : vector<64x32xf32>
    %cst_67 = arith.constant dense<0.000000e+00> : vector<64x64xf32>
    %142 = tpu.matmul %47, %139, %cst_67 {dimension_numbers = #tpu.dot_dimension_numbers<[1], [1], [0], [0], [0, 0, 1, 0], [], []>} : vector<64x32xf32>, vector<64x32xf32>, vector<64x64xf32> -> vector<64x64xf32>
    %c0_68 = arith.constant 0 : index
    %c0_69 = arith.constant 0 : index
    %143 = vector.load %arg20[%c0_68, %c0_69] : memref<64x64xf32, #tpu.memory_space<vmem>>, vector<64x64xf32>
    %144 = arith.addf %142, %143 : vector<64x64xf32>
    %c0_70 = arith.constant 0 : index
    %c0_71 = arith.constant 0 : index
    %145 = vector.load %arg30[%c0_70, %c0_71] : memref<576x64xf32, #tpu.memory_space<vmem>>, vector<64x32xf32>
    %146 = arith.mulf %47, %145 : vector<64x32xf32>
    %c64 = arith.constant 64 : index
    %c0_72 = arith.constant 0 : index
    %147 = vector.load %arg30[%c64, %c0_72] : memref<576x64xf32, #tpu.memory_space<vmem>>, vector<64x32xf32>
    %148 = arith.mulf %47, %147 : vector<64x32xf32>
    %c128 = arith.constant 128 : index
    %c0_73 = arith.constant 0 : index
    %149 = vector.load %arg30[%c128, %c0_73] : memref<576x64xf32, #tpu.memory_space<vmem>>, vector<64x32xf32>
    %150 = arith.mulf %47, %149 : vector<64x32xf32>
    %c192_74 = arith.constant 192 : index
    %c0_75 = arith.constant 0 : index
    %151 = vector.load %arg30[%c192_74, %c0_75] : memref<576x64xf32, #tpu.memory_space<vmem>>, vector<64x32xf32>
    %152 = arith.mulf %47, %151 : vector<64x32xf32>
    %c256 = arith.constant 256 : index
    %c0_76 = arith.constant 0 : index
    %153 = vector.load %arg30[%c256, %c0_76] : memref<576x64xf32, #tpu.memory_space<vmem>>, vector<64x32xf32>
    %154 = arith.mulf %47, %153 : vector<64x32xf32>
    %c320 = arith.constant 320 : index
    %c0_77 = arith.constant 0 : index
    %155 = vector.load %arg30[%c320, %c0_77] : memref<576x64xf32, #tpu.memory_space<vmem>>, vector<64x32xf32>
    %156 = arith.mulf %47, %155 : vector<64x32xf32>
    %c384_78 = arith.constant 384 : index
    %c0_79 = arith.constant 0 : index
    %157 = vector.load %arg30[%c384_78, %c0_79] : memref<576x64xf32, #tpu.memory_space<vmem>>, vector<64x32xf32>
    %158 = arith.mulf %47, %157 : vector<64x32xf32>
    %c448 = arith.constant 448 : index
    %c0_80 = arith.constant 0 : index
    %159 = vector.load %arg30[%c448, %c0_80] : memref<576x64xf32, #tpu.memory_space<vmem>>, vector<64x32xf32>
    %160 = arith.mulf %47, %159 : vector<64x32xf32>
    %c512 = arith.constant 512 : index
    %c0_81 = arith.constant 0 : index
    %161 = vector.load %arg30[%c512, %c0_81] : memref<576x64xf32, #tpu.memory_space<vmem>>, vector<64x32xf32>
    %162 = arith.mulf %47, %161 : vector<64x32xf32>
    %163 = tpu.concatenate %146, %148, %150, %152, %154, %156, %158, %160, %162 in 1 : vector<64x32xf32>, vector<64x32xf32>, vector<64x32xf32>, vector<64x32xf32>, vector<64x32xf32>, vector<64x32xf32>, vector<64x32xf32>, vector<64x32xf32>, vector<64x32xf32> -> vector<64x288xf32>
    %c0_82 = arith.constant 0 : index
    %c0_83 = arith.constant 0 : index
    %164 = vector.load %arg19[%c0_82, %c0_83] : memref<64x36xf32, #tpu.memory_space<vmem>>, vector<64x36xf32>
    %c0_84 = arith.constant 0 : index
    %c0_85 = arith.constant 0 : index
    %165 = vector.load %arg22[%c0_84, %c0_85] : memref<288x36xf32, #tpu.memory_space<vmem>>, vector<288x36xf32>
    %cst_86 = arith.constant dense<0.000000e+00> : vector<64x36xf32>
    %166 = tpu.matmul %163, %165, %cst_86 {dimension_numbers = #tpu.dot_dimension_numbers<[1], [0], [0], [1], [0, 0, 1, 1], [], []>} : vector<64x288xf32>, vector<288x36xf32>, vector<64x36xf32> -> vector<64x36xf32>
    %167 = arith.addf %164, %166 : vector<64x36xf32>
    %cst_87 = arith.constant dense<0xFF800000> : vector<64xf32>
    %168 = vector.multi_reduction <maximumf>, %167, %cst_87 [1] : vector<64x36xf32> to vector<64xf32>
    %169 = vector.shape_cast %168 : vector<64xf32> to vector<64x1xf32>
    %cst_88 = arith.constant dense<0xFF800000> : vector<64xf32>
    %170 = vector.multi_reduction <maximumf>, %144, %cst_88 [1] : vector<64x64xf32> to vector<64xf32>
    %171 = vector.shape_cast %170 : vector<64xf32> to vector<64x1xf32>
    %172 = arith.maximumf %169, %171 : vector<64x1xf32>
    %173 = vector.broadcast %172 : vector<64x1xf32> to vector<64x36xf32>
    %174 = arith.subf %167, %173 : vector<64x36xf32>
    %175 = math.exp %174 : vector<64x36xf32>
    %176 = vector.broadcast %172 : vector<64x1xf32> to vector<64x64xf32>
    %177 = arith.subf %144, %176 : vector<64x64xf32>
    %178 = math.exp %177 : vector<64x64xf32>
    %179 = tpu.concatenate %175, %178 in 1 : vector<64x36xf32>, vector<64x64xf32> -> vector<64x100xf32>
    %c0_89 = arith.constant 0 : index
    %c0_90 = arith.constant 0 : index
    %180 = vector.load %arg24[%c0_89, %c0_90] : memref<100x100xf32, #tpu.memory_space<vmem>>, vector<100x100xf32>
    %cst_91 = arith.constant dense<0.000000e+00> : vector<64x100xf32>
    %181 = tpu.matmul %179, %180, %cst_91 {dimension_numbers = #tpu.dot_dimension_numbers<[1], [0], [0], [1], [0, 0, 1, 1], [], []>} : vector<64x100xf32>, vector<100x100xf32>, vector<64x100xf32> -> vector<64x100xf32>
    %182 = tpu.reciprocal %181 {approx = true} : vector<64x100xf32> -> vector<64x100xf32>
    %183 = vector.extract_strided_slice %182 {offsets = [0, 0], sizes = [64, 36], strides = [1, 1]} : vector<64x100xf32> to vector<64x36xf32>
    %184 = arith.mulf %175, %183 : vector<64x36xf32>
    %185 = vector.extract_strided_slice %182 {offsets = [0, 36], sizes = [64, 64], strides = [1, 1]} : vector<64x100xf32> to vector<64x64xf32>
    %186 = arith.mulf %178, %185 : vector<64x64xf32>
    %c0_92 = arith.constant 0 : index
    %c0_93 = arith.constant 0 : index
    %187 = vector.load %arg17[%c0_92, %c0_93] : memref<32x36xf32, #tpu.memory_space<vmem>>, vector<32x36xf32>
    %cst_94 = arith.constant dense<0.000000e+00> : vector<64x36xf32>
    %188 = tpu.matmul %42, %187, %cst_94 {dimension_numbers = #tpu.dot_dimension_numbers<[1], [0], [0], [1], [0, 0, 1, 1], [], []>} : vector<64x32xf32>, vector<32x36xf32>, vector<64x36xf32> -> vector<64x36xf32>
    %c0_95 = arith.constant 0 : index
    %c0_96 = arith.constant 0 : index
    %189 = vector.load %arg18[%c0_95, %c0_96] : memref<1x36xf32, #tpu.memory_space<vmem>>, vector<1x36xf32>
    %190 = vector.broadcast %189 : vector<1x36xf32> to vector<64x36xf32>
    %191 = arith.addf %188, %190 : vector<64x36xf32>
    %192 = arith.addf %191, %184 : vector<64x36xf32>
    %c0_97 = arith.constant 0 : index
    %c0_98 = arith.constant 0 : index
    %193 = vector.load %arg23[%c0_97, %c0_98] : memref<36x288xf32, #tpu.memory_space<vmem>>, vector<36x288xf32>
    %cst_99 = arith.constant dense<0.000000e+00> : vector<64x288xf32>
    %194 = tpu.matmul %192, %193, %cst_99 {dimension_numbers = #tpu.dot_dimension_numbers<[1], [0], [0], [1], [0, 0, 1, 1], [], []>} : vector<64x36xf32>, vector<36x288xf32>, vector<64x288xf32> -> vector<64x288xf32>
    %cst_100 = arith.constant dense<0.000000e+00> : vector<64x32xf32>
    %195 = tpu.matmul %186, %141, %cst_100 {dimension_numbers = #tpu.dot_dimension_numbers<[1], [0], [0], [1], [0, 0, 1, 1], [], []>} : vector<64x64xf32>, vector<64x32xf32>, vector<64x32xf32> -> vector<64x32xf32>
    %196 = vector.extract_strided_slice %194 {offsets = [0, 0], sizes = [64, 32], strides = [1, 1]} : vector<64x288xf32> to vector<64x32xf32>
    %c0_101 = arith.constant 0 : index
    %c32 = arith.constant 32 : index
    %197 = vector.load %arg30[%c0_101, %c32] : memref<576x64xf32, #tpu.memory_space<vmem>>, vector<64x32xf32>
    %198 = arith.mulf %196, %197 : vector<64x32xf32>
    %199 = arith.addf %195, %198 : vector<64x32xf32>
    %200 = vector.extract_strided_slice %194 {offsets = [0, 32], sizes = [64, 32], strides = [1, 1]} : vector<64x288xf32> to vector<64x32xf32>
    %c64_102 = arith.constant 64 : index
    %c32_103 = arith.constant 32 : index
    %201 = vector.load %arg30[%c64_102, %c32_103] : memref<576x64xf32, #tpu.memory_space<vmem>>, vector<64x32xf32>
    %202 = arith.mulf %200, %201 : vector<64x32xf32>
    %203 = arith.addf %199, %202 : vector<64x32xf32>
    %204 = vector.extract_strided_slice %194 {offsets = [0, 64], sizes = [64, 32], strides = [1, 1]} : vector<64x288xf32> to vector<64x32xf32>
    %c128_104 = arith.constant 128 : index
    %c32_105 = arith.constant 32 : index
    %205 = vector.load %arg30[%c128_104, %c32_105] : memref<576x64xf32, #tpu.memory_space<vmem>>, vector<64x32xf32>
    %206 = arith.mulf %204, %205 : vector<64x32xf32>
    %207 = arith.addf %203, %206 : vector<64x32xf32>
    %208 = vector.extract_strided_slice %194 {offsets = [0, 96], sizes = [64, 32], strides = [1, 1]} : vector<64x288xf32> to vector<64x32xf32>
    %c192_106 = arith.constant 192 : index
    %c32_107 = arith.constant 32 : index
    %209 = vector.load %arg30[%c192_106, %c32_107] : memref<576x64xf32, #tpu.memory_space<vmem>>, vector<64x32xf32>
    %210 = arith.mulf %208, %209 : vector<64x32xf32>
    %211 = arith.addf %207, %210 : vector<64x32xf32>
    %212 = vector.extract_strided_slice %194 {offsets = [0, 128], sizes = [64, 32], strides = [1, 1]} : vector<64x288xf32> to vector<64x32xf32>
    %c256_108 = arith.constant 256 : index
    %c32_109 = arith.constant 32 : index
    %213 = vector.load %arg30[%c256_108, %c32_109] : memref<576x64xf32, #tpu.memory_space<vmem>>, vector<64x32xf32>
    %214 = arith.mulf %212, %213 : vector<64x32xf32>
    %215 = arith.addf %211, %214 : vector<64x32xf32>
    %216 = vector.extract_strided_slice %194 {offsets = [0, 160], sizes = [64, 32], strides = [1, 1]} : vector<64x288xf32> to vector<64x32xf32>
    %c320_110 = arith.constant 320 : index
    %c32_111 = arith.constant 32 : index
    %217 = vector.load %arg30[%c320_110, %c32_111] : memref<576x64xf32, #tpu.memory_space<vmem>>, vector<64x32xf32>
    %218 = arith.mulf %216, %217 : vector<64x32xf32>
    %219 = arith.addf %215, %218 : vector<64x32xf32>
    %220 = vector.extract_strided_slice %194 {offsets = [0, 192], sizes = [64, 32], strides = [1, 1]} : vector<64x288xf32> to vector<64x32xf32>
    %c384_112 = arith.constant 384 : index
    %c32_113 = arith.constant 32 : index
    %221 = vector.load %arg30[%c384_112, %c32_113] : memref<576x64xf32, #tpu.memory_space<vmem>>, vector<64x32xf32>
    %222 = arith.mulf %220, %221 : vector<64x32xf32>
    %223 = arith.addf %219, %222 : vector<64x32xf32>
    %224 = vector.extract_strided_slice %194 {offsets = [0, 224], sizes = [64, 32], strides = [1, 1]} : vector<64x288xf32> to vector<64x32xf32>
    %c448_114 = arith.constant 448 : index
    %c32_115 = arith.constant 32 : index
    %225 = vector.load %arg30[%c448_114, %c32_115] : memref<576x64xf32, #tpu.memory_space<vmem>>, vector<64x32xf32>
    %226 = arith.mulf %224, %225 : vector<64x32xf32>
    %227 = arith.addf %223, %226 : vector<64x32xf32>
    %228 = vector.extract_strided_slice %194 {offsets = [0, 256], sizes = [64, 32], strides = [1, 1]} : vector<64x288xf32> to vector<64x32xf32>
    %c512_116 = arith.constant 512 : index
    %c32_117 = arith.constant 32 : index
    %229 = vector.load %arg30[%c512_116, %c32_117] : memref<576x64xf32, #tpu.memory_space<vmem>>, vector<64x32xf32>
    %230 = arith.mulf %228, %229 : vector<64x32xf32>
    %231 = arith.addf %227, %230 : vector<64x32xf32>
    %c0_118 = arith.constant 0 : index
    %c0_119 = arith.constant 0 : index
    %c0_120 = arith.constant 0 : index
    %232 = vector.load %arg1[%c0_118, %c0_119, %c0_120] : memref<1x64x32xf32, #tpu.memory_space<vmem>>, vector<1x64x32xf32>
    %233 = vector.shape_cast %232 : vector<1x64x32xf32> to vector<64x32xf32>
    %c0_121 = arith.constant 0 : index
    %c0_122 = arith.constant 0 : index
    %234 = vector.load %arg7[%c0_121, %c0_122] : memref<32x32xf32, #tpu.memory_space<vmem>>, vector<32x32xf32>
    %cst_123 = arith.constant dense<0.000000e+00> : vector<64x32xf32>
    %235 = tpu.matmul %231, %234, %cst_123 {dimension_numbers = #tpu.dot_dimension_numbers<[1], [0], [0], [1], [0, 0, 1, 1], [], []>} : vector<64x32xf32>, vector<32x32xf32>, vector<64x32xf32> -> vector<64x32xf32>
    %236 = arith.addf %233, %235 : vector<64x32xf32>
    %c0_124 = arith.constant 0 : index
    %c0_125 = arith.constant 0 : index
    %237 = vector.load %arg8[%c0_124, %c0_125] : memref<1x32xf32, #tpu.memory_space<vmem>>, vector<1x32xf32>
    %238 = vector.broadcast %237 : vector<1x32xf32> to vector<64x32xf32>
    %239 = arith.addf %236, %238 : vector<64x32xf32>
    %240 = vector.extract_strided_slice %0 {offsets = [4, 0], sizes = [1, 32], strides = [1, 1]} : vector<6x32xf32> to vector<1x32xf32>
    %241 = vector.extract_strided_slice %0 {offsets = [5, 0], sizes = [1, 32], strides = [1, 1]} : vector<6x32xf32> to vector<1x32xf32>
    %cst_126 = arith.constant dense<0.000000e+00> : vector<64xf32>
    %242 = vector.multi_reduction <add>, %239, %cst_126 [1] : vector<64x32xf32> to vector<64xf32>
    %243 = vector.shape_cast %242 : vector<64xf32> to vector<64x1xf32>
    %cst_127 = arith.constant 3.200000e+01 : f32
    %244 = vector.broadcast %cst_127 : f32 to vector<64x1xf32>
    %245 = arith.divf %243, %244 : vector<64x1xf32>
    %246 = vector.broadcast %245 : vector<64x1xf32> to vector<64x32xf32>
    %247 = arith.subf %239, %246 : vector<64x32xf32>
    %248 = arith.mulf %247, %247 : vector<64x32xf32>
    %cst_128 = arith.constant dense<0.000000e+00> : vector<64xf32>
    %249 = vector.multi_reduction <add>, %248, %cst_128 [1] : vector<64x32xf32> to vector<64xf32>
    %250 = vector.shape_cast %249 : vector<64xf32> to vector<64x1xf32>
    %cst_129 = arith.constant 3.200000e+01 : f32
    %251 = vector.broadcast %cst_129 : f32 to vector<64x1xf32>
    %252 = arith.divf %250, %251 : vector<64x1xf32>
    %253 = vector.broadcast %245 : vector<64x1xf32> to vector<64x32xf32>
    %254 = arith.subf %239, %253 : vector<64x32xf32>
    %cst_130 = arith.constant 9.99999974E-6 : f32
    %255 = vector.broadcast %cst_130 : f32 to vector<64x1xf32>
    %256 = arith.addf %252, %255 : vector<64x1xf32>
    %257 = math.rsqrt %256 : vector<64x1xf32>
    %258 = vector.broadcast %257 : vector<64x1xf32> to vector<64x32xf32>
    %259 = arith.mulf %254, %258 : vector<64x32xf32>
    %260 = vector.broadcast %240 : vector<1x32xf32> to vector<64x32xf32>
    %261 = arith.mulf %259, %260 : vector<64x32xf32>
    %262 = vector.broadcast %241 : vector<1x32xf32> to vector<64x32xf32>
    %263 = arith.addf %261, %262 : vector<64x32xf32>
    %c0_131 = arith.constant 0 : index
    %c0_132 = arith.constant 0 : index
    %264 = vector.load %arg9[%c0_131, %c0_132] : memref<32x128xf32, #tpu.memory_space<vmem>>, vector<32x128xf32>
    %cst_133 = arith.constant dense<0.000000e+00> : vector<64x128xf32>
    %265 = tpu.matmul %263, %264, %cst_133 {dimension_numbers = #tpu.dot_dimension_numbers<[1], [0], [0], [1], [0, 0, 1, 1], [], []>} : vector<64x32xf32>, vector<32x128xf32>, vector<64x128xf32> -> vector<64x128xf32>
    %c0_134 = arith.constant 0 : index
    %c0_135 = arith.constant 0 : index
    %266 = vector.load %arg10[%c0_134, %c0_135] : memref<1x128xf32, #tpu.memory_space<vmem>>, vector<1x128xf32>
    %267 = vector.broadcast %266 : vector<1x128xf32> to vector<64x128xf32>
    %268 = arith.addf %265, %267 : vector<64x128xf32>
    %269 = vector.extract_strided_slice %268 {offsets = [0, 0], sizes = [64, 64], strides = [1, 1]} : vector<64x128xf32> to vector<64x64xf32>
    %270 = vector.extract_strided_slice %268 {offsets = [0, 64], sizes = [64, 64], strides = [1, 1]} : vector<64x128xf32> to vector<64x64xf32>
    %c0_136 = arith.constant 0 : index
    %c0_137 = arith.constant 0 : index
    %271 = vector.load %arg21[%c0_136, %c0_137] : memref<576x64xf32, #tpu.memory_space<vmem>>, vector<192x64xf32>
    %cst_138 = arith.constant dense<0.000000e+00> : vector<192x64xf32>
    %272 = tpu.matmul %271, %269, %cst_138 {dimension_numbers = #tpu.dot_dimension_numbers<[1], [0], [0], [1], [0, 0, 1, 1], [], []>} : vector<192x64xf32>, vector<64x64xf32>, vector<192x64xf32> -> vector<192x64xf32>
    %c0_139 = arith.constant 0 : index
    %c0_140 = arith.constant 0 : index
    %273 = vector.load %arg30[%c0_139, %c0_140] : memref<576x64xf32, #tpu.memory_space<vmem>>, vector<192x64xf32>
    tpu.vector_store %arg30[%c0_139, %c0_140], %272 {strides = array<i32>} : memref<576x64xf32, #tpu.memory_space<vmem>>, vector<192x64xf32>,
    %c192_141 = arith.constant 192 : index
    %c0_142 = arith.constant 0 : index
    %274 = vector.load %arg21[%c192_141, %c0_142] : memref<576x64xf32, #tpu.memory_space<vmem>>, vector<192x64xf32>
    %cst_143 = arith.constant dense<0.000000e+00> : vector<192x64xf32>
    %275 = tpu.matmul %274, %269, %cst_143 {dimension_numbers = #tpu.dot_dimension_numbers<[1], [0], [0], [1], [0, 0, 1, 1], [], []>} : vector<192x64xf32>, vector<64x64xf32>, vector<192x64xf32> -> vector<192x64xf32>
    %c192_144 = arith.constant 192 : index
    %c0_145 = arith.constant 0 : index
    %276 = vector.load %arg30[%c192_144, %c0_145] : memref<576x64xf32, #tpu.memory_space<vmem>>, vector<192x64xf32>
    tpu.vector_store %arg30[%c192_144, %c0_145], %275 {strides = array<i32>} : memref<576x64xf32, #tpu.memory_space<vmem>>, vector<192x64xf32>,
    %c384_146 = arith.constant 384 : index
    %c0_147 = arith.constant 0 : index
    %277 = vector.load %arg21[%c384_146, %c0_147] : memref<576x64xf32, #tpu.memory_space<vmem>>, vector<192x64xf32>
    %cst_148 = arith.constant dense<0.000000e+00> : vector<192x64xf32>
    %278 = tpu.matmul %277, %269, %cst_148 {dimension_numbers = #tpu.dot_dimension_numbers<[1], [0], [0], [1], [0, 0, 1, 1], [], []>} : vector<192x64xf32>, vector<64x64xf32>, vector<192x64xf32> -> vector<192x64xf32>
    %c384_149 = arith.constant 384 : index
    %c0_150 = arith.constant 0 : index
    %279 = vector.load %arg30[%c384_149, %c0_150] : memref<576x64xf32, #tpu.memory_space<vmem>>, vector<192x64xf32>
    tpu.vector_store %arg30[%c384_149, %c0_150], %278 {strides = array<i32>} : memref<576x64xf32, #tpu.memory_space<vmem>>, vector<192x64xf32>,
    %c0_151 = arith.constant 0 : index
    %c0_152 = arith.constant 0 : index
    %280 = vector.load %arg11[%c0_151, %c0_152] : memref<9x64xf32, #tpu.memory_space<vmem>>, vector<9x64xf32>
    %cst_153 = arith.constant 0.000000e+00 : f32
    %281 = vector.broadcast %cst_153 : f32 to vector<64x64xf32>
    %c0_154 = arith.constant 0 : index
    %c0_155 = arith.constant 0 : index
    %282 = vector.load %arg12[%c0_154, %c0_155] : memref<1x64xf32, #tpu.memory_space<vmem>>, vector<1x64xf32>
    %283 = vector.broadcast %282 : vector<1x64xf32> to vector<64x64xf32>
    %284 = arith.addf %281, %283 : vector<64x64xf32>
    %c0_156 = arith.constant 0 : index
    %c0_157 = arith.constant 0 : index
    %285 = vector.load %arg30[%c0_156, %c0_157] : memref<576x64xf32, #tpu.memory_space<vmem>>, vector<64x64xf32>
    %286 = vector.extract_strided_slice %280 {offsets = [0, 0], sizes = [1, 64], strides = [1, 1]} : vector<9x64xf32> to vector<1x64xf32>
    %287 = vector.broadcast %286 : vector<1x64xf32> to vector<64x64xf32>
    %288 = arith.mulf %285, %287 : vector<64x64xf32>
    %289 = arith.addf %284, %288 : vector<64x64xf32>
    %c64_158 = arith.constant 64 : index
    %c0_159 = arith.constant 0 : index
    %290 = vector.load %arg30[%c64_158, %c0_159] : memref<576x64xf32, #tpu.memory_space<vmem>>, vector<64x64xf32>
    %291 = vector.extract_strided_slice %280 {offsets = [1, 0], sizes = [1, 64], strides = [1, 1]} : vector<9x64xf32> to vector<1x64xf32>
    %292 = vector.broadcast %291 : vector<1x64xf32> to vector<64x64xf32>
    %293 = arith.mulf %290, %292 : vector<64x64xf32>
    %294 = arith.addf %289, %293 : vector<64x64xf32>
    %c128_160 = arith.constant 128 : index
    %c0_161 = arith.constant 0 : index
    %295 = vector.load %arg30[%c128_160, %c0_161] : memref<576x64xf32, #tpu.memory_space<vmem>>, vector<64x64xf32>
    %296 = vector.extract_strided_slice %280 {offsets = [2, 0], sizes = [1, 64], strides = [1, 1]} : vector<9x64xf32> to vector<1x64xf32>
    %297 = vector.broadcast %296 : vector<1x64xf32> to vector<64x64xf32>
    %298 = arith.mulf %295, %297 : vector<64x64xf32>
    %299 = arith.addf %294, %298 : vector<64x64xf32>
    %c192_162 = arith.constant 192 : index
    %c0_163 = arith.constant 0 : index
    %300 = vector.load %arg30[%c192_162, %c0_163] : memref<576x64xf32, #tpu.memory_space<vmem>>, vector<64x64xf32>
    %301 = vector.extract_strided_slice %280 {offsets = [3, 0], sizes = [1, 64], strides = [1, 1]} : vector<9x64xf32> to vector<1x64xf32>
    %302 = vector.broadcast %301 : vector<1x64xf32> to vector<64x64xf32>
    %303 = arith.mulf %300, %302 : vector<64x64xf32>
    %304 = arith.addf %299, %303 : vector<64x64xf32>
    %c256_164 = arith.constant 256 : index
    %c0_165 = arith.constant 0 : index
    %305 = vector.load %arg30[%c256_164, %c0_165] : memref<576x64xf32, #tpu.memory_space<vmem>>, vector<64x64xf32>
    %306 = vector.extract_strided_slice %280 {offsets = [4, 0], sizes = [1, 64], strides = [1, 1]} : vector<9x64xf32> to vector<1x64xf32>
    %307 = vector.broadcast %306 : vector<1x64xf32> to vector<64x64xf32>
    %308 = arith.mulf %305, %307 : vector<64x64xf32>
    %309 = arith.addf %304, %308 : vector<64x64xf32>
    %c320_166 = arith.constant 320 : index
    %c0_167 = arith.constant 0 : index
    %310 = vector.load %arg30[%c320_166, %c0_167] : memref<576x64xf32, #tpu.memory_space<vmem>>, vector<64x64xf32>
    %311 = vector.extract_strided_slice %280 {offsets = [5, 0], sizes = [1, 64], strides = [1, 1]} : vector<9x64xf32> to vector<1x64xf32>
    %312 = vector.broadcast %311 : vector<1x64xf32> to vector<64x64xf32>
    %313 = arith.mulf %310, %312 : vector<64x64xf32>
    %314 = arith.addf %309, %313 : vector<64x64xf32>
    %c384_168 = arith.constant 384 : index
    %c0_169 = arith.constant 0 : index
    %315 = vector.load %arg30[%c384_168, %c0_169] : memref<576x64xf32, #tpu.memory_space<vmem>>, vector<64x64xf32>
    %316 = vector.extract_strided_slice %280 {offsets = [6, 0], sizes = [1, 64], strides = [1, 1]} : vector<9x64xf32> to vector<1x64xf32>
    %317 = vector.broadcast %316 : vector<1x64xf32> to vector<64x64xf32>
    %318 = arith.mulf %315, %317 : vector<64x64xf32>
    %319 = arith.addf %314, %318 : vector<64x64xf32>
    %c448_170 = arith.constant 448 : index
    %c0_171 = arith.constant 0 : index
    %320 = vector.load %arg30[%c448_170, %c0_171] : memref<576x64xf32, #tpu.memory_space<vmem>>, vector<64x64xf32>
    %321 = vector.extract_strided_slice %280 {offsets = [7, 0], sizes = [1, 64], strides = [1, 1]} : vector<9x64xf32> to vector<1x64xf32>
    %322 = vector.broadcast %321 : vector<1x64xf32> to vector<64x64xf32>
    %323 = arith.mulf %320, %322 : vector<64x64xf32>
    %324 = arith.addf %319, %323 : vector<64x64xf32>
    %c512_172 = arith.constant 512 : index
    %c0_173 = arith.constant 0 : index
    %325 = vector.load %arg30[%c512_172, %c0_173] : memref<576x64xf32, #tpu.memory_space<vmem>>, vector<64x64xf32>
    %326 = vector.extract_strided_slice %280 {offsets = [8, 0], sizes = [1, 64], strides = [1, 1]} : vector<9x64xf32> to vector<1x64xf32>
    %327 = vector.broadcast %326 : vector<1x64xf32> to vector<64x64xf32>
    %328 = arith.mulf %325, %327 : vector<64x64xf32>
    %329 = arith.addf %324, %328 : vector<64x64xf32>
    %330 = math.absf %329 : vector<64x64xf32>
    %cst_174 = arith.constant 0.707106769 : f32
    %331 = vector.broadcast %cst_174 : f32 to vector<64x64xf32>
    %332 = arith.mulf %330, %331 : vector<64x64xf32>
    %cst_175 = arith.constant 0.327591091 : f32
    %333 = vector.broadcast %cst_175 : f32 to vector<64x64xf32>
    %334 = arith.mulf %333, %332 : vector<64x64xf32>
    %cst_176 = arith.constant 1.000000e+00 : f32
    %335 = vector.broadcast %cst_176 : f32 to vector<64x64xf32>
    %336 = arith.addf %335, %334 : vector<64x64xf32>
    %337 = tpu.reciprocal %336 {approx = true} : vector<64x64xf32> -> vector<64x64xf32>
    %cst_177 = arith.constant 1.06140542 : f32
    %338 = vector.broadcast %cst_177 : f32 to vector<64x64xf32>
    %339 = arith.mulf %337, %338 : vector<64x64xf32>
    %cst_178 = arith.constant -1.45315206 : f32
    %340 = vector.broadcast %cst_178 : f32 to vector<64x64xf32>
    %341 = arith.addf %340, %339 : vector<64x64xf32>
    %342 = arith.mulf %337, %341 : vector<64x64xf32>
    %cst_179 = arith.constant 1.42141378 : f32
    %343 = vector.broadcast %cst_179 : f32 to vector<64x64xf32>
    %344 = arith.addf %343, %342 : vector<64x64xf32>
    %345 = arith.mulf %337, %344 : vector<64x64xf32>
    %cst_180 = arith.constant -0.284496725 : f32
    %346 = vector.broadcast %cst_180 : f32 to vector<64x64xf32>
    %347 = arith.addf %346, %345 : vector<64x64xf32>
    %348 = arith.mulf %337, %347 : vector<64x64xf32>
    %cst_181 = arith.constant 0.254829586 : f32
    %349 = vector.broadcast %cst_181 : f32 to vector<64x64xf32>
    %350 = arith.addf %349, %348 : vector<64x64xf32>
    %351 = arith.mulf %337, %350 : vector<64x64xf32>
    %cst_182 = arith.constant 0.000000e+00 : f32
    %352 = vector.broadcast %cst_182 : f32 to vector<64x64xf32>
    %353 = arith.subf %352, %332 : vector<64x64xf32>
    %354 = arith.mulf %353, %332 : vector<64x64xf32>
    %355 = math.exp %354 : vector<64x64xf32>
    %356 = arith.mulf %351, %355 : vector<64x64xf32>
    %cst_183 = arith.constant 1.000000e+00 : f32
    %357 = vector.broadcast %cst_183 : f32 to vector<64x64xf32>
    %358 = arith.subf %357, %356 : vector<64x64xf32>
    %cst_184 = arith.constant 0.000000e+00 : f32
    %359 = vector.broadcast %cst_184 : f32 to vector<64x64xf32>
    %360 = arith.cmpf oge, %329, %359 : vector<64x64xf32>
    %cst_185 = arith.constant 0.000000e+00 : f32
    %361 = vector.broadcast %cst_185 : f32 to vector<64x64xf32>
    %362 = arith.subf %361, %358 : vector<64x64xf32>
    %363 = arith.select %360, %358, %362 : vector<64x64xi1>, vector<64x64xf32>
    %cst_186 = arith.constant 5.000000e-01 : f32
    %364 = vector.broadcast %cst_186 : f32 to vector<64x64xf32>
    %365 = arith.mulf %364, %329 : vector<64x64xf32>
    %cst_187 = arith.constant 1.000000e+00 : f32
    %366 = vector.broadcast %cst_187 : f32 to vector<64x64xf32>
    %367 = arith.addf %366, %363 : vector<64x64xf32>
    %368 = arith.mulf %365, %367 : vector<64x64xf32>
    %369 = arith.mulf %368, %270 : vector<64x64xf32>
    %c0_188 = arith.constant 0 : index
    %c0_189 = arith.constant 0 : index
    %370 = vector.load %arg13[%c0_188, %c0_189] : memref<64x32xf32, #tpu.memory_space<vmem>>, vector<64x32xf32>
    %cst_190 = arith.constant dense<0.000000e+00> : vector<64x32xf32>
    %371 = tpu.matmul %369, %370, %cst_190 {dimension_numbers = #tpu.dot_dimension_numbers<[1], [0], [0], [1], [0, 0, 1, 1], [], []>} : vector<64x64xf32>, vector<64x32xf32>, vector<64x32xf32> -> vector<64x32xf32>
    %c0_191 = arith.constant 0 : index
    %c0_192 = arith.constant 0 : index
    %372 = vector.load %arg14[%c0_191, %c0_192] : memref<1x32xf32, #tpu.memory_space<vmem>>, vector<1x32xf32>
    %373 = vector.broadcast %372 : vector<1x32xf32> to vector<64x32xf32>
    %374 = arith.addf %371, %373 : vector<64x32xf32>
    %375 = arith.addf %239, %374 : vector<64x32xf32>
    %376 = vector.shape_cast %375 : vector<64x32xf32> to vector<1x64x32xf32>
    %c0_193 = arith.constant 0 : index
    %c0_194 = arith.constant 0 : index
    %c0_195 = arith.constant 0 : index
    %377 = vector.load %arg29[%c0_193, %c0_194, %c0_195] : memref<1x64x32xf32, #tpu.memory_space<vmem>>, vector<1x64x32xf32>
    tpu.vector_store %arg29[%c0_193, %c0_194, %c0_195], %376 {strides = array<i32>} : memref<1x64x32xf32, #tpu.memory_space<vmem>>, vector<1x64x32xf32>,
    return
  }
  func.func @transform_0(%arg0: i32) -> (i32, i32, i32) {
    %c0_i32 = arith.constant 0 : i32
    %c0_i32_0 = arith.constant 0 : i32
    %c0_i32_1 = arith.constant 0 : i32
    return %arg0, %c0_i32, %c0_i32_0 : i32, i32, i32
  }
  func.func @transform_1(%arg0: i32) -> (i32, i32) {
    %c0_i32 = arith.constant 0 : i32
    %c0_i32_0 = arith.constant 0 : i32
    %c0_i32_1 = arith.constant 0 : i32
    return %c0_i32, %c0_i32_0 : i32, i32
  }
  func.func @transform_2(%arg0: i32) -> (i32, i32) {
    %c0_i32 = arith.constant 0 : i32
    %c0_i32_0 = arith.constant 0 : i32
    %c0_i32_1 = arith.constant 0 : i32
    return %c0_i32, %c0_i32_0 : i32, i32
  }
  func.func @transform_3(%arg0: i32) -> (i32, i32) {
    %c0_i32 = arith.constant 0 : i32
    %c0_i32_0 = arith.constant 0 : i32
    %c0_i32_1 = arith.constant 0 : i32
    return %c0_i32, %c0_i32_0 : i32, i32
  }
  func.func @transform_4(%arg0: i32) -> (i32, i32) {
    %c0_i32 = arith.constant 0 : i32
    %c0_i32_0 = arith.constant 0 : i32
    %c0_i32_1 = arith.constant 0 : i32
    return %c0_i32, %c0_i32_0 : i32, i32
  }
  func.func @transform_5(%arg0: i32) -> (i32, i32) {
    %c0_i32 = arith.constant 0 : i32
    %c0_i32_0 = arith.constant 0 : i32
    %c0_i32_1 = arith.constant 0 : i32
    return %c0_i32, %c0_i32_0 : i32, i32
  }
  func.func @transform_6(%arg0: i32) -> (i32, i32) {
    %c0_i32 = arith.constant 0 : i32
    %c0_i32_0 = arith.constant 0 : i32
    %c0_i32_1 = arith.constant 0 : i32
    return %c0_i32, %c0_i32_0 : i32, i32
  }
  func.func @transform_7(%arg0: i32) -> (i32, i32) {
    %c0_i32 = arith.constant 0 : i32
    %c0_i32_0 = arith.constant 0 : i32
    %c0_i32_1 = arith.constant 0 : i32
    return %c0_i32, %c0_i32_0 : i32, i32
  }
  func.func @transform_8(%arg0: i32) -> (i32, i32) {
    %c0_i32 = arith.constant 0 : i32
    %c0_i32_0 = arith.constant 0 : i32
    %c0_i32_1 = arith.constant 0 : i32
    return %c0_i32, %c0_i32_0 : i32, i32
  }
  func.func @transform_9(%arg0: i32) -> (i32, i32) {
    %c0_i32 = arith.constant 0 : i32
    %c0_i32_0 = arith.constant 0 : i32
    %c0_i32_1 = arith.constant 0 : i32
    return %c0_i32, %c0_i32_0 : i32, i32
  }
  func.func @transform_10(%arg0: i32) -> (i32, i32) {
    %c0_i32 = arith.constant 0 : i32
    %c0_i32_0 = arith.constant 0 : i32
    %c0_i32_1 = arith.constant 0 : i32
    return %c0_i32, %c0_i32_0 : i32, i32
  }
  func.func @transform_11(%arg0: i32) -> (i32, i32) {
    %c0_i32 = arith.constant 0 : i32
    %c0_i32_0 = arith.constant 0 : i32
    %c0_i32_1 = arith.constant 0 : i32
    return %c0_i32, %c0_i32_0 : i32, i32
  }
  func.func @transform_12(%arg0: i32) -> (i32, i32) {
    %c0_i32 = arith.constant 0 : i32
    %c0_i32_0 = arith.constant 0 : i32
    %c0_i32_1 = arith.constant 0 : i32
    return %c0_i32, %c0_i32_0 : i32, i32
  }
  func.func @transform_13(%arg0: i32) -> (i32, i32) {
    %c0_i32 = arith.constant 0 : i32
    %c0_i32_0 = arith.constant 0 : i32
    %c0_i32_1 = arith.constant 0 : i32
    return %c0_i32, %c0_i32_0 : i32, i32
  }
  func.func @transform_14(%arg0: i32) -> (i32, i32) {
    %c0_i32 = arith.constant 0 : i32
    %c0_i32_0 = arith.constant 0 : i32
    %c0_i32_1 = arith.constant 0 : i32
    return %c0_i32, %c0_i32_0 : i32, i32
  }
  func.func @transform_15(%arg0: i32) -> (i32, i32) {
    %c0_i32 = arith.constant 0 : i32
    %c0_i32_0 = arith.constant 0 : i32
    %c0_i32_1 = arith.constant 0 : i32
    return %c0_i32, %c0_i32_0 : i32, i32
  }
  func.func @transform_16(%arg0: i32) -> (i32, i32) {
    %c0_i32 = arith.constant 0 : i32
    %c0_i32_0 = arith.constant 0 : i32
    %c0_i32_1 = arith.constant 0 : i32
    return %c0_i32, %c0_i32_0 : i32, i32
  }
  func.func @transform_17(%arg0: i32) -> (i32, i32) {
    %c0_i32 = arith.constant 0 : i32
    %c0_i32_0 = arith.constant 0 : i32
    %c0_i32_1 = arith.constant 0 : i32
    return %c0_i32, %c0_i32_0 : i32, i32
  }
  func.func @transform_18(%arg0: i32) -> (i32, i32) {
    %c0_i32 = arith.constant 0 : i32
    %c0_i32_0 = arith.constant 0 : i32
    %c0_i32_1 = arith.constant 0 : i32
    return %c0_i32, %c0_i32_0 : i32, i32
  }
  func.func @transform_19(%arg0: i32) -> (i32, i32) {
    %c0_i32 = arith.constant 0 : i32
    %c0_i32_0 = arith.constant 0 : i32
    %c0_i32_1 = arith.constant 0 : i32
    return %c0_i32, %c0_i32_0 : i32, i32
  }
  func.func @transform_20(%arg0: i32) -> (i32, i32) {
    %c0_i32 = arith.constant 0 : i32
    %c0_i32_0 = arith.constant 0 : i32
    %c0_i32_1 = arith.constant 0 : i32
    return %c0_i32, %c0_i32_0 : i32, i32
  }
  func.func @transform_21(%arg0: i32) -> (i32, i32) {
    %c0_i32 = arith.constant 0 : i32
    %c0_i32_0 = arith.constant 0 : i32
    %c0_i32_1 = arith.constant 0 : i32
    return %c0_i32, %c0_i32_0 : i32, i32
  }
  func.func @transform_22(%arg0: i32) -> (i32, i32) {
    %c0_i32 = arith.constant 0 : i32
    %c0_i32_0 = arith.constant 0 : i32
    %c0_i32_1 = arith.constant 0 : i32
    return %c0_i32, %c0_i32_0 : i32, i32
  }
  func.func @transform_23(%arg0: i32) -> (i32, i32) {
    %c0_i32 = arith.constant 0 : i32
    %c0_i32_0 = arith.constant 0 : i32
    %c0_i32_1 = arith.constant 0 : i32
    return %c0_i32, %c0_i32_0 : i32, i32
  }
  func.func @transform_24(%arg0: i32) -> (i32, i32) {
    %c0_i32 = arith.constant 0 : i32
    %c0_i32_0 = arith.constant 0 : i32
    %c0_i32_1 = arith.constant 0 : i32
    return %c0_i32, %c0_i32_0 : i32, i32
  }
  func.func @transform_25(%arg0: i32) -> (i32, i32) {
    %c0_i32 = arith.constant 0 : i32
    %c0_i32_0 = arith.constant 0 : i32
    %c0_i32_1 = arith.constant 0 : i32
    return %c0_i32, %c0_i32_0 : i32, i32
  }
  func.func @transform_26(%arg0: i32) -> (i32, i32) {
    %c0_i32 = arith.constant 0 : i32
    %c0_i32_0 = arith.constant 0 : i32
    %c0_i32_1 = arith.constant 0 : i32
    return %c0_i32, %c0_i32_0 : i32, i32
  }
  func.func @transform_27(%arg0: i32) -> (i32, i32) {
    %c0_i32 = arith.constant 0 : i32
    %c0_i32_0 = arith.constant 0 : i32
    %c0_i32_1 = arith.constant 0 : i32
    return %c0_i32, %c0_i32_0 : i32, i32
  }
  func.func @transform_28(%arg0: i32) -> (i32, i32, i32) {
    %c0_i32 = arith.constant 0 : i32
    %c0_i32_0 = arith.constant 0 : i32
    %c0_i32_1 = arith.constant 0 : i32
    return %arg0, %c0_i32, %c0_i32_0 : i32, i32, i32
  }
}

</mosaic_0001>

<llo_original>
// kernel: block_forward_pallas.1
$region0: #{block_forward_pallas.1}
  #allocation0 [shape = 'u32[]', space=smem, size = 0x4, offset = 0x4, fixed_abs, tag = 'smem constant byte address 0x4 - core index']
  #allocation1 [shape = 'u32[144,128]{1,0:T(1,128)}', space=vmem, size = 0x12000, scoped, tag = 'internal scratch']
  #allocation2 [shape = 'f32[576,64]{1,0:T(8,128)}', space=vmem, size = 0x48000, scoped, tag = 'scratch operand']
  %s0 = inlined_call_operand.vmem [shape: f32[2,64,32], index: 0, kind: input, shape index: {}]
  %s1 = inlined_call_operand.vmem [shape: f32[32,128], index: 1, kind: input, shape index: {}]
  %s2 = inlined_call_operand.vmem [shape: f32[1,128], index: 2, kind: input, shape index: {}]
  %s3 = inlined_call_operand.vmem [shape: f32[32,64], index: 3, kind: input, shape index: {}]
  %s4 = inlined_call_operand.vmem [shape: f32[1,64], index: 4, kind: input, shape index: {}]
  %s5 = inlined_call_operand.vmem [shape: f32[6,32], index: 5, kind: input, shape index: {}]
  %s6 = inlined_call_operand.vmem [shape: f32[32,32], index: 6, kind: input, shape index: {}]
  %s7 = inlined_call_operand.vmem [shape: f32[1,32], index: 7, kind: input, shape index: {}]
  %s8 = inlined_call_operand.vmem [shape: f32[32,128], index: 8, kind: input, shape index: {}]
  %s9 = inlined_call_operand.vmem [shape: f32[1,128], index: 9, kind: input, shape index: {}]
  %s10 = inlined_call_operand.vmem [shape: f32[9,64], index: 10, kind: input, shape index: {}]
  %s11 = inlined_call_operand.vmem [shape: f32[1,64], index: 11, kind: input, shape index: {}]
  %s12 = inlined_call_operand.vmem [shape: f32[64,32], index: 12, kind: input, shape index: {}]
  %s13 = inlined_call_operand.vmem [shape: f32[1,32], index: 13, kind: input, shape index: {}]
  %s14 = inlined_call_operand.vmem [shape: f32[64,32], index: 14, kind: input, shape index: {}]
  %s15 = inlined_call_operand.vmem [shape: f32[64,32], index: 15, kind: input, shape index: {}]
  %s16 = inlined_call_operand.vmem [shape: f32[32,36], index: 16, kind: input, shape index: {}]
  %s17 = inlined_call_operand.vmem [shape: f32[1,36], index: 17, kind: input, shape index: {}]
  %s18 = inlined_call_operand.vmem [shape: f32[64,36], index: 18, kind: input, shape index: {}]
  %s19 = inlined_call_operand.vmem [shape: f32[64,64], index: 19, kind: input, shape index: {}]
  %s20 = inlined_call_operand.vmem [shape: f32[576,64], index: 20, kind: input, shape index: {}]
  %s21 = inlined_call_operand.vmem [shape: f32[288,36], index: 21, kind: input, shape index: {}]
  %s22 = inlined_call_operand.vmem [shape: f32[36,288], index: 22, kind: input, shape index: {}]
  %s23 = inlined_call_operand.vmem [shape: f32[100,100], index: 23, kind: input, shape index: {}]
  %s24 = inlined_call_operand.vmem [shape: f32[16,64], index: 24, kind: input, shape index: {}]
  %s25 = inlined_call_operand.vmem [shape: f32[64,64], index: 25, kind: input, shape index: {}]
  %s26 = inlined_call_operand.vmem [shape: f32[32,32], index: 26, kind: input, shape index: {}]
  %s27 = inlined_call_operand.vmem [shape: f32[64,32], index: 27, kind: input, shape index: {}]
  %s28 = inlined_call_operand.vmem [shape: f32[2,64,32], index: 28, kind: output, shape index: {}]
  %s29 = sld [smem:[#allocation0]]
  $region145: #{block_forward_pallas.1} parent=0
    _
  %s31 = ssub.s32 1, %s29
  %s32 = scalar_select 0, %s31, %s29
  loop: start=0, step=1, limit=4
  $region2: #{block_forward_pallas.1} parent=0 // loop_pre_header
    _
  $region3: #{block_forward_pallas.1} parent=0 // loop_header
    %s34 = sphi 0, %s38
    %p35 = scmp.ge.s32.totalorder %s34, 4
    %s44 = sphi 0, %s46
    %s47 = sphi 0, %s44
    %s48 = sphi 0, %s47
    %s64 = sphi 0, %s48
    %s68 = sphi 0, %s68
    %s70 = sphi 0, %s68
    %s71 = sphi 0, %s70
    %s85 = sphi 0, %s71
    %s89 = sphi 0, %s89
    %s91 = sphi 0, %s89
    %s92 = sphi 0, %s91
    %s106 = sphi 0, %s92
    %s110 = sphi 0, %s110
    %s112 = sphi 0, %s110
    %s113 = sphi 0, %s112
    %s127 = sphi 0, %s113
    %s131 = sphi 0, %s131
    %s133 = sphi 0, %s131
    %s134 = sphi 0, %s133
    %s148 = sphi 0, %s134
    %s152 = sphi 0, %s152
    %s154 = sphi 0, %s152
    %s155 = sphi 0, %s154
    %s169 = sphi 0, %s155
    %s173 = sphi 0, %s173
    %s175 = sphi 0, %s173
    %s176 = sphi 0, %s175
    %s190 = sphi 0, %s176
    %s194 = sphi 0, %s194
    %s196 = sphi 0, %s194
    %s197 = sphi 0, %s196
    %s211 = sphi 0, %s197
    %s215 = sphi 0, %s215
    %s217 = sphi 0, %s215
    %s218 = sphi 0, %s217
    %s232 = sphi 0, %s218
    %s236 = sphi 0, %s236
    %s238 = sphi 0, %s236
    %s239 = sphi 0, %s238
    %s253 = sphi 0, %s239
    %s257 = sphi 0, %s257
    %s259 = sphi 0, %s257
    %s260 = sphi 0, %s259
    %s274 = sphi 0, %s260
    %s278 = sphi 0, %s278
    %s280 = sphi 0, %s278
    %s281 = sphi 0, %s280
    %s295 = sphi 0, %s281
    %s299 = sphi 0, %s299
    %s301 = sphi 0, %s299
    %s302 = sphi 0, %s301
    %s316 = sphi 0, %s302
    %s320 = sphi 0, %s320
    %s322 = sphi 0, %s320
    %s323 = sphi 0, %s322
    %s337 = sphi 0, %s323
    %s341 = sphi 0, %s341
    %s343 = sphi 0, %s341
    %s344 = sphi 0, %s343
    %s358 = sphi 0, %s344
    %s362 = sphi 0, %s362
    %s364 = sphi 0, %s362
    %s365 = sphi 0, %s364
    %s379 = sphi 0, %s365
    %s383 = sphi 0, %s383
    %s385 = sphi 0, %s383
    %s386 = sphi 0, %s385
    %s400 = sphi 0, %s386
    %s404 = sphi 0, %s404
    %s406 = sphi 0, %s404
    %s407 = sphi 0, %s406
    %s421 = sphi 0, %s407
    %s425 = sphi 0, %s425
    %s427 = sphi 0, %s425
    %s428 = sphi 0, %s427
    %s442 = sphi 0, %s428
    %s446 = sphi 0, %s446
    %s448 = sphi 0, %s446
    %s449 = sphi 0, %s448
    %s463 = sphi 0, %s449
    %s467 = sphi 0, %s467
    %s469 = sphi 0, %s467
    %s470 = sphi 0, %s469
    %s484 = sphi 0, %s470
    %s488 = sphi 0, %s488
    %s490 = sphi 0, %s488
    %s491 = sphi 0, %s490
    %s505 = sphi 0, %s491
    %s509 = sphi 0, %s509
    %s511 = sphi 0, %s509
    %s512 = sphi 0, %s511
    %s526 = sphi 0, %s512
    %s530 = sphi 0, %s530
    %s532 = sphi 0, %s530
    %s533 = sphi 0, %s532
    %s547 = sphi 0, %s533
    %s551 = sphi 0, %s551
    %s553 = sphi 0, %s551
    %s554 = sphi 0, %s553
    %s568 = sphi 0, %s554
    %s572 = sphi 0, %s572
    %s574 = sphi 0, %s572
    %s575 = sphi 0, %s574
    %s589 = sphi 0, %s575
    %s593 = sphi 0, %s593
    %s595 = sphi 0, %s593
    %s596 = sphi 0, %s595
    %s610 = sphi 0, %s596
    %s614 = sphi 0, %s614
    %s616 = sphi 0, %s614
    %s617 = sphi 0, %s616
    %s631 = sphi 0, %s617
    %s637 = sphi 0, %s639
    %s640 = sphi 0, %s637
    %s641 = sphi 0, %s640
    %s657 = sphi 0, %s641
  $region4: #{block_forward_pallas.1} parent=0 // loop_header_branch
    %37 = sbr.rel (%p35) target = $region8
  $region5: #{block_forward_pallas.1} parent=0 // loop_body
    %s39 = ssub.s32 %s34, 1
    %s40 = ssub.s32 %s34, 2
    %s41 = sadd.s32 %s34, 1
    %s42 = ssub.s32 %s34, %s41
    %p43 = scmp.eq.s32.totalorder %s42, 0
    %s45 = sadd.s32 %s44, 1
    %s46 = scalar_select %p43, %s44, %s45
    %p49 = pneg %p43
    %p50 = scmp.eq.s32.totalorder %s34, 1
    %p51 = por %p49, %p50
    %p52 = scmp.ne.s32.totalorder %s44, %s47
    %p53 = scmp.eq.s32.totalorder %s34, 0
    %p54 = por %p52, %p53
    %p55 = scmp.ne.s32.totalorder %s44, %s47
    %p56 = scmp.eq.s32.totalorder %s39, 1
    %p57 = por %p55, %p56
    %p58 = scmp.ne.s32.totalorder %s47, %s48
    %p59 = scmp.eq.s32.totalorder %s39, 0
    %p60 = por %p58, %p59
    %p61 = scmp.ne.s32.totalorder %s47, %s48
    %p62 = scmp.eq.s32.totalorder %s40, 1
    %p63 = por %p61, %p62
    %p65 = scmp.ne.s32.totalorder %s48, %s64
    %p66 = scmp.eq.s32.totalorder %s40, 0
    %p67 = por %p65, %p66
    %s69 = sadd.s32 %s68, 1
    %p72 = scmp.eq.s32.totalorder %s34, 1
    %p73 = scmp.ne.s32.totalorder %s68, %s70
    %p74 = scmp.eq.s32.totalorder %s34, 0
    %p75 = por %p73, %p74
    %p76 = scmp.ne.s32.totalorder %s68, %s70
    %p77 = scmp.eq.s32.totalorder %s39, 1
    %p78 = por %p76, %p77
    %p79 = scmp.ne.s32.totalorder %s70, %s71
    %p80 = scmp.eq.s32.totalorder %s39, 0
    %p81 = por %p79, %p80
    %p82 = scmp.ne.s32.totalorder %s70, %s71
    %p83 = scmp.eq.s32.totalorder %s40, 1
    %p84 = por %p82, %p83
    %p86 = scmp.ne.s32.totalorder %s71, %s85
    %p87 = scmp.eq.s32.totalorder %s40, 0
    %p88 = por %p86, %p87
    %s90 = sadd.s32 %s89, 1
    %p93 = scmp.eq.s32.totalorder %s34, 1
    %p94 = scmp.ne.s32.totalorder %s89, %s91
    %p95 = scmp.eq.s32.totalorder %s34, 0
    %p96 = por %p94, %p95
    %p97 = scmp.ne.s32.totalorder %s89, %s91
    %p98 = scmp.eq.s32.totalorder %s39, 1
    %p99 = por %p97, %p98
    %p100 = scmp.ne.s32.totalorder %s91, %s92
    %p101 = scmp.eq.s32.totalorder %s39, 0
    %p102 = por %p100, %p101
    %p103 = scmp.ne.s32.totalorder %s91, %s92
    %p104 = scmp.eq.s32.totalorder %s40, 1
    %p105 = por %p103, %p104
    %p107 = scmp.ne.s32.totalorder %s92, %s106
    %p108 = scmp.eq.s32.totalorder %s40, 0
    %p109 = por %p107, %p108
    %s111 = sadd.s32 %s110, 1
    %p114 = scmp.eq.s32.totalorder %s34, 1
    %p115 = scmp.ne.s32.totalorder %s110, %s112
    %p116 = scmp.eq.s32.totalorder %s34, 0
    %p117 = por %p115, %p116
    %p118 = scmp.ne.s32.totalorder %s110, %s112
    %p119 = scmp.eq.s32.totalorder %s39, 1
    %p120 = por %p118, %p119
    %p121 = scmp.ne.s32.totalorder %s112, %s113
    %p122 = scmp.eq.s32.totalorder %s39, 0
    %p123 = por %p121, %p122
    %p124 = scmp.ne.s32.totalorder %s112, %s113
    %p125 = scmp.eq.s32.totalorder %s40, 1
    %p126 = por %p124, %p125
    %p128 = scmp.ne.s32.totalorder %s113, %s127
    %p129 = scmp.eq.s32.totalorder %s40, 0
    %p130 = por %p128, %p129
    %s132 = sadd.s32 %s131, 1
    %p135 = scmp.eq.s32.totalorder %s34, 1
    %p136 = scmp.ne.s32.totalorder %s131, %s133
    %p137 = scmp.eq.s32.totalorder %s34, 0
    %p138 = por %p136, %p137
    %p139 = scmp.ne.s32.totalorder %s131, %s133
    %p140 = scmp.eq.s32.totalorder %s39, 1
    %p141 = por %p139, %p140
    %p142 = scmp.ne.s32.totalorder %s133, %s134
    %p143 = scmp.eq.s32.totalorder %s39, 0
    %p144 = por %p142, %p143
    %p145 = scmp.ne.s32.totalorder %s133, %s134
    %p146 = scmp.eq.s32.totalorder %s40, 1
    %p147 = por %p145, %p146
    %p149 = scmp.ne.s32.totalorder %s134, %s148
    %p150 = scmp.eq.s32.totalorder %s40, 0
    %p151 = por %p149, %p150
    %s153 = sadd.s32 %s152, 1
    %p156 = scmp.eq.s32.totalorder %s34, 1
    %p157 = scmp.ne.s32.totalorder %s152, %s154
    %p158 = scmp.eq.s32.totalorder %s34, 0
    %p159 = por %p157, %p158
    %p160 = scmp.ne.s32.totalorder %s152, %s154
    %p161 = scmp.eq.s32.totalorder %s39, 1
    %p162 = por %p160, %p161
    %p163 = scmp.ne.s32.totalorder %s154, %s155
    %p164 = scmp.eq.s32.totalorder %s39, 0
    %p165 = por %p163, %p164
    %p166 = scmp.ne.s32.totalorder %s154, %s155
    %p167 = scmp.eq.s32.totalorder %s40, 1
    %p168 = por %p166, %p167
    %p170 = scmp.ne.s32.totalorder %s155, %s169
    %p171 = scmp.eq.s32.totalorder %s40, 0
    %p172 = por %p170, %p171
    %s174 = sadd.s32 %s173, 1
    %p177 = scmp.eq.s32.totalorder %s34, 1
    %p178 = scmp.ne.s32.totalorder %s173, %s175
    %p179 = scmp.eq.s32.totalorder %s34, 0
    %p180 = por %p178, %p179
    %p181 = scmp.ne.s32.totalorder %s173, %s175
    %p182 = scmp.eq.s32.totalorder %s39, 1
    %p183 = por %p181, %p182
    %p184 = scmp.ne.s32.totalorder %s175, %s176
    %p185 = scmp.eq.s32.totalorder %s39, 0
    %p186 = por %p184, %p185
    %p187 = scmp.ne.s32.totalorder %s175, %s176
    %p188 = scmp.eq.s32.totalorder %s40, 1
    %p189 = por %p187, %p188
    %p191 = scmp.ne.s32.totalorder %s176, %s190
    %p192 = scmp.eq.s32.totalorder %s40, 0
    %p193 = por %p191, %p192
    %s195 = sadd.s32 %s194, 1
    %p198 = scmp.eq.s32.totalorder %s34, 1
    %p199 = scmp.ne.s32.totalorder %s194, %s196
    %p200 = scmp.eq.s32.totalorder %s34, 0
    %p201 = por %p199, %p200
    %p202 = scmp.ne.s32.totalorder %s194, %s196
    %p203 = scmp.eq.s32.totalorder %s39, 1
    %p204 = por %p202, %p203
    %p205 = scmp.ne.s32.totalorder %s196, %s197
    %p206 = scmp.eq.s32.totalorder %s39, 0
    %p207 = por %p205, %p206
    %p208 = scmp.ne.s32.totalorder %s196, %s197
    %p209 = scmp.eq.s32.totalorder %s40, 1
    %p210 = por %p208, %p209
    %p212 = scmp.ne.s32.totalorder %s197, %s211
    %p213 = scmp.eq.s32.totalorder %s40, 0
    %p214 = por %p212, %p213
    %s216 = sadd.s32 %s215, 1
    %p219 = scmp.eq.s32.totalorder %s34, 1
    %p220 = scmp.ne.s32.totalorder %s215, %s217
    %p221 = scmp.eq.s32.totalorder %s34, 0
    %p222 = por %p220, %p221
    %p223 = scmp.ne.s32.totalorder %s215, %s217
    %p224 = scmp.eq.s32.totalorder %s39, 1
    %p225 = por %p223, %p224
    %p226 = scmp.ne.s32.totalorder %s217, %s218
    %p227 = scmp.eq.s32.totalorder %s39, 0
    %p228 = por %p226, %p227
    %p229 = scmp.ne.s32.totalorder %s217, %s218
    %p230 = scmp.eq.s32.totalorder %s40, 1
    %p231 = por %p229, %p230
    %p233 = scmp.ne.s32.totalorder %s218, %s232
    %p234 = scmp.eq.s32.totalorder %s40, 0
    %p235 = por %p233, %p234
    %s237 = sadd.s32 %s236, 1
    %p240 = scmp.eq.s32.totalorder %s34, 1
    %p241 = scmp.ne.s32.totalorder %s236, %s238
    %p242 = scmp.eq.s32.totalorder %s34, 0
    %p243 = por %p241, %p242
    %p244 = scmp.ne.s32.totalorder %s236, %s238
    %p245 = scmp.eq.s32.totalorder %s39, 1
    %p246 = por %p244, %p245
    %p247 = scmp.ne.s32.totalorder %s238, %s239
    %p248 = scmp.eq.s32.totalorder %s39, 0
    %p249 = por %p247, %p248
    %p250 = scmp.ne.s32.totalorder %s238, %s239
    %p251 = scmp.eq.s32.totalorder %s40, 1
    %p252 = por %p250, %p251
    %p254 = scmp.ne.s32.totalorder %s239, %s253
    %p255 = scmp.eq.s32.totalorder %s40, 0
    %p256 = por %p254, %p255
    %s258 = sadd.s32 %s257, 1
    %p261 = scmp.eq.s32.totalorder %s34, 1
    %p262 = scmp.ne.s32.totalorder %s257, %s259
    %p263 = scmp.eq.s32.totalorder %s34, 0
    %p264 = por %p262, %p263
    %p265 = scmp.ne.s32.totalorder %s257, %s259
    %p266 = scmp.eq.s32.totalorder %s39, 1
    %p267 = por %p265, %p266
    %p268 = scmp.ne.s32.totalorder %s259, %s260
    %p269 = scmp.eq.s32.totalorder %s39, 0
    %p270 = por %p268, %p269
    %p271 = scmp.ne.s32.totalorder %s259, %s260
    %p272 = scmp.eq.s32.totalorder %s40, 1
    %p273 = por %p271, %p272
    %p275 = scmp.ne.s32.totalorder %s260, %s274
    %p276 = scmp.eq.s32.totalorder %s40, 0
    %p277 = por %p275, %p276
    %s279 = sadd.s32 %s278, 1
    %p282 = scmp.eq.s32.totalorder %s34, 1
    %p283 = scmp.ne.s32.totalorder %s278, %s280
    %p284 = scmp.eq.s32.totalorder %s34, 0
    %p285 = por %p283, %p284
    %p286 = scmp.ne.s32.totalorder %s278, %s280
    %p287 = scmp.eq.s32.totalorder %s39, 1
    %p288 = por %p286, %p287
    %p289 = scmp.ne.s32.totalorder %s280, %s281
    %p290 = scmp.eq.s32.totalorder %s39, 0
    %p291 = por %p289, %p290
    %p292 = scmp.ne.s32.totalorder %s280, %s281
    %p293 = scmp.eq.s32.totalorder %s40, 1
    %p294 = por %p292, %p293
    %p296 = scmp.ne.s32.totalorder %s281, %s295
    %p297 = scmp.eq.s32.totalorder %s40, 0
    %p298 = por %p296, %p297
    %s300 = sadd.s32 %s299, 1
    %p303 = scmp.eq.s32.totalorder %s34, 1
    %p304 = scmp.ne.s32.totalorder %s299, %s301
    %p305 = scmp.eq.s32.totalorder %s34, 0
    %p306 = por %p304, %p305
    %p307 = scmp.ne.s32.totalorder %s299, %s301
    %p308 = scmp.eq.s32.totalorder %s39, 1
    %p309 = por %p307, %p308
    %p310 = scmp.ne.s32.totalorder %s301, %s302
    %p311 = scmp.eq.s32.totalorder %s39, 0
    %p312 = por %p310, %p311
    %p313 = scmp.ne.s32.totalorder %s301, %s302
    %p314 = scmp.eq.s32.totalorder %s40, 1
    %p315 = por %p313, %p314
    %p317 = scmp.ne.s32.totalorder %s302, %s316
    %p318 = scmp.eq.s32.totalorder %s40, 0
    %p319 = por %p317, %p318
    %s321 = sadd.s32 %s320, 1
    %p324 = scmp.eq.s32.totalorder %s34, 1
    %p325 = scmp.ne.s32.totalorder %s320, %s322
    %p326 = scmp.eq.s32.totalorder %s34, 0
    %p327 = por %p325, %p326
    %p328 = scmp.ne.s32.totalorder %s320, %s322
    %p329 = scmp.eq.s32.totalorder %s39, 1
    %p330 = por %p328, %p329
    %p331 = scmp.ne.s32.totalorder %s322, %s323
    %p332 = scmp.eq.s32.totalorder %s39, 0
    %p333 = por %p331, %p332
    %p334 = scmp.ne.s32.totalorder %s322, %s323
    %p335 = scmp.eq.s32.totalorder %s40, 1
    %p336 = por %p334, %p335
    %p338 = scmp.ne.s32.totalorder %s323, %s337
    %p339 = scmp.eq.s32.totalorder %s40, 0
    %p340 = por %p338, %p339
    %s342 = sadd.s32 %s341, 1
    %p345 = scmp.eq.s32.totalorder %s34, 1
    %p346 = scmp.ne.s32.totalorder %s341, %s343
    %p347 = scmp.eq.s32.totalorder %s34, 0
    %p348 = por %p346, %p347
    %p349 = scmp.ne.s32.totalorder %s341, %s343
    %p350 = scmp.eq.s32.totalorder %s39, 1
    %p351 = por %p349, %p350
    %p352 = scmp.ne.s32.totalorder %s343, %s344
    %p353 = scmp.eq.s32.totalorder %s39, 0
    %p354 = por %p352, %p353
    %p355 = scmp.ne.s32.totalorder %s343, %s344
    %p356 = scmp.eq.s32.totalorder %s40, 1
    %p357 = por %p355, %p356
    %p359 = scmp.ne.s32.totalorder %s344, %s358
    %p360 = scmp.eq.s32.totalorder %s40, 0
    %p361 = por %p359, %p360
    %s363 = sadd.s32 %s362, 1
    %p366 = scmp.eq.s32.totalorder %s34, 1
    %p367 = scmp.ne.s32.totalorder %s362, %s364
    %p368 = scmp.eq.s32.totalorder %s34, 0
    %p369 = por %p367, %p368
    %p370 = scmp.ne.s32.totalorder %s362, %s364
    %p371 = scmp.eq.s32.totalorder %s39, 1
    %p372 = por %p370, %p371
    %p373 = scmp.ne.s32.totalorder %s364, %s365
    %p374 = scmp.eq.s32.totalorder %s39, 0
    %p375 = por %p373, %p374
    %p376 = scmp.ne.s32.totalorder %s364, %s365
    %p377 = scmp.eq.s32.totalorder %s40, 1
    %p378 = por %p376, %p377
    %p380 = scmp.ne.s32.totalorder %s365, %s379
    %p381 = scmp.eq.s32.totalorder %s40, 0
    %p382 = por %p380, %p381
    %s384 = sadd.s32 %s383, 1
    %p387 = scmp.eq.s32.totalorder %s34, 1
    %p388 = scmp.ne.s32.totalorder %s383, %s385
    %p389 = scmp.eq.s32.totalorder %s34, 0
    %p390 = por %p388, %p389
    %p391 = scmp.ne.s32.totalorder %s383, %s385
    %p392 = scmp.eq.s32.totalorder %s39, 1
    %p393 = por %p391, %p392
    %p394 = scmp.ne.s32.totalorder %s385, %s386
    %p395 = scmp.eq.s32.totalorder %s39, 0
    %p396 = por %p394, %p395
    %p397 = scmp.ne.s32.totalorder %s385, %s386
    %p398 = scmp.eq.s32.totalorder %s40, 1
    %p399 = por %p397, %p398
    %p401 = scmp.ne.s32.totalorder %s386, %s400
    %p402 = scmp.eq.s32.totalorder %s40, 0
    %p403 = por %p401, %p402
    %s405 = sadd.s32 %s404, 1
    %p408 = scmp.eq.s32.totalorder %s34, 1
    %p409 = scmp.ne.s32.totalorder %s404, %s406
    %p410 = scmp.eq.s32.totalorder %s34, 0
    %p411 = por %p409, %p410
    %p412 = scmp.ne.s32.totalorder %s404, %s406
    %p413 = scmp.eq.s32.totalorder %s39, 1
    %p414 = por %p412, %p413
    %p415 = scmp.ne.s32.totalorder %s406, %s407
    %p416 = scmp.eq.s32.totalorder %s39, 0
    %p417 = por %p415, %p416
    %p418 = scmp.ne.s32.totalorder %s406, %s407
    %p419 = scmp.eq.s32.totalorder %s40, 1
    %p420 = por %p418, %p419
    %p422 = scmp.ne.s32.totalorder %s407, %s421
    %p423 = scmp.eq.s32.totalorder %s40, 0
    %p424 = por %p422, %p423
    %s426 = sadd.s32 %s425, 1
    %p429 = scmp.eq.s32.totalorder %s34, 1
    %p430 = scmp.ne.s32.totalorder %s425, %s427
    %p431 = scmp.eq.s32.totalorder %s34, 0
    %p432 = por %p430, %p431
    %p433 = scmp.ne.s32.totalorder %s425, %s427
    %p434 = scmp.eq.s32.totalorder %s39, 1
    %p435 = por %p433, %p434
    %p436 = scmp.ne.s32.totalorder %s427, %s428
    %p437 = scmp.eq.s32.totalorder %s39, 0
    %p438 = por %p436, %p437
    %p439 = scmp.ne.s32.totalorder %s427, %s428
    %p440 = scmp.eq.s32.totalorder %s40, 1
    %p441 = por %p439, %p440
    %p443 = scmp.ne.s32.totalorder %s428, %s442
    %p444 = scmp.eq.s32.totalorder %s40, 0
    %p445 = por %p443, %p444
    %s447 = sadd.s32 %s446, 1
    %p450 = scmp.eq.s32.totalorder %s34, 1
    %p451 = scmp.ne.s32.totalorder %s446, %s448
    %p452 = scmp.eq.s32.totalorder %s34, 0
    %p453 = por %p451, %p452
    %p454 = scmp.ne.s32.totalorder %s446, %s448
    %p455 = scmp.eq.s32.totalorder %s39, 1
    %p456 = por %p454, %p455
    %p457 = scmp.ne.s32.totalorder %s448, %s449
    %p458 = scmp.eq.s32.totalorder %s39, 0
    %p459 = por %p457, %p458
    %p460 = scmp.ne.s32.totalorder %s448, %s449
    %p461 = scmp.eq.s32.totalorder %s40, 1
    %p462 = por %p460, %p461
    %p464 = scmp.ne.s32.totalorder %s449, %s463
    %p465 = scmp.eq.s32.totalorder %s40, 0
    %p466 = por %p464, %p465
    %s468 = sadd.s32 %s467, 1
    %p471 = scmp.eq.s32.totalorder %s34, 1
    %p472 = scmp.ne.s32.totalorder %s467, %s469
    %p473 = scmp.eq.s32.totalorder %s34, 0
    %p474 = por %p472, %p473
    %p475 = scmp.ne.s32.totalorder %s467, %s469
    %p476 = scmp.eq.s32.totalorder %s39, 1
    %p477 = por %p475, %p476
    %p478 = scmp.ne.s32.totalorder %s469, %s470
    %p479 = scmp.eq.s32.totalorder %s39, 0
    %p480 = por %p478, %p479
    %p481 = scmp.ne.s32.totalorder %s469, %s470
    %p482 = scmp.eq.s32.totalorder %s40, 1
    %p483 = por %p481, %p482
    %p485 = scmp.ne.s32.totalorder %s470, %s484
    %p486 = scmp.eq.s32.totalorder %s40, 0
    %p487 = por %p485, %p486
    %s489 = sadd.s32 %s488, 1
    %p492 = scmp.eq.s32.totalorder %s34, 1
    %p493 = scmp.ne.s32.totalorder %s488, %s490
    %p494 = scmp.eq.s32.totalorder %s34, 0
    %p495 = por %p493, %p494
    %p496 = scmp.ne.s32.totalorder %s488, %s490
    %p497 = scmp.eq.s32.totalorder %s39, 1
    %p498 = por %p496, %p497
    %p499 = scmp.ne.s32.totalorder %s490, %s491
    %p500 = scmp.eq.s32.totalorder %s39, 0
    %p501 = por %p499, %p500
    %p502 = scmp.ne.s32.totalorder %s490, %s491
    %p503 = scmp.eq.s32.totalorder %s40, 1
    %p504 = por %p502, %p503
    %p506 = scmp.ne.s32.totalorder %s491, %s505
    %p507 = scmp.eq.s32.totalorder %s40, 0
    %p508 = por %p506, %p507
    %s510 = sadd.s32 %s509, 1
    %p513 = scmp.eq.s32.totalorder %s34, 1
    %p514 = scmp.ne.s32.totalorder %s509, %s511
    %p515 = scmp.eq.s32.totalorder %s34, 0
    %p516 = por %p514, %p515
    %p517 = scmp.ne.s32.totalorder %s509, %s511
    %p518 = scmp.eq.s32.totalorder %s39, 1
    %p519 = por %p517, %p518
    %p520 = scmp.ne.s32.totalorder %s511, %s512
    %p521 = scmp.eq.s32.totalorder %s39, 0
    %p522 = por %p520, %p521
    %p523 = scmp.ne.s32.totalorder %s511, %s512
    %p524 = scmp.eq.s32.totalorder %s40, 1
    %p525 = por %p523, %p524
    %p527 = scmp.ne.s32.totalorder %s512, %s526
    %p528 = scmp.eq.s32.totalorder %s40, 0
    %p529 = por %p527, %p528
    %s531 = sadd.s32 %s530, 1
    %p534 = scmp.eq.s32.totalorder %s34, 1
    %p535 = scmp.ne.s32.totalorder %s530, %s532
    %p536 = scmp.eq.s32.totalorder %s34, 0
    %p537 = por %p535, %p536
    %p538 = scmp.ne.s32.totalorder %s530, %s532
    %p539 = scmp.eq.s32.totalorder %s39, 1
    %p540 = por %p538, %p539
    %p541 = scmp.ne.s32.totalorder %s532, %s533
    %p542 = scmp.eq.s32.totalorder %s39, 0
    %p543 = por %p541, %p542
    %p544 = scmp.ne.s32.totalorder %s532, %s533
    %p545 = scmp.eq.s32.totalorder %s40, 1
    %p546 = por %p544, %p545
    %p548 = scmp.ne.s32.totalorder %s533, %s547
    %p549 = scmp.eq.s32.totalorder %s40, 0
    %p550 = por %p548, %p549
    %s552 = sadd.s32 %s551, 1
    %p555 = scmp.eq.s32.totalorder %s34, 1
    %p556 = scmp.ne.s32.totalorder %s551, %s553
    %p557 = scmp.eq.s32.totalorder %s34, 0
    %p558 = por %p556, %p557
    %p559 = scmp.ne.s32.totalorder %s551, %s553
    %p560 = scmp.eq.s32.totalorder %s39, 1
    %p561 = por %p559, %p560
    %p562 = scmp.ne.s32.totalorder %s553, %s554
    %p563 = scmp.eq.s32.totalorder %s39, 0
    %p564 = por %p562, %p563
    %p565 = scmp.ne.s32.totalorder %s553, %s554
    %p566 = scmp.eq.s32.totalorder %s40, 1
    %p567 = por %p565, %p566
    %p569 = scmp.ne.s32.totalorder %s554, %s568
    %p570 = scmp.eq.s32.totalorder %s40, 0
    %p571 = por %p569, %p570
    %s573 = sadd.s32 %s572, 1
    %p576 = scmp.eq.s32.totalorder %s34, 1
    %p577 = scmp.ne.s32.totalorder %s572, %s574
    %p578 = scmp.eq.s32.totalorder %s34, 0
    %p579 = por %p577, %p578
    %p580 = scmp.ne.s32.totalorder %s572, %s574
    %p581 = scmp.eq.s32.totalorder %s39, 1
    %p582 = por %p580, %p581
    %p583 = scmp.ne.s32.totalorder %s574, %s575
    %p584 = scmp.eq.s32.totalorder %s39, 0
    %p585 = por %p583, %p584
    %p586 = scmp.ne.s32.totalorder %s574, %s575
    %p587 = scmp.eq.s32.totalorder %s40, 1
    %p588 = por %p586, %p587
    %p590 = scmp.ne.s32.totalorder %s575, %s589
    %p591 = scmp.eq.s32.totalorder %s40, 0
    %p592 = por %p590, %p591
    %s594 = sadd.s32 %s593, 1
    %p597 = scmp.eq.s32.totalorder %s34, 1
    %p598 = scmp.ne.s32.totalorder %s593, %s595
    %p599 = scmp.eq.s32.totalorder %s34, 0
    %p600 = por %p598, %p599
    %p601 = scmp.ne.s32.totalorder %s593, %s595
    %p602 = scmp.eq.s32.totalorder %s39, 1
    %p603 = por %p601, %p602
    %p604 = scmp.ne.s32.totalorder %s595, %s596
    %p605 = scmp.eq.s32.totalorder %s39, 0
    %p606 = por %p604, %p605
    %p607 = scmp.ne.s32.totalorder %s595, %s596
    %p608 = scmp.eq.s32.totalorder %s40, 1
    %p609 = por %p607, %p608
    %p611 = scmp.ne.s32.totalorder %s596, %s610
    %p612 = scmp.eq.s32.totalorder %s40, 0
    %p613 = por %p611, %p612
    %s615 = sadd.s32 %s614, 1
    %p618 = scmp.eq.s32.totalorder %s34, 1
    %p619 = scmp.ne.s32.totalorder %s614, %s616
    %p620 = scmp.eq.s32.totalorder %s34, 0
    %p621 = por %p619, %p620
    %p622 = scmp.ne.s32.totalorder %s614, %s616
    %p623 = scmp.eq.s32.totalorder %s39, 1
    %p624 = por %p622, %p623
    %p625 = scmp.ne.s32.totalorder %s616, %s617
    %p626 = scmp.eq.s32.totalorder %s39, 0
    %p627 = por %p625, %p626
    %p628 = scmp.ne.s32.totalorder %s616, %s617
    %p629 = scmp.eq.s32.totalorder %s40, 1
    %p630 = por %p628, %p629
    %p632 = scmp.ne.s32.totalorder %s617, %s631
    %p633 = scmp.eq.s32.totalorder %s40, 0
    %p634 = por %p632, %p633
    %s635 = ssub.s32 %s34, %s41
    %p636 = scmp.eq.s32.totalorder %s635, 0
    %s638 = sadd.s32 %s637, 1
    %s639 = scalar_select %p636, %s637, %s638
    %p642 = pneg %p636
    %p643 = scmp.eq.s32.totalorder %s34, 1
    %p644 = por %p642, %p643
    %p645 = scmp.ne.s32.totalorder %s637, %s640
    %p646 = scmp.eq.s32.totalorder %s34, 0
    %p647 = por %p645, %p646
    %p648 = scmp.ne.s32.totalorder %s637, %s640
    %p649 = scmp.eq.s32.totalorder %s39, 1
    %p650 = por %p648, %p649
    %p651 = scmp.ne.s32.totalorder %s640, %s641
    %p652 = scmp.eq.s32.totalorder %s39, 0
    %p653 = por %p651, %p652
    %p654 = scmp.ne.s32.totalorder %s640, %s641
    %p655 = scmp.eq.s32.totalorder %s40, 1
    %p656 = por %p654, %p655
    %p658 = scmp.ne.s32.totalorder %s641, %s657
    %p659 = scmp.eq.s32.totalorder %s40, 0
    %p660 = por %p658, %p659
    %p661 = scmp.le.s32.totalorder 1, %s34
    %p662 = scmp.lt.s32.totalorder %s34, 3
    %p663 = pnand %p661, %p662
    %p664 = pneg %p663
    // Predicated region
    $region9: #{block_forward_pallas.1} parent=5 // pred_check
      _
    $region10: #{block_forward_pallas.1} parent=5 // pred_check_branch
      %666 = sbr.rel (%p663) target = $region12
    $region11: #{block_forward_pallas.1} parent=5 // pred_region
      %s667 = ssub.s32 %s34, 1
      // Predicated region
      $region13: #{block_forward_pallas.1} parent=11 // pred_check
        %p668 = pneg %p81
      $region14: #{block_forward_pallas.1} parent=11 // pred_check_branch
        %670 = sbr.rel (%p668) target = $region16
      $region15: #{block_forward_pallas.1} parent=11 // pred_region
        _
      $region16: #{block_forward_pallas.1} parent=11 // pred_fallthru
        _
      // Predicated region
      $region17: #{block_forward_pallas.1} parent=11 // pred_check
        %p671 = pneg %p102
      $region18: #{block_forward_pallas.1} parent=11 // pred_check_branch
        %673 = sbr.rel (%p671) target = $region20
      $region19: #{block_forward_pallas.1} parent=11 // pred_region
        _
      $region20: #{block_forward_pallas.1} parent=11 // pred_fallthru
        _
      // Predicated region
      $region21: #{block_forward_pallas.1} parent=11 // pred_check
        %p674 = pneg %p123
      $region22: #{block_forward_pallas.1} parent=11 // pred_check_branch
        %676 = sbr.rel (%p674) target = $region24
      $region23: #{block_forward_pallas.1} parent=11 // pred_region
        _
      $region24: #{block_forward_pallas.1} parent=11 // pred_fallthru
        _
      // Predicated region
      $region25: #{block_forward_pallas.1} parent=11 // pred_check
        %p677 = pneg %p144
      $region26: #{block_forward_pallas.1} parent=11 // pred_check_branch
        %679 = sbr.rel (%p677) target = $region28
      $region27: #{block_forward_pallas.1} parent=11 // pred_region
        _
      $region28: #{block_forward_pallas.1} parent=11 // pred_fallthru
        _
      // Predicated region
      $region29: #{block_forward_pallas.1} parent=11 // pred_check
        %p680 = pneg %p165
      $region30: #{block_forward_pallas.1} parent=11 // pred_check_branch
        %682 = sbr.rel (%p680) target = $region32
      $region31: #{block_forward_pallas.1} parent=11 // pred_region
        _
      $region32: #{block_forward_pallas.1} parent=11 // pred_fallthru
        _
      // Predicated region
      $region33: #{block_forward_pallas.1} parent=11 // pred_check
        %p683 = pneg %p186
      $region34: #{block_forward_pallas.1} parent=11 // pred_check_branch
        %685 = sbr.rel (%p683) target = $region36
      $region35: #{block_forward_pallas.1} parent=11 // pred_region
        _
      $region36: #{block_forward_pallas.1} parent=11 // pred_fallthru
        _
      // Predicated region
      $region37: #{block_forward_pallas.1} parent=11 // pred_check
        %p686 = pneg %p207
      $region38: #{block_forward_pallas.1} parent=11 // pred_check_branch
        %688 = sbr.rel (%p686) target = $region40
      $region39: #{block_forward_pallas.1} parent=11 // pred_region
        _
      $region40: #{block_forward_pallas.1} parent=11 // pred_fallthru
        _
      // Predicated region
      $region41: #{block_forward_pallas.1} parent=11 // pred_check
        %p689 = pneg %p228
      $region42: #{block_forward_pallas.1} parent=11 // pred_check_branch
        %691 = sbr.rel (%p689) target = $region44
      $region43: #{block_forward_pallas.1} parent=11 // pred_region
        _
      $region44: #{block_forward_pallas.1} parent=11 // pred_fallthru
        _
      // Predicated region
      $region45: #{block_forward_pallas.1} parent=11 // pred_check
        %p692 = pneg %p249
      $region46: #{block_forward_pallas.1} parent=11 // pred_check_branch
        %694 = sbr.rel (%p692) target = $region48
      $region47: #{block_forward_pallas.1} parent=11 // pred_region
        _
      $region48: #{block_forward_pallas.1} parent=11 // pred_fallthru
        _
      // Predicated region
      $region49: #{block_forward_pallas.1} parent=11 // pred_check
        %p695 = pneg %p270
      $region50: #{block_forward_pallas.1} parent=11 // pred_check_branch
        %697 = sbr.rel (%p695) target = $region52
      $region51: #{block_forward_pallas.1} parent=11 // pred_region
        _
      $region52: #{block_forward_pallas.1} parent=11 // pred_fallthru
        _
      // Predicated region
      $region53: #{block_forward_pallas.1} parent=11 // pred_check
        %p698 = pneg %p291
      $region54: #{block_forward_pallas.1} parent=11 // pred_check_branch
        %700 = sbr.rel (%p698) target = $region56
      $region55: #{block_forward_pallas.1} parent=11 // pred_region
        _
      $region56: #{block_forward_pallas.1} parent=11 // pred_fallthru
        _
      // Predicated region
      $region57: #{block_forward_pallas.1} parent=11 // pred_check
        %p701 = pneg %p312
      $region58: #{block_forward_pallas.1} parent=11 // pred_check_branch
        %703 = sbr.rel (%p701) target = $region60
      $region59: #{block_forward_pallas.1} parent=11 // pred_region
        _
      $region60: #{block_forward_pallas.1} parent=11 // pred_fallthru
        _
      // Predicated region
      $region61: #{block_forward_pallas.1} parent=11 // pred_check
        %p704 = pneg %p333
      $region62: #{block_forward_pallas.1} parent=11 // pred_check_branch
        %706 = sbr.rel (%p704) target = $region64
      $region63: #{block_forward_pallas.1} parent=11 // pred_region
        _
      $region64: #{block_forward_pallas.1} parent=11 // pred_fallthru
        _
      // Predicated region
      $region65: #{block_forward_pallas.1} parent=11 // pred_check
        %p707 = pneg %p354
      $region66: #{block_forward_pallas.1} parent=11 // pred_check_branch
        %709 = sbr.rel (%p707) target = $region68
      $region67: #{block_forward_pallas.1} parent=11 // pred_region
        _
      $region68: #{block_forward_pallas.1} parent=11 // pred_fallthru
        _
      // Predicated region
      $region69: #{block_forward_pallas.1} parent=11 // pred_check
        %p710 = pneg %p375
      $region70: #{block_forward_pallas.1} parent=11 // pred_check_branch
        %712 = sbr.rel (%p710) target = $region72
      $region71: #{block_forward_pallas.1} parent=11 // pred_region
        _
      $region72: #{block_forward_pallas.1} parent=11 // pred_fallthru
        _
      // Predicated region
      $region73: #{block_forward_pallas.1} parent=11 // pred_check
        %p713 = pneg %p396
      $region74: #{block_forward_pallas.1} parent=11 // pred_check_branch
        %715 = sbr.rel (%p713) target = $region76
      $region75: #{block_forward_pallas.1} parent=11 // pred_region
        _
      $region76: #{block_forward_pallas.1} parent=11 // pred_fallthru
        _
      // Predicated region
      $region77: #{block_forward_pallas.1} parent=11 // pred_check
        %p716 = pneg %p417
      $region78: #{block_forward_pallas.1} parent=11 // pred_check_branch
        %718 = sbr.rel (%p716) target = $region80
      $region79: #{block_forward_pallas.1} parent=11 // pred_region
        _
      $region80: #{block_forward_pallas.1} parent=11 // pred_fallthru
        _
      // Predicated region
      $region81: #{block_forward_pallas.1} parent=11 // pred_check
        %p719 = pneg %p438
      $region82: #{block_forward_pallas.1} parent=11 // pred_check_branch
        %721 = sbr.rel (%p719) target = $region84
      $region83: #{block_forward_pallas.1} parent=11 // pred_region
        _
      $region84: #{block_forward_pallas.1} parent=11 // pred_fallthru
        _
      // Predicated region
      $region85: #{block_forward_pallas.1} parent=11 // pred_check
        %p722 = pneg %p459
      $region86: #{block_forward_pallas.1} parent=11 // pred_check_branch
        %724 = sbr.rel (%p722) target = $region88
      $region87: #{block_forward_pallas.1} parent=11 // pred_region
        _
      $region88: #{block_forward_pallas.1} parent=11 // pred_fallthru
        _
      // Predicated region
      $region89: #{block_forward_pallas.1} parent=11 // pred_check
        %p725 = pneg %p480
      $region90: #{block_forward_pallas.1} parent=11 // pred_check_branch
        %727 = sbr.rel (%p725) target = $region92
      $region91: #{block_forward_pallas.1} parent=11 // pred_region
        _
      $region92: #{block_forward_pallas.1} parent=11 // pred_fallthru
        _
      // Predicated region
      $region93: #{block_forward_pallas.1} parent=11 // pred_check
        %p728 = pneg %p501
      $region94: #{block_forward_pallas.1} parent=11 // pred_check_branch
        %730 = sbr.rel (%p728) target = $region96
      $region95: #{block_forward_pallas.1} parent=11 // pred_region
        _
      $region96: #{block_forward_pallas.1} parent=11 // pred_fallthru
        _
      // Predicated region
      $region97: #{block_forward_pallas.1} parent=11 // pred_check
        %p731 = pneg %p522
      $region98: #{block_forward_pallas.1} parent=11 // pred_check_branch
        %733 = sbr.rel (%p731) target = $region100
      $region99: #{block_forward_pallas.1} parent=11 // pred_region
        _
      $region100: #{block_forward_pallas.1} parent=11 // pred_fallthru
        _
      // Predicated region
      $region101: #{block_forward_pallas.1} parent=11 // pred_check
        %p734 = pneg %p543
      $region102: #{block_forward_pallas.1} parent=11 // pred_check_branch
        %736 = sbr.rel (%p734) target = $region104
      $region103: #{block_forward_pallas.1} parent=11 // pred_region
        _
      $region104: #{block_forward_pallas.1} parent=11 // pred_fallthru
        _
      // Predicated region
      $region105: #{block_forward_pallas.1} parent=11 // pred_check
        %p737 = pneg %p564
      $region106: #{block_forward_pallas.1} parent=11 // pred_check_branch
        %739 = sbr.rel (%p737) target = $region108
      $region107: #{block_forward_pallas.1} parent=11 // pred_region
        _
      $region108: #{block_forward_pallas.1} parent=11 // pred_fallthru
        _
      // Predicated region
      $region109: #{block_forward_pallas.1} parent=11 // pred_check
        %p740 = pneg %p585
      $region110: #{block_forward_pallas.1} parent=11 // pred_check_branch
        %742 = sbr.rel (%p740) target = $region112
      $region111: #{block_forward_pallas.1} parent=11 // pred_region
        _
      $region112: #{block_forward_pallas.1} parent=11 // pred_fallthru
        _
      // Predicated region
      $region113: #{block_forward_pallas.1} parent=11 // pred_check
        %p743 = pneg %p606
      $region114: #{block_forward_pallas.1} parent=11 // pred_check_branch
        %745 = sbr.rel (%p743) target = $region116
      $region115: #{block_forward_pallas.1} parent=11 // pred_region
        _
      $region116: #{block_forward_pallas.1} parent=11 // pred_fallthru
        _
      // Predicated region
      $region117: #{block_forward_pallas.1} parent=11 // pred_check
        %p746 = pneg %p627
      $region118: #{block_forward_pallas.1} parent=11 // pred_check_branch
        %748 = sbr.rel (%p746) target = $region120
      $region119: #{block_forward_pallas.1} parent=11 // pred_region
        _
      $region120: #{block_forward_pallas.1} parent=11 // pred_fallthru
        _
    $region12: #{block_forward_pallas.1} parent=5 // pred_fallthru
      _
    %p749 = scmp.lt.s32.totalorder %s34, 2
    // Predicated region
    $region121: #{block_forward_pallas.1} parent=5 // pred_check
      %p750 = pneg %p749
    $region122: #{block_forward_pallas.1} parent=5 // pred_check_branch
      %752 = sbr.rel (%p750) target = $region124
    $region123: #{block_forward_pallas.1} parent=5 // pred_region
      // Predicated region
      $region125: #{block_forward_pallas.1} parent=123 // pred_check
        %p753 = pneg %p54
      $region126: #{block_forward_pallas.1} parent=123 // pred_check_branch
        %755 = sbr.rel (%p753) target = $region128
      $region127: #{block_forward_pallas.1} parent=123 // pred_region
        %p756 = scmp.lt.s32.totalorder %s34, 1
        %s757 = scalar_select %p756, %s34, 1
        %s758 = smul.addr %s757, 8
        %s759 = smul.addr %s758, 8
        %s760 = scalar_lea.vmem %s0, %s759
      $region128: #{block_forward_pallas.1} parent=123 // pred_fallthru
        _
    $region124: #{block_forward_pallas.1} parent=5 // pred_fallthru
      _
    %p761 = scmp.le.s32.totalorder 1, %s34
    %p762 = scmp.lt.s32.totalorder %s34, 3
    %p763 = pnand %p761, %p762
    %p764 = pneg %p763
    // Predicated region
    $region129: #{block_forward_pallas.1} parent=5 // pred_check
      _
    $region130: #{block_forward_pallas.1} parent=5 // pred_check_branch
      %766 = sbr.rel (%p763) target = $region132
    $region131: #{block_forward_pallas.1} parent=5 // pred_region
      %s767 = ssub.s32 %s34, 1
      %p768 = scmp.lt.s32.totalorder %s39, 1
      %s769 = scalar_select %p768, %s39, 1
      %s770 = smul.addr %s769, 8
      %s771 = smul.addr %s770, 8
      %s772 = scalar_lea.vmem %s0, %s771
      %p773 = pneg %p60
      %p774 = pneg %p57
      %p775 = pneg %p81
      %p776 = pneg %p78
      %p777 = pneg %p102
      %p778 = pneg %p99
      %p779 = pneg %p123
      %p780 = pneg %p120
      %p781 = pneg %p144
      %p782 = pneg %p141
      %p783 = pneg %p165
      %p784 = pneg %p162
      %p785 = pneg %p186
      %p786 = pneg %p183
      %p787 = pneg %p207
      %p788 = pneg %p204
      %p789 = pneg %p228
      %p790 = pneg %p225
      %p791 = pneg %p249
      %p792 = pneg %p246
      %p793 = pneg %p270
      %p794 = pneg %p267
      %p795 = pneg %p291
      %p796 = pneg %p288
      %p797 = pneg %p312
      %p798 = pneg %p309
      %p799 = pneg %p333
      %p800 = pneg %p330
      %p801 = pneg %p354
      %p802 = pneg %p351
      %p803 = pneg %p375
      %p804 = pneg %p372
      %p805 = pneg %p396
      %p806 = pneg %p393
      %p807 = pneg %p417
      %p808 = pneg %p414
      %p809 = pneg %p438
      %p810 = pneg %p435
      %p811 = pneg %p459
      %p812 = pneg %p456
      %p813 = pneg %p480
      %p814 = pneg %p477
      %p815 = pneg %p501
      %p816 = pneg %p498
      %p817 = pneg %p522
      %p818 = pneg %p519
      %p819 = pneg %p543
      %p820 = pneg %p540
      %p821 = pneg %p564
      %p822 = pneg %p561
      %p823 = pneg %p585
      %p824 = pneg %p582
      %p825 = pneg %p606
      %p826 = pneg %p603
      %p827 = pneg %p627
      %p828 = pneg %p624
      %p829 = pneg %p653
      %p830 = pneg %p650
      %p831 = scmp.lt.s32.totalorder %s39, 1
      %s832 = scalar_select %p831, %s39, 1
      %s833 = smul.addr %s832, 8
      %s834 = smul.addr %s833, 8
      %s835 = scalar_lea.vmem %s28, %s834
      %p836 = scmp.lt.s32.totalorder %s39, 1
      %s837 = scalar_select %p836, %s39, 1
      %s838 = smul.addr %s837, 8
      %s839 = smul.addr %s838, 8
      %s840 = scalar_lea.vmem %s0, %s839
      %p841 = scmp.lt.s32.totalorder %s39, 1
      %s842 = scalar_select %p841, %s39, 1
      %s843 = smul.addr %s842, 8
      %s844 = smul.addr %s843, 8
      %s845 = scalar_lea.vmem %s28, %s844
      %v846 = vld [vmem:[%s5] sm:$0x3f]
      %v847 = vld [vmem:[%s840] sm:$0xff]
      %v848 = vld [vmem:[%s840 + $0x8] sm:$0xff]
      %v849 = vld [vmem:[%s840 + $0x10] sm:$0xff]
      %v850 = vld [vmem:[%s840 + $0x18] sm:$0xff]
      %v851 = vld [vmem:[%s840 + $0x20] sm:$0xff]
      %v852 = vld [vmem:[%s840 + $0x28] sm:$0xff]
      %v853 = vld [vmem:[%s840 + $0x30] sm:$0xff]
      %v854 = vld [vmem:[%s840 + $0x38] sm:$0xff]
      %vm855 = vcmask 261120
      %v856 = vsel %vm855, %v847, 0.0
      %857 = vadd.xlane.f32.xlu0 %v856
      %v858 = vpop.xlane.xlu0 %857
      %v859 = vsel %vm855, %v848, 0.0
      %860 = vadd.xlane.f32.xlu0 %v859
      %v861 = vpop.xlane.xlu0 %860
      %v862 = vsel %vm855, %v849, 0.0
      %863 = vadd.xlane.f32.xlu0 %v862
      %v864 = vpop.xlane.xlu0 %863
      %v865 = vsel %vm855, %v850, 0.0
      %866 = vadd.xlane.f32.xlu0 %v865
      %v867 = vpop.xlane.xlu0 %866
      %v868 = vsel %vm855, %v851, 0.0
      %869 = vadd.xlane.f32.xlu0 %v868
      %v870 = vpop.xlane.xlu0 %869
      %v871 = vsel %vm855, %v852, 0.0
      %872 = vadd.xlane.f32.xlu0 %v871
      %v873 = vpop.xlane.xlu0 %872
      %v874 = vsel %vm855, %v853, 0.0
      %875 = vadd.xlane.f32.xlu0 %v874
      %v876 = vpop.xlane.xlu0 %875
      %v877 = vsel %vm855, %v854, 0.0
      %878 = vadd.xlane.f32.xlu0 %v877
      %v879 = vpop.xlane.xlu0 %878
      %v880 = vrcp.pop 32.0
      %v881 = vmul.f32 %v858, %v880
      %v882 = vmul.f32 %v861, %v880
      %v883 = vmul.f32 %v864, %v880
      %v884 = vmul.f32 %v867, %v880
      %v885 = vmul.f32 %v870, %v880
      %v886 = vmul.f32 %v873, %v880
      %v887 = vmul.f32 %v876, %v880
      %v888 = vmul.f32 %v879, %v880
      %v889 = vsub.f32 %v847, %v881
      %v890 = vsub.f32 %v848, %v882
      %v891 = vsub.f32 %v849, %v883
      %v892 = vsub.f32 %v850, %v884
      %v893 = vsub.f32 %v851, %v885
      %v894 = vsub.f32 %v852, %v886
      %v895 = vsub.f32 %v853, %v887
      %v896 = vsub.f32 %v854, %v888
      %v897 = vmul.f32 %v889, %v889
      %v898 = vmul.f32 %v890, %v890
      %v899 = vmul.f32 %v891, %v891
      %v900 = vmul.f32 %v892, %v892
      %v901 = vmul.f32 %v893, %v893
      %v902 = vmul.f32 %v894, %v894
      %v903 = vmul.f32 %v895, %v895
      %v904 = vmul.f32 %v896, %v896
      %v905 = vsel %vm855, %v897, 0.0
      %906 = vadd.xlane.f32.xlu0 %v905
      %v907 = vpop.xlane.xlu0 %906
      %v908 = vsel %vm855, %v898, 0.0
      %909 = vadd.xlane.f32.xlu0 %v908
      %v910 = vpop.xlane.xlu0 %909
      %v911 = vsel %vm855, %v899, 0.0
      %912 = vadd.xlane.f32.xlu0 %v911
      %v913 = vpop.xlane.xlu0 %912
      %v914 = vsel %vm855, %v900, 0.0
      %915 = vadd.xlane.f32.xlu0 %v914
      %v916 = vpop.xlane.xlu0 %915
      %v917 = vsel %vm855, %v901, 0.0
      %918 = vadd.xlane.f32.xlu0 %v917
      %v919 = vpop.xlane.xlu0 %918
      %v920 = vsel %vm855, %v902, 0.0
      %921 = vadd.xlane.f32.xlu0 %v920
      %v922 = vpop.xlane.xlu0 %921
      %v923 = vsel %vm855, %v903, 0.0
      %924 = vadd.xlane.f32.xlu0 %v923
      %v925 = vpop.xlane.xlu0 %924
      %v926 = vsel %vm855, %v904, 0.0
      %927 = vadd.xlane.f32.xlu0 %v926
      %v928 = vpop.xlane.xlu0 %927
      %v929 = vmul.f32 %v907, %v880
      %v930 = vmul.f32 %v910, %v880
      %v931 = vmul.f32 %v913, %v880
      %v932 = vmul.f32 %v916, %v880
      %v933 = vmul.f32 %v919, %v880
      %v934 = vmul.f32 %v922, %v880
      %v935 = vmul.f32 %v925, %v880
      %v936 = vmul.f32 %v928, %v880
      %v937 = vadd.f32 %v929, 1e-05
      %v938 = vadd.f32 %v930, 1e-05
      %v939 = vadd.f32 %v931, 1e-05
      %v940 = vadd.f32 %v932, 1e-05
      %v941 = vadd.f32 %v933, 1e-05
      %v942 = vadd.f32 %v934, 1e-05
      %v943 = vadd.f32 %v935, 1e-05
      %v944 = vadd.f32 %v936, 1e-05
      %v945 = vrsqrt.pop %v937
      %v946 = vrsqrt.pop %v938
      %v947 = vrsqrt.pop %v939
      %v948 = vrsqrt.pop %v940
      %v949 = vrsqrt.pop %v941
      %v950 = vrsqrt.pop %v942
      %v951 = vrsqrt.pop %v943
      %v952 = vrsqrt.pop %v944
      %v953 = vmul.f32 %v889, %v945
      %v954 = vmul.f32 %v890, %v946
      %v955 = vmul.f32 %v891, %v947
      %v956 = vmul.f32 %v892, %v948
      %v957 = vmul.f32 %v893, %v949
      %v958 = vmul.f32 %v894, %v950
      %v959 = vmul.f32 %v895, %v951
      %v960 = vmul.f32 %v896, %v952
      %v961 = vlaneseq
      %v962 = vshrl.u32 %v961, 7
      %v963 = vsub.s32 0, %v962
      %v964 = vrot.slane %v846, %v963
      %v965 = vmul.f32 %v953, %v964
      %v966 = vmul.f32 %v954, %v964
      %v967 = vmul.f32 %v955, %v964
      %v968 = vmul.f32 %v956, %v964
      %v969 = vmul.f32 %v957, %v964
      %v970 = vmul.f32 %v958, %v964
      %v971 = vmul.f32 %v959, %v964
      %v972 = vmul.f32 %v960, %v964
      %v973 = vlaneseq
      %v974 = vshrl.u32 %v973, 7
      %v975 = vsub.s32 1, %v974
      %v976 = vrot.slane %v846, %v975
      %v977 = vadd.f32 %v965, %v976
      %v978 = vadd.f32 %v966, %v976
      %v979 = vadd.f32 %v967, %v976
      %v980 = vadd.f32 %v968, %v976
      %v981 = vadd.f32 %v969, %v976
      %v982 = vadd.f32 %v970, %v976
      %v983 = vadd.f32 %v971, %v976
      %v984 = vadd.f32 %v972, %v976
      %v985 = vld [vmem:[%s1] sm:$0xff]
      %v986 = vld [vmem:[%s1 + $0x8] sm:$0xff]
      %v987 = vld [vmem:[%s1 + $0x10] sm:$0xff]
      %v988 = vld [vmem:[%s1 + $0x18] sm:$0xff]
      %v989 = vld [vmem:[%s2] sm:$0x1]
      %v991 = vlaneseq
      %v992 = vshrl.u32 %v991, 7
      %v993 = vsub.s32 0, %v992
      %v994 = vrot.slane %v989, %v993
      %v997 = vsel %vm855, %v977, 0
      %v1000 = vsel %vm855, %v978, 0
      %v1003 = vsel %vm855, %v979, 0
      %v1006 = vsel %vm855, %v980, 0
      %v1009 = vsel %vm855, %v981, 0
      %v1012 = vsel %vm855, %v982, 0
      %v1015 = vsel %vm855, %v983, 0
      %v1018 = vsel %vm855, %v984, 0
      %1020 = vmatprep.subr.mxu0 0.0
      %1021 = vmatpush1.msra.mxu0 %v985
      %1022 = vmatprep.subr.mxu0 0.0
      %1023 = vmatpush1.msra.mxu0 %v986
      %1024 = vmatprep.subr.mxu0 0.0
      %1025 = vmatpush1.msra.mxu0 %v987
      %1026 = vmatprep.subr.mxu0 0.0
      %1027 = vmatpush1.msra.mxu0 %v988
      %1028 = vmatprep.subr.mxu0 0.0
      %1029 = vmatpush1.msra.mxu0 0.0
      %1030 = vmatprep.subr.mxu0 0.0
      %1031 = vmatpush1.msra.mxu0 0.0
      %1032 = vmatprep.subr.mxu0 0.0
      %1033 = vmatpush1.msra.mxu0 0.0
      %1034 = vmatprep.subr.mxu0 0.0
      %1035 = vmatpush1.msra.mxu0 0.0
      %1036 = vmatprep.subr.mxu0 0.0
      %1037 = vmatpush1.msra.mxu0 0.0
      %1038 = vmatprep.subr.mxu0 0.0
      %1039 = vmatpush1.msra.mxu0 0.0
      %1040 = vmatprep.subr.mxu0 0.0
      %1041 = vmatpush1.msra.mxu0 0.0
      %1042 = vmatprep.subr.mxu0 0.0
      %1043 = vmatpush1.msra.mxu0 0.0
      %1044 = vmatprep.subr.mxu0 0.0
      %1045 = vmatpush1.msra.mxu0 0.0
      %1046 = vmatprep.subr.mxu0 0.0
      %1047 = vmatpush1.msra.mxu0 0.0
      %1048 = vmatprep.subr.mxu0 0.0
      %1049 = vmatpush1.msra.mxu0 0.0
      %1050 = vmatprep.subr.mxu0 0.0
      %1051 = vmatpush1.msra.mxu0 0.0
      %1052 = vmatprep.subr.mxu0 0.0
      %1053 = vmatpush1.msra.mxu0 0.0
      %1054 = vmatprep.subr.mxu0 0.0
      %1055 = vmatpush1.msra.mxu0 0.0
      %1056 = vmatprep.subr.mxu0 0.0
      %1057 = vmatpush1.msra.mxu0 0.0
      %1058 = vmatprep.subr.mxu0 0.0
      %1059 = vmatpush1.msra.mxu0 0.0
      %1060 = vmatprep.subr.mxu0 0.0
      %1061 = vmatpush1.msra.mxu0 0.0
      %1062 = vmatprep.subr.mxu0 0.0
      %1063 = vmatpush1.msra.mxu0 0.0
      %1064 = vmatprep.subr.mxu0 0.0
      %1065 = vmatpush1.msra.mxu0 0.0
      %1066 = vmatprep.subr.mxu0 0.0
      %1067 = vmatpush1.msra.mxu0 0.0
      %1068 = vmatprep.subr.mxu0 0.0
      %1069 = vmatpush1.msra.mxu0 0.0
      %1070 = vmatprep.subr.mxu0 0.0
      %1071 = vmatpush1.msra.mxu0 0.0
      %1072 = vmatprep.subr.mxu0 0.0
      %1073 = vmatpush1.msra.mxu0 0.0
      %1074 = vmatprep.subr.mxu0 0.0
      %1075 = vmatpush1.msra.mxu0 0.0
      %1076 = vmatprep.subr.mxu0 0.0
      %1077 = vmatpush1.msra.mxu0 0.0
      %1078 = vmatprep.subr.mxu0 0.0
      %1079 = vmatpush1.msra.mxu0 0.0
      %1080 = vmatprep.subr.mxu0 0.0
      %1081 = vmatpush1.msra.mxu0 0.0
      %1082 = vmatprep.subr.mxu0 0.0
      %1083 = vmatpush1.msra.mxu0 0.0
      %1084 = vmatprep.mubr.f32.mxu0 0.0
      %1085 = vmatmul.mubr.f32.gmra.mrb[0].mxu0 %v997
      %v1086 = vpop.f32.mrb[0].mxu0
      %v1087 = vadd.f32 %v994, %v1086
      %v1088 = vpop.f32.mrb[0].mxu0
      %1089 = vmatprep.mubr.f32.mxu0 0.0
      %1090 = vmatmul.mubr.f32.gmra.mrb[0].mxu0 %v1000
      %v1091 = vpop.f32.mrb[0].mxu0
      %v1092 = vadd.f32 %v994, %v1091
      %v1093 = vpop.f32.mrb[0].mxu0
      %1094 = vmatprep.mubr.f32.mxu0 0.0
      %1095 = vmatmul.mubr.f32.gmra.mrb[0].mxu0 %v1003
      %v1096 = vpop.f32.mrb[0].mxu0
      %v1097 = vadd.f32 %v994, %v1096
      %v1098 = vpop.f32.mrb[0].mxu0
      %1099 = vmatprep.mubr.f32.mxu0 0.0
      %1100 = vmatmul.mubr.f32.gmra.mrb[0].mxu0 %v1006
      %v1101 = vpop.f32.mrb[0].mxu0
      %v1102 = vadd.f32 %v994, %v1101
      %v1103 = vpop.f32.mrb[0].mxu0
      %1104 = vmatprep.mubr.f32.mxu0 0.0
      %1105 = vmatmul.mubr.f32.gmra.mrb[0].mxu0 %v1009
      %v1106 = vpop.f32.mrb[0].mxu0
      %v1107 = vadd.f32 %v994, %v1106
      %v1108 = vpop.f32.mrb[0].mxu0
      %1109 = vmatprep.mubr.f32.mxu0 0.0
      %1110 = vmatmul.mubr.f32.gmra.mrb[0].mxu0 %v1012
      %v1111 = vpop.f32.mrb[0].mxu0
      %v1112 = vadd.f32 %v994, %v1111
      %v1113 = vpop.f32.mrb[0].mxu0
      %1114 = vmatprep.mubr.f32.mxu0 0.0
      %1115 = vmatmul.mubr.f32.gmra.mrb[0].mxu0 %v1015
      %v1116 = vpop.f32.mrb[0].mxu0
      %v1117 = vadd.f32 %v994, %v1116
      %v1118 = vpop.f32.mrb[0].mxu0
      %1119 = vmatprep.mubr.f32.mxu0 0.0
      %1120 = vmatmul.mubr.f32.gmra.mrb[0].mxu0 %v1018
      %v1121 = vpop.f32.mrb[0].mxu0
      %v1122 = vadd.f32 %v994, %v1121
      %v1123 = vpop.f32.mrb[0].mxu0
      %1124 = vdwg.mxu0
      %v1125 = vmul.f32 %v1087, %v1087
      %v1126 = vmul.f32 %v1092, %v1092
      %v1127 = vmul.f32 %v1097, %v1097
      %v1128 = vmul.f32 %v1102, %v1102
      %v1129 = vmul.f32 %v1107, %v1107
      %v1130 = vmul.f32 %v1112, %v1112
      %v1131 = vmul.f32 %v1117, %v1117
      %v1132 = vmul.f32 %v1122, %v1122
      %v1133 = vld [vmem:[%s25] sm:$0xff]
      %v1134 = vld [vmem:[%s25 + $0x8] sm:$0xff]
      %v1135 = vld [vmem:[%s25 + $0x10] sm:$0xff]
      %v1136 = vld [vmem:[%s25 + $0x18] sm:$0xff]
      %v1137 = vld [vmem:[%s25 + $0x20] sm:$0xff]
      %v1138 = vld [vmem:[%s25 + $0x28] sm:$0xff]
      %v1139 = vld [vmem:[%s25 + $0x30] sm:$0xff]
      %v1140 = vld [vmem:[%s25 + $0x38] sm:$0xff]
      %vm1141 = vcmask 523264
      %v1143 = vsel %vm1141, %v1125, 0
      %v1146 = vsel %vm1141, %v1126, 0
      %v1149 = vsel %vm1141, %v1127, 0
      %v1152 = vsel %vm1141, %v1128, 0
      %v1155 = vsel %vm1141, %v1129, 0
      %v1158 = vsel %vm1141, %v1130, 0
      %v1161 = vsel %vm1141, %v1131, 0
      %v1164 = vsel %vm1141, %v1132, 0
      %1166 = vmatprep.subr.mxu0 0.0
      %1167 = vmatpush1.msra.mxu0 %v1133
      %1168 = vmatprep.subr.mxu0 0.0
      %1169 = vmatpush1.msra.mxu0 %v1134
      %1170 = vmatprep.subr.mxu0 0.0
      %1171 = vmatpush1.msra.mxu0 %v1135
      %1172 = vmatprep.subr.mxu0 0.0
      %1173 = vmatpush1.msra.mxu0 %v1136
      %1174 = vmatprep.subr.mxu0 0.0
      %1175 = vmatpush1.msra.mxu0 %v1137
      %1176 = vmatprep.subr.mxu0 0.0
      %1177 = vmatpush1.msra.mxu0 %v1138
      %1178 = vmatprep.subr.mxu0 0.0
      %1179 = vmatpush1.msra.mxu0 %v1139
      %1180 = vmatprep.subr.mxu0 0.0
      %1181 = vmatpush1.msra.mxu0 %v1140
      %1182 = vmatprep.subr.mxu0 0.0
      %1183 = vmatpush1.msra.mxu0 0.0
      %1184 = vmatprep.subr.mxu0 0.0
      %1185 = vmatpush1.msra.mxu0 0.0
      %1186 = vmatprep.subr.mxu0 0.0
      %1187 = vmatpush1.msra.mxu0 0.0
      %1188 = vmatprep.subr.mxu0 0.0
      %1189 = vmatpush1.msra.mxu0 0.0
      %1190 = vmatprep.subr.mxu0 0.0
      %1191 = vmatpush1.msra.mxu0 0.0
      %1192 = vmatprep.subr.mxu0 0.0
      %1193 = vmatpush1.msra.mxu0 0.0
      %1194 = vmatprep.subr.mxu0 0.0
      %1195 = vmatpush1.msra.mxu0 0.0
      %1196 = vmatprep.subr.mxu0 0.0
      %1197 = vmatpush1.msra.mxu0 0.0
      %1198 = vmatprep.subr.mxu0 0.0
      %1199 = vmatpush1.msra.mxu0 0.0
      %1200 = vmatprep.subr.mxu0 0.0
      %1201 = vmatpush1.msra.mxu0 0.0
      %1202 = vmatprep.subr.mxu0 0.0
      %1203 = vmatpush1.msra.mxu0 0.0
      %1204 = vmatprep.subr.mxu0 0.0
      %1205 = vmatpush1.msra.mxu0 0.0
      %1206 = vmatprep.subr.mxu0 0.0
      %1207 = vmatpush1.msra.mxu0 0.0
      %1208 = vmatprep.subr.mxu0 0.0
      %1209 = vmatpush1.msra.mxu0 0.0
      %1210 = vmatprep.subr.mxu0 0.0
      %1211 = vmatpush1.msra.mxu0 0.0
      %1212 = vmatprep.subr.mxu0 0.0
      %1213 = vmatpush1.msra.mxu0 0.0
      %1214 = vmatprep.subr.mxu0 0.0
      %1215 = vmatpush1.msra.mxu0 0.0
      %1216 = vmatprep.subr.mxu0 0.0
      %1217 = vmatpush1.msra.mxu0 0.0
      %1218 = vmatprep.subr.mxu0 0.0
      %1219 = vmatpush1.msra.mxu0 0.0
      %1220 = vmatprep.subr.mxu0 0.0
      %1221 = vmatpush1.msra.mxu0 0.0
      %1222 = vmatprep.subr.mxu0 0.0
      %1223 = vmatpush1.msra.mxu0 0.0
      %1224 = vmatprep.subr.mxu0 0.0
      %1225 = vmatpush1.msra.mxu0 0.0
      %1226 = vmatprep.subr.mxu0 0.0
      %1227 = vmatpush1.msra.mxu0 0.0
      %1228 = vmatprep.subr.mxu0 0.0
      %1229 = vmatpush1.msra.mxu0 0.0
      %1230 = vmatprep.mubr.f32.mxu0 0.0
      %1231 = vmatmul.mubr.f32.gmra.mrb[0].mxu0 %v1143
      %v1232 = vpop.f32.mrb[0].mxu0
      %v1233 = vadd.f32 0.0, %v1232
      %v1234 = vpop.f32.mrb[0].mxu0
      %1235 = vmatprep.mubr.f32.mxu0 0.0
      %1236 = vmatmul.mubr.f32.gmra.mrb[0].mxu0 %v1146
      %v1237 = vpop.f32.mrb[0].mxu0
      %v1238 = vadd.f32 0.0, %v1237
      %v1239 = vpop.f32.mrb[0].mxu0
      %1240 = vmatprep.mubr.f32.mxu0 0.0
      %1241 = vmatmul.mubr.f32.gmra.mrb[0].mxu0 %v1149
      %v1242 = vpop.f32.mrb[0].mxu0
      %v1243 = vadd.f32 0.0, %v1242
      %v1244 = vpop.f32.mrb[0].mxu0
      %1245 = vmatprep.mubr.f32.mxu0 0.0
      %1246 = vmatmul.mubr.f32.gmra.mrb[0].mxu0 %v1152
      %v1247 = vpop.f32.mrb[0].mxu0
      %v1248 = vadd.f32 0.0, %v1247
      %v1249 = vpop.f32.mrb[0].mxu0
      %1250 = vmatprep.mubr.f32.mxu0 0.0
      %1251 = vmatmul.mubr.f32.gmra.mrb[0].mxu0 %v1155
      %v1252 = vpop.f32.mrb[0].mxu0
      %v1253 = vadd.f32 0.0, %v1252
      %v1254 = vpop.f32.mrb[0].mxu0
      %1255 = vmatprep.mubr.f32.mxu0 0.0
      %1256 = vmatmul.mubr.f32.gmra.mrb[0].mxu0 %v1158
      %v1257 = vpop.f32.mrb[0].mxu0
      %v1258 = vadd.f32 0.0, %v1257
      %v1259 = vpop.f32.mrb[0].mxu0
      %1260 = vmatprep.mubr.f32.mxu0 0.0
      %1261 = vmatmul.mubr.f32.gmra.mrb[0].mxu0 %v1161
      %v1262 = vpop.f32.mrb[0].mxu0
      %v1263 = vadd.f32 0.0, %v1262
      %v1264 = vpop.f32.mrb[0].mxu0
      %1265 = vmatprep.mubr.f32.mxu0 0.0
      %1266 = vmatmul.mubr.f32.gmra.mrb[0].mxu0 %v1164
      %v1267 = vpop.f32.mrb[0].mxu0
      %v1268 = vadd.f32 0.0, %v1267
      %v1269 = vpop.f32.mrb[0].mxu0
      %1270 = vdwg.mxu0
      %v1271 = vmax.f32 %v1233, 1e-24
      %v1272 = vmax.f32 %v1238, 1e-24
      %v1273 = vmax.f32 %v1243, 1e-24
      %v1274 = vmax.f32 %v1248, 1e-24
      %v1275 = vmax.f32 %v1253, 1e-24
      %v1276 = vmax.f32 %v1258, 1e-24
      %v1277 = vmax.f32 %v1263, 1e-24
      %v1278 = vmax.f32 %v1268, 1e-24
      %v1279 = vrsqrt.pop %v1271
      %v1280 = vrsqrt.pop %v1272
      %v1281 = vrsqrt.pop %v1273
      %v1282 = vrsqrt.pop %v1274
      %v1283 = vrsqrt.pop %v1275
      %v1284 = vrsqrt.pop %v1276
      %v1285 = vrsqrt.pop %v1277
      %v1286 = vrsqrt.pop %v1278
      %v1287 = vmul.f32 %v1087, %v1279
      %v1288 = vmul.f32 %v1092, %v1280
      %v1289 = vmul.f32 %v1097, %v1281
      %v1290 = vmul.f32 %v1102, %v1282
      %v1291 = vmul.f32 %v1107, %v1283
      %v1292 = vmul.f32 %v1112, %v1284
      %v1293 = vmul.f32 %v1117, %v1285
      %v1294 = vmul.f32 %v1122, %v1286
      %v1295 = vld [vmem:[%s14] sm:$0xff]
      %v1296 = vld [vmem:[%s14 + $0x8] sm:$0xff]
      %v1297 = vld [vmem:[%s14 + $0x10] sm:$0xff]
      %v1298 = vld [vmem:[%s14 + $0x18] sm:$0xff]
      %v1299 = vld [vmem:[%s14 + $0x20] sm:$0xff]
      %v1300 = vld [vmem:[%s14 + $0x28] sm:$0xff]
      %v1301 = vld [vmem:[%s14 + $0x30] sm:$0xff]
      %v1302 = vld [vmem:[%s14 + $0x38] sm:$0xff]
      %v1303 = vmul.f32 %v1287, %v1295
      %v1304 = vmul.f32 %v1288, %v1296
      %v1305 = vmul.f32 %v1289, %v1297
      %v1306 = vmul.f32 %v1290, %v1298
      %v1307 = vmul.f32 %v1291, %v1299
      %v1308 = vmul.f32 %v1292, %v1300
      %v1309 = vmul.f32 %v1293, %v1301
      %v1310 = vmul.f32 %v1294, %v1302
      %v1311 = vld [vmem:[%s15] sm:$0xff]
      %v1312 = vld [vmem:[%s15 + $0x8] sm:$0xff]
      %v1313 = vld [vmem:[%s15 + $0x10] sm:$0xff]
      %v1314 = vld [vmem:[%s15 + $0x18] sm:$0xff]
      %v1315 = vld [vmem:[%s15 + $0x20] sm:$0xff]
      %v1316 = vld [vmem:[%s15 + $0x28] sm:$0xff]
      %v1317 = vld [vmem:[%s15 + $0x30] sm:$0xff]
      %v1318 = vld [vmem:[%s15 + $0x38] sm:$0xff]
      %v1319 = vadd.f32 %v1303, %v1311
      %v1320 = vadd.f32 %v1304, %v1312
      %v1321 = vadd.f32 %v1305, %v1313
      %v1322 = vadd.f32 %v1306, %v1314
      %v1323 = vadd.f32 %v1307, %v1315
      %v1324 = vadd.f32 %v1308, %v1316
      %v1325 = vadd.f32 %v1309, %v1317
      %v1326 = vadd.f32 %v1310, %v1318
      %1335 = vrot.lane.b32.xlu0 %v1287, 96
      %v1336 = vpop.permute.xlu0 %1335
      %1337 = vrot.lane.b32.xlu0 %v1288, 96
      %v1338 = vpop.permute.xlu0 %1337
      %1339 = vrot.lane.b32.xlu0 %v1289, 96
      %v1340 = vpop.permute.xlu0 %1339
      %1341 = vrot.lane.b32.xlu0 %v1290, 96
      %v1342 = vpop.permute.xlu0 %1341
      %1343 = vrot.lane.b32.xlu0 %v1291, 96
      %v1344 = vpop.permute.xlu0 %1343
      %1345 = vrot.lane.b32.xlu0 %v1292, 96
      %v1346 = vpop.permute.xlu0 %1345
      %1347 = vrot.lane.b32.xlu0 %v1293, 96
      %v1348 = vpop.permute.xlu0 %1347
      %1349 = vrot.lane.b32.xlu0 %v1294, 96
      %v1350 = vpop.permute.xlu0 %1349
      %1367 = vrot.lane.b32.xlu0 %v1087, 96
      %v1368 = vpop.permute.xlu0 %1367
      %1369 = vrot.lane.b32.xlu0 %v1092, 96
      %v1370 = vpop.permute.xlu0 %1369
      %1371 = vrot.lane.b32.xlu0 %v1097, 96
      %v1372 = vpop.permute.xlu0 %1371
      %1373 = vrot.lane.b32.xlu0 %v1102, 96
      %v1374 = vpop.permute.xlu0 %1373
      %1375 = vrot.lane.b32.xlu0 %v1107, 96
      %v1376 = vpop.permute.xlu0 %1375
      %1377 = vrot.lane.b32.xlu0 %v1112, 96
      %v1378 = vpop.permute.xlu0 %1377
      %1379 = vrot.lane.b32.xlu0 %v1117, 96
      %v1380 = vpop.permute.xlu0 %1379
      %1381 = vrot.lane.b32.xlu0 %v1122, 96
      %v1382 = vpop.permute.xlu0 %1381
      %v1391 = vsel %vm855, %v1336, %v1368
      %v1392 = vsel %vm855, %v1338, %v1370
      %v1393 = vsel %vm855, %v1340, %v1372
      %v1394 = vsel %vm855, %v1342, %v1374
      %v1395 = vsel %vm855, %v1344, %v1376
      %v1396 = vsel %vm855, %v1346, %v1378
      %v1397 = vsel %vm855, %v1348, %v1380
      %v1398 = vsel %vm855, %v1350, %v1382
      %v1399 = vld [vmem:[%s20] sm:$0xff]
      %v1400 = vld [vmem:[%s20 + $0x8] sm:$0xff]
      %v1401 = vld [vmem:[%s20 + $0x10] sm:$0xff]
      %v1402 = vld [vmem:[%s20 + $0x18] sm:$0xff]
      %v1403 = vld [vmem:[%s20 + $0x20] sm:$0xff]
      %v1404 = vld [vmem:[%s20 + $0x28] sm:$0xff]
      %v1405 = vld [vmem:[%s20 + $0x30] sm:$0xff]
      %v1406 = vld [vmem:[%s20 + $0x38] sm:$0xff]
      %v1407 = vld [vmem:[%s20 + $0x40] sm:$0xff]
      %v1408 = vld [vmem:[%s20 + $0x48] sm:$0xff]
      %v1409 = vld [vmem:[%s20 + $0x50] sm:$0xff]
      %v1410 = vld [vmem:[%s20 + $0x58] sm:$0xff]
      %v1411 = vld [vmem:[%s20 + $0x60] sm:$0xff]
      %v1412 = vld [vmem:[%s20 + $0x68] sm:$0xff]
      %v1413 = vld [vmem:[%s20 + $0x70] sm:$0xff]
      %v1414 = vld [vmem:[%s20 + $0x78] sm:$0xff]
      %v1415 = vld [vmem:[%s20 + $0x80] sm:$0xff]
      %v1416 = vld [vmem:[%s20 + $0x88] sm:$0xff]
      %v1417 = vld [vmem:[%s20 + $0x90] sm:$0xff]
      %v1418 = vld [vmem:[%s20 + $0x98] sm:$0xff]
      %v1419 = vld [vmem:[%s20 + $0xa0] sm:$0xff]
      %v1420 = vld [vmem:[%s20 + $0xa8] sm:$0xff]
      %v1421 = vld [vmem:[%s20 + $0xb0] sm:$0xff]
      %v1422 = vld [vmem:[%s20 + $0xb8] sm:$0xff]
      %v1424 = vsel %vm1141, %v1399, 0
      %v1427 = vsel %vm1141, %v1400, 0
      %v1430 = vsel %vm1141, %v1401, 0
      %v1433 = vsel %vm1141, %v1402, 0
      %v1436 = vsel %vm1141, %v1403, 0
      %v1439 = vsel %vm1141, %v1404, 0
      %v1442 = vsel %vm1141, %v1405, 0
      %v1445 = vsel %vm1141, %v1406, 0
      %v1448 = vsel %vm1141, %v1407, 0
      %v1451 = vsel %vm1141, %v1408, 0
      %v1454 = vsel %vm1141, %v1409, 0
      %v1457 = vsel %vm1141, %v1410, 0
      %v1460 = vsel %vm1141, %v1411, 0
      %v1463 = vsel %vm1141, %v1412, 0
      %v1466 = vsel %vm1141, %v1413, 0
      %v1469 = vsel %vm1141, %v1414, 0
      %v1472 = vsel %vm1141, %v1415, 0
      %v1475 = vsel %vm1141, %v1416, 0
      %v1478 = vsel %vm1141, %v1417, 0
      %v1481 = vsel %vm1141, %v1418, 0
      %v1484 = vsel %vm1141, %v1419, 0
      %v1487 = vsel %vm1141, %v1420, 0
      %v1490 = vsel %vm1141, %v1421, 0
      %v1493 = vsel %vm1141, %v1422, 0
      %1495 = vmatprep.subr.mxu0 0.0
      %1496 = vmatpush1.msra.mxu0 %v1391
      %1497 = vmatprep.subr.mxu0 0.0
      %1498 = vmatpush1.msra.mxu0 %v1392
      %1499 = vmatprep.subr.mxu0 0.0
      %1500 = vmatpush1.msra.mxu0 %v1393
      %1501 = vmatprep.subr.mxu0 0.0
      %1502 = vmatpush1.msra.mxu0 %v1394
      %1503 = vmatprep.subr.mxu0 0.0
      %1504 = vmatpush1.msra.mxu0 %v1395
      %1505 = vmatprep.subr.mxu0 0.0
      %1506 = vmatpush1.msra.mxu0 %v1396
      %1507 = vmatprep.subr.mxu0 0.0
      %1508 = vmatpush1.msra.mxu0 %v1397
      %1509 = vmatprep.subr.mxu0 0.0
      %1510 = vmatpush1.msra.mxu0 %v1398
      %1511 = vmatprep.subr.mxu0 0.0
      %1512 = vmatpush1.msra.mxu0 0.0
      %1513 = vmatprep.subr.mxu0 0.0
      %1514 = vmatpush1.msra.mxu0 0.0
      %1515 = vmatprep.subr.mxu0 0.0
      %1516 = vmatpush1.msra.mxu0 0.0
      %1517 = vmatprep.subr.mxu0 0.0
      %1518 = vmatpush1.msra.mxu0 0.0
      %1519 = vmatprep.subr.mxu0 0.0
      %1520 = vmatpush1.msra.mxu0 0.0
      %1521 = vmatprep.subr.mxu0 0.0
      %1522 = vmatpush1.msra.mxu0 0.0
      %1523 = vmatprep.subr.mxu0 0.0
      %1524 = vmatpush1.msra.mxu0 0.0
      %1525 = vmatprep.subr.mxu0 0.0
      %1526 = vmatpush1.msra.mxu0 0.0
      %1527 = vmatprep.subr.mxu0 0.0
      %1528 = vmatpush1.msra.mxu0 0.0
      %1529 = vmatprep.subr.mxu0 0.0
      %1530 = vmatpush1.msra.mxu0 0.0
      %1531 = vmatprep.subr.mxu0 0.0
      %1532 = vmatpush1.msra.mxu0 0.0
      %1533 = vmatprep.subr.mxu0 0.0
      %1534 = vmatpush1.msra.mxu0 0.0
      %1535 = vmatprep.subr.mxu0 0.0
      %1536 = vmatpush1.msra.mxu0 0.0
      %1537 = vmatprep.subr.mxu0 0.0
      %1538 = vmatpush1.msra.mxu0 0.0
      %1539 = vmatprep.subr.mxu0 0.0
      %1540 = vmatpush1.msra.mxu0 0.0
      %1541 = vmatprep.subr.mxu0 0.0
      %1542 = vmatpush1.msra.mxu0 0.0
      %1543 = vmatprep.subr.mxu0 0.0
      %1544 = vmatpush1.msra.mxu0 0.0
      %1545 = vmatprep.subr.mxu0 0.0
      %1546 = vmatpush1.msra.mxu0 0.0
      %1547 = vmatprep.subr.mxu0 0.0
      %1548 = vmatpush1.msra.mxu0 0.0
      %1549 = vmatprep.subr.mxu0 0.0
      %1550 = vmatpush1.msra.mxu0 0.0
      %1551 = vmatprep.subr.mxu0 0.0
      %1552 = vmatpush1.msra.mxu0 0.0
      %1553 = vmatprep.subr.mxu0 0.0
      %1554 = vmatpush1.msra.mxu0 0.0
      %1555 = vmatprep.subr.mxu0 0.0
      %1556 = vmatpush1.msra.mxu0 0.0
      %1557 = vmatprep.subr.mxu0 0.0
      %1558 = vmatpush1.msra.mxu0 0.0
      %1559 = vmatprep.mubr.f32.mxu0 0.0
      %1560 = vmatmul.mubr.f32.gmra.mrb[0].mxu0 %v1424
      %v1561 = vpop.f32.mrb[0].mxu0
      %v1562 = vadd.f32 0.0, %v1561
      %v1563 = vpop.f32.mrb[0].mxu0
      %1564 = vmatprep.mubr.f32.mxu0 0.0
      %1565 = vmatmul.mubr.f32.gmra.mrb[0].mxu0 %v1427
      %v1566 = vpop.f32.mrb[0].mxu0
      %v1567 = vadd.f32 0.0, %v1566
      %v1568 = vpop.f32.mrb[0].mxu0
      %1569 = vmatprep.mubr.f32.mxu0 0.0
      %1570 = vmatmul.mubr.f32.gmra.mrb[0].mxu0 %v1430
      %v1571 = vpop.f32.mrb[0].mxu0
      %v1572 = vadd.f32 0.0, %v1571
      %v1573 = vpop.f32.mrb[0].mxu0
      %1574 = vmatprep.mubr.f32.mxu0 0.0
      %1575 = vmatmul.mubr.f32.gmra.mrb[0].mxu0 %v1433
      %v1576 = vpop.f32.mrb[0].mxu0
      %v1577 = vadd.f32 0.0, %v1576
      %v1578 = vpop.f32.mrb[0].mxu0
      %1579 = vmatprep.mubr.f32.mxu0 0.0
      %1580 = vmatmul.mubr.f32.gmra.mrb[0].mxu0 %v1436
      %v1581 = vpop.f32.mrb[0].mxu0
      %v1582 = vadd.f32 0.0, %v1581
      %v1583 = vpop.f32.mrb[0].mxu0
      %1584 = vmatprep.mubr.f32.mxu0 0.0
      %1585 = vmatmul.mubr.f32.gmra.mrb[0].mxu0 %v1439
      %v1586 = vpop.f32.mrb[0].mxu0
      %v1587 = vadd.f32 0.0, %v1586
      %v1588 = vpop.f32.mrb[0].mxu0
      %1589 = vmatprep.mubr.f32.mxu0 0.0
      %1590 = vmatmul.mubr.f32.gmra.mrb[0].mxu0 %v1442
      %v1591 = vpop.f32.mrb[0].mxu0
      %v1592 = vadd.f32 0.0, %v1591
      %v1593 = vpop.f32.mrb[0].mxu0
      %1594 = vmatprep.mubr.f32.mxu0 0.0
      %1595 = vmatmul.mubr.f32.gmra.mrb[0].mxu0 %v1445
      %v1596 = vpop.f32.mrb[0].mxu0
      %v1597 = vadd.f32 0.0, %v1596
      %v1598 = vpop.f32.mrb[0].mxu0
      %1599 = vmatprep.mubr.f32.mxu0 0.0
      %1600 = vmatmul.mubr.f32.gmra.mrb[0].mxu0 %v1448
      %v1601 = vpop.f32.mrb[0].mxu0
      %v1602 = vadd.f32 0.0, %v1601
      %v1603 = vpop.f32.mrb[0].mxu0
      %1604 = vmatprep.mubr.f32.mxu0 0.0
      %1605 = vmatmul.mubr.f32.gmra.mrb[0].mxu0 %v1451
      %v1606 = vpop.f32.mrb[0].mxu0
      %v1607 = vadd.f32 0.0, %v1606
      %v1608 = vpop.f32.mrb[0].mxu0
      %1609 = vmatprep.mubr.f32.mxu0 0.0
      %1610 = vmatmul.mubr.f32.gmra.mrb[0].mxu0 %v1454
      %v1611 = vpop.f32.mrb[0].mxu0
      %v1612 = vadd.f32 0.0, %v1611
      %v1613 = vpop.f32.mrb[0].mxu0
      %1614 = vmatprep.mubr.f32.mxu0 0.0
      %1615 = vmatmul.mubr.f32.gmra.mrb[0].mxu0 %v1457
      %v1616 = vpop.f32.mrb[0].mxu0
      %v1617 = vadd.f32 0.0, %v1616
      %v1618 = vpop.f32.mrb[0].mxu0
      %1619 = vmatprep.mubr.f32.mxu0 0.0
      %1620 = vmatmul.mubr.f32.gmra.mrb[0].mxu0 %v1460
      %v1621 = vpop.f32.mrb[0].mxu0
      %v1622 = vadd.f32 0.0, %v1621
      %v1623 = vpop.f32.mrb[0].mxu0
      %1624 = vmatprep.mubr.f32.mxu0 0.0
      %1625 = vmatmul.mubr.f32.gmra.mrb[0].mxu0 %v1463
      %v1626 = vpop.f32.mrb[0].mxu0
      %v1627 = vadd.f32 0.0, %v1626
      %v1628 = vpop.f32.mrb[0].mxu0
      %1629 = vmatprep.mubr.f32.mxu0 0.0
      %1630 = vmatmul.mubr.f32.gmra.mrb[0].mxu0 %v1466
      %v1631 = vpop.f32.mrb[0].mxu0
      %v1632 = vadd.f32 0.0, %v1631
      %v1633 = vpop.f32.mrb[0].mxu0
      %1634 = vmatprep.mubr.f32.mxu0 0.0
      %1635 = vmatmul.mubr.f32.gmra.mrb[0].mxu0 %v1469
      %v1636 = vpop.f32.mrb[0].mxu0
      %v1637 = vadd.f32 0.0, %v1636
      %v1638 = vpop.f32.mrb[0].mxu0
      %1639 = vmatprep.mubr.f32.mxu0 0.0
      %1640 = vmatmul.mubr.f32.gmra.mrb[0].mxu0 %v1472
      %v1641 = vpop.f32.mrb[0].mxu0
      %v1642 = vadd.f32 0.0, %v1641
      %v1643 = vpop.f32.mrb[0].mxu0
      %1644 = vmatprep.mubr.f32.mxu0 0.0
      %1645 = vmatmul.mubr.f32.gmra.mrb[0].mxu0 %v1475
      %v1646 = vpop.f32.mrb[0].mxu0
      %v1647 = vadd.f32 0.0, %v1646
      %v1648 = vpop.f32.mrb[0].mxu0
      %1649 = vmatprep.mubr.f32.mxu0 0.0
      %1650 = vmatmul.mubr.f32.gmra.mrb[0].mxu0 %v1478
      %v1651 = vpop.f32.mrb[0].mxu0
      %v1652 = vadd.f32 0.0, %v1651
      %v1653 = vpop.f32.mrb[0].mxu0
      %1654 = vmatprep.mubr.f32.mxu0 0.0
      %1655 = vmatmul.mubr.f32.gmra.mrb[0].mxu0 %v1481
      %v1656 = vpop.f32.mrb[0].mxu0
      %v1657 = vadd.f32 0.0, %v1656
      %v1658 = vpop.f32.mrb[0].mxu0
      %1659 = vmatprep.mubr.f32.mxu0 0.0
      %1660 = vmatmul.mubr.f32.gmra.mrb[0].mxu0 %v1484
      %v1661 = vpop.f32.mrb[0].mxu0
      %v1662 = vadd.f32 0.0, %v1661
      %v1663 = vpop.f32.mrb[0].mxu0
      %1664 = vmatprep.mubr.f32.mxu0 0.0
      %1665 = vmatmul.mubr.f32.gmra.mrb[0].mxu0 %v1487
      %v1666 = vpop.f32.mrb[0].mxu0
      %v1667 = vadd.f32 0.0, %v1666
      %v1668 = vpop.f32.mrb[0].mxu0
      %1669 = vmatprep.mubr.f32.mxu0 0.0
      %1670 = vmatmul.mubr.f32.gmra.mrb[0].mxu0 %v1490
      %v1671 = vpop.f32.mrb[0].mxu0
      %v1672 = vadd.f32 0.0, %v1671
      %v1673 = vpop.f32.mrb[0].mxu0
      %1674 = vmatprep.mubr.f32.mxu0 0.0
      %1675 = vmatmul.mubr.f32.gmra.mrb[0].mxu0 %v1493
      %v1676 = vpop.f32.mrb[0].mxu0
      %v1677 = vadd.f32 0.0, %v1676
      %v1678 = vpop.f32.mrb[0].mxu0
      %1679 = vdwg.mxu0
      %1680 = vst.msk [vmem:[#allocation2] sm:$0xff] %vm1141, %v1562
      %1681 = vst.msk [vmem:[#allocation2 + $0x8] sm:$0xff] %vm1141, %v1567
      %1682 = vst.msk [vmem:[#allocation2 + $0x10] sm:$0xff] %vm1141, %v1572
      %1683 = vst.msk [vmem:[#allocation2 + $0x18] sm:$0xff] %vm1141, %v1577
      %1684 = vst.msk [vmem:[#allocation2 + $0x20] sm:$0xff] %vm1141, %v1582
      %1685 = vst.msk [vmem:[#allocation2 + $0x28] sm:$0xff] %vm1141, %v1587
      %1686 = vst.msk [vmem:[#allocation2 + $0x30] sm:$0xff] %vm1141, %v1592
      %1687 = vst.msk [vmem:[#allocation2 + $0x38] sm:$0xff] %vm1141, %v1597
      %1688 = vst.msk [vmem:[#allocation2 + $0x40] sm:$0xff] %vm1141, %v1602
      %1689 = vst.msk [vmem:[#allocation2 + $0x48] sm:$0xff] %vm1141, %v1607
      %1690 = vst.msk [vmem:[#allocation2 + $0x50] sm:$0xff] %vm1141, %v1612
      %1691 = vst.msk [vmem:[#allocation2 + $0x58] sm:$0xff] %vm1141, %v1617
      %1692 = vst.msk [vmem:[#allocation2 + $0x60] sm:$0xff] %vm1141, %v1622
      %1693 = vst.msk [vmem:[#allocation2 + $0x68] sm:$0xff] %vm1141, %v1627
      %1694 = vst.msk [vmem:[#allocation2 + $0x70] sm:$0xff] %vm1141, %v1632
      %1695 = vst.msk [vmem:[#allocation2 + $0x78] sm:$0xff] %vm1141, %v1637
      %1696 = vst.msk [vmem:[#allocation2 + $0x80] sm:$0xff] %vm1141, %v1642
      %1697 = vst.msk [vmem:[#allocation2 + $0x88] sm:$0xff] %vm1141, %v1647
      %1698 = vst.msk [vmem:[#allocation2 + $0x90] sm:$0xff] %vm1141, %v1652
      %1699 = vst.msk [vmem:[#allocation2 + $0x98] sm:$0xff] %vm1141, %v1657
      %1700 = vst.msk [vmem:[#allocation2 + $0xa0] sm:$0xff] %vm1141, %v1662
      %1701 = vst.msk [vmem:[#allocation2 + $0xa8] sm:$0xff] %vm1141, %v1667
      %1702 = vst.msk [vmem:[#allocation2 + $0xb0] sm:$0xff] %vm1141, %v1672
      %1703 = vst.msk [vmem:[#allocation2 + $0xb8] sm:$0xff] %vm1141, %v1677
      %v1704 = vld [vmem:[%s20 + $0xc0] sm:$0xff]
      %v1705 = vld [vmem:[%s20 + $0xc8] sm:$0xff]
      %v1706 = vld [vmem:[%s20 + $0xd0] sm:$0xff]
      %v1707 = vld [vmem:[%s20 + $0xd8] sm:$0xff]
      %v1708 = vld [vmem:[%s20 + $0xe0] sm:$0xff]
      %v1709 = vld [vmem:[%s20 + $0xe8] sm:$0xff]
      %v1710 = vld [vmem:[%s20 + $0xf0] sm:$0xff]
      %v1711 = vld [vmem:[%s20 + $0xf8] sm:$0xff]
      %v1712 = vld [vmem:[%s20 + $0x100] sm:$0xff]
      %v1713 = vld [vmem:[%s20 + $0x108] sm:$0xff]
      %v1714 = vld [vmem:[%s20 + $0x110] sm:$0xff]
      %v1715 = vld [vmem:[%s20 + $0x118] sm:$0xff]
      %v1716 = vld [vmem:[%s20 + $0x120] sm:$0xff]
      %v1717 = vld [vmem:[%s20 + $0x128] sm:$0xff]
      %v1718 = vld [vmem:[%s20 + $0x130] sm:$0xff]
      %v1719 = vld [vmem:[%s20 + $0x138] sm:$0xff]
      %v1720 = vld [vmem:[%s20 + $0x140] sm:$0xff]
      %v1721 = vld [vmem:[%s20 + $0x148] sm:$0xff]
      %v1722 = vld [vmem:[%s20 + $0x150] sm:$0xff]
      %v1723 = vld [vmem:[%s20 + $0x158] sm:$0xff]
      %v1724 = vld [vmem:[%s20 + $0x160] sm:$0xff]
      %v1725 = vld [vmem:[%s20 + $0x168] sm:$0xff]
      %v1726 = vld [vmem:[%s20 + $0x170] sm:$0xff]
      %v1727 = vld [vmem:[%s20 + $0x178] sm:$0xff]
      %v1729 = vsel %vm1141, %v1704, 0
      %v1732 = vsel %vm1141, %v1705, 0
      %v1735 = vsel %vm1141, %v1706, 0
      %v1738 = vsel %vm1141, %v1707, 0
      %v1741 = vsel %vm1141, %v1708, 0
      %v1744 = vsel %vm1141, %v1709, 0
      %v1747 = vsel %vm1141, %v1710, 0
      %v1750 = vsel %vm1141, %v1711, 0
      %v1753 = vsel %vm1141, %v1712, 0
      %v1756 = vsel %vm1141, %v1713, 0
      %v1759 = vsel %vm1141, %v1714, 0
      %v1762 = vsel %vm1141, %v1715, 0
      %v1765 = vsel %vm1141, %v1716, 0
      %v1768 = vsel %vm1141, %v1717, 0
      %v1771 = vsel %vm1141, %v1718, 0
      %v1774 = vsel %vm1141, %v1719, 0
      %v1777 = vsel %vm1141, %v1720, 0
      %v1780 = vsel %vm1141, %v1721, 0
      %v1783 = vsel %vm1141, %v1722, 0
      %v1786 = vsel %vm1141, %v1723, 0
      %v1789 = vsel %vm1141, %v1724, 0
      %v1792 = vsel %vm1141, %v1725, 0
      %v1795 = vsel %vm1141, %v1726, 0
      %v1798 = vsel %vm1141, %v1727, 0
      %1800 = vmatprep.subr.mxu0 0.0
      %1801 = vmatpush1.msra.mxu0 %v1391
      %1802 = vmatprep.subr.mxu0 0.0
      %1803 = vmatpush1.msra.mxu0 %v1392
      %1804 = vmatprep.subr.mxu0 0.0
      %1805 = vmatpush1.msra.mxu0 %v1393
      %1806 = vmatprep.subr.mxu0 0.0
      %1807 = vmatpush1.msra.mxu0 %v1394
      %1808 = vmatprep.subr.mxu0 0.0
      %1809 = vmatpush1.msra.mxu0 %v1395
      %1810 = vmatprep.subr.mxu0 0.0
      %1811 = vmatpush1.msra.mxu0 %v1396
      %1812 = vmatprep.subr.mxu0 0.0
      %1813 = vmatpush1.msra.mxu0 %v1397
      %1814 = vmatprep.subr.mxu0 0.0
      %1815 = vmatpush1.msra.mxu0 %v1398
      %1816 = vmatprep.subr.mxu0 0.0
      %1817 = vmatpush1.msra.mxu0 0.0
      %1818 = vmatprep.subr.mxu0 0.0
      %1819 = vmatpush1.msra.mxu0 0.0
      %1820 = vmatprep.subr.mxu0 0.0
      %1821 = vmatpush1.msra.mxu0 0.0
      %1822 = vmatprep.subr.mxu0 0.0
      %1823 = vmatpush1.msra.mxu0 0.0
      %1824 = vmatprep.subr.mxu0 0.0
      %1825 = vmatpush1.msra.mxu0 0.0
      %1826 = vmatprep.subr.mxu0 0.0
      %1827 = vmatpush1.msra.mxu0 0.0
      %1828 = vmatprep.subr.mxu0 0.0
      %1829 = vmatpush1.msra.mxu0 0.0
      %1830 = vmatprep.subr.mxu0 0.0
      %1831 = vmatpush1.msra.mxu0 0.0
      %1832 = vmatprep.subr.mxu0 0.0
      %1833 = vmatpush1.msra.mxu0 0.0
      %1834 = vmatprep.subr.mxu0 0.0
      %1835 = vmatpush1.msra.mxu0 0.0
      %1836 = vmatprep.subr.mxu0 0.0
      %1837 = vmatpush1.msra.mxu0 0.0
      %1838 = vmatprep.subr.mxu0 0.0
      %1839 = vmatpush1.msra.mxu0 0.0
      %1840 = vmatprep.subr.mxu0 0.0
      %1841 = vmatpush1.msra.mxu0 0.0
      %1842 = vmatprep.subr.mxu0 0.0
      %1843 = vmatpush1.msra.mxu0 0.0
      %1844 = vmatprep.subr.mxu0 0.0
      %1845 = vmatpush1.msra.mxu0 0.0
      %1846 = vmatprep.subr.mxu0 0.0
      %1847 = vmatpush1.msra.mxu0 0.0
      %1848 = vmatprep.subr.mxu0 0.0
      %1849 = vmatpush1.msra.mxu0 0.0
      %1850 = vmatprep.subr.mxu0 0.0
      %1851 = vmatpush1.msra.mxu0 0.0
      %1852 = vmatprep.subr.mxu0 0.0
      %1853 = vmatpush1.msra.mxu0 0.0
      %1854 = vmatprep.subr.mxu0 0.0
      %1855 = vmatpush1.msra.mxu0 0.0
      %1856 = vmatprep.subr.mxu0 0.0
      %1857 = vmatpush1.msra.mxu0 0.0
      %1858 = vmatprep.subr.mxu0 0.0
      %1859 = vmatpush1.msra.mxu0 0.0
      %1860 = vmatprep.subr.mxu0 0.0
      %1861 = vmatpush1.msra.mxu0 0.0
      %1862 = vmatprep.subr.mxu0 0.0
      %1863 = vmatpush1.msra.mxu0 0.0
      %1864 = vmatprep.mubr.f32.mxu0 0.0
      %1865 = vmatmul.mubr.f32.gmra.mrb[0].mxu0 %v1729
      %v1866 = vpop.f32.mrb[0].mxu0
      %v1867 = vadd.f32 0.0, %v1866
      %v1868 = vpop.f32.mrb[0].mxu0
      %1869 = vmatprep.mubr.f32.mxu0 0.0
      %1870 = vmatmul.mubr.f32.gmra.mrb[0].mxu0 %v1732
      %v1871 = vpop.f32.mrb[0].mxu0
      %v1872 = vadd.f32 0.0, %v1871
      %v1873 = vpop.f32.mrb[0].mxu0
      %1874 = vmatprep.mubr.f32.mxu0 0.0
      %1875 = vmatmul.mubr.f32.gmra.mrb[0].mxu0 %v1735
      %v1876 = vpop.f32.mrb[0].mxu0
      %v1877 = vadd.f32 0.0, %v1876
      %v1878 = vpop.f32.mrb[0].mxu0
      %1879 = vmatprep.mubr.f32.mxu0 0.0
      %1880 = vmatmul.mubr.f32.gmra.mrb[0].mxu0 %v1738
      %v1881 = vpop.f32.mrb[0].mxu0
      %v1882 = vadd.f32 0.0, %v1881
      %v1883 = vpop.f32.mrb[0].mxu0
      %1884 = vmatprep.mubr.f32.mxu0 0.0
      %1885 = vmatmul.mubr.f32.gmra.mrb[0].mxu0 %v1741
      %v1886 = vpop.f32.mrb[0].mxu0
      %v1887 = vadd.f32 0.0, %v1886
      %v1888 = vpop.f32.mrb[0].mxu0
      %1889 = vmatprep.mubr.f32.mxu0 0.0
      %1890 = vmatmul.mubr.f32.gmra.mrb[0].mxu0 %v1744
      %v1891 = vpop.f32.mrb[0].mxu0
      %v1892 = vadd.f32 0.0, %v1891
      %v1893 = vpop.f32.mrb[0].mxu0
      %1894 = vmatprep.mubr.f32.mxu0 0.0
      %1895 = vmatmul.mubr.f32.gmra.mrb[0].mxu0 %v1747
      %v1896 = vpop.f32.mrb[0].mxu0
      %v1897 = vadd.f32 0.0, %v1896
      %v1898 = vpop.f32.mrb[0].mxu0
      %1899 = vmatprep.mubr.f32.mxu0 0.0
      %1900 = vmatmul.mubr.f32.gmra.mrb[0].mxu0 %v1750
      %v1901 = vpop.f32.mrb[0].mxu0
      %v1902 = vadd.f32 0.0, %v1901
      %v1903 = vpop.f32.mrb[0].mxu0
      %1904 = vmatprep.mubr.f32.mxu0 0.0
      %1905 = vmatmul.mubr.f32.gmra.mrb[0].mxu0 %v1753
      %v1906 = vpop.f32.mrb[0].mxu0
      %v1907 = vadd.f32 0.0, %v1906
      %v1908 = vpop.f32.mrb[0].mxu0
      %1909 = vmatprep.mubr.f32.mxu0 0.0
      %1910 = vmatmul.mubr.f32.gmra.mrb[0].mxu0 %v1756
      %v1911 = vpop.f32.mrb[0].mxu0
      %v1912 = vadd.f32 0.0, %v1911
      %v1913 = vpop.f32.mrb[0].mxu0
      %1914 = vmatprep.mubr.f32.mxu0 0.0
      %1915 = vmatmul.mubr.f32.gmra.mrb[0].mxu0 %v1759
      %v1916 = vpop.f32.mrb[0].mxu0
      %v1917 = vadd.f32 0.0, %v1916
      %v1918 = vpop.f32.mrb[0].mxu0
      %1919 = vmatprep.mubr.f32.mxu0 0.0
      %1920 = vmatmul.mubr.f32.gmra.mrb[0].mxu0 %v1762
      %v1921 = vpop.f32.mrb[0].mxu0
      %v1922 = vadd.f32 0.0, %v1921
      %v1923 = vpop.f32.mrb[0].mxu0
      %1924 = vmatprep.mubr.f32.mxu0 0.0
      %1925 = vmatmul.mubr.f32.gmra.mrb[0].mxu0 %v1765
      %v1926 = vpop.f32.mrb[0].mxu0
      %v1927 = vadd.f32 0.0, %v1926
      %v1928 = vpop.f32.mrb[0].mxu0
      %1929 = vmatprep.mubr.f32.mxu0 0.0
      %1930 = vmatmul.mubr.f32.gmra.mrb[0].mxu0 %v1768
      %v1931 = vpop.f32.mrb[0].mxu0
      %v1932 = vadd.f32 0.0, %v1931
      %v1933 = vpop.f32.mrb[0].mxu0
      %1934 = vmatprep.mubr.f32.mxu0 0.0
      %1935 = vmatmul.mubr.f32.gmra.mrb[0].mxu0 %v1771
      %v1936 = vpop.f32.mrb[0].mxu0
      %v1937 = vadd.f32 0.0, %v1936
      %v1938 = vpop.f32.mrb[0].mxu0
      %1939 = vmatprep.mubr.f32.mxu0 0.0
      %1940 = vmatmul.mubr.f32.gmra.mrb[0].mxu0 %v1774
      %v1941 = vpop.f32.mrb[0].mxu0
      %v1942 = vadd.f32 0.0, %v1941
      %v1943 = vpop.f32.mrb[0].mxu0
      %1944 = vmatprep.mubr.f32.mxu0 0.0
      %1945 = vmatmul.mubr.f32.gmra.mrb[0].mxu0 %v1777
      %v1946 = vpop.f32.mrb[0].mxu0
      %v1947 = vadd.f32 0.0, %v1946
      %v1948 = vpop.f32.mrb[0].mxu0
      %1949 = vmatprep.mubr.f32.mxu0 0.0
      %1950 = vmatmul.mubr.f32.gmra.mrb[0].mxu0 %v1780
      %v1951 = vpop.f32.mrb[0].mxu0
      %v1952 = vadd.f32 0.0, %v1951
      %v1953 = vpop.f32.mrb[0].mxu0
      %1954 = vmatprep.mubr.f32.mxu0 0.0
      %1955 = vmatmul.mubr.f32.gmra.mrb[0].mxu0 %v1783
      %v1956 = vpop.f32.mrb[0].mxu0
      %v1957 = vadd.f32 0.0, %v1956
      %v1958 = vpop.f32.mrb[0].mxu0
      %1959 = vmatprep.mubr.f32.mxu0 0.0
      %1960 = vmatmul.mubr.f32.gmra.mrb[0].mxu0 %v1786
      %v1961 = vpop.f32.mrb[0].mxu0
      %v1962 = vadd.f32 0.0, %v1961
      %v1963 = vpop.f32.mrb[0].mxu0
      %1964 = vmatprep.mubr.f32.mxu0 0.0
      %1965 = vmatmul.mubr.f32.gmra.mrb[0].mxu0 %v1789
      %v1966 = vpop.f32.mrb[0].mxu0
      %v1967 = vadd.f32 0.0, %v1966
      %v1968 = vpop.f32.mrb[0].mxu0
      %1969 = vmatprep.mubr.f32.mxu0 0.0
      %1970 = vmatmul.mubr.f32.gmra.mrb[0].mxu0 %v1792
      %v1971 = vpop.f32.mrb[0].mxu0
      %v1972 = vadd.f32 0.0, %v1971
      %v1973 = vpop.f32.mrb[0].mxu0
      %1974 = vmatprep.mubr.f32.mxu0 0.0
      %1975 = vmatmul.mubr.f32.gmra.mrb[0].mxu0 %v1795
      %v1976 = vpop.f32.mrb[0].mxu0
      %v1977 = vadd.f32 0.0, %v1976
      %v1978 = vpop.f32.mrb[0].mxu0
      %1979 = vmatprep.mubr.f32.mxu0 0.0
      %1980 = vmatmul.mubr.f32.gmra.mrb[0].mxu0 %v1798
      %v1981 = vpop.f32.mrb[0].mxu0
      %v1982 = vadd.f32 0.0, %v1981
      %v1983 = vpop.f32.mrb[0].mxu0
      %1984 = vdwg.mxu0
      %1985 = vst.msk [vmem:[#allocation2 + $0xc0] sm:$0xff] %vm1141, %v1867
      %1986 = vst.msk [vmem:[#allocation2 + $0xc8] sm:$0xff] %vm1141, %v1872
      %1987 = vst.msk [vmem:[#allocation2 + $0xd0] sm:$0xff] %vm1141, %v1877
      %1988 = vst.msk [vmem:[#allocation2 + $0xd8] sm:$0xff] %vm1141, %v1882
      %1989 = vst.msk [vmem:[#allocation2 + $0xe0] sm:$0xff] %vm1141, %v1887
      %1990 = vst.msk [vmem:[#allocation2 + $0xe8] sm:$0xff] %vm1141, %v1892
      %1991 = vst.msk [vmem:[#allocation2 + $0xf0] sm:$0xff] %vm1141, %v1897
      %1992 = vst.msk [vmem:[#allocation2 + $0xf8] sm:$0xff] %vm1141, %v1902
      %1993 = vst.msk [vmem:[#allocation2 + $0x100] sm:$0xff] %vm1141, %v1907
      %1994 = vst.msk [vmem:[#allocation2 + $0x108] sm:$0xff] %vm1141, %v1912
      %1995 = vst.msk [vmem:[#allocation2 + $0x110] sm:$0xff] %vm1141, %v1917
      %1996 = vst.msk [vmem:[#allocation2 + $0x118] sm:$0xff] %vm1141, %v1922
      %1997 = vst.msk [vmem:[#allocation2 + $0x120] sm:$0xff] %vm1141, %v1927
      %1998 = vst.msk [vmem:[#allocation2 + $0x128] sm:$0xff] %vm1141, %v1932
      %1999 = vst.msk [vmem:[#allocation2 + $0x130] sm:$0xff] %vm1141, %v1937
      %2000 = vst.msk [vmem:[#allocation2 + $0x138] sm:$0xff] %vm1141, %v1942
      %2001 = vst.msk [vmem:[#allocation2 + $0x140] sm:$0xff] %vm1141, %v1947
      %2002 = vst.msk [vmem:[#allocation2 + $0x148] sm:$0xff] %vm1141, %v1952
      %2003 = vst.msk [vmem:[#allocation2 + $0x150] sm:$0xff] %vm1141, %v1957
      %2004 = vst.msk [vmem:[#allocation2 + $0x158] sm:$0xff] %vm1141, %v1962
      %2005 = vst.msk [vmem:[#allocation2 + $0x160] sm:$0xff] %vm1141, %v1967
      %2006 = vst.msk [vmem:[#allocation2 + $0x168] sm:$0xff] %vm1141, %v1972
      %2007 = vst.msk [vmem:[#allocation2 + $0x170] sm:$0xff] %vm1141, %v1977
      %2008 = vst.msk [vmem:[#allocation2 + $0x178] sm:$0xff] %vm1141, %v1982
      %v2009 = vld [vmem:[%s20 + $0x180] sm:$0xff]
      %v2010 = vld [vmem:[%s20 + $0x188] sm:$0xff]
      %v2011 = vld [vmem:[%s20 + $0x190] sm:$0xff]
      %v2012 = vld [vmem:[%s20 + $0x198] sm:$0xff]
      %v2013 = vld [vmem:[%s20 + $0x1a0] sm:$0xff]
      %v2014 = vld [vmem:[%s20 + $0x1a8] sm:$0xff]
      %v2015 = vld [vmem:[%s20 + $0x1b0] sm:$0xff]
      %v2016 = vld [vmem:[%s20 + $0x1b8] sm:$0xff]
      %v2017 = vld [vmem:[%s20 + $0x1c0] sm:$0xff]
      %v2018 = vld [vmem:[%s20 + $0x1c8] sm:$0xff]
      %v2019 = vld [vmem:[%s20 + $0x1d0] sm:$0xff]
      %v2020 = vld [vmem:[%s20 + $0x1d8] sm:$0xff]
      %v2021 = vld [vmem:[%s20 + $0x1e0] sm:$0xff]
      %v2022 = vld [vmem:[%s20 + $0x1e8] sm:$0xff]
      %v2023 = vld [vmem:[%s20 + $0x1f0] sm:$0xff]
      %v2024 = vld [vmem:[%s20 + $0x1f8] sm:$0xff]
      %v2025 = vld [vmem:[%s20 + $0x200] sm:$0xff]
      %v2026 = vld [vmem:[%s20 + $0x208] sm:$0xff]
      %v2027 = vld [vmem:[%s20 + $0x210] sm:$0xff]
      %v2028 = vld [vmem:[%s20 + $0x218] sm:$0xff]
      %v2029 = vld [vmem:[%s20 + $0x220] sm:$0xff]
      %v2030 = vld [vmem:[%s20 + $0x228] sm:$0xff]
      %v2031 = vld [vmem:[%s20 + $0x230] sm:$0xff]
      %v2032 = vld [vmem:[%s20 + $0x238] sm:$0xff]
      %v2034 = vsel %vm1141, %v2009, 0
      %v2037 = vsel %vm1141, %v2010, 0
      %v2040 = vsel %vm1141, %v2011, 0
      %v2043 = vsel %vm1141, %v2012, 0
      %v2046 = vsel %vm1141, %v2013, 0
      %v2049 = vsel %vm1141, %v2014, 0
      %v2052 = vsel %vm1141, %v2015, 0
      %v2055 = vsel %vm1141, %v2016, 0
      %v2058 = vsel %vm1141, %v2017, 0
      %v2061 = vsel %vm1141, %v2018, 0
      %v2064 = vsel %vm1141, %v2019, 0
      %v2067 = vsel %vm1141, %v2020, 0
      %v2070 = vsel %vm1141, %v2021, 0
      %v2073 = vsel %vm1141, %v2022, 0
      %v2076 = vsel %vm1141, %v2023, 0
      %v2079 = vsel %vm1141, %v2024, 0
      %v2082 = vsel %vm1141, %v2025, 0
      %v2085 = vsel %vm1141, %v2026, 0
      %v2088 = vsel %vm1141, %v2027, 0
      %v2091 = vsel %vm1141, %v2028, 0
      %v2094 = vsel %vm1141, %v2029, 0
      %v2097 = vsel %vm1141, %v2030, 0
      %v2100 = vsel %vm1141, %v2031, 0
      %v2103 = vsel %vm1141, %v2032, 0
      %2105 = vmatprep.subr.mxu0 0.0
      %2106 = vmatpush1.msra.mxu0 %v1391
      %2107 = vmatprep.subr.mxu0 0.0
      %2108 = vmatpush1.msra.mxu0 %v1392
      %2109 = vmatprep.subr.mxu0 0.0
      %2110 = vmatpush1.msra.mxu0 %v1393
      %2111 = vmatprep.subr.mxu0 0.0
      %2112 = vmatpush1.msra.mxu0 %v1394
      %2113 = vmatprep.subr.mxu0 0.0
      %2114 = vmatpush1.msra.mxu0 %v1395
      %2115 = vmatprep.subr.mxu0 0.0
      %2116 = vmatpush1.msra.mxu0 %v1396
      %2117 = vmatprep.subr.mxu0 0.0
      %2118 = vmatpush1.msra.mxu0 %v1397
      %2119 = vmatprep.subr.mxu0 0.0
      %2120 = vmatpush1.msra.mxu0 %v1398
      %2121 = vmatprep.subr.mxu0 0.0
      %2122 = vmatpush1.msra.mxu0 0.0
      %2123 = vmatprep.subr.mxu0 0.0
      %2124 = vmatpush1.msra.mxu0 0.0
      %2125 = vmatprep.subr.mxu0 0.0
      %2126 = vmatpush1.msra.mxu0 0.0
      %2127 = vmatprep.subr.mxu0 0.0
      %2128 = vmatpush1.msra.mxu0 0.0
      %2129 = vmatprep.subr.mxu0 0.0
      %2130 = vmatpush1.msra.mxu0 0.0
      %2131 = vmatprep.subr.mxu0 0.0
      %2132 = vmatpush1.msra.mxu0 0.0
      %2133 = vmatprep.subr.mxu0 0.0
      %2134 = vmatpush1.msra.mxu0 0.0
      %2135 = vmatprep.subr.mxu0 0.0
      %2136 = vmatpush1.msra.mxu0 0.0
      %2137 = vmatprep.subr.mxu0 0.0
      %2138 = vmatpush1.msra.mxu0 0.0
      %2139 = vmatprep.subr.mxu0 0.0
      %2140 = vmatpush1.msra.mxu0 0.0
      %2141 = vmatprep.subr.mxu0 0.0
      %2142 = vmatpush1.msra.mxu0 0.0
      %2143 = vmatprep.subr.mxu0 0.0
      %2144 = vmatpush1.msra.mxu0 0.0
      %2145 = vmatprep.subr.mxu0 0.0
      %2146 = vmatpush1.msra.mxu0 0.0
      %2147 = vmatprep.subr.mxu0 0.0
      %2148 = vmatpush1.msra.mxu0 0.0
      %2149 = vmatprep.subr.mxu0 0.0
      %2150 = vmatpush1.msra.mxu0 0.0
      %2151 = vmatprep.subr.mxu0 0.0
      %2152 = vmatpush1.msra.mxu0 0.0
      %2153 = vmatprep.subr.mxu0 0.0
      %2154 = vmatpush1.msra.mxu0 0.0
      %2155 = vmatprep.subr.mxu0 0.0
      %2156 = vmatpush1.msra.mxu0 0.0
      %2157 = vmatprep.subr.mxu0 0.0
      %2158 = vmatpush1.msra.mxu0 0.0
      %2159 = vmatprep.subr.mxu0 0.0
      %2160 = vmatpush1.msra.mxu0 0.0
      %2161 = vmatprep.subr.mxu0 0.0
      %2162 = vmatpush1.msra.mxu0 0.0
      %2163 = vmatprep.subr.mxu0 0.0
      %2164 = vmatpush1.msra.mxu0 0.0
      %2165 = vmatprep.subr.mxu0 0.0
      %2166 = vmatpush1.msra.mxu0 0.0
      %2167 = vmatprep.subr.mxu0 0.0
      %2168 = vmatpush1.msra.mxu0 0.0
      %2169 = vmatprep.mubr.f32.mxu0 0.0
      %2170 = vmatmul.mubr.f32.gmra.mrb[0].mxu0 %v2034
      %v2171 = vpop.f32.mrb[0].mxu0
      %v2172 = vadd.f32 0.0, %v2171
      %v2173 = vpop.f32.mrb[0].mxu0
      %2174 = vmatprep.mubr.f32.mxu0 0.0
      %2175 = vmatmul.mubr.f32.gmra.mrb[0].mxu0 %v2037
      %v2176 = vpop.f32.mrb[0].mxu0
      %v2177 = vadd.f32 0.0, %v2176
      %v2178 = vpop.f32.mrb[0].mxu0
      %2179 = vmatprep.mubr.f32.mxu0 0.0
      %2180 = vmatmul.mubr.f32.gmra.mrb[0].mxu0 %v2040
      %v2181 = vpop.f32.mrb[0].mxu0
      %v2182 = vadd.f32 0.0, %v2181
      %v2183 = vpop.f32.mrb[0].mxu0
      %2184 = vmatprep.mubr.f32.mxu0 0.0
      %2185 = vmatmul.mubr.f32.gmra.mrb[0].mxu0 %v2043
      %v2186 = vpop.f32.mrb[0].mxu0
      %v2187 = vadd.f32 0.0, %v2186
      %v2188 = vpop.f32.mrb[0].mxu0
      %2189 = vmatprep.mubr.f32.mxu0 0.0
      %2190 = vmatmul.mubr.f32.gmra.mrb[0].mxu0 %v2046
      %v2191 = vpop.f32.mrb[0].mxu0
      %v2192 = vadd.f32 0.0, %v2191
      %v2193 = vpop.f32.mrb[0].mxu0
      %2194 = vmatprep.mubr.f32.mxu0 0.0
      %2195 = vmatmul.mubr.f32.gmra.mrb[0].mxu0 %v2049
      %v2196 = vpop.f32.mrb[0].mxu0
      %v2197 = vadd.f32 0.0, %v2196
      %v2198 = vpop.f32.mrb[0].mxu0
      %2199 = vmatprep.mubr.f32.mxu0 0.0
      %2200 = vmatmul.mubr.f32.gmra.mrb[0].mxu0 %v2052
      %v2201 = vpop.f32.mrb[0].mxu0
      %v2202 = vadd.f32 0.0, %v2201
      %v2203 = vpop.f32.mrb[0].mxu0
      %2204 = vmatprep.mubr.f32.mxu0 0.0
      %2205 = vmatmul.mubr.f32.gmra.mrb[0].mxu0 %v2055
      %v2206 = vpop.f32.mrb[0].mxu0
      %v2207 = vadd.f32 0.0, %v2206
      %v2208 = vpop.f32.mrb[0].mxu0
      %2209 = vmatprep.mubr.f32.mxu0 0.0
      %2210 = vmatmul.mubr.f32.gmra.mrb[0].mxu0 %v2058
      %v2211 = vpop.f32.mrb[0].mxu0
      %v2212 = vadd.f32 0.0, %v2211
      %v2213 = vpop.f32.mrb[0].mxu0
      %2214 = vmatprep.mubr.f32.mxu0 0.0
      %2215 = vmatmul.mubr.f32.gmra.mrb[0].mxu0 %v2061
      %v2216 = vpop.f32.mrb[0].mxu0
      %v2217 = vadd.f32 0.0, %v2216
      %v2218 = vpop.f32.mrb[0].mxu0
      %2219 = vmatprep.mubr.f32.mxu0 0.0
      %2220 = vmatmul.mubr.f32.gmra.mrb[0].mxu0 %v2064
      %v2221 = vpop.f32.mrb[0].mxu0
      %v2222 = vadd.f32 0.0, %v2221
      %v2223 = vpop.f32.mrb[0].mxu0
      %2224 = vmatprep.mubr.f32.mxu0 0.0
      %2225 = vmatmul.mubr.f32.gmra.mrb[0].mxu0 %v2067
      %v2226 = vpop.f32.mrb[0].mxu0
      %v2227 = vadd.f32 0.0, %v2226
      %v2228 = vpop.f32.mrb[0].mxu0
      %2229 = vmatprep.mubr.f32.mxu0 0.0
      %2230 = vmatmul.mubr.f32.gmra.mrb[0].mxu0 %v2070
      %v2231 = vpop.f32.mrb[0].mxu0
      %v2232 = vadd.f32 0.0, %v2231
      %v2233 = vpop.f32.mrb[0].mxu0
      %2234 = vmatprep.mubr.f32.mxu0 0.0
      %2235 = vmatmul.mubr.f32.gmra.mrb[0].mxu0 %v2073
      %v2236 = vpop.f32.mrb[0].mxu0
      %v2237 = vadd.f32 0.0, %v2236
      %v2238 = vpop.f32.mrb[0].mxu0
      %2239 = vmatprep.mubr.f32.mxu0 0.0
      %2240 = vmatmul.mubr.f32.gmra.mrb[0].mxu0 %v2076
      %v2241 = vpop.f32.mrb[0].mxu0
      %v2242 = vadd.f32 0.0, %v2241
      %v2243 = vpop.f32.mrb[0].mxu0
      %2244 = vmatprep.mubr.f32.mxu0 0.0
      %2245 = vmatmul.mubr.f32.gmra.mrb[0].mxu0 %v2079
      %v2246 = vpop.f32.mrb[0].mxu0
      %v2247 = vadd.f32 0.0, %v2246
      %v2248 = vpop.f32.mrb[0].mxu0
      %2249 = vmatprep.mubr.f32.mxu0 0.0
      %2250 = vmatmul.mubr.f32.gmra.mrb[0].mxu0 %v2082
      %v2251 = vpop.f32.mrb[0].mxu0
      %v2252 = vadd.f32 0.0, %v2251
      %v2253 = vpop.f32.mrb[0].mxu0
      %2254 = vmatprep.mubr.f32.mxu0 0.0
      %2255 = vmatmul.mubr.f32.gmra.mrb[0].mxu0 %v2085
      %v2256 = vpop.f32.mrb[0].mxu0
      %v2257 = vadd.f32 0.0, %v2256
      %v2258 = vpop.f32.mrb[0].mxu0
      %2259 = vmatprep.mubr.f32.mxu0 0.0
      %2260 = vmatmul.mubr.f32.gmra.mrb[0].mxu0 %v2088
      %v2261 = vpop.f32.mrb[0].mxu0
      %v2262 = vadd.f32 0.0, %v2261
      %v2263 = vpop.f32.mrb[0].mxu0
      %2264 = vmatprep.mubr.f32.mxu0 0.0
      %2265 = vmatmul.mubr.f32.gmra.mrb[0].mxu0 %v2091
      %v2266 = vpop.f32.mrb[0].mxu0
      %v2267 = vadd.f32 0.0, %v2266
      %v2268 = vpop.f32.mrb[0].mxu0
      %2269 = vmatprep.mubr.f32.mxu0 0.0
      %2270 = vmatmul.mubr.f32.gmra.mrb[0].mxu0 %v2094
      %v2271 = vpop.f32.mrb[0].mxu0
      %v2272 = vadd.f32 0.0, %v2271
      %v2273 = vpop.f32.mrb[0].mxu0
      %2274 = vmatprep.mubr.f32.mxu0 0.0
      %2275 = vmatmul.mubr.f32.gmra.mrb[0].mxu0 %v2097
      %v2276 = vpop.f32.mrb[0].mxu0
      %v2277 = vadd.f32 0.0, %v2276
      %v2278 = vpop.f32.mrb[0].mxu0
      %2279 = vmatprep.mubr.f32.mxu0 0.0
      %2280 = vmatmul.mubr.f32.gmra.mrb[0].mxu0 %v2100
      %v2281 = vpop.f32.mrb[0].mxu0
      %v2282 = vadd.f32 0.0, %v2281
      %v2283 = vpop.f32.mrb[0].mxu0
      %2284 = vmatprep.mubr.f32.mxu0 0.0
      %2285 = vmatmul.mubr.f32.gmra.mrb[0].mxu0 %v2103
      %v2286 = vpop.f32.mrb[0].mxu0
      %v2287 = vadd.f32 0.0, %v2286
      %v2288 = vpop.f32.mrb[0].mxu0
      %2289 = vdwg.mxu0
      %2290 = vst.msk [vmem:[#allocation2 + $0x180] sm:$0xff] %vm1141, %v2172
      %2291 = vst.msk [vmem:[#allocation2 + $0x188] sm:$0xff] %vm1141, %v2177
      %2292 = vst.msk [vmem:[#allocation2 + $0x190] sm:$0xff] %vm1141, %v2182
      %2293 = vst.msk [vmem:[#allocation2 + $0x198] sm:$0xff] %vm1141, %v2187
      %2294 = vst.msk [vmem:[#allocation2 + $0x1a0] sm:$0xff] %vm1141, %v2192
      %2295 = vst.msk [vmem:[#allocation2 + $0x1a8] sm:$0xff] %vm1141, %v2197
      %2296 = vst.msk [vmem:[#allocation2 + $0x1b0] sm:$0xff] %vm1141, %v2202
      %2297 = vst.msk [vmem:[#allocation2 + $0x1b8] sm:$0xff] %vm1141, %v2207
      %2298 = vst.msk [vmem:[#allocation2 + $0x1c0] sm:$0xff] %vm1141, %v2212
      %2299 = vst.msk [vmem:[#allocation2 + $0x1c8] sm:$0xff] %vm1141, %v2217
      %2300 = vst.msk [vmem:[#allocation2 + $0x1d0] sm:$0xff] %vm1141, %v2222
      %2301 = vst.msk [vmem:[#allocation2 + $0x1d8] sm:$0xff] %vm1141, %v2227
      %2302 = vst.msk [vmem:[#allocation2 + $0x1e0] sm:$0xff] %vm1141, %v2232
      %2303 = vst.msk [vmem:[#allocation2 + $0x1e8] sm:$0xff] %vm1141, %v2237
      %2304 = vst.msk [vmem:[#allocation2 + $0x1f0] sm:$0xff] %vm1141, %v2242
      %2305 = vst.msk [vmem:[#allocation2 + $0x1f8] sm:$0xff] %vm1141, %v2247
      %2306 = vst.msk [vmem:[#allocation2 + $0x200] sm:$0xff] %vm1141, %v2252
      %2307 = vst.msk [vmem:[#allocation2 + $0x208] sm:$0xff] %vm1141, %v2257
      %2308 = vst.msk [vmem:[#allocation2 + $0x210] sm:$0xff] %vm1141, %v2262
      %2309 = vst.msk [vmem:[#allocation2 + $0x218] sm:$0xff] %vm1141, %v2267
      %2310 = vst.msk [vmem:[#allocation2 + $0x220] sm:$0xff] %vm1141, %v2272
      %2311 = vst.msk [vmem:[#allocation2 + $0x228] sm:$0xff] %vm1141, %v2277
      %2312 = vst.msk [vmem:[#allocation2 + $0x230] sm:$0xff] %vm1141, %v2282
      %2313 = vst.msk [vmem:[#allocation2 + $0x238] sm:$0xff] %vm1141, %v2287
      %v2314 = vld [vmem:[%s24] sm:$0xff]
      %v2315 = vld [vmem:[%s24 + $0x8] sm:$0xff]
      %v2316 = vand.u32 2147483647, %v1087
      %v2317 = vand.u32 2147483647, %v1092
      %v2318 = vand.u32 2147483647, %v1097
      %v2319 = vand.u32 2147483647, %v1102
      %v2320 = vand.u32 2147483647, %v1107
      %v2321 = vand.u32 2147483647, %v1112
      %v2322 = vand.u32 2147483647, %v1117
      %v2323 = vand.u32 2147483647, %v1122
      %v2324 = vmul.f32 %v2316, 0.70710677
      %v2325 = vmul.f32 %v2317, 0.70710677
      %v2326 = vmul.f32 %v2318, 0.70710677
      %v2327 = vmul.f32 %v2319, 0.70710677
      %v2328 = vmul.f32 %v2320, 0.70710677
      %v2329 = vmul.f32 %v2321, 0.70710677
      %v2330 = vmul.f32 %v2322, 0.70710677
      %v2331 = vmul.f32 %v2323, 0.70710677
      %v2332 = vmul.f32 %v2324, 0.3275911
      %v2333 = vmul.f32 %v2325, 0.3275911
      %v2334 = vmul.f32 %v2326, 0.3275911
      %v2335 = vmul.f32 %v2327, 0.3275911
      %v2336 = vmul.f32 %v2328, 0.3275911
      %v2337 = vmul.f32 %v2329, 0.3275911
      %v2338 = vmul.f32 %v2330, 0.3275911
      %v2339 = vmul.f32 %v2331, 0.3275911
      %v2340 = vadd.f32 %v2332, 1.0
      %v2341 = vadd.f32 %v2333, 1.0
      %v2342 = vadd.f32 %v2334, 1.0
      %v2343 = vadd.f32 %v2335, 1.0
      %v2344 = vadd.f32 %v2336, 1.0
      %v2345 = vadd.f32 %v2337, 1.0
      %v2346 = vadd.f32 %v2338, 1.0
      %v2347 = vadd.f32 %v2339, 1.0
      %v2348 = vrcp.pop %v2340
      %v2349 = vrcp.pop %v2341
      %v2350 = vrcp.pop %v2342
      %v2351 = vrcp.pop %v2343
      %v2352 = vrcp.pop %v2344
      %v2353 = vrcp.pop %v2345
      %v2354 = vrcp.pop %v2346
      %v2355 = vrcp.pop %v2347
      %v2356 = vmul.f32 %v2348, 1.0614054
      %v2357 = vmul.f32 %v2349, 1.0614054
      %v2358 = vmul.f32 %v2350, 1.0614054
      %v2359 = vmul.f32 %v2351, 1.0614054
      %v2360 = vmul.f32 %v2352, 1.0614054
      %v2361 = vmul.f32 %v2353, 1.0614054
      %v2362 = vmul.f32 %v2354, 1.0614054
      %v2363 = vmul.f32 %v2355, 1.0614054
      %v2364 = vadd.f32 %v2356, -1.4531521
      %v2365 = vadd.f32 %v2357, -1.4531521
      %v2366 = vadd.f32 %v2358, -1.4531521
      %v2367 = vadd.f32 %v2359, -1.4531521
      %v2368 = vadd.f32 %v2360, -1.4531521
      %v2369 = vadd.f32 %v2361, -1.4531521
      %v2370 = vadd.f32 %v2362, -1.4531521
      %v2371 = vadd.f32 %v2363, -1.4531521
      %v2372 = vmul.f32 %v2348, %v2364
      %v2373 = vmul.f32 %v2349, %v2365
      %v2374 = vmul.f32 %v2350, %v2366
      %v2375 = vmul.f32 %v2351, %v2367
      %v2376 = vmul.f32 %v2352, %v2368
      %v2377 = vmul.f32 %v2353, %v2369
      %v2378 = vmul.f32 %v2354, %v2370
      %v2379 = vmul.f32 %v2355, %v2371
      %v2380 = vadd.f32 %v2372, 1.4214138
      %v2381 = vadd.f32 %v2373, 1.4214138
      %v2382 = vadd.f32 %v2374, 1.4214138
      %v2383 = vadd.f32 %v2375, 1.4214138
      %v2384 = vadd.f32 %v2376, 1.4214138
      %v2385 = vadd.f32 %v2377, 1.4214138
      %v2386 = vadd.f32 %v2378, 1.4214138
      %v2387 = vadd.f32 %v2379, 1.4214138
      %v2388 = vmul.f32 %v2348, %v2380
      %v2389 = vmul.f32 %v2349, %v2381
      %v2390 = vmul.f32 %v2350, %v2382
      %v2391 = vmul.f32 %v2351, %v2383
      %v2392 = vmul.f32 %v2352, %v2384
      %v2393 = vmul.f32 %v2353, %v2385
      %v2394 = vmul.f32 %v2354, %v2386
      %v2395 = vmul.f32 %v2355, %v2387
      %v2396 = vadd.f32 %v2388, -0.28449672
      %v2397 = vadd.f32 %v2389, -0.28449672
      %v2398 = vadd.f32 %v2390, -0.28449672
      %v2399 = vadd.f32 %v2391, -0.28449672
      %v2400 = vadd.f32 %v2392, -0.28449672
      %v2401 = vadd.f32 %v2393, -0.28449672
      %v2402 = vadd.f32 %v2394, -0.28449672
      %v2403 = vadd.f32 %v2395, -0.28449672
      %v2404 = vmul.f32 %v2348, %v2396
      %v2405 = vmul.f32 %v2349, %v2397
      %v2406 = vmul.f32 %v2350, %v2398
      %v2407 = vmul.f32 %v2351, %v2399
      %v2408 = vmul.f32 %v2352, %v2400
      %v2409 = vmul.f32 %v2353, %v2401
      %v2410 = vmul.f32 %v2354, %v2402
      %v2411 = vmul.f32 %v2355, %v2403
      %v2412 = vadd.f32 %v2404, 0.2548296
      %v2413 = vadd.f32 %v2405, 0.2548296
      %v2414 = vadd.f32 %v2406, 0.2548296
      %v2415 = vadd.f32 %v2407, 0.2548296
      %v2416 = vadd.f32 %v2408, 0.2548296
      %v2417 = vadd.f32 %v2409, 0.2548296
      %v2418 = vadd.f32 %v2410, 0.2548296
      %v2419 = vadd.f32 %v2411, 0.2548296
      %v2420 = vmul.f32 %v2348, %v2412
      %v2421 = vmul.f32 %v2349, %v2413
      %v2422 = vmul.f32 %v2350, %v2414
      %v2423 = vmul.f32 %v2351, %v2415
      %v2424 = vmul.f32 %v2352, %v2416
      %v2425 = vmul.f32 %v2353, %v2417
      %v2426 = vmul.f32 %v2354, %v2418
      %v2427 = vmul.f32 %v2355, %v2419
      %v2428 = vsub.f32 0.0, %v2324
      %v2429 = vsub.f32 0.0, %v2325
      %v2430 = vsub.f32 0.0, %v2326
      %v2431 = vsub.f32 0.0, %v2327
      %v2432 = vsub.f32 0.0, %v2328
      %v2433 = vsub.f32 0.0, %v2329
      %v2434 = vsub.f32 0.0, %v2330
      %v2435 = vsub.f32 0.0, %v2331
      %v2436 = vmul.f32 %v2428, %v2324
      %v2437 = vmul.f32 %v2429, %v2325
      %v2438 = vmul.f32 %v2430, %v2326
      %v2439 = vmul.f32 %v2431, %v2327
      %v2440 = vmul.f32 %v2432, %v2328
      %v2441 = vmul.f32 %v2433, %v2329
      %v2442 = vmul.f32 %v2434, %v2330
      %v2443 = vmul.f32 %v2435, %v2331
      %v2444 = vmul.f32 %v2436, 1.442695
      %v2445 = vpow.pop %v2444
      %v2446 = vmul.f32 %v2437, 1.442695
      %v2447 = vpow.pop %v2446
      %v2448 = vmul.f32 %v2438, 1.442695
      %v2449 = vpow.pop %v2448
      %v2450 = vmul.f32 %v2439, 1.442695
      %v2451 = vpow.pop %v2450
      %v2452 = vmul.f32 %v2440, 1.442695
      %v2453 = vpow.pop %v2452
      %v2454 = vmul.f32 %v2441, 1.442695
      %v2455 = vpow.pop %v2454
      %v2456 = vmul.f32 %v2442, 1.442695
      %v2457 = vpow.pop %v2456
      %v2458 = vmul.f32 %v2443, 1.442695
      %v2459 = vpow.pop %v2458
      %v2460 = vmul.f32 %v2420, %v2445
      %v2461 = vmul.f32 %v2421, %v2447
      %v2462 = vmul.f32 %v2422, %v2449
      %v2463 = vmul.f32 %v2423, %v2451
      %v2464 = vmul.f32 %v2424, %v2453
      %v2465 = vmul.f32 %v2425, %v2455
      %v2466 = vmul.f32 %v2426, %v2457
      %v2467 = vmul.f32 %v2427, %v2459
      %v2468 = vsub.f32 1.0, %v2460
      %v2469 = vsub.f32 1.0, %v2461
      %v2470 = vsub.f32 1.0, %v2462
      %v2471 = vsub.f32 1.0, %v2463
      %v2472 = vsub.f32 1.0, %v2464
      %v2473 = vsub.f32 1.0, %v2465
      %v2474 = vsub.f32 1.0, %v2466
      %v2475 = vsub.f32 1.0, %v2467
      %vm2476 = vcmp.ge.f32.partialorder %v1087, 0.0
      %vm2477 = vcmp.ge.f32.partialorder %v1092, 0.0
      %vm2478 = vcmp.ge.f32.partialorder %v1097, 0.0
      %vm2479 = vcmp.ge.f32.partialorder %v1102, 0.0
      %vm2480 = vcmp.ge.f32.partialorder %v1107, 0.0
      %vm2481 = vcmp.ge.f32.partialorder %v1112, 0.0
      %vm2482 = vcmp.ge.f32.partialorder %v1117, 0.0
      %vm2483 = vcmp.ge.f32.partialorder %v1122, 0.0
      %v2484 = vsub.f32 0.0, %v2468
      %v2485 = vsub.f32 0.0, %v2469
      %v2486 = vsub.f32 0.0, %v2470
      %v2487 = vsub.f32 0.0, %v2471
      %v2488 = vsub.f32 0.0, %v2472
      %v2489 = vsub.f32 0.0, %v2473
      %v2490 = vsub.f32 0.0, %v2474
      %v2491 = vsub.f32 0.0, %v2475
      %v2492 = vsel %vm2476, %v2468, %v2484
      %v2493 = vsel %vm2477, %v2469, %v2485
      %v2494 = vsel %vm2478, %v2470, %v2486
      %v2495 = vsel %vm2479, %v2471, %v2487
      %v2496 = vsel %vm2480, %v2472, %v2488
      %v2497 = vsel %vm2481, %v2473, %v2489
      %v2498 = vsel %vm2482, %v2474, %v2490
      %v2499 = vsel %vm2483, %v2475, %v2491
      %v2500 = vmul.f32 %v1087, 0.5
      %v2501 = vmul.f32 %v1092, 0.5
      %v2502 = vmul.f32 %v1097, 0.5
      %v2503 = vmul.f32 %v1102, 0.5
      %v2504 = vmul.f32 %v1107, 0.5
      %v2505 = vmul.f32 %v1112, 0.5
      %v2506 = vmul.f32 %v1117, 0.5
      %v2507 = vmul.f32 %v1122, 0.5
      %v2508 = vadd.f32 %v2492, 1.0
      %v2509 = vadd.f32 %v2493, 1.0
      %v2510 = vadd.f32 %v2494, 1.0
      %v2511 = vadd.f32 %v2495, 1.0
      %v2512 = vadd.f32 %v2496, 1.0
      %v2513 = vadd.f32 %v2497, 1.0
      %v2514 = vadd.f32 %v2498, 1.0
      %v2515 = vadd.f32 %v2499, 1.0
      %v2516 = vmul.f32 %v2500, %v2508
      %v2517 = vmul.f32 %v2501, %v2509
      %v2518 = vmul.f32 %v2502, %v2510
      %v2519 = vmul.f32 %v2503, %v2511
      %v2520 = vmul.f32 %v2504, %v2512
      %v2521 = vmul.f32 %v2505, %v2513
      %v2522 = vmul.f32 %v2506, %v2514
      %v2523 = vmul.f32 %v2507, %v2515
      %2532 = vrot.lane.b32.xlu0 %v2516, 32
      %v2533 = vpop.permute.xlu0 %2532
      %2534 = vrot.lane.b32.xlu0 %v2517, 32
      %v2535 = vpop.permute.xlu0 %2534
      %2536 = vrot.lane.b32.xlu0 %v2518, 32
      %v2537 = vpop.permute.xlu0 %2536
      %2538 = vrot.lane.b32.xlu0 %v2519, 32
      %v2539 = vpop.permute.xlu0 %2538
      %2540 = vrot.lane.b32.xlu0 %v2520, 32
      %v2541 = vpop.permute.xlu0 %2540
      %2542 = vrot.lane.b32.xlu0 %v2521, 32
      %v2543 = vpop.permute.xlu0 %2542
      %2544 = vrot.lane.b32.xlu0 %v2522, 32
      %v2545 = vpop.permute.xlu0 %2544
      %2546 = vrot.lane.b32.xlu0 %v2523, 32
      %v2547 = vpop.permute.xlu0 %2546
      %v2557 = vsel %vm1141, %v2314, 0
      %v2560 = vsel %vm1141, %v2315, 0
      %2562 = vmatprep.subr.mxu0 0.0
      %2563 = vmatpush1.msra.mxu0 %v2533
      %2564 = vmatprep.subr.mxu0 0.0
      %2565 = vmatpush1.msra.mxu0 %v2535
      %2566 = vmatprep.subr.mxu0 0.0
      %2567 = vmatpush1.msra.mxu0 %v2537
      %2568 = vmatprep.subr.mxu0 0.0
      %2569 = vmatpush1.msra.mxu0 %v2539
      %2570 = vmatprep.subr.mxu0 0.0
      %2571 = vmatpush1.msra.mxu0 %v2541
      %2572 = vmatprep.subr.mxu0 0.0
      %2573 = vmatpush1.msra.mxu0 %v2543
      %2574 = vmatprep.subr.mxu0 0.0
      %2575 = vmatpush1.msra.mxu0 %v2545
      %2576 = vmatprep.subr.mxu0 0.0
      %2577 = vmatpush1.msra.mxu0 %v2547
      %2578 = vmatprep.subr.mxu0 0.0
      %2579 = vmatpush1.msra.mxu0 0.0
      %2580 = vmatprep.subr.mxu0 0.0
      %2581 = vmatpush1.msra.mxu0 0.0
      %2582 = vmatprep.subr.mxu0 0.0
      %2583 = vmatpush1.msra.mxu0 0.0
      %2584 = vmatprep.subr.mxu0 0.0
      %2585 = vmatpush1.msra.mxu0 0.0
      %2586 = vmatprep.subr.mxu0 0.0
      %2587 = vmatpush1.msra.mxu0 0.0
      %2588 = vmatprep.subr.mxu0 0.0
      %2589 = vmatpush1.msra.mxu0 0.0
      %2590 = vmatprep.subr.mxu0 0.0
      %2591 = vmatpush1.msra.mxu0 0.0
      %2592 = vmatprep.subr.mxu0 0.0
      %2593 = vmatpush1.msra.mxu0 0.0
      %2594 = vmatprep.subr.mxu0 0.0
      %2595 = vmatpush1.msra.mxu0 0.0
      %2596 = vmatprep.subr.mxu0 0.0
      %2597 = vmatpush1.msra.mxu0 0.0
      %2598 = vmatprep.subr.mxu0 0.0
      %2599 = vmatpush1.msra.mxu0 0.0
      %2600 = vmatprep.subr.mxu0 0.0
      %2601 = vmatpush1.msra.mxu0 0.0
      %2602 = vmatprep.subr.mxu0 0.0
      %2603 = vmatpush1.msra.mxu0 0.0
      %2604 = vmatprep.subr.mxu0 0.0
      %2605 = vmatpush1.msra.mxu0 0.0
      %2606 = vmatprep.subr.mxu0 0.0
      %2607 = vmatpush1.msra.mxu0 0.0
      %2608 = vmatprep.subr.mxu0 0.0
      %2609 = vmatpush1.msra.mxu0 0.0
      %2610 = vmatprep.subr.mxu0 0.0
      %2611 = vmatpush1.msra.mxu0 0.0
      %2612 = vmatprep.subr.mxu0 0.0
      %2613 = vmatpush1.msra.mxu0 0.0
      %2614 = vmatprep.subr.mxu0 0.0
      %2615 = vmatpush1.msra.mxu0 0.0
      %2616 = vmatprep.subr.mxu0 0.0
      %2617 = vmatpush1.msra.mxu0 0.0
      %2618 = vmatprep.subr.mxu0 0.0
      %2619 = vmatpush1.msra.mxu0 0.0
      %2620 = vmatprep.subr.mxu0 0.0
      %2621 = vmatpush1.msra.mxu0 0.0
      %2622 = vmatprep.subr.mxu0 0.0
      %2623 = vmatpush1.msra.mxu0 0.0
      %2624 = vmatprep.subr.mxu0 0.0
      %2625 = vmatpush1.msra.mxu0 0.0
      %2626 = vmatprep.mubr.f32.mxu0 0.0
      %2627 = vmatmul.mubr.f32.gmra.mrb[0].mxu0 %v2557
      %v2628 = vpop.f32.mrb[0].mxu0
      %v2629 = vadd.f32 0.0, %v2628
      %v2630 = vpop.f32.mrb[0].mxu0
      %2631 = vmatprep.mubr.f32.mxu0 0.0
      %2632 = vmatmul.mubr.f32.gmra.mrb[0].mxu0 %v2560
      %v2633 = vpop.f32.mrb[0].mxu0
      %v2634 = vadd.f32 0.0, %v2633
      %v2635 = vpop.f32.mrb[0].mxu0
      %2636 = vdwg.mxu0
      %v2637 = vsel %vm855, %v2629, 0.0
      %2638 = vadd.xlane.f32.xlu0 %v2637
      %v2639 = vpop.xlane.xlu0 %2638
      %v2640 = vsel %vm855, %v2634, 0.0
      %2641 = vadd.xlane.f32.xlu0 %v2640
      %v2642 = vpop.xlane.xlu0 %2641
      %v2643 = vmul.f32 %v2639, %v880
      %v2644 = vmul.f32 %v2642, %v880
      %v2645 = vsub.f32 %v2629, %v2643
      %v2646 = vsub.f32 %v2634, %v2644
      %v2647 = vmul.f32 %v2645, %v2645
      %v2648 = vmul.f32 %v2646, %v2646
      %v2649 = vsel %vm855, %v2647, 0.0
      %2650 = vadd.xlane.f32.xlu0 %v2649
      %v2651 = vpop.xlane.xlu0 %2650
      %v2652 = vsel %vm855, %v2648, 0.0
      %2653 = vadd.xlane.f32.xlu0 %v2652
      %v2654 = vpop.xlane.xlu0 %2653
      %v2655 = vmul.f32 %v2651, %v880
      %v2656 = vmul.f32 %v2654, %v880
      %v2657 = vadd.f32 %v2655, 1e-05
      %v2658 = vadd.f32 %v2656, 1e-05
      %v2659 = vrsqrt.pop %v2657
      %v2660 = vrsqrt.pop %v2658
      %v2661 = vmul.f32 %v2645, %v2659
      %v2662 = vmul.f32 %v2646, %v2660
      %v2663 = vlaneseq
      %v2664 = vshrl.u32 %v2663, 7
      %v2665 = vsub.s32 2, %v2664
      %v2666 = vrot.slane %v846, %v2665
      %v2667 = vmul.f32 %v2661, %v2666
      %v2668 = vmul.f32 %v2662, %v2666
      %v2669 = vlaneseq
      %v2670 = vshrl.u32 %v2669, 7
      %v2671 = vsub.s32 3, %v2670
      %v2672 = vrot.slane %v846, %v2671
      %v2673 = vadd.f32 %v2667, %v2672
      %v2674 = vadd.f32 %v2668, %v2672
      %v2675 = vld [vmem:[%s3] sm:$0xff]
      %v2676 = vld [vmem:[%s3 + $0x8] sm:$0xff]
      %v2677 = vld [vmem:[%s3 + $0x10] sm:$0xff]
      %v2678 = vld [vmem:[%s3 + $0x18] sm:$0xff]
      %v2679 = vld [vmem:[%s4] sm:$0x1]
      %v2681 = vlaneseq
      %v2682 = vshrl.u32 %v2681, 7
      %v2683 = vsub.s32 0, %v2682
      %v2684 = vrot.slane %v2679, %v2683
      %v2687 = vsel %vm855, %v2673, 0
      %v2690 = vsel %vm855, %v2674, 0
      %2692 = vmatprep.subr.mxu0 0.0
      %2693 = vmatpush1.msra.mxu0 %v2675
      %2694 = vmatprep.subr.mxu0 0.0
      %2695 = vmatpush1.msra.mxu0 %v2676
      %2696 = vmatprep.subr.mxu0 0.0
      %2697 = vmatpush1.msra.mxu0 %v2677
      %2698 = vmatprep.subr.mxu0 0.0
      %2699 = vmatpush1.msra.mxu0 %v2678
      %2700 = vmatprep.subr.mxu0 0.0
      %2701 = vmatpush1.msra.mxu0 0.0
      %2702 = vmatprep.subr.mxu0 0.0
      %2703 = vmatpush1.msra.mxu0 0.0
      %2704 = vmatprep.subr.mxu0 0.0
      %2705 = vmatpush1.msra.mxu0 0.0
      %2706 = vmatprep.subr.mxu0 0.0
      %2707 = vmatpush1.msra.mxu0 0.0
      %2708 = vmatprep.subr.mxu0 0.0
      %2709 = vmatpush1.msra.mxu0 0.0
      %2710 = vmatprep.subr.mxu0 0.0
      %2711 = vmatpush1.msra.mxu0 0.0
      %2712 = vmatprep.subr.mxu0 0.0
      %2713 = vmatpush1.msra.mxu0 0.0
      %2714 = vmatprep.subr.mxu0 0.0
      %2715 = vmatpush1.msra.mxu0 0.0
      %2716 = vmatprep.subr.mxu0 0.0
      %2717 = vmatpush1.msra.mxu0 0.0
      %2718 = vmatprep.subr.mxu0 0.0
      %2719 = vmatpush1.msra.mxu0 0.0
      %2720 = vmatprep.subr.mxu0 0.0
      %2721 = vmatpush1.msra.mxu0 0.0
      %2722 = vmatprep.subr.mxu0 0.0
      %2723 = vmatpush1.msra.mxu0 0.0
      %2724 = vmatprep.subr.mxu0 0.0
      %2725 = vmatpush1.msra.mxu0 0.0
      %2726 = vmatprep.subr.mxu0 0.0
      %2727 = vmatpush1.msra.mxu0 0.0
      %2728 = vmatprep.subr.mxu0 0.0
      %2729 = vmatpush1.msra.mxu0 0.0
      %2730 = vmatprep.subr.mxu0 0.0
      %2731 = vmatpush1.msra.mxu0 0.0
      %2732 = vmatprep.subr.mxu0 0.0
      %2733 = vmatpush1.msra.mxu0 0.0
      %2734 = vmatprep.subr.mxu0 0.0
      %2735 = vmatpush1.msra.mxu0 0.0
      %2736 = vmatprep.subr.mxu0 0.0
      %2737 = vmatpush1.msra.mxu0 0.0
      %2738 = vmatprep.subr.mxu0 0.0
      %2739 = vmatpush1.msra.mxu0 0.0
      %2740 = vmatprep.subr.mxu0 0.0
      %2741 = vmatpush1.msra.mxu0 0.0
      %2742 = vmatprep.subr.mxu0 0.0
      %2743 = vmatpush1.msra.mxu0 0.0
      %2744 = vmatprep.subr.mxu0 0.0
      %2745 = vmatpush1.msra.mxu0 0.0
      %2746 = vmatprep.subr.mxu0 0.0
      %2747 = vmatpush1.msra.mxu0 0.0
      %2748 = vmatprep.subr.mxu0 0.0
      %2749 = vmatpush1.msra.mxu0 0.0
      %2750 = vmatprep.subr.mxu0 0.0
      %2751 = vmatpush1.msra.mxu0 0.0
      %2752 = vmatprep.subr.mxu0 0.0
      %2753 = vmatpush1.msra.mxu0 0.0
      %2754 = vmatprep.subr.mxu0 0.0
      %2755 = vmatpush1.msra.mxu0 0.0
      %2756 = vmatprep.mubr.f32.mxu0 0.0
      %2757 = vmatmul.mubr.f32.gmra.mrb[0].mxu0 %v2687
      %v2758 = vpop.f32.mrb[0].mxu0
      %v2759 = vadd.f32 %v2684, %v2758
      %v2760 = vpop.f32.mrb[0].mxu0
      %2761 = vmatprep.mubr.f32.mxu0 0.0
      %2762 = vmatmul.mubr.f32.gmra.mrb[0].mxu0 %v2690
      %v2763 = vpop.f32.mrb[0].mxu0
      %v2764 = vadd.f32 %v2684, %v2763
      %v2765 = vpop.f32.mrb[0].mxu0
      %2766 = vdwg.mxu0
      %v2767 = vmul.f32 %v2759, %v2759
      %v2768 = vmul.f32 %v2764, %v2764
      %v2769 = vld [vmem:[%s26] sm:$0xff]
      %v2770 = vld [vmem:[%s26 + $0x8] sm:$0xff]
      %v2771 = vld [vmem:[%s26 + $0x10] sm:$0xff]
      %v2772 = vld [vmem:[%s26 + $0x18] sm:$0xff]
      %v2774 = vsel %vm855, %v2767, 0
      %v2777 = vsel %vm855, %v2768, 0
      %2779 = vmatprep.subr.mxu0 0.0
      %2780 = vmatpush1.msra.mxu0 %v2769
      %2781 = vmatprep.subr.mxu0 0.0
      %2782 = vmatpush1.msra.mxu0 %v2770
      %2783 = vmatprep.subr.mxu0 0.0
      %2784 = vmatpush1.msra.mxu0 %v2771
      %2785 = vmatprep.subr.mxu0 0.0
      %2786 = vmatpush1.msra.mxu0 %v2772
      %2787 = vmatprep.subr.mxu0 0.0
      %2788 = vmatpush1.msra.mxu0 0.0
      %2789 = vmatprep.subr.mxu0 0.0
      %2790 = vmatpush1.msra.mxu0 0.0
      %2791 = vmatprep.subr.mxu0 0.0
      %2792 = vmatpush1.msra.mxu0 0.0
      %2793 = vmatprep.subr.mxu0 0.0
      %2794 = vmatpush1.msra.mxu0 0.0
      %2795 = vmatprep.subr.mxu0 0.0
      %2796 = vmatpush1.msra.mxu0 0.0
      %2797 = vmatprep.subr.mxu0 0.0
      %2798 = vmatpush1.msra.mxu0 0.0
      %2799 = vmatprep.subr.mxu0 0.0
      %2800 = vmatpush1.msra.mxu0 0.0
      %2801 = vmatprep.subr.mxu0 0.0
      %2802 = vmatpush1.msra.mxu0 0.0
      %2803 = vmatprep.subr.mxu0 0.0
      %2804 = vmatpush1.msra.mxu0 0.0
      %2805 = vmatprep.subr.mxu0 0.0
      %2806 = vmatpush1.msra.mxu0 0.0
      %2807 = vmatprep.subr.mxu0 0.0
      %2808 = vmatpush1.msra.mxu0 0.0
      %2809 = vmatprep.subr.mxu0 0.0
      %2810 = vmatpush1.msra.mxu0 0.0
      %2811 = vmatprep.subr.mxu0 0.0
      %2812 = vmatpush1.msra.mxu0 0.0
      %2813 = vmatprep.subr.mxu0 0.0
      %2814 = vmatpush1.msra.mxu0 0.0
      %2815 = vmatprep.subr.mxu0 0.0
      %2816 = vmatpush1.msra.mxu0 0.0
      %2817 = vmatprep.subr.mxu0 0.0
      %2818 = vmatpush1.msra.mxu0 0.0
      %2819 = vmatprep.subr.mxu0 0.0
      %2820 = vmatpush1.msra.mxu0 0.0
      %2821 = vmatprep.subr.mxu0 0.0
      %2822 = vmatpush1.msra.mxu0 0.0
      %2823 = vmatprep.subr.mxu0 0.0
      %2824 = vmatpush1.msra.mxu0 0.0
      %2825 = vmatprep.subr.mxu0 0.0
      %2826 = vmatpush1.msra.mxu0 0.0
      %2827 = vmatprep.subr.mxu0 0.0
      %2828 = vmatpush1.msra.mxu0 0.0
      %2829 = vmatprep.subr.mxu0 0.0
      %2830 = vmatpush1.msra.mxu0 0.0
      %2831 = vmatprep.subr.mxu0 0.0
      %2832 = vmatpush1.msra.mxu0 0.0
      %2833 = vmatprep.subr.mxu0 0.0
      %2834 = vmatpush1.msra.mxu0 0.0
      %2835 = vmatprep.subr.mxu0 0.0
      %2836 = vmatpush1.msra.mxu0 0.0
      %2837 = vmatprep.subr.mxu0 0.0
      %2838 = vmatpush1.msra.mxu0 0.0
      %2839 = vmatprep.subr.mxu0 0.0
      %2840 = vmatpush1.msra.mxu0 0.0
      %2841 = vmatprep.subr.mxu0 0.0
      %2842 = vmatpush1.msra.mxu0 0.0
      %2843 = vmatprep.mubr.f32.mxu0 0.0
      %2844 = vmatmul.mubr.f32.gmra.mrb[0].mxu0 %v2774
      %v2845 = vpop.f32.mrb[0].mxu0
      %v2846 = vadd.f32 0.0, %v2845
      %v2847 = vpop.f32.mrb[0].mxu0
      %2848 = vmatprep.mubr.f32.mxu0 0.0
      %2849 = vmatmul.mubr.f32.gmra.mrb[0].mxu0 %v2777
      %v2850 = vpop.f32.mrb[0].mxu0
      %v2851 = vadd.f32 0.0, %v2850
      %v2852 = vpop.f32.mrb[0].mxu0
      %2853 = vdwg.mxu0
      %v2854 = vmax.f32 %v2846, 1e-24
      %v2855 = vmax.f32 %v2851, 1e-24
      %v2856 = vrsqrt.pop %v2854
      %v2857 = vrsqrt.pop %v2855
      %v2858 = vmul.f32 %v2759, %v2856
      %v2859 = vmul.f32 %v2764, %v2857
      %v2860 = vld [vmem:[%s27] sm:$0xff]
      %v2861 = vld [vmem:[%s27 + $0x8] sm:$0xff]
      %v2862 = vld [vmem:[%s27 + $0x10] sm:$0xff]
      %v2863 = vld [vmem:[%s27 + $0x18] sm:$0xff]
      %v2864 = vld [vmem:[%s27 + $0x20] sm:$0xff]
      %v2865 = vld [vmem:[%s27 + $0x28] sm:$0xff]
      %v2866 = vld [vmem:[%s27 + $0x30] sm:$0xff]
      %v2867 = vld [vmem:[%s27 + $0x38] sm:$0xff]
      %v2868 = vmul.f32 %v2858, %v2860
      %v2869 = vmul.f32 %v2859, %v2861
      %v2870 = vmul.f32 %v2858, %v2862
      %v2871 = vmul.f32 %v2859, %v2863
      %v2872 = vmul.f32 %v2858, %v2864
      %v2873 = vmul.f32 %v2859, %v2865
      %v2874 = vmul.f32 %v2858, %v2866
      %v2875 = vmul.f32 %v2859, %v2867
      %2884 = vrot.lane.b32.xlu0 %v2860, 32
      %v2885 = vpop.permute.xlu0 %2884
      %2886 = vrot.lane.b32.xlu0 %v2861, 32
      %v2887 = vpop.permute.xlu0 %2886
      %2888 = vrot.lane.b32.xlu0 %v2862, 32
      %v2889 = vpop.permute.xlu0 %2888
      %2890 = vrot.lane.b32.xlu0 %v2863, 32
      %v2891 = vpop.permute.xlu0 %2890
      %2892 = vrot.lane.b32.xlu0 %v2864, 32
      %v2893 = vpop.permute.xlu0 %2892
      %2894 = vrot.lane.b32.xlu0 %v2865, 32
      %v2895 = vpop.permute.xlu0 %2894
      %2896 = vrot.lane.b32.xlu0 %v2866, 32
      %v2897 = vpop.permute.xlu0 %2896
      %2898 = vrot.lane.b32.xlu0 %v2867, 32
      %v2899 = vpop.permute.xlu0 %2898
      %v2908 = vmul.f32 %v2759, %v2885
      %v2909 = vmul.f32 %v2764, %v2887
      %v2910 = vmul.f32 %v2759, %v2889
      %v2911 = vmul.f32 %v2764, %v2891
      %v2912 = vmul.f32 %v2759, %v2893
      %v2913 = vmul.f32 %v2764, %v2895
      %v2914 = vmul.f32 %v2759, %v2897
      %v2915 = vmul.f32 %v2764, %v2899
      %v2916 = vld [vmem:[%s19] sm:$0xff]
      %v2917 = vld [vmem:[%s19 + $0x8] sm:$0xff]
      %v2918 = vld [vmem:[%s19 + $0x10] sm:$0xff]
      %v2919 = vld [vmem:[%s19 + $0x18] sm:$0xff]
      %v2920 = vld [vmem:[%s19 + $0x20] sm:$0xff]
      %v2921 = vld [vmem:[%s19 + $0x28] sm:$0xff]
      %v2922 = vld [vmem:[%s19 + $0x30] sm:$0xff]
      %v2923 = vld [vmem:[%s19 + $0x38] sm:$0xff]
      %v2925 = vsel %vm855, %v1319, 0
      %v2928 = vsel %vm855, %v1320, 0
      %v2931 = vsel %vm855, %v1321, 0
      %v2934 = vsel %vm855, %v1322, 0
      %v2937 = vsel %vm855, %v1323, 0
      %v2940 = vsel %vm855, %v1324, 0
      %v2943 = vsel %vm855, %v1325, 0
      %v2946 = vsel %vm855, %v1326, 0
      %v2949 = vsel %vm855, %v2868, 0
      %v2952 = vsel %vm855, %v2869, 0
      %v2955 = vsel %vm855, %v2870, 0
      %v2958 = vsel %vm855, %v2871, 0
      %v2961 = vsel %vm855, %v2872, 0
      %v2964 = vsel %vm855, %v2873, 0
      %v2967 = vsel %vm855, %v2874, 0
      %v2970 = vsel %vm855, %v2875, 0
      %2972 = vmatprep.subr.mxu0 0.0
      %2973 = vmatpush1.xpose.msra.mxu0 %v2949
      %2974 = vmatprep.subr.mxu0 0.0
      %2975 = vmatpush1.xpose.msra.mxu0 %v2952
      %2976 = vmatprep.subr.mxu0 0.0
      %2977 = vmatpush1.xpose.msra.mxu0 %v2955
      %2978 = vmatprep.subr.mxu0 0.0
      %2979 = vmatpush1.xpose.msra.mxu0 %v2958
      %2980 = vmatprep.subr.mxu0 0.0
      %2981 = vmatpush1.xpose.msra.mxu0 %v2961
      %2982 = vmatprep.subr.mxu0 0.0
      %2983 = vmatpush1.xpose.msra.mxu0 %v2964
      %2984 = vmatprep.subr.mxu0 0.0
      %2985 = vmatpush1.xpose.msra.mxu0 %v2967
      %2986 = vmatprep.subr.mxu0 0.0
      %2987 = vmatpush1.xpose.msra.mxu0 %v2970
      %2988 = vmatprep.subr.mxu0 0.0
      %2989 = vmatpush1.xpose.msra.mxu0 0.0
      %2990 = vmatprep.subr.mxu0 0.0
      %2991 = vmatpush1.xpose.msra.mxu0 0.0
      %2992 = vmatprep.subr.mxu0 0.0
      %2993 = vmatpush1.xpose.msra.mxu0 0.0
      %2994 = vmatprep.subr.mxu0 0.0
      %2995 = vmatpush1.xpose.msra.mxu0 0.0
      %2996 = vmatprep.subr.mxu0 0.0
      %2997 = vmatpush1.xpose.msra.mxu0 0.0
      %2998 = vmatprep.subr.mxu0 0.0
      %2999 = vmatpush1.xpose.msra.mxu0 0.0
      %3000 = vmatprep.subr.mxu0 0.0
      %3001 = vmatpush1.xpose.msra.mxu0 0.0
      %3002 = vmatprep.subr.mxu0 0.0
      %3003 = vmatpush1.xpose.msra.mxu0 0.0
      %3004 = vmatprep.subr.mxu0 0.0
      %3005 = vmatpush1.xpose.msra.mxu0 0.0
      %3006 = vmatprep.subr.mxu0 0.0
      %3007 = vmatpush1.xpose.msra.mxu0 0.0
      %3008 = vmatprep.subr.mxu0 0.0
      %3009 = vmatpush1.xpose.msra.mxu0 0.0
      %3010 = vmatprep.subr.mxu0 0.0
      %3011 = vmatpush1.xpose.msra.mxu0 0.0
      %3012 = vmatprep.subr.mxu0 0.0
      %3013 = vmatpush1.xpose.msra.mxu0 0.0
      %3014 = vmatprep.subr.mxu0 0.0
      %3015 = vmatpush1.xpose.msra.mxu0 0.0
      %3016 = vmatprep.subr.mxu0 0.0
      %3017 = vmatpush1.xpose.msra.mxu0 0.0
      %3018 = vmatprep.subr.mxu0 0.0
      %3019 = vmatpush1.xpose.msra.mxu0 0.0
      %3020 = vmatprep.subr.mxu0 0.0
      %3021 = vmatpush1.xpose.msra.mxu0 0.0
      %3022 = vmatprep.subr.mxu0 0.0
      %3023 = vmatpush1.xpose.msra.mxu0 0.0
      %3024 = vmatprep.subr.mxu0 0.0
      %3025 = vmatpush1.xpose.msra.mxu0 0.0
      %3026 = vmatprep.subr.mxu0 0.0
      %3027 = vmatpush1.xpose.msra.mxu0 0.0
      %3028 = vmatprep.subr.mxu0 0.0
      %3029 = vmatpush1.xpose.msra.mxu0 0.0
      %3030 = vmatprep.subr.mxu0 0.0
      %3031 = vmatpush1.xpose.msra.mxu0 0.0
      %3032 = vmatprep.subr.mxu0 0.0
      %3033 = vmatpush1.xpose.msra.mxu0 0.0
      %3034 = vmatprep.subr.mxu0 0.0
      %3035 = vmatpush1.xpose.msra.mxu0 0.0
      %3036 = vmatprep.mubr.f32.mxu0 0.0
      %3037 = vmatmul.mubr.f32.gmra.mrb[0].mxu0 %v2925
      %v3038 = vpop.f32.mrb[0].mxu0
      %v3039 = vadd.f32 %v2916, %v3038
      %v3040 = vpop.f32.mrb[0].mxu0
      %3041 = vmatprep.mubr.f32.mxu0 0.0
      %3042 = vmatmul.mubr.f32.gmra.mrb[0].mxu0 %v2928
      %v3043 = vpop.f32.mrb[0].mxu0
      %v3044 = vadd.f32 %v2917, %v3043
      %v3045 = vpop.f32.mrb[0].mxu0
      %3046 = vmatprep.mubr.f32.mxu0 0.0
      %3047 = vmatmul.mubr.f32.gmra.mrb[0].mxu0 %v2931
      %v3048 = vpop.f32.mrb[0].mxu0
      %v3049 = vadd.f32 %v2918, %v3048
      %v3050 = vpop.f32.mrb[0].mxu0
      %3051 = vmatprep.mubr.f32.mxu0 0.0
      %3052 = vmatmul.mubr.f32.gmra.mrb[0].mxu0 %v2934
      %v3053 = vpop.f32.mrb[0].mxu0
      %v3054 = vadd.f32 %v2919, %v3053
      %v3055 = vpop.f32.mrb[0].mxu0
      %3056 = vmatprep.mubr.f32.mxu0 0.0
      %3057 = vmatmul.mubr.f32.gmra.mrb[0].mxu0 %v2937
      %v3058 = vpop.f32.mrb[0].mxu0
      %v3059 = vadd.f32 %v2920, %v3058
      %v3060 = vpop.f32.mrb[0].mxu0
      %3061 = vmatprep.mubr.f32.mxu0 0.0
      %3062 = vmatmul.mubr.f32.gmra.mrb[0].mxu0 %v2940
      %v3063 = vpop.f32.mrb[0].mxu0
      %v3064 = vadd.f32 %v2921, %v3063
      %v3065 = vpop.f32.mrb[0].mxu0
      %3066 = vmatprep.mubr.f32.mxu0 0.0
      %3067 = vmatmul.mubr.f32.gmra.mrb[0].mxu0 %v2943
      %v3068 = vpop.f32.mrb[0].mxu0
      %v3069 = vadd.f32 %v2922, %v3068
      %v3070 = vpop.f32.mrb[0].mxu0
      %3071 = vmatprep.mubr.f32.mxu0 0.0
      %3072 = vmatmul.mubr.f32.gmra.mrb[0].mxu0 %v2946
      %v3073 = vpop.f32.mrb[0].mxu0
      %v3074 = vadd.f32 %v2923, %v3073
      %v3075 = vpop.f32.mrb[0].mxu0
      %3076 = vdwg.mxu0
      %v3077 = vld [vmem:[#allocation2] sm:$0xff]
      %v3078 = vld [vmem:[#allocation2 + $0x8] sm:$0xff]
      %v3079 = vld [vmem:[#allocation2 + $0x10] sm:$0xff]
      %v3080 = vld [vmem:[#allocation2 + $0x18] sm:$0xff]
      %v3081 = vld [vmem:[#allocation2 + $0x20] sm:$0xff]
      %v3082 = vld [vmem:[#allocation2 + $0x28] sm:$0xff]
      %v3083 = vld [vmem:[#allocation2 + $0x30] sm:$0xff]
      %v3084 = vld [vmem:[#allocation2 + $0x38] sm:$0xff]
      %v3085 = vmul.f32 %v1319, %v3077
      %v3086 = vmul.f32 %v1320, %v3078
      %v3087 = vmul.f32 %v1321, %v3079
      %v3088 = vmul.f32 %v1322, %v3080
      %v3089 = vmul.f32 %v1323, %v3081
      %v3090 = vmul.f32 %v1324, %v3082
      %v3091 = vmul.f32 %v1325, %v3083
      %v3092 = vmul.f32 %v1326, %v3084
      %v3093 = vld [vmem:[#allocation2 + $0x40] sm:$0xff]
      %v3094 = vld [vmem:[#allocation2 + $0x48] sm:$0xff]
      %v3095 = vld [vmem:[#allocation2 + $0x50] sm:$0xff]
      %v3096 = vld [vmem:[#allocation2 + $0x58] sm:$0xff]
      %v3097 = vld [vmem:[#allocation2 + $0x60] sm:$0xff]
      %v3098 = vld [vmem:[#allocation2 + $0x68] sm:$0xff]
      %v3099 = vld [vmem:[#allocation2 + $0x70] sm:$0xff]
      %v3100 = vld [vmem:[#allocation2 + $0x78] sm:$0xff]
      %v3101 = vmul.f32 %v1319, %v3093
      %v3102 = vmul.f32 %v1320, %v3094
      %v3103 = vmul.f32 %v1321, %v3095
      %v3104 = vmul.f32 %v1322, %v3096
      %v3105 = vmul.f32 %v1323, %v3097
      %v3106 = vmul.f32 %v1324, %v3098
      %v3107 = vmul.f32 %v1325, %v3099
      %v3108 = vmul.f32 %v1326, %v3100
      %v3109 = vld [vmem:[#allocation2 + $0x80] sm:$0xff]
      %v3110 = vld [vmem:[#allocation2 + $0x88] sm:$0xff]
      %v3111 = vld [vmem:[#allocation2 + $0x90] sm:$0xff]
      %v3112 = vld [vmem:[#allocation2 + $0x98] sm:$0xff]
      %v3113 = vld [vmem:[#allocation2 + $0xa0] sm:$0xff]
      %v3114 = vld [vmem:[#allocation2 + $0xa8] sm:$0xff]
      %v3115 = vld [vmem:[#allocation2 + $0xb0] sm:$0xff]
      %v3116 = vld [vmem:[#allocation2 + $0xb8] sm:$0xff]
      %v3117 = vmul.f32 %v1319, %v3109
      %v3118 = vmul.f32 %v1320, %v3110
      %v3119 = vmul.f32 %v1321, %v3111
      %v3120 = vmul.f32 %v1322, %v3112
      %v3121 = vmul.f32 %v1323, %v3113
      %v3122 = vmul.f32 %v1324, %v3114
      %v3123 = vmul.f32 %v1325, %v3115
      %v3124 = vmul.f32 %v1326, %v3116
      %v3125 = vld [vmem:[#allocation2 + $0xc0] sm:$0xff]
      %v3126 = vld [vmem:[#allocation2 + $0xc8] sm:$0xff]
      %v3127 = vld [vmem:[#allocation2 + $0xd0] sm:$0xff]
      %v3128 = vld [vmem:[#allocation2 + $0xd8] sm:$0xff]
      %v3129 = vld [vmem:[#allocation2 + $0xe0] sm:$0xff]
      %v3130 = vld [vmem:[#allocation2 + $0xe8] sm:$0xff]
      %v3131 = vld [vmem:[#allocation2 + $0xf0] sm:$0xff]
      %v3132 = vld [vmem:[#allocation2 + $0xf8] sm:$0xff]
      %v3133 = vmul.f32 %v1319, %v3125
      %v3134 = vmul.f32 %v1320, %v3126
      %v3135 = vmul.f32 %v1321, %v3127
      %v3136 = vmul.f32 %v1322, %v3128
      %v3137 = vmul.f32 %v1323, %v3129
      %v3138 = vmul.f32 %v1324, %v3130
      %v3139 = vmul.f32 %v1325, %v3131
      %v3140 = vmul.f32 %v1326, %v3132
      %v3141 = vld [vmem:[#allocation2 + $0x100] sm:$0xff]
      %v3142 = vld [vmem:[#allocation2 + $0x108] sm:$0xff]
      %v3143 = vld [vmem:[#allocation2 + $0x110] sm:$0xff]
      %v3144 = vld [vmem:[#allocation2 + $0x118] sm:$0xff]
      %v3145 = vld [vmem:[#allocation2 + $0x120] sm:$0xff]
      %v3146 = vld [vmem:[#allocation2 + $0x128] sm:$0xff]
      %v3147 = vld [vmem:[#allocation2 + $0x130] sm:$0xff]
      %v3148 = vld [vmem:[#allocation2 + $0x138] sm:$0xff]
      %v3149 = vmul.f32 %v1319, %v3141
      %v3150 = vmul.f32 %v1320, %v3142
      %v3151 = vmul.f32 %v1321, %v3143
      %v3152 = vmul.f32 %v1322, %v3144
      %v3153 = vmul.f32 %v1323, %v3145
      %v3154 = vmul.f32 %v1324, %v3146
      %v3155 = vmul.f32 %v1325, %v3147
      %v3156 = vmul.f32 %v1326, %v3148
      %v3157 = vld [vmem:[#allocation2 + $0x140] sm:$0xff]
      %v3158 = vld [vmem:[#allocation2 + $0x148] sm:$0xff]
      %v3159 = vld [vmem:[#allocation2 + $0x150] sm:$0xff]
      %v3160 = vld [vmem:[#allocation2 + $0x158] sm:$0xff]
      %v3161 = vld [vmem:[#allocation2 + $0x160] sm:$0xff]
      %v3162 = vld [vmem:[#allocation2 + $0x168] sm:$0xff]
      %v3163 = vld [vmem:[#allocation2 + $0x170] sm:$0xff]
      %v3164 = vld [vmem:[#allocation2 + $0x178] sm:$0xff]
      %v3165 = vmul.f32 %v1319, %v3157
      %v3166 = vmul.f32 %v1320, %v3158
      %v3167 = vmul.f32 %v1321, %v3159
      %v3168 = vmul.f32 %v1322, %v3160
      %v3169 = vmul.f32 %v1323, %v3161
      %v3170 = vmul.f32 %v1324, %v3162
      %v3171 = vmul.f32 %v1325, %v3163
      %v3172 = vmul.f32 %v1326, %v3164
      %v3173 = vld [vmem:[#allocation2 + $0x180] sm:$0xff]
      %v3174 = vld [vmem:[#allocation2 + $0x188] sm:$0xff]
      %v3175 = vld [vmem:[#allocation2 + $0x190] sm:$0xff]
      %v3176 = vld [vmem:[#allocation2 + $0x198] sm:$0xff]
      %v3177 = vld [vmem:[#allocation2 + $0x1a0] sm:$0xff]
      %v3178 = vld [vmem:[#allocation2 + $0x1a8] sm:$0xff]
      %v3179 = vld [vmem:[#allocation2 + $0x1b0] sm:$0xff]
      %v3180 = vld [vmem:[#allocation2 + $0x1b8] sm:$0xff]
      %v3181 = vmul.f32 %v1319, %v3173
      %v3182 = vmul.f32 %v1320, %v3174
      %v3183 = vmul.f32 %v1321, %v3175
      %v3184 = vmul.f32 %v1322, %v3176
      %v3185 = vmul.f32 %v1323, %v3177
      %v3186 = vmul.f32 %v1324, %v3178
      %v3187 = vmul.f32 %v1325, %v3179
      %v3188 = vmul.f32 %v1326, %v3180
      %v3189 = vld [vmem:[#allocation2 + $0x1c0] sm:$0xff]
      %v3190 = vld [vmem:[#allocation2 + $0x1c8] sm:$0xff]
      %v3191 = vld [vmem:[#allocation2 + $0x1d0] sm:$0xff]
      %v3192 = vld [vmem:[#allocation2 + $0x1d8] sm:$0xff]
      %v3193 = vld [vmem:[#allocation2 + $0x1e0] sm:$0xff]
      %v3194 = vld [vmem:[#allocation2 + $0x1e8] sm:$0xff]
      %v3195 = vld [vmem:[#allocation2 + $0x1f0] sm:$0xff]
      %v3196 = vld [vmem:[#allocation2 + $0x1f8] sm:$0xff]
      %v3197 = vmul.f32 %v1319, %v3189
      %v3198 = vmul.f32 %v1320, %v3190
      %v3199 = vmul.f32 %v1321, %v3191
      %v3200 = vmul.f32 %v1322, %v3192
      %v3201 = vmul.f32 %v1323, %v3193
      %v3202 = vmul.f32 %v1324, %v3194
      %v3203 = vmul.f32 %v1325, %v3195
      %v3204 = vmul.f32 %v1326, %v3196
      %v3205 = vld [vmem:[#allocation2 + $0x200] sm:$0xff]
      %v3206 = vld [vmem:[#allocation2 + $0x208] sm:$0xff]
      %v3207 = vld [vmem:[#allocation2 + $0x210] sm:$0xff]
      %v3208 = vld [vmem:[#allocation2 + $0x218] sm:$0xff]
      %v3209 = vld [vmem:[#allocation2 + $0x220] sm:$0xff]
      %v3210 = vld [vmem:[#allocation2 + $0x228] sm:$0xff]
      %v3211 = vld [vmem:[#allocation2 + $0x230] sm:$0xff]
      %v3212 = vld [vmem:[#allocation2 + $0x238] sm:$0xff]
      %v3213 = vmul.f32 %v1319, %v3205
      %v3214 = vmul.f32 %v1320, %v3206
      %v3215 = vmul.f32 %v1321, %v3207
      %v3216 = vmul.f32 %v1322, %v3208
      %v3217 = vmul.f32 %v1323, %v3209
      %v3218 = vmul.f32 %v1324, %v3210
      %v3219 = vmul.f32 %v1325, %v3211
      %v3220 = vmul.f32 %v1326, %v3212
      %3229 = vrot.lane.b32.xlu0 %v3101, 32
      %v3230 = vpop.permute.xlu0 %3229
      %3231 = vrot.lane.b32.xlu0 %v3102, 32
      %v3232 = vpop.permute.xlu0 %3231
      %3233 = vrot.lane.b32.xlu0 %v3103, 32
      %v3234 = vpop.permute.xlu0 %3233
      %3235 = vrot.lane.b32.xlu0 %v3104, 32
      %v3236 = vpop.permute.xlu0 %3235
      %3237 = vrot.lane.b32.xlu0 %v3105, 32
      %v3238 = vpop.permute.xlu0 %3237
      %3239 = vrot.lane.b32.xlu0 %v3106, 32
      %v3240 = vpop.permute.xlu0 %3239
      %3241 = vrot.lane.b32.xlu0 %v3107, 32
      %v3242 = vpop.permute.xlu0 %3241
      %3243 = vrot.lane.b32.xlu0 %v3108, 32
      %v3244 = vpop.permute.xlu0 %3243
      %3261 = vrot.lane.b32.xlu0 %v3117, 64
      %v3262 = vpop.permute.xlu0 %3261
      %3263 = vrot.lane.b32.xlu0 %v3118, 64
      %v3264 = vpop.permute.xlu0 %3263
      %3265 = vrot.lane.b32.xlu0 %v3119, 64
      %v3266 = vpop.permute.xlu0 %3265
      %3267 = vrot.lane.b32.xlu0 %v3120, 64
      %v3268 = vpop.permute.xlu0 %3267
      %3269 = vrot.lane.b32.xlu0 %v3121, 64
      %v3270 = vpop.permute.xlu0 %3269
      %3271 = vrot.lane.b32.xlu0 %v3122, 64
      %v3272 = vpop.permute.xlu0 %3271
      %3273 = vrot.lane.b32.xlu0 %v3123, 64
      %v3274 = vpop.permute.xlu0 %3273
      %3275 = vrot.lane.b32.xlu0 %v3124, 64
      %v3276 = vpop.permute.xlu0 %3275
      %3293 = vrot.lane.b32.xlu0 %v3133, 96
      %v3294 = vpop.permute.xlu0 %3293
      %3295 = vrot.lane.b32.xlu0 %v3134, 96
      %v3296 = vpop.permute.xlu0 %3295
      %3297 = vrot.lane.b32.xlu0 %v3135, 96
      %v3298 = vpop.permute.xlu0 %3297
      %3299 = vrot.lane.b32.xlu0 %v3136, 96
      %v3300 = vpop.permute.xlu0 %3299
      %3301 = vrot.lane.b32.xlu0 %v3137, 96
      %v3302 = vpop.permute.xlu0 %3301
      %3303 = vrot.lane.b32.xlu0 %v3138, 96
      %v3304 = vpop.permute.xlu0 %3303
      %3305 = vrot.lane.b32.xlu0 %v3139, 96
      %v3306 = vpop.permute.xlu0 %3305
      %3307 = vrot.lane.b32.xlu0 %v3140, 96
      %v3308 = vpop.permute.xlu0 %3307
      %3325 = vrot.lane.b32.xlu0 %v3165, 32
      %v3326 = vpop.permute.xlu0 %3325
      %3327 = vrot.lane.b32.xlu0 %v3166, 32
      %v3328 = vpop.permute.xlu0 %3327
      %3329 = vrot.lane.b32.xlu0 %v3167, 32
      %v3330 = vpop.permute.xlu0 %3329
      %3331 = vrot.lane.b32.xlu0 %v3168, 32
      %v3332 = vpop.permute.xlu0 %3331
      %3333 = vrot.lane.b32.xlu0 %v3169, 32
      %v3334 = vpop.permute.xlu0 %3333
      %3335 = vrot.lane.b32.xlu0 %v3170, 32
      %v3336 = vpop.permute.xlu0 %3335
      %3337 = vrot.lane.b32.xlu0 %v3171, 32
      %v3338 = vpop.permute.xlu0 %3337
      %3339 = vrot.lane.b32.xlu0 %v3172, 32
      %v3340 = vpop.permute.xlu0 %3339
      %3357 = vrot.lane.b32.xlu0 %v3181, 64
      %v3358 = vpop.permute.xlu0 %3357
      %3359 = vrot.lane.b32.xlu0 %v3182, 64
      %v3360 = vpop.permute.xlu0 %3359
      %3361 = vrot.lane.b32.xlu0 %v3183, 64
      %v3362 = vpop.permute.xlu0 %3361
      %3363 = vrot.lane.b32.xlu0 %v3184, 64
      %v3364 = vpop.permute.xlu0 %3363
      %3365 = vrot.lane.b32.xlu0 %v3185, 64
      %v3366 = vpop.permute.xlu0 %3365
      %3367 = vrot.lane.b32.xlu0 %v3186, 64
      %v3368 = vpop.permute.xlu0 %3367
      %3369 = vrot.lane.b32.xlu0 %v3187, 64
      %v3370 = vpop.permute.xlu0 %3369
      %3371 = vrot.lane.b32.xlu0 %v3188, 64
      %v3372 = vpop.permute.xlu0 %3371
      %3389 = vrot.lane.b32.xlu0 %v3197, 96
      %v3390 = vpop.permute.xlu0 %3389
      %3391 = vrot.lane.b32.xlu0 %v3198, 96
      %v3392 = vpop.permute.xlu0 %3391
      %3393 = vrot.lane.b32.xlu0 %v3199, 96
      %v3394 = vpop.permute.xlu0 %3393
      %3395 = vrot.lane.b32.xlu0 %v3200, 96
      %v3396 = vpop.permute.xlu0 %3395
      %3397 = vrot.lane.b32.xlu0 %v3201, 96
      %v3398 = vpop.permute.xlu0 %3397
      %3399 = vrot.lane.b32.xlu0 %v3202, 96
      %v3400 = vpop.permute.xlu0 %3399
      %3401 = vrot.lane.b32.xlu0 %v3203, 96
      %v3402 = vpop.permute.xlu0 %3401
      %3403 = vrot.lane.b32.xlu0 %v3204, 96
      %v3404 = vpop.permute.xlu0 %3403
      %v3413 = vsel %vm855, %v3085, %v3230
      %v3414 = vsel %vm855, %v3086, %v3232
      %v3415 = vsel %vm855, %v3087, %v3234
      %v3416 = vsel %vm855, %v3088, %v3236
      %v3417 = vsel %vm855, %v3089, %v3238
      %v3418 = vsel %vm855, %v3090, %v3240
      %v3419 = vsel %vm855, %v3091, %v3242
      %v3420 = vsel %vm855, %v3092, %v3244
      %v3421 = vsel %vm1141, %v3413, %v3262
      %v3422 = vsel %vm1141, %v3414, %v3264
      %v3423 = vsel %vm1141, %v3415, %v3266
      %v3424 = vsel %vm1141, %v3416, %v3268
      %v3425 = vsel %vm1141, %v3417, %v3270
      %v3426 = vsel %vm1141, %v3418, %v3272
      %v3427 = vsel %vm1141, %v3419, %v3274
      %v3428 = vsel %vm1141, %v3420, %v3276
      %vm3429 = vcmask 785408
      %v3430 = vsel %vm3429, %v3421, %v3294
      %v3431 = vsel %vm3429, %v3422, %v3296
      %v3432 = vsel %vm3429, %v3423, %v3298
      %v3433 = vsel %vm3429, %v3424, %v3300
      %v3434 = vsel %vm3429, %v3425, %v3302
      %v3435 = vsel %vm3429, %v3426, %v3304
      %v3436 = vsel %vm3429, %v3427, %v3306
      %v3437 = vsel %vm3429, %v3428, %v3308
      %v3438 = vsel %vm855, %v3149, %v3326
      %v3439 = vsel %vm855, %v3150, %v3328
      %v3440 = vsel %vm855, %v3151, %v3330
      %v3441 = vsel %vm855, %v3152, %v3332
      %v3442 = vsel %vm855, %v3153, %v3334
      %v3443 = vsel %vm855, %v3154, %v3336
      %v3444 = vsel %vm855, %v3155, %v3338
      %v3445 = vsel %vm855, %v3156, %v3340
      %v3446 = vsel %vm1141, %v3438, %v3358
      %v3447 = vsel %vm1141, %v3439, %v3360
      %v3448 = vsel %vm1141, %v3440, %v3362
      %v3449 = vsel %vm1141, %v3441, %v3364
      %v3450 = vsel %vm1141, %v3442, %v3366
      %v3451 = vsel %vm1141, %v3443, %v3368
      %v3452 = vsel %vm1141, %v3444, %v3370
      %v3453 = vsel %vm1141, %v3445, %v3372
      %v3454 = vsel %vm3429, %v3446, %v3390
      %v3455 = vsel %vm3429, %v3447, %v3392
      %v3456 = vsel %vm3429, %v3448, %v3394
      %v3457 = vsel %vm3429, %v3449, %v3396
      %v3458 = vsel %vm3429, %v3450, %v3398
      %v3459 = vsel %vm3429, %v3451, %v3400
      %v3460 = vsel %vm3429, %v3452, %v3402
      %v3461 = vsel %vm3429, %v3453, %v3404
      %v3462 = vld [vmem:[%s18] sm:$0xff]
      %v3463 = vld [vmem:[%s18 + $0x8] sm:$0xff]
      %v3464 = vld [vmem:[%s18 + $0x10] sm:$0xff]
      %v3465 = vld [vmem:[%s18 + $0x18] sm:$0xff]
      %v3466 = vld [vmem:[%s18 + $0x20] sm:$0xff]
      %v3467 = vld [vmem:[%s18 + $0x28] sm:$0xff]
      %v3468 = vld [vmem:[%s18 + $0x30] sm:$0xff]
      %v3469 = vld [vmem:[%s18 + $0x38] sm:$0xff]
      %v3470 = vld [vmem:[%s21] sm:$0xff]
      %v3471 = vld [vmem:[%s21 + $0x8] sm:$0xff]
      %v3472 = vld [vmem:[%s21 + $0x10] sm:$0xff]
      %v3473 = vld [vmem:[%s21 + $0x18] sm:$0xff]
      %v3474 = vld [vmem:[%s21 + $0x20] sm:$0xff]
      %v3475 = vld [vmem:[%s21 + $0x28] sm:$0xff]
      %v3476 = vld [vmem:[%s21 + $0x30] sm:$0xff]
      %v3477 = vld [vmem:[%s21 + $0x38] sm:$0xff]
      %v3478 = vld [vmem:[%s21 + $0x40] sm:$0xff]
      %v3479 = vld [vmem:[%s21 + $0x48] sm:$0xff]
      %v3480 = vld [vmem:[%s21 + $0x50] sm:$0xff]
      %v3481 = vld [vmem:[%s21 + $0x58] sm:$0xff]
      %v3482 = vld [vmem:[%s21 + $0x60] sm:$0xff]
      %v3483 = vld [vmem:[%s21 + $0x68] sm:$0xff]
      %v3484 = vld [vmem:[%s21 + $0x70] sm:$0xff]
      %v3485 = vld [vmem:[%s21 + $0x78] sm:$0xff]
      %v3486 = vld [vmem:[%s21 + $0x80] sm:$0xff]
      %v3487 = vld [vmem:[%s21 + $0x88] sm:$0xff]
      %v3488 = vld [vmem:[%s21 + $0x90] sm:$0xff]
      %v3489 = vld [vmem:[%s21 + $0x98] sm:$0xff]
      %v3490 = vld [vmem:[%s21 + $0xa0] sm:$0xff]
      %v3491 = vld [vmem:[%s21 + $0xa8] sm:$0xff]
      %v3492 = vld [vmem:[%s21 + $0xb0] sm:$0xff]
      %v3493 = vld [vmem:[%s21 + $0xb8] sm:$0xff]
      %v3494 = vld [vmem:[%s21 + $0xc0] sm:$0xff]
      %v3495 = vld [vmem:[%s21 + $0xc8] sm:$0xff]
      %v3496 = vld [vmem:[%s21 + $0xd0] sm:$0xff]
      %v3497 = vld [vmem:[%s21 + $0xd8] sm:$0xff]
      %v3498 = vld [vmem:[%s21 + $0xe0] sm:$0xff]
      %v3499 = vld [vmem:[%s21 + $0xe8] sm:$0xff]
      %v3500 = vld [vmem:[%s21 + $0xf0] sm:$0xff]
      %v3501 = vld [vmem:[%s21 + $0xf8] sm:$0xff]
      %v3502 = vld [vmem:[%s21 + $0x100] sm:$0xff]
      %v3503 = vld [vmem:[%s21 + $0x108] sm:$0xff]
      %v3504 = vld [vmem:[%s21 + $0x110] sm:$0xff]
      %v3505 = vld [vmem:[%s21 + $0x118] sm:$0xff]
      %v3507 = vsel %vm855, %v3213, 0
      %v3510 = vsel %vm855, %v3214, 0
      %v3513 = vsel %vm855, %v3215, 0
      %v3516 = vsel %vm855, %v3216, 0
      %v3519 = vsel %vm855, %v3217, 0
      %v3522 = vsel %vm855, %v3218, 0
      %v3525 = vsel %vm855, %v3219, 0
      %v3528 = vsel %vm855, %v3220, 0
      %3530 = vmatprep.subr.mxu0 0.0
      %3531 = vmatpush1.msra.mxu0 %v3470
      %3532 = vmatprep.subr.mxu0 0.0
      %3533 = vmatpush1.msra.mxu0 %v3471
      %3534 = vmatprep.subr.mxu0 0.0
      %3535 = vmatpush1.msra.mxu0 %v3472
      %3536 = vmatprep.subr.mxu0 0.0
      %3537 = vmatpush1.msra.mxu0 %v3473
      %3538 = vmatprep.subr.mxu0 0.0
      %3539 = vmatpush1.msra.mxu0 %v3474
      %3540 = vmatprep.subr.mxu0 0.0
      %3541 = vmatpush1.msra.mxu0 %v3475
      %3542 = vmatprep.subr.mxu0 0.0
      %3543 = vmatpush1.msra.mxu0 %v3476
      %3544 = vmatprep.subr.mxu0 0.0
      %3545 = vmatpush1.msra.mxu0 %v3477
      %3546 = vmatprep.subr.mxu0 0.0
      %3547 = vmatpush1.msra.mxu0 %v3478
      %3548 = vmatprep.subr.mxu0 0.0
      %3549 = vmatpush1.msra.mxu0 %v3479
      %3550 = vmatprep.subr.mxu0 0.0
      %3551 = vmatpush1.msra.mxu0 %v3480
      %3552 = vmatprep.subr.mxu0 0.0
      %3553 = vmatpush1.msra.mxu0 %v3481
      %3554 = vmatprep.subr.mxu0 0.0
      %3555 = vmatpush1.msra.mxu0 %v3482
      %3556 = vmatprep.subr.mxu0 0.0
      %3557 = vmatpush1.msra.mxu0 %v3483
      %3558 = vmatprep.subr.mxu0 0.0
      %3559 = vmatpush1.msra.mxu0 %v3484
      %3560 = vmatprep.subr.mxu0 0.0
      %3561 = vmatpush1.msra.mxu0 %v3485
      %3562 = vmatprep.subr.mxu0 0.0
      %3563 = vmatpush1.msra.mxu0 %v3486
      %3564 = vmatprep.subr.mxu0 0.0
      %3565 = vmatpush1.msra.mxu0 %v3487
      %3566 = vmatprep.subr.mxu0 0.0
      %3567 = vmatpush1.msra.mxu0 %v3488
      %3568 = vmatprep.subr.mxu0 0.0
      %3569 = vmatpush1.msra.mxu0 %v3489
      %3570 = vmatprep.subr.mxu0 0.0
      %3571 = vmatpush1.msra.mxu0 %v3490
      %3572 = vmatprep.subr.mxu0 0.0
      %3573 = vmatpush1.msra.mxu0 %v3491
      %3574 = vmatprep.subr.mxu0 0.0
      %3575 = vmatpush1.msra.mxu0 %v3492
      %3576 = vmatprep.subr.mxu0 0.0
      %3577 = vmatpush1.msra.mxu0 %v3493
      %3578 = vmatprep.subr.mxu0 0.0
      %3579 = vmatpush1.msra.mxu0 %v3494
      %3580 = vmatprep.subr.mxu0 0.0
      %3581 = vmatpush1.msra.mxu0 %v3495
      %3582 = vmatprep.subr.mxu0 0.0
      %3583 = vmatpush1.msra.mxu0 %v3496
      %3584 = vmatprep.subr.mxu0 0.0
      %3585 = vmatpush1.msra.mxu0 %v3497
      %3586 = vmatprep.subr.mxu0 0.0
      %3587 = vmatpush1.msra.mxu0 %v3498
      %3588 = vmatprep.subr.mxu0 0.0
      %3589 = vmatpush1.msra.mxu0 %v3499
      %3590 = vmatprep.subr.mxu0 0.0
      %3591 = vmatpush1.msra.mxu0 %v3500
      %3592 = vmatprep.subr.mxu0 0.0
      %3593 = vmatpush1.msra.mxu0 %v3501
      %3594 = vmatprep.mubr.f32.mxu0 %v3454
      %3595 = vmatmul.mubr.f32.gmra.mrb[0].mxu0 %v3430
      %v3596 = vpop.f32.mrb[0].mxu0
      %v3597 = vadd.f32 0.0, %v3596
      %v3598 = vpop.f32.mrb[0].mxu0
      %3599 = vmatprep.mubr.f32.mxu0 %v3455
      %3600 = vmatmul.mubr.f32.gmra.mrb[0].mxu0 %v3431
      %v3601 = vpop.f32.mrb[0].mxu0
      %v3602 = vadd.f32 0.0, %v3601
      %v3603 = vpop.f32.mrb[0].mxu0
      %3604 = vmatprep.mubr.f32.mxu0 %v3456
      %3605 = vmatmul.mubr.f32.gmra.mrb[0].mxu0 %v3432
      %v3606 = vpop.f32.mrb[0].mxu0
      %v3607 = vadd.f32 0.0, %v3606
      %v3608 = vpop.f32.mrb[0].mxu0
      %3609 = vmatprep.mubr.f32.mxu0 %v3457
      %3610 = vmatmul.mubr.f32.gmra.mrb[0].mxu0 %v3433
      %v3611 = vpop.f32.mrb[0].mxu0
      %v3612 = vadd.f32 0.0, %v3611
      %v3613 = vpop.f32.mrb[0].mxu0
      %3614 = vmatprep.mubr.f32.mxu0 %v3458
      %3615 = vmatmul.mubr.f32.gmra.mrb[0].mxu0 %v3434
      %v3616 = vpop.f32.mrb[0].mxu0
      %v3617 = vadd.f32 0.0, %v3616
      %v3618 = vpop.f32.mrb[0].mxu0
      %3619 = vmatprep.mubr.f32.mxu0 %v3459
      %3620 = vmatmul.mubr.f32.gmra.mrb[0].mxu0 %v3435
      %v3621 = vpop.f32.mrb[0].mxu0
      %v3622 = vadd.f32 0.0, %v3621
      %v3623 = vpop.f32.mrb[0].mxu0
      %3624 = vmatprep.mubr.f32.mxu0 %v3460
      %3625 = vmatmul.mubr.f32.gmra.mrb[0].mxu0 %v3436
      %v3626 = vpop.f32.mrb[0].mxu0
      %v3627 = vadd.f32 0.0, %v3626
      %v3628 = vpop.f32.mrb[0].mxu0
      %3629 = vmatprep.mubr.f32.mxu0 %v3461
      %3630 = vmatmul.mubr.f32.gmra.mrb[0].mxu0 %v3437
      %v3631 = vpop.f32.mrb[0].mxu0
      %v3632 = vadd.f32 0.0, %v3631
      %v3633 = vpop.f32.mrb[0].mxu0
      %3634 = vdwg.mxu0
      %3635 = vmatprep.subr.mxu0 0.0
      %3636 = vmatpush1.msra.mxu0 %v3502
      %3637 = vmatprep.subr.mxu0 0.0
      %3638 = vmatpush1.msra.mxu0 %v3503
      %3639 = vmatprep.subr.mxu0 0.0
      %3640 = vmatpush1.msra.mxu0 %v3504
      %3641 = vmatprep.subr.mxu0 0.0
      %3642 = vmatpush1.msra.mxu0 %v3505
      %3643 = vmatprep.subr.mxu0 0.0
      %3644 = vmatpush1.msra.mxu0 0.0
      %3645 = vmatprep.subr.mxu0 0.0
      %3646 = vmatpush1.msra.mxu0 0.0
      %3647 = vmatprep.subr.mxu0 0.0
      %3648 = vmatpush1.msra.mxu0 0.0
      %3649 = vmatprep.subr.mxu0 0.0
      %3650 = vmatpush1.msra.mxu0 0.0
      %3651 = vmatprep.subr.mxu0 0.0
      %3652 = vmatpush1.msra.mxu0 0.0
      %3653 = vmatprep.subr.mxu0 0.0
      %3654 = vmatpush1.msra.mxu0 0.0
      %3655 = vmatprep.subr.mxu0 0.0
      %3656 = vmatpush1.msra.mxu0 0.0
      %3657 = vmatprep.subr.mxu0 0.0
      %3658 = vmatpush1.msra.mxu0 0.0
      %3659 = vmatprep.subr.mxu0 0.0
      %3660 = vmatpush1.msra.mxu0 0.0
      %3661 = vmatprep.subr.mxu0 0.0
      %3662 = vmatpush1.msra.mxu0 0.0
      %3663 = vmatprep.subr.mxu0 0.0
      %3664 = vmatpush1.msra.mxu0 0.0
      %3665 = vmatprep.subr.mxu0 0.0
      %3666 = vmatpush1.msra.mxu0 0.0
      %3667 = vmatprep.subr.mxu0 0.0
      %3668 = vmatpush1.msra.mxu0 0.0
      %3669 = vmatprep.subr.mxu0 0.0
      %3670 = vmatpush1.msra.mxu0 0.0
      %3671 = vmatprep.subr.mxu0 0.0
      %3672 = vmatpush1.msra.mxu0 0.0
      %3673 = vmatprep.subr.mxu0 0.0
      %3674 = vmatpush1.msra.mxu0 0.0
      %3675 = vmatprep.subr.mxu0 0.0
      %3676 = vmatpush1.msra.mxu0 0.0
      %3677 = vmatprep.subr.mxu0 0.0
      %3678 = vmatpush1.msra.mxu0 0.0
      %3679 = vmatprep.subr.mxu0 0.0
      %3680 = vmatpush1.msra.mxu0 0.0
      %3681 = vmatprep.subr.mxu0 0.0
      %3682 = vmatpush1.msra.mxu0 0.0
      %3683 = vmatprep.subr.mxu0 0.0
      %3684 = vmatpush1.msra.mxu0 0.0
      %3685 = vmatprep.subr.mxu0 0.0
      %3686 = vmatpush1.msra.mxu0 0.0
      %3687 = vmatprep.subr.mxu0 0.0
      %3688 = vmatpush1.msra.mxu0 0.0
      %3689 = vmatprep.subr.mxu0 0.0
      %3690 = vmatpush1.msra.mxu0 0.0
      %3691 = vmatprep.subr.mxu0 0.0
      %3692 = vmatpush1.msra.mxu0 0.0
      %3693 = vmatprep.subr.mxu0 0.0
      %3694 = vmatpush1.msra.mxu0 0.0
      %3695 = vmatprep.subr.mxu0 0.0
      %3696 = vmatpush1.msra.mxu0 0.0
      %3697 = vmatprep.subr.mxu0 0.0
      %3698 = vmatpush1.msra.mxu0 0.0
      %3699 = vmatprep.mubr.f32.mxu0 0.0
      %3700 = vmatmul.mubr.f32.gmra.mrb[0].mxu0 %v3507
      %v3701 = vpop.f32.mrb[0].mxu0
      %v3702 = vadd.f32 %v3597, %v3701
      %v3703 = vpop.f32.mrb[0].mxu0
      %3704 = vmatprep.mubr.f32.mxu0 0.0
      %3705 = vmatmul.mubr.f32.gmra.mrb[0].mxu0 %v3510
      %v3706 = vpop.f32.mrb[0].mxu0
      %v3707 = vadd.f32 %v3602, %v3706
      %v3708 = vpop.f32.mrb[0].mxu0
      %3709 = vmatprep.mubr.f32.mxu0 0.0
      %3710 = vmatmul.mubr.f32.gmra.mrb[0].mxu0 %v3513
      %v3711 = vpop.f32.mrb[0].mxu0
      %v3712 = vadd.f32 %v3607, %v3711
      %v3713 = vpop.f32.mrb[0].mxu0
      %3714 = vmatprep.mubr.f32.mxu0 0.0
      %3715 = vmatmul.mubr.f32.gmra.mrb[0].mxu0 %v3516
      %v3716 = vpop.f32.mrb[0].mxu0
      %v3717 = vadd.f32 %v3612, %v3716
      %v3718 = vpop.f32.mrb[0].mxu0
      %3719 = vmatprep.mubr.f32.mxu0 0.0
      %3720 = vmatmul.mubr.f32.gmra.mrb[0].mxu0 %v3519
      %v3721 = vpop.f32.mrb[0].mxu0
      %v3722 = vadd.f32 %v3617, %v3721
      %v3723 = vpop.f32.mrb[0].mxu0
      %3724 = vmatprep.mubr.f32.mxu0 0.0
      %3725 = vmatmul.mubr.f32.gmra.mrb[0].mxu0 %v3522
      %v3726 = vpop.f32.mrb[0].mxu0
      %v3727 = vadd.f32 %v3622, %v3726
      %v3728 = vpop.f32.mrb[0].mxu0
      %3729 = vmatprep.mubr.f32.mxu0 0.0
      %3730 = vmatmul.mubr.f32.gmra.mrb[0].mxu0 %v3525
      %v3731 = vpop.f32.mrb[0].mxu0
      %v3732 = vadd.f32 %v3627, %v3731
      %v3733 = vpop.f32.mrb[0].mxu0
      %3734 = vmatprep.mubr.f32.mxu0 0.0
      %3735 = vmatmul.mubr.f32.gmra.mrb[0].mxu0 %v3528
      %v3736 = vpop.f32.mrb[0].mxu0
      %v3737 = vadd.f32 %v3632, %v3736
      %v3738 = vpop.f32.mrb[0].mxu0
      %3739 = vdwg.mxu0
      %v3740 = vadd.f32 %v3462, %v3702
      %v3741 = vadd.f32 %v3463, %v3707
      %v3742 = vadd.f32 %v3464, %v3712
      %v3743 = vadd.f32 %v3465, %v3717
      %v3744 = vadd.f32 %v3466, %v3722
      %v3745 = vadd.f32 %v3467, %v3727
      %v3746 = vadd.f32 %v3468, %v3732
      %v3747 = vadd.f32 %v3469, %v3737
      %vm3748 = vcmask 293888
      %v3749 = vsel %vm3748, %v3740, -inf
      %3750 = vmax.xlane.f32.xlu0 %v3749
      %v3751 = vpop.xlane.xlu0 %3750
      %v3752 = vsel %vm3748, %v3741, -inf
      %3753 = vmax.xlane.f32.xlu0 %v3752
      %v3754 = vpop.xlane.xlu0 %3753
      %v3755 = vsel %vm3748, %v3742, -inf
      %3756 = vmax.xlane.f32.xlu0 %v3755
      %v3757 = vpop.xlane.xlu0 %3756
      %v3758 = vsel %vm3748, %v3743, -inf
      %3759 = vmax.xlane.f32.xlu0 %v3758
      %v3760 = vpop.xlane.xlu0 %3759
      %v3761 = vsel %vm3748, %v3744, -inf
      %3762 = vmax.xlane.f32.xlu0 %v3761
      %v3763 = vpop.xlane.xlu0 %3762
      %v3764 = vsel %vm3748, %v3745, -inf
      %3765 = vmax.xlane.f32.xlu0 %v3764
      %v3766 = vpop.xlane.xlu0 %3765
      %v3767 = vsel %vm3748, %v3746, -inf
      %3768 = vmax.xlane.f32.xlu0 %v3767
      %v3769 = vpop.xlane.xlu0 %3768
      %v3770 = vsel %vm3748, %v3747, -inf
      %3771 = vmax.xlane.f32.xlu0 %v3770
      %v3772 = vpop.xlane.xlu0 %3771
      %v3773 = vsel %vm1141, %v3039, -inf
      %3774 = vmax.xlane.f32.xlu0 %v3773
      %v3775 = vpop.xlane.xlu0 %3774
      %v3776 = vsel %vm1141, %v3044, -inf
      %3777 = vmax.xlane.f32.xlu0 %v3776
      %v3778 = vpop.xlane.xlu0 %3777
      %v3779 = vsel %vm1141, %v3049, -inf
      %3780 = vmax.xlane.f32.xlu0 %v3779
      %v3781 = vpop.xlane.xlu0 %3780
      %v3782 = vsel %vm1141, %v3054, -inf
      %3783 = vmax.xlane.f32.xlu0 %v3782
      %v3784 = vpop.xlane.xlu0 %3783
      %v3785 = vsel %vm1141, %v3059, -inf
      %3786 = vmax.xlane.f32.xlu0 %v3785
      %v3787 = vpop.xlane.xlu0 %3786
      %v3788 = vsel %vm1141, %v3064, -inf
      %3789 = vmax.xlane.f32.xlu0 %v3788
      %v3790 = vpop.xlane.xlu0 %3789
      %v3791 = vsel %vm1141, %v3069, -inf
      %3792 = vmax.xlane.f32.xlu0 %v3791
      %v3793 = vpop.xlane.xlu0 %3792
      %v3794 = vsel %vm1141, %v3074, -inf
      %3795 = vmax.xlane.f32.xlu0 %v3794
      %v3796 = vpop.xlane.xlu0 %3795
      %v3797 = vmax.f32 %v3751, %v3775
      %v3798 = vmax.f32 %v3754, %v3778
      %v3799 = vmax.f32 %v3757, %v3781
      %v3800 = vmax.f32 %v3760, %v3784
      %v3801 = vmax.f32 %v3763, %v3787
      %v3802 = vmax.f32 %v3766, %v3790
      %v3803 = vmax.f32 %v3769, %v3793
      %v3804 = vmax.f32 %v3772, %v3796
      %v3805 = vsub.f32 %v3740, %v3797
      %v3806 = vsub.f32 %v3741, %v3798
      %v3807 = vsub.f32 %v3742, %v3799
      %v3808 = vsub.f32 %v3743, %v3800
      %v3809 = vsub.f32 %v3744, %v3801
      %v3810 = vsub.f32 %v3745, %v3802
      %v3811 = vsub.f32 %v3746, %v3803
      %v3812 = vsub.f32 %v3747, %v3804
      %v3813 = vmul.f32 %v3805, 1.442695
      %v3814 = vpow.pop %v3813
      %v3815 = vmul.f32 %v3806, 1.442695
      %v3816 = vpow.pop %v3815
      %v3817 = vmul.f32 %v3807, 1.442695
      %v3818 = vpow.pop %v3817
      %v3819 = vmul.f32 %v3808, 1.442695
      %v3820 = vpow.pop %v3819
      %v3821 = vmul.f32 %v3809, 1.442695
      %v3822 = vpow.pop %v3821
      %v3823 = vmul.f32 %v3810, 1.442695
      %v3824 = vpow.pop %v3823
      %v3825 = vmul.f32 %v3811, 1.442695
      %v3826 = vpow.pop %v3825
      %v3827 = vmul.f32 %v3812, 1.442695
      %v3828 = vpow.pop %v3827
      %v3829 = vsub.f32 %v3039, %v3797
      %v3830 = vsub.f32 %v3044, %v3798
      %v3831 = vsub.f32 %v3049, %v3799
      %v3832 = vsub.f32 %v3054, %v3800
      %v3833 = vsub.f32 %v3059, %v3801
      %v3834 = vsub.f32 %v3064, %v3802
      %v3835 = vsub.f32 %v3069, %v3803
      %v3836 = vsub.f32 %v3074, %v3804
      %v3837 = vmul.f32 %v3829, 1.442695
      %v3838 = vpow.pop %v3837
      %v3839 = vmul.f32 %v3830, 1.442695
      %v3840 = vpow.pop %v3839
      %v3841 = vmul.f32 %v3831, 1.442695
      %v3842 = vpow.pop %v3841
      %v3843 = vmul.f32 %v3832, 1.442695
      %v3844 = vpow.pop %v3843
      %v3845 = vmul.f32 %v3833, 1.442695
      %v3846 = vpow.pop %v3845
      %v3847 = vmul.f32 %v3834, 1.442695
      %v3848 = vpow.pop %v3847
      %v3849 = vmul.f32 %v3835, 1.442695
      %v3850 = vpow.pop %v3849
      %v3851 = vmul.f32 %v3836, 1.442695
      %v3852 = vpow.pop %v3851
      %3861 = vrot.lane.b32.xlu0 %v3838, 36
      %v3862 = vpop.permute.xlu0 %3861
      %3863 = vrot.lane.b32.xlu0 %v3840, 36
      %v3864 = vpop.permute.xlu0 %3863
      %3865 = vrot.lane.b32.xlu0 %v3842, 36
      %v3866 = vpop.permute.xlu0 %3865
      %3867 = vrot.lane.b32.xlu0 %v3844, 36
      %v3868 = vpop.permute.xlu0 %3867
      %3869 = vrot.lane.b32.xlu0 %v3846, 36
      %v3870 = vpop.permute.xlu0 %3869
      %3871 = vrot.lane.b32.xlu0 %v3848, 36
      %v3872 = vpop.permute.xlu0 %3871
      %3873 = vrot.lane.b32.xlu0 %v3850, 36
      %v3874 = vpop.permute.xlu0 %3873
      %3875 = vrot.lane.b32.xlu0 %v3852, 36
      %v3876 = vpop.permute.xlu0 %3875
      %v3885 = vsel %vm3748, %v3814, %v3862
      %v3886 = vsel %vm3748, %v3816, %v3864
      %v3887 = vsel %vm3748, %v3818, %v3866
      %v3888 = vsel %vm3748, %v3820, %v3868
      %v3889 = vsel %vm3748, %v3822, %v3870
      %v3890 = vsel %vm3748, %v3824, %v3872
      %v3891 = vsel %vm3748, %v3826, %v3874
      %v3892 = vsel %vm3748, %v3828, %v3876
      %v3893 = vld [vmem:[%s23] sm:$0xff]
      %v3894 = vld [vmem:[%s23 + $0x8] sm:$0xff]
      %v3895 = vld [vmem:[%s23 + $0x10] sm:$0xff]
      %v3896 = vld [vmem:[%s23 + $0x18] sm:$0xff]
      %v3897 = vld [vmem:[%s23 + $0x20] sm:$0xff]
      %v3898 = vld [vmem:[%s23 + $0x28] sm:$0xff]
      %v3899 = vld [vmem:[%s23 + $0x30] sm:$0xff]
      %v3900 = vld [vmem:[%s23 + $0x38] sm:$0xff]
      %v3901 = vld [vmem:[%s23 + $0x40] sm:$0xff]
      %v3902 = vld [vmem:[%s23 + $0x48] sm:$0xff]
      %v3903 = vld [vmem:[%s23 + $0x50] sm:$0xff]
      %v3904 = vld [vmem:[%s23 + $0x58] sm:$0xff]
      %v3905 = vld [vmem:[%s23 + $0x60] sm:$0xf]
      %vm3906 = vcmask 818176
      %v3908 = vsel %vm3906, %v3885, 0
      %v3911 = vsel %vm3906, %v3886, 0
      %v3914 = vsel %vm3906, %v3887, 0
      %v3917 = vsel %vm3906, %v3888, 0
      %v3920 = vsel %vm3906, %v3889, 0
      %v3923 = vsel %vm3906, %v3890, 0
      %v3926 = vsel %vm3906, %v3891, 0
      %v3929 = vsel %vm3906, %v3892, 0
      %vm3931 = vcmask 1043456
      %v3933 = vsel %vm3931, %v3905, 0
      %3935 = vmatprep.subr.mxu0 0.0
      %3936 = vmatpush1.msra.mxu0 %v3893
      %3937 = vmatprep.subr.mxu0 0.0
      %3938 = vmatpush1.msra.mxu0 %v3894
      %3939 = vmatprep.subr.mxu0 0.0
      %3940 = vmatpush1.msra.mxu0 %v3895
      %3941 = vmatprep.subr.mxu0 0.0
      %3942 = vmatpush1.msra.mxu0 %v3896
      %3943 = vmatprep.subr.mxu0 0.0
      %3944 = vmatpush1.msra.mxu0 %v3897
      %3945 = vmatprep.subr.mxu0 0.0
      %3946 = vmatpush1.msra.mxu0 %v3898
      %3947 = vmatprep.subr.mxu0 0.0
      %3948 = vmatpush1.msra.mxu0 %v3899
      %3949 = vmatprep.subr.mxu0 0.0
      %3950 = vmatpush1.msra.mxu0 %v3900
      %3951 = vmatprep.subr.mxu0 0.0
      %3952 = vmatpush1.msra.mxu0 %v3901
      %3953 = vmatprep.subr.mxu0 0.0
      %3954 = vmatpush1.msra.mxu0 %v3902
      %3955 = vmatprep.subr.mxu0 0.0
      %3956 = vmatpush1.msra.mxu0 %v3903
      %3957 = vmatprep.subr.mxu0 0.0
      %3958 = vmatpush1.msra.mxu0 %v3904
      %3959 = vmatprep.subr.mxu0 0.0
      %3960 = vmatpush1.msra.mxu0 %v3933
      %3961 = vmatprep.subr.mxu0 0.0
      %3962 = vmatpush1.msra.mxu0 0.0
      %3963 = vmatprep.subr.mxu0 0.0
      %3964 = vmatpush1.msra.mxu0 0.0
      %3965 = vmatprep.subr.mxu0 0.0
      %3966 = vmatpush1.msra.mxu0 0.0
      %3967 = vmatprep.subr.mxu0 0.0
      %3968 = vmatpush1.msra.mxu0 0.0
      %3969 = vmatprep.subr.mxu0 0.0
      %3970 = vmatpush1.msra.mxu0 0.0
      %3971 = vmatprep.subr.mxu0 0.0
      %3972 = vmatpush1.msra.mxu0 0.0
      %3973 = vmatprep.subr.mxu0 0.0
      %3974 = vmatpush1.msra.mxu0 0.0
      %3975 = vmatprep.subr.mxu0 0.0
      %3976 = vmatpush1.msra.mxu0 0.0
      %3977 = vmatprep.subr.mxu0 0.0
      %3978 = vmatpush1.msra.mxu0 0.0
      %3979 = vmatprep.subr.mxu0 0.0
      %3980 = vmatpush1.msra.mxu0 0.0
      %3981 = vmatprep.subr.mxu0 0.0
      %3982 = vmatpush1.msra.mxu0 0.0
      %3983 = vmatprep.subr.mxu0 0.0
      %3984 = vmatpush1.msra.mxu0 0.0
      %3985 = vmatprep.subr.mxu0 0.0
      %3986 = vmatpush1.msra.mxu0 0.0
      %3987 = vmatprep.subr.mxu0 0.0
      %3988 = vmatpush1.msra.mxu0 0.0
      %3989 = vmatprep.subr.mxu0 0.0
      %3990 = vmatpush1.msra.mxu0 0.0
      %3991 = vmatprep.subr.mxu0 0.0
      %3992 = vmatpush1.msra.mxu0 0.0
      %3993 = vmatprep.subr.mxu0 0.0
      %3994 = vmatpush1.msra.mxu0 0.0
      %3995 = vmatprep.subr.mxu0 0.0
      %3996 = vmatpush1.msra.mxu0 0.0
      %3997 = vmatprep.subr.mxu0 0.0
      %3998 = vmatpush1.msra.mxu0 0.0
      %3999 = vmatprep.mubr.f32.mxu0 0.0
      %4000 = vmatmul.mubr.f32.gmra.mrb[0].mxu0 %v3908
      %v4001 = vpop.f32.mrb[0].mxu0
      %v4002 = vadd.f32 0.0, %v4001
      %v4003 = vpop.f32.mrb[0].mxu0
      %4004 = vmatprep.mubr.f32.mxu0 0.0
      %4005 = vmatmul.mubr.f32.gmra.mrb[0].mxu0 %v3911
      %v4006 = vpop.f32.mrb[0].mxu0
      %v4007 = vadd.f32 0.0, %v4006
      %v4008 = vpop.f32.mrb[0].mxu0
      %4009 = vmatprep.mubr.f32.mxu0 0.0
      %4010 = vmatmul.mubr.f32.gmra.mrb[0].mxu0 %v3914
      %v4011 = vpop.f32.mrb[0].mxu0
      %v4012 = vadd.f32 0.0, %v4011
      %v4013 = vpop.f32.mrb[0].mxu0
      %4014 = vmatprep.mubr.f32.mxu0 0.0
      %4015 = vmatmul.mubr.f32.gmra.mrb[0].mxu0 %v3917
      %v4016 = vpop.f32.mrb[0].mxu0
      %v4017 = vadd.f32 0.0, %v4016
      %v4018 = vpop.f32.mrb[0].mxu0
      %4019 = vmatprep.mubr.f32.mxu0 0.0
      %4020 = vmatmul.mubr.f32.gmra.mrb[0].mxu0 %v3920
      %v4021 = vpop.f32.mrb[0].mxu0
      %v4022 = vadd.f32 0.0, %v4021
      %v4023 = vpop.f32.mrb[0].mxu0
      %4024 = vmatprep.mubr.f32.mxu0 0.0
      %4025 = vmatmul.mubr.f32.gmra.mrb[0].mxu0 %v3923
      %v4026 = vpop.f32.mrb[0].mxu0
      %v4027 = vadd.f32 0.0, %v4026
      %v4028 = vpop.f32.mrb[0].mxu0
      %4029 = vmatprep.mubr.f32.mxu0 0.0
      %4030 = vmatmul.mubr.f32.gmra.mrb[0].mxu0 %v3926
      %v4031 = vpop.f32.mrb[0].mxu0
      %v4032 = vadd.f32 0.0, %v4031
      %v4033 = vpop.f32.mrb[0].mxu0
      %4034 = vmatprep.mubr.f32.mxu0 0.0
      %4035 = vmatmul.mubr.f32.gmra.mrb[0].mxu0 %v3929
      %v4036 = vpop.f32.mrb[0].mxu0
      %v4037 = vadd.f32 0.0, %v4036
      %v4038 = vpop.f32.mrb[0].mxu0
      %4039 = vdwg.mxu0
      %v4040 = vrcp.pop %v4002
      %v4041 = vrcp.pop %v4007
      %v4042 = vrcp.pop %v4012
      %v4043 = vrcp.pop %v4017
      %v4044 = vrcp.pop %v4022
      %v4045 = vrcp.pop %v4027
      %v4046 = vrcp.pop %v4032
      %v4047 = vrcp.pop %v4037
      %v4048 = vmul.f32 %v3814, %v4040
      %v4049 = vmul.f32 %v3816, %v4041
      %v4050 = vmul.f32 %v3818, %v4042
      %v4051 = vmul.f32 %v3820, %v4043
      %v4052 = vmul.f32 %v3822, %v4044
      %v4053 = vmul.f32 %v3824, %v4045
      %v4054 = vmul.f32 %v3826, %v4046
      %v4055 = vmul.f32 %v3828, %v4047
      %4064 = vrot.lane.b32.xlu0 %v4040, 92
      %v4065 = vpop.permute.xlu0 %4064
      %4066 = vrot.lane.b32.xlu0 %v4041, 92
      %v4067 = vpop.permute.xlu0 %4066
      %4068 = vrot.lane.b32.xlu0 %v4042, 92
      %v4069 = vpop.permute.xlu0 %4068
      %4070 = vrot.lane.b32.xlu0 %v4043, 92
      %v4071 = vpop.permute.xlu0 %4070
      %4072 = vrot.lane.b32.xlu0 %v4044, 92
      %v4073 = vpop.permute.xlu0 %4072
      %4074 = vrot.lane.b32.xlu0 %v4045, 92
      %v4075 = vpop.permute.xlu0 %4074
      %4076 = vrot.lane.b32.xlu0 %v4046, 92
      %v4077 = vpop.permute.xlu0 %4076
      %4078 = vrot.lane.b32.xlu0 %v4047, 92
      %v4079 = vpop.permute.xlu0 %4078
      %v4088 = vmul.f32 %v3838, %v4065
      %v4089 = vmul.f32 %v3840, %v4067
      %v4090 = vmul.f32 %v3842, %v4069
      %v4091 = vmul.f32 %v3844, %v4071
      %v4092 = vmul.f32 %v3846, %v4073
      %v4093 = vmul.f32 %v3848, %v4075
      %v4094 = vmul.f32 %v3850, %v4077
      %v4095 = vmul.f32 %v3852, %v4079
      %v4096 = vld [vmem:[%s16] sm:$0xff]
      %v4097 = vld [vmem:[%s16 + $0x8] sm:$0xff]
      %v4098 = vld [vmem:[%s16 + $0x10] sm:$0xff]
      %v4099 = vld [vmem:[%s16 + $0x18] sm:$0xff]
      %v4100 = vld [vmem:[%s17] sm:$0x1]
      %v4102 = vlaneseq
      %v4103 = vshrl.u32 %v4102, 7
      %v4104 = vsub.s32 0, %v4103
      %v4105 = vrot.slane %v4100, %v4104
      %v4107 = vsel %vm855, %v1287, 0
      %v4109 = vsel %vm855, %v1288, 0
      %v4111 = vsel %vm855, %v1289, 0
      %v4113 = vsel %vm855, %v1290, 0
      %v4115 = vsel %vm855, %v1291, 0
      %v4117 = vsel %vm855, %v1292, 0
      %v4119 = vsel %vm855, %v1293, 0
      %v4121 = vsel %vm855, %v1294, 0
      %4123 = vmatprep.subr.mxu0 0.0
      %4124 = vmatpush1.msra.mxu0 %v4096
      %4125 = vmatprep.subr.mxu0 0.0
      %4126 = vmatpush1.msra.mxu0 %v4097
      %4127 = vmatprep.subr.mxu0 0.0
      %4128 = vmatpush1.msra.mxu0 %v4098
      %4129 = vmatprep.subr.mxu0 0.0
      %4130 = vmatpush1.msra.mxu0 %v4099
      %4131 = vmatprep.subr.mxu0 0.0
      %4132 = vmatpush1.msra.mxu0 0.0
      %4133 = vmatprep.subr.mxu0 0.0
      %4134 = vmatpush1.msra.mxu0 0.0
      %4135 = vmatprep.subr.mxu0 0.0
      %4136 = vmatpush1.msra.mxu0 0.0
      %4137 = vmatprep.subr.mxu0 0.0
      %4138 = vmatpush1.msra.mxu0 0.0
      %4139 = vmatprep.subr.mxu0 0.0
      %4140 = vmatpush1.msra.mxu0 0.0
      %4141 = vmatprep.subr.mxu0 0.0
      %4142 = vmatpush1.msra.mxu0 0.0
      %4143 = vmatprep.subr.mxu0 0.0
      %4144 = vmatpush1.msra.mxu0 0.0
      %4145 = vmatprep.subr.mxu0 0.0
      %4146 = vmatpush1.msra.mxu0 0.0
      %4147 = vmatprep.subr.mxu0 0.0
      %4148 = vmatpush1.msra.mxu0 0.0
      %4149 = vmatprep.subr.mxu0 0.0
      %4150 = vmatpush1.msra.mxu0 0.0
      %4151 = vmatprep.subr.mxu0 0.0
      %4152 = vmatpush1.msra.mxu0 0.0
      %4153 = vmatprep.subr.mxu0 0.0
      %4154 = vmatpush1.msra.mxu0 0.0
      %4155 = vmatprep.subr.mxu0 0.0
      %4156 = vmatpush1.msra.mxu0 0.0
      %4157 = vmatprep.subr.mxu0 0.0
      %4158 = vmatpush1.msra.mxu0 0.0
      %4159 = vmatprep.subr.mxu0 0.0
      %4160 = vmatpush1.msra.mxu0 0.0
      %4161 = vmatprep.subr.mxu0 0.0
      %4162 = vmatpush1.msra.mxu0 0.0
      %4163 = vmatprep.subr.mxu0 0.0
      %4164 = vmatpush1.msra.mxu0 0.0
      %4165 = vmatprep.subr.mxu0 0.0
      %4166 = vmatpush1.msra.mxu0 0.0
      %4167 = vmatprep.subr.mxu0 0.0
      %4168 = vmatpush1.msra.mxu0 0.0
      %4169 = vmatprep.subr.mxu0 0.0
      %4170 = vmatpush1.msra.mxu0 0.0
      %4171 = vmatprep.subr.mxu0 0.0
      %4172 = vmatpush1.msra.mxu0 0.0
      %4173 = vmatprep.subr.mxu0 0.0
      %4174 = vmatpush1.msra.mxu0 0.0
      %4175 = vmatprep.subr.mxu0 0.0
      %4176 = vmatpush1.msra.mxu0 0.0
      %4177 = vmatprep.subr.mxu0 0.0
      %4178 = vmatpush1.msra.mxu0 0.0
      %4179 = vmatprep.subr.mxu0 0.0
      %4180 = vmatpush1.msra.mxu0 0.0
      %4181 = vmatprep.subr.mxu0 0.0
      %4182 = vmatpush1.msra.mxu0 0.0
      %4183 = vmatprep.subr.mxu0 0.0
      %4184 = vmatpush1.msra.mxu0 0.0
      %4185 = vmatprep.subr.mxu0 0.0
      %4186 = vmatpush1.msra.mxu0 0.0
      %4187 = vmatprep.mubr.f32.mxu0 0.0
      %4188 = vmatmul.mubr.f32.gmra.mrb[0].mxu0 %v4107
      %v4189 = vpop.f32.mrb[0].mxu0
      %v4190 = vadd.f32 %v4105, %v4189
      %v4191 = vpop.f32.mrb[0].mxu0
      %4192 = vmatprep.mubr.f32.mxu0 0.0
      %4193 = vmatmul.mubr.f32.gmra.mrb[0].mxu0 %v4109
      %v4194 = vpop.f32.mrb[0].mxu0
      %v4195 = vadd.f32 %v4105, %v4194
      %v4196 = vpop.f32.mrb[0].mxu0
      %4197 = vmatprep.mubr.f32.mxu0 0.0
      %4198 = vmatmul.mubr.f32.gmra.mrb[0].mxu0 %v4111
      %v4199 = vpop.f32.mrb[0].mxu0
      %v4200 = vadd.f32 %v4105, %v4199
      %v4201 = vpop.f32.mrb[0].mxu0
      %4202 = vmatprep.mubr.f32.mxu0 0.0
      %4203 = vmatmul.mubr.f32.gmra.mrb[0].mxu0 %v4113
      %v4204 = vpop.f32.mrb[0].mxu0
      %v4205 = vadd.f32 %v4105, %v4204
      %v4206 = vpop.f32.mrb[0].mxu0
      %4207 = vmatprep.mubr.f32.mxu0 0.0
      %4208 = vmatmul.mubr.f32.gmra.mrb[0].mxu0 %v4115
      %v4209 = vpop.f32.mrb[0].mxu0
      %v4210 = vadd.f32 %v4105, %v4209
      %v4211 = vpop.f32.mrb[0].mxu0
      %4212 = vmatprep.mubr.f32.mxu0 0.0
      %4213 = vmatmul.mubr.f32.gmra.mrb[0].mxu0 %v4117
      %v4214 = vpop.f32.mrb[0].mxu0
      %v4215 = vadd.f32 %v4105, %v4214
      %v4216 = vpop.f32.mrb[0].mxu0
      %4217 = vmatprep.mubr.f32.mxu0 0.0
      %4218 = vmatmul.mubr.f32.gmra.mrb[0].mxu0 %v4119
      %v4219 = vpop.f32.mrb[0].mxu0
      %v4220 = vadd.f32 %v4105, %v4219
      %v4221 = vpop.f32.mrb[0].mxu0
      %4222 = vmatprep.mubr.f32.mxu0 0.0
      %4223 = vmatmul.mubr.f32.gmra.mrb[0].mxu0 %v4121
      %v4224 = vpop.f32.mrb[0].mxu0
      %v4225 = vadd.f32 %v4105, %v4224
      %v4226 = vpop.f32.mrb[0].mxu0
      %4227 = vdwg.mxu0
      %v4228 = vadd.f32 %v4190, %v4048
      %v4229 = vadd.f32 %v4195, %v4049
      %v4230 = vadd.f32 %v4200, %v4050
      %v4231 = vadd.f32 %v4205, %v4051
      %v4232 = vadd.f32 %v4210, %v4052
      %v4233 = vadd.f32 %v4215, %v4053
      %v4234 = vadd.f32 %v4220, %v4054
      %v4235 = vadd.f32 %v4225, %v4055
      %v4236 = vld [vmem:[%s22] sm:$0xff]
      %v4237 = vld [vmem:[%s22 + $0x8] sm:$0xff]
      %v4238 = vld [vmem:[%s22 + $0x10] sm:$0xff]
      %v4239 = vld [vmem:[%s22 + $0x18] sm:$0xff]
      %v4240 = vld [vmem:[%s22 + $0x20] sm:$0xff]
      %v4241 = vld [vmem:[%s22 + $0x28] sm:$0xff]
      %v4242 = vld [vmem:[%s22 + $0x30] sm:$0xff]
      %v4243 = vld [vmem:[%s22 + $0x38] sm:$0xff]
      %v4244 = vld [vmem:[%s22 + $0x40] sm:$0xff]
      %v4245 = vld [vmem:[%s22 + $0x48] sm:$0xff]
      %v4246 = vld [vmem:[%s22 + $0x50] sm:$0xff]
      %v4247 = vld [vmem:[%s22 + $0x58] sm:$0xff]
      %v4248 = vld [vmem:[%s22 + $0x60] sm:$0xf]
      %v4249 = vld [vmem:[%s22 + $0x68] sm:$0xf]
      %v4250 = vld [vmem:[%s22 + $0x70] sm:$0xf]
      %v4252 = vsel %vm3748, %v4228, 0
      %v4255 = vsel %vm3748, %v4229, 0
      %v4258 = vsel %vm3748, %v4230, 0
      %v4261 = vsel %vm3748, %v4231, 0
      %v4264 = vsel %vm3748, %v4232, 0
      %v4267 = vsel %vm3748, %v4233, 0
      %v4270 = vsel %vm3748, %v4234, 0
      %v4273 = vsel %vm3748, %v4235, 0
      %v4276 = vsel %vm3931, %v4248, 0
      %v4279 = vsel %vm3931, %v4249, 0
      %v4282 = vsel %vm3931, %v4250, 0
      %4284 = vmatprep.subr.mxu0 %v4237
      %4285 = vmatpush1.msra.mxu0 %v4236
      %4286 = vmatprep.subr.mxu0 %v4240
      %4287 = vmatpush1.msra.mxu0 %v4239
      %4288 = vmatprep.subr.mxu0 %v4243
      %4289 = vmatpush1.msra.mxu0 %v4242
      %4290 = vmatprep.subr.mxu0 %v4246
      %4291 = vmatpush1.msra.mxu0 %v4245
      %4292 = vmatprep.subr.mxu0 %v4279
      %4293 = vmatpush1.msra.mxu0 %v4276
      %4294 = vmatprep.subr.mxu0 0.0
      %4295 = vmatpush1.msra.mxu0 0.0
      %4296 = vmatprep.subr.mxu0 0.0
      %4297 = vmatpush1.msra.mxu0 0.0
      %4298 = vmatprep.subr.mxu0 0.0
      %4299 = vmatpush1.msra.mxu0 0.0
      %4300 = vmatprep.subr.mxu0 0.0
      %4301 = vmatpush1.msra.mxu0 0.0
      %4302 = vmatprep.subr.mxu0 0.0
      %4303 = vmatpush1.msra.mxu0 0.0
      %4304 = vmatprep.subr.mxu0 0.0
      %4305 = vmatpush1.msra.mxu0 0.0
      %4306 = vmatprep.subr.mxu0 0.0
      %4307 = vmatpush1.msra.mxu0 0.0
      %4308 = vmatprep.subr.mxu0 0.0
      %4309 = vmatpush1.msra.mxu0 0.0
      %4310 = vmatprep.subr.mxu0 0.0
      %4311 = vmatpush1.msra.mxu0 0.0
      %4312 = vmatprep.subr.mxu0 0.0
      %4313 = vmatpush1.msra.mxu0 0.0
      %4314 = vmatprep.subr.mxu0 0.0
      %4315 = vmatpush1.msra.mxu0 0.0
      %4316 = vmatprep.subr.mxu0 0.0
      %4317 = vmatpush1.msra.mxu0 0.0
      %4318 = vmatprep.subr.mxu0 0.0
      %4319 = vmatpush1.msra.mxu0 0.0
      %4320 = vmatprep.subr.mxu0 0.0
      %4321 = vmatpush1.msra.mxu0 0.0
      %4322 = vmatprep.subr.mxu0 0.0
      %4323 = vmatpush1.msra.mxu0 0.0
      %4324 = vmatprep.subr.mxu0 0.0
      %4325 = vmatpush1.msra.mxu0 0.0
      %4326 = vmatprep.subr.mxu0 0.0
      %4327 = vmatpush1.msra.mxu0 0.0
      %4328 = vmatprep.subr.mxu0 0.0
      %4329 = vmatpush1.msra.mxu0 0.0
      %4330 = vmatprep.subr.mxu0 0.0
      %4331 = vmatpush1.msra.mxu0 0.0
      %4332 = vmatprep.subr.mxu0 0.0
      %4333 = vmatpush1.msra.mxu0 0.0
      %4334 = vmatprep.subr.mxu0 0.0
      %4335 = vmatpush1.msra.mxu0 0.0
      %4336 = vmatprep.subr.mxu0 0.0
      %4337 = vmatpush1.msra.mxu0 0.0
      %4338 = vmatprep.subr.mxu0 0.0
      %4339 = vmatpush1.msra.mxu0 0.0
      %4340 = vmatprep.subr.mxu0 0.0
      %4341 = vmatpush1.msra.mxu0 0.0
      %4342 = vmatprep.subr.mxu0 0.0
      %4343 = vmatpush1.msra.mxu0 0.0
      %4344 = vmatprep.subr.mxu0 0.0
      %4345 = vmatpush1.msra.mxu0 0.0
      %4346 = vmatprep.subr.mxu0 0.0
      %4347 = vmatpush1.msra.mxu0 0.0
      %4348 = vmatprep.mubr.f32.mxu0 0.0
      %4349 = vmatmul.mubr.f32.gmra.mrb[0].mxu0 %v4252
      %v4350 = vpop.f32.mrb[0].mxu0
      %v4351 = vadd.f32 0.0, %v4350
      %v4352 = vpop.f32.mrb[0].mxu0
      %v4353 = vadd.f32 0.0, %v4352
      %4354 = vmatprep.mubr.f32.mxu0 0.0
      %4355 = vmatmul.mubr.f32.gmra.mrb[0].mxu0 %v4255
      %v4356 = vpop.f32.mrb[0].mxu0
      %v4357 = vadd.f32 0.0, %v4356
      %v4358 = vpop.f32.mrb[0].mxu0
      %v4359 = vadd.f32 0.0, %v4358
      %4360 = vmatprep.mubr.f32.mxu0 0.0
      %4361 = vmatmul.mubr.f32.gmra.mrb[0].mxu0 %v4258
      %v4362 = vpop.f32.mrb[0].mxu0
      %v4363 = vadd.f32 0.0, %v4362
      %v4364 = vpop.f32.mrb[0].mxu0
      %v4365 = vadd.f32 0.0, %v4364
      %4366 = vmatprep.mubr.f32.mxu0 0.0
      %4367 = vmatmul.mubr.f32.gmra.mrb[0].mxu0 %v4261
      %v4368 = vpop.f32.mrb[0].mxu0
      %v4369 = vadd.f32 0.0, %v4368
      %v4370 = vpop.f32.mrb[0].mxu0
      %v4371 = vadd.f32 0.0, %v4370
      %4372 = vmatprep.mubr.f32.mxu0 0.0
      %4373 = vmatmul.mubr.f32.gmra.mrb[0].mxu0 %v4264
      %v4374 = vpop.f32.mrb[0].mxu0
      %v4375 = vadd.f32 0.0, %v4374
      %v4376 = vpop.f32.mrb[0].mxu0
      %v4377 = vadd.f32 0.0, %v4376
      %4378 = vmatprep.mubr.f32.mxu0 0.0
      %4379 = vmatmul.mubr.f32.gmra.mrb[0].mxu0 %v4267
      %v4380 = vpop.f32.mrb[0].mxu0
      %v4381 = vadd.f32 0.0, %v4380
      %v4382 = vpop.f32.mrb[0].mxu0
      %v4383 = vadd.f32 0.0, %v4382
      %4384 = vmatprep.mubr.f32.mxu0 0.0
      %4385 = vmatmul.mubr.f32.gmra.mrb[0].mxu0 %v4270
      %v4386 = vpop.f32.mrb[0].mxu0
      %v4387 = vadd.f32 0.0, %v4386
      %v4388 = vpop.f32.mrb[0].mxu0
      %v4389 = vadd.f32 0.0, %v4388
      %4390 = vmatprep.mubr.f32.mxu0 0.0
      %4391 = vmatmul.mubr.f32.gmra.mrb[0].mxu0 %v4273
      %v4392 = vpop.f32.mrb[0].mxu0
      %v4393 = vadd.f32 0.0, %v4392
      %v4394 = vpop.f32.mrb[0].mxu0
      %v4395 = vadd.f32 0.0, %v4394
      %4396 = vdwg.mxu0
      %4397 = vmatprep.subr.mxu0 0.0
      %4398 = vmatpush1.msra.mxu0 %v4238
      %4399 = vmatprep.subr.mxu0 0.0
      %4400 = vmatpush1.msra.mxu0 %v4241
      %4401 = vmatprep.subr.mxu0 0.0
      %4402 = vmatpush1.msra.mxu0 %v4244
      %4403 = vmatprep.subr.mxu0 0.0
      %4404 = vmatpush1.msra.mxu0 %v4247
      %4405 = vmatprep.subr.mxu0 0.0
      %4406 = vmatpush1.msra.mxu0 %v4282
      %4407 = vmatprep.subr.mxu0 0.0
      %4408 = vmatpush1.msra.mxu0 0.0
      %4409 = vmatprep.subr.mxu0 0.0
      %4410 = vmatpush1.msra.mxu0 0.0
      %4411 = vmatprep.subr.mxu0 0.0
      %4412 = vmatpush1.msra.mxu0 0.0
      %4413 = vmatprep.subr.mxu0 0.0
      %4414 = vmatpush1.msra.mxu0 0.0
      %4415 = vmatprep.subr.mxu0 0.0
      %4416 = vmatpush1.msra.mxu0 0.0
      %4417 = vmatprep.subr.mxu0 0.0
      %4418 = vmatpush1.msra.mxu0 0.0
      %4419 = vmatprep.subr.mxu0 0.0
      %4420 = vmatpush1.msra.mxu0 0.0
      %4421 = vmatprep.subr.mxu0 0.0
      %4422 = vmatpush1.msra.mxu0 0.0
      %4423 = vmatprep.subr.mxu0 0.0
      %4424 = vmatpush1.msra.mxu0 0.0
      %4425 = vmatprep.subr.mxu0 0.0
      %4426 = vmatpush1.msra.mxu0 0.0
      %4427 = vmatprep.subr.mxu0 0.0
      %4428 = vmatpush1.msra.mxu0 0.0
      %4429 = vmatprep.subr.mxu0 0.0
      %4430 = vmatpush1.msra.mxu0 0.0
      %4431 = vmatprep.subr.mxu0 0.0
      %4432 = vmatpush1.msra.mxu0 0.0
      %4433 = vmatprep.subr.mxu0 0.0
      %4434 = vmatpush1.msra.mxu0 0.0
      %4435 = vmatprep.subr.mxu0 0.0
      %4436 = vmatpush1.msra.mxu0 0.0
      %4437 = vmatprep.subr.mxu0 0.0
      %4438 = vmatpush1.msra.mxu0 0.0
      %4439 = vmatprep.subr.mxu0 0.0
      %4440 = vmatpush1.msra.mxu0 0.0
      %4441 = vmatprep.subr.mxu0 0.0
      %4442 = vmatpush1.msra.mxu0 0.0
      %4443 = vmatprep.subr.mxu0 0.0
      %4444 = vmatpush1.msra.mxu0 0.0
      %4445 = vmatprep.subr.mxu0 0.0
      %4446 = vmatpush1.msra.mxu0 0.0
      %4447 = vmatprep.subr.mxu0 0.0
      %4448 = vmatpush1.msra.mxu0 0.0
      %4449 = vmatprep.subr.mxu0 0.0
      %4450 = vmatpush1.msra.mxu0 0.0
      %4451 = vmatprep.subr.mxu0 0.0
      %4452 = vmatpush1.msra.mxu0 0.0
      %4453 = vmatprep.subr.mxu0 0.0
      %4454 = vmatpush1.msra.mxu0 0.0
      %4455 = vmatprep.subr.mxu0 0.0
      %4456 = vmatpush1.msra.mxu0 0.0
      %4457 = vmatprep.subr.mxu0 0.0
      %4458 = vmatpush1.msra.mxu0 0.0
      %4459 = vmatprep.subr.mxu0 0.0
      %4460 = vmatpush1.msra.mxu0 0.0
      %4461 = vmatprep.mubr.f32.mxu0 0.0
      %4462 = vmatmul.mubr.f32.gmra.mrb[0].mxu0 %v4252
      %v4463 = vpop.f32.mrb[0].mxu0
      %v4464 = vadd.f32 0.0, %v4463
      %v4465 = vpop.f32.mrb[0].mxu0
      %4466 = vmatprep.mubr.f32.mxu0 0.0
      %4467 = vmatmul.mubr.f32.gmra.mrb[0].mxu0 %v4255
      %v4468 = vpop.f32.mrb[0].mxu0
      %v4469 = vadd.f32 0.0, %v4468
      %v4470 = vpop.f32.mrb[0].mxu0
      %4471 = vmatprep.mubr.f32.mxu0 0.0
      %4472 = vmatmul.mubr.f32.gmra.mrb[0].mxu0 %v4258
      %v4473 = vpop.f32.mrb[0].mxu0
      %v4474 = vadd.f32 0.0, %v4473
      %v4475 = vpop.f32.mrb[0].mxu0
      %4476 = vmatprep.mubr.f32.mxu0 0.0
      %4477 = vmatmul.mubr.f32.gmra.mrb[0].mxu0 %v4261
      %v4478 = vpop.f32.mrb[0].mxu0
      %v4479 = vadd.f32 0.0, %v4478
      %v4480 = vpop.f32.mrb[0].mxu0
      %4481 = vmatprep.mubr.f32.mxu0 0.0
      %4482 = vmatmul.mubr.f32.gmra.mrb[0].mxu0 %v4264
      %v4483 = vpop.f32.mrb[0].mxu0
      %v4484 = vadd.f32 0.0, %v4483
      %v4485 = vpop.f32.mrb[0].mxu0
      %4486 = vmatprep.mubr.f32.mxu0 0.0
      %4487 = vmatmul.mubr.f32.gmra.mrb[0].mxu0 %v4267
      %v4488 = vpop.f32.mrb[0].mxu0
      %v4489 = vadd.f32 0.0, %v4488
      %v4490 = vpop.f32.mrb[0].mxu0
      %4491 = vmatprep.mubr.f32.mxu0 0.0
      %4492 = vmatmul.mubr.f32.gmra.mrb[0].mxu0 %v4270
      %v4493 = vpop.f32.mrb[0].mxu0
      %v4494 = vadd.f32 0.0, %v4493
      %v4495 = vpop.f32.mrb[0].mxu0
      %4496 = vmatprep.mubr.f32.mxu0 0.0
      %4497 = vmatmul.mubr.f32.gmra.mrb[0].mxu0 %v4273
      %v4498 = vpop.f32.mrb[0].mxu0
      %v4499 = vadd.f32 0.0, %v4498
      %v4500 = vpop.f32.mrb[0].mxu0
      %4501 = vdwg.mxu0
      %4510 = vrot.lane.b32.xlu0 %v3077, 96
      %v4511 = vpop.permute.xlu0 %4510
      %4512 = vrot.lane.b32.xlu0 %v3078, 96
      %v4513 = vpop.permute.xlu0 %4512
      %4514 = vrot.lane.b32.xlu0 %v3079, 96
      %v4515 = vpop.permute.xlu0 %4514
      %4516 = vrot.lane.b32.xlu0 %v3080, 96
      %v4517 = vpop.permute.xlu0 %4516
      %4518 = vrot.lane.b32.xlu0 %v3081, 96
      %v4519 = vpop.permute.xlu0 %4518
      %4520 = vrot.lane.b32.xlu0 %v3082, 96
      %v4521 = vpop.permute.xlu0 %4520
      %4522 = vrot.lane.b32.xlu0 %v3083, 96
      %v4523 = vpop.permute.xlu0 %4522
      %4524 = vrot.lane.b32.xlu0 %v3084, 96
      %v4525 = vpop.permute.xlu0 %4524
      %v4534 = vmul.f32 %v4351, %v4511
      %v4535 = vmul.f32 %v4357, %v4513
      %v4536 = vmul.f32 %v4363, %v4515
      %v4537 = vmul.f32 %v4369, %v4517
      %v4538 = vmul.f32 %v4375, %v4519
      %v4539 = vmul.f32 %v4381, %v4521
      %v4540 = vmul.f32 %v4387, %v4523
      %v4541 = vmul.f32 %v4393, %v4525
      %4550 = vrot.lane.b32.xlu0 %v2908, 96
      %v4551 = vpop.permute.xlu0 %4550
      %4552 = vrot.lane.b32.xlu0 %v2909, 96
      %v4553 = vpop.permute.xlu0 %4552
      %4554 = vrot.lane.b32.xlu0 %v2910, 96
      %v4555 = vpop.permute.xlu0 %4554
      %4556 = vrot.lane.b32.xlu0 %v2911, 96
      %v4557 = vpop.permute.xlu0 %4556
      %4558 = vrot.lane.b32.xlu0 %v2912, 96
      %v4559 = vpop.permute.xlu0 %4558
      %4560 = vrot.lane.b32.xlu0 %v2913, 96
      %v4561 = vpop.permute.xlu0 %4560
      %4562 = vrot.lane.b32.xlu0 %v2914, 96
      %v4563 = vpop.permute.xlu0 %4562
      %4564 = vrot.lane.b32.xlu0 %v2915, 96
      %v4565 = vpop.permute.xlu0 %4564
      %v4575 = vsel %vm1141, %v4088, 0
      %v4578 = vsel %vm1141, %v4089, 0
      %v4581 = vsel %vm1141, %v4090, 0
      %v4584 = vsel %vm1141, %v4091, 0
      %v4587 = vsel %vm1141, %v4092, 0
      %v4590 = vsel %vm1141, %v4093, 0
      %v4593 = vsel %vm1141, %v4094, 0
      %v4596 = vsel %vm1141, %v4095, 0
      %4598 = vmatprep.subr.mxu0 0.0
      %4599 = vmatpush1.msra.mxu0 %v4551
      %4600 = vmatprep.subr.mxu0 0.0
      %4601 = vmatpush1.msra.mxu0 %v4553
      %4602 = vmatprep.subr.mxu0 0.0
      %4603 = vmatpush1.msra.mxu0 %v4555
      %4604 = vmatprep.subr.mxu0 0.0
      %4605 = vmatpush1.msra.mxu0 %v4557
      %4606 = vmatprep.subr.mxu0 0.0
      %4607 = vmatpush1.msra.mxu0 %v4559
      %4608 = vmatprep.subr.mxu0 0.0
      %4609 = vmatpush1.msra.mxu0 %v4561
      %4610 = vmatprep.subr.mxu0 0.0
      %4611 = vmatpush1.msra.mxu0 %v4563
      %4612 = vmatprep.subr.mxu0 0.0
      %4613 = vmatpush1.msra.mxu0 %v4565
      %4614 = vmatprep.subr.mxu0 0.0
      %4615 = vmatpush1.msra.mxu0 0.0
      %4616 = vmatprep.subr.mxu0 0.0
      %4617 = vmatpush1.msra.mxu0 0.0
      %4618 = vmatprep.subr.mxu0 0.0
      %4619 = vmatpush1.msra.mxu0 0.0
      %4620 = vmatprep.subr.mxu0 0.0
      %4621 = vmatpush1.msra.mxu0 0.0
      %4622 = vmatprep.subr.mxu0 0.0
      %4623 = vmatpush1.msra.mxu0 0.0
      %4624 = vmatprep.subr.mxu0 0.0
      %4625 = vmatpush1.msra.mxu0 0.0
      %4626 = vmatprep.subr.mxu0 0.0
      %4627 = vmatpush1.msra.mxu0 0.0
      %4628 = vmatprep.subr.mxu0 0.0
      %4629 = vmatpush1.msra.mxu0 0.0
      %4630 = vmatprep.subr.mxu0 0.0
      %4631 = vmatpush1.msra.mxu0 0.0
      %4632 = vmatprep.subr.mxu0 0.0
      %4633 = vmatpush1.msra.mxu0 0.0
      %4634 = vmatprep.subr.mxu0 0.0
      %4635 = vmatpush1.msra.mxu0 0.0
      %4636 = vmatprep.subr.mxu0 0.0
      %4637 = vmatpush1.msra.mxu0 0.0
      %4638 = vmatprep.subr.mxu0 0.0
      %4639 = vmatpush1.msra.mxu0 0.0
      %4640 = vmatprep.subr.mxu0 0.0
      %4641 = vmatpush1.msra.mxu0 0.0
      %4642 = vmatprep.subr.mxu0 0.0
      %4643 = vmatpush1.msra.mxu0 0.0
      %4644 = vmatprep.subr.mxu0 0.0
      %4645 = vmatpush1.msra.mxu0 0.0
      %4646 = vmatprep.subr.mxu0 0.0
      %4647 = vmatpush1.msra.mxu0 0.0
      %4648 = vmatprep.subr.mxu0 0.0
      %4649 = vmatpush1.msra.mxu0 0.0
      %4650 = vmatprep.subr.mxu0 0.0
      %4651 = vmatpush1.msra.mxu0 0.0
      %4652 = vmatprep.subr.mxu0 0.0
      %4653 = vmatpush1.msra.mxu0 0.0
      %4654 = vmatprep.subr.mxu0 0.0
      %4655 = vmatpush1.msra.mxu0 0.0
      %4656 = vmatprep.subr.mxu0 0.0
      %4657 = vmatpush1.msra.mxu0 0.0
      %4658 = vmatprep.subr.mxu0 0.0
      %4659 = vmatpush1.msra.mxu0 0.0
      %4660 = vmatprep.subr.mxu0 0.0
      %4661 = vmatpush1.msra.mxu0 0.0
      %4662 = vmatprep.mubr.f32.mxu0 0.0
      %4663 = vmatmul.mubr.f32.gmra.mrb[0].mxu0 %v4575
      %v4664 = vpop.f32.mrb[0].mxu0
      %v4665 = vadd.f32 %v4534, %v4664
      %v4666 = vpop.f32.mrb[0].mxu0
      %4667 = vmatprep.mubr.f32.mxu0 0.0
      %4668 = vmatmul.mubr.f32.gmra.mrb[0].mxu0 %v4578
      %v4669 = vpop.f32.mrb[0].mxu0
      %v4670 = vadd.f32 %v4535, %v4669
      %v4671 = vpop.f32.mrb[0].mxu0
      %4672 = vmatprep.mubr.f32.mxu0 0.0
      %4673 = vmatmul.mubr.f32.gmra.mrb[0].mxu0 %v4581
      %v4674 = vpop.f32.mrb[0].mxu0
      %v4675 = vadd.f32 %v4536, %v4674
      %v4676 = vpop.f32.mrb[0].mxu0
      %4677 = vmatprep.mubr.f32.mxu0 0.0
      %4678 = vmatmul.mubr.f32.gmra.mrb[0].mxu0 %v4584
      %v4679 = vpop.f32.mrb[0].mxu0
      %v4680 = vadd.f32 %v4537, %v4679
      %v4681 = vpop.f32.mrb[0].mxu0
      %4682 = vmatprep.mubr.f32.mxu0 0.0
      %4683 = vmatmul.mubr.f32.gmra.mrb[0].mxu0 %v4587
      %v4684 = vpop.f32.mrb[0].mxu0
      %v4685 = vadd.f32 %v4538, %v4684
      %v4686 = vpop.f32.mrb[0].mxu0
      %4687 = vmatprep.mubr.f32.mxu0 0.0
      %4688 = vmatmul.mubr.f32.gmra.mrb[0].mxu0 %v4590
      %v4689 = vpop.f32.mrb[0].mxu0
      %v4690 = vadd.f32 %v4539, %v4689
      %v4691 = vpop.f32.mrb[0].mxu0
      %4692 = vmatprep.mubr.f32.mxu0 0.0
      %4693 = vmatmul.mubr.f32.gmra.mrb[0].mxu0 %v4593
      %v4694 = vpop.f32.mrb[0].mxu0
      %v4695 = vadd.f32 %v4540, %v4694
      %v4696 = vpop.f32.mrb[0].mxu0
      %4697 = vmatprep.mubr.f32.mxu0 0.0
      %4698 = vmatmul.mubr.f32.gmra.mrb[0].mxu0 %v4596
      %v4699 = vpop.f32.mrb[0].mxu0
      %v4700 = vadd.f32 %v4541, %v4699
      %v4701 = vpop.f32.mrb[0].mxu0
      %4702 = vdwg.mxu0
      %v4703 = vmul.f32 %v4351, %v3093
      %v4704 = vmul.f32 %v4357, %v3094
      %v4705 = vmul.f32 %v4363, %v3095
      %v4706 = vmul.f32 %v4369, %v3096
      %v4707 = vmul.f32 %v4375, %v3097
      %v4708 = vmul.f32 %v4381, %v3098
      %v4709 = vmul.f32 %v4387, %v3099
      %v4710 = vmul.f32 %v4393, %v3100
      %4719 = vrot.lane.b32.xlu0 %v4703, 96
      %v4720 = vpop.permute.xlu0 %4719
      %4721 = vrot.lane.b32.xlu0 %v4704, 96
      %v4722 = vpop.permute.xlu0 %4721
      %4723 = vrot.lane.b32.xlu0 %v4705, 96
      %v4724 = vpop.permute.xlu0 %4723
      %4725 = vrot.lane.b32.xlu0 %v4706, 96
      %v4726 = vpop.permute.xlu0 %4725
      %4727 = vrot.lane.b32.xlu0 %v4707, 96
      %v4728 = vpop.permute.xlu0 %4727
      %4729 = vrot.lane.b32.xlu0 %v4708, 96
      %v4730 = vpop.permute.xlu0 %4729
      %4731 = vrot.lane.b32.xlu0 %v4709, 96
      %v4732 = vpop.permute.xlu0 %4731
      %4733 = vrot.lane.b32.xlu0 %v4710, 96
      %v4734 = vpop.permute.xlu0 %4733
      %v4743 = vadd.f32 %v4665, %v4720
      %v4744 = vadd.f32 %v4670, %v4722
      %v4745 = vadd.f32 %v4675, %v4724
      %v4746 = vadd.f32 %v4680, %v4726
      %v4747 = vadd.f32 %v4685, %v4728
      %v4748 = vadd.f32 %v4690, %v4730
      %v4749 = vadd.f32 %v4695, %v4732
      %v4750 = vadd.f32 %v4700, %v4734
      %4759 = vrot.lane.b32.xlu0 %v3109, 32
      %v4760 = vpop.permute.xlu0 %4759
      %4761 = vrot.lane.b32.xlu0 %v3110, 32
      %v4762 = vpop.permute.xlu0 %4761
      %4763 = vrot.lane.b32.xlu0 %v3111, 32
      %v4764 = vpop.permute.xlu0 %4763
      %4765 = vrot.lane.b32.xlu0 %v3112, 32
      %v4766 = vpop.permute.xlu0 %4765
      %4767 = vrot.lane.b32.xlu0 %v3113, 32
      %v4768 = vpop.permute.xlu0 %4767
      %4769 = vrot.lane.b32.xlu0 %v3114, 32
      %v4770 = vpop.permute.xlu0 %4769
      %4771 = vrot.lane.b32.xlu0 %v3115, 32
      %v4772 = vpop.permute.xlu0 %4771
      %4773 = vrot.lane.b32.xlu0 %v3116, 32
      %v4774 = vpop.permute.xlu0 %4773
      %v4783 = vmul.f32 %v4351, %v4760
      %v4784 = vmul.f32 %v4357, %v4762
      %v4785 = vmul.f32 %v4363, %v4764
      %v4786 = vmul.f32 %v4369, %v4766
      %v4787 = vmul.f32 %v4375, %v4768
      %v4788 = vmul.f32 %v4381, %v4770
      %v4789 = vmul.f32 %v4387, %v4772
      %v4790 = vmul.f32 %v4393, %v4774
      %4799 = vrot.lane.b32.xlu0 %v4783, 64
      %v4800 = vpop.permute.xlu0 %4799
      %4801 = vrot.lane.b32.xlu0 %v4784, 64
      %v4802 = vpop.permute.xlu0 %4801
      %4803 = vrot.lane.b32.xlu0 %v4785, 64
      %v4804 = vpop.permute.xlu0 %4803
      %4805 = vrot.lane.b32.xlu0 %v4786, 64
      %v4806 = vpop.permute.xlu0 %4805
      %4807 = vrot.lane.b32.xlu0 %v4787, 64
      %v4808 = vpop.permute.xlu0 %4807
      %4809 = vrot.lane.b32.xlu0 %v4788, 64
      %v4810 = vpop.permute.xlu0 %4809
      %4811 = vrot.lane.b32.xlu0 %v4789, 64
      %v4812 = vpop.permute.xlu0 %4811
      %4813 = vrot.lane.b32.xlu0 %v4790, 64
      %v4814 = vpop.permute.xlu0 %4813
      %v4823 = vadd.f32 %v4743, %v4800
      %v4824 = vadd.f32 %v4744, %v4802
      %v4825 = vadd.f32 %v4745, %v4804
      %v4826 = vadd.f32 %v4746, %v4806
      %v4827 = vadd.f32 %v4747, %v4808
      %v4828 = vadd.f32 %v4748, %v4810
      %v4829 = vadd.f32 %v4749, %v4812
      %v4830 = vadd.f32 %v4750, %v4814
      %4839 = vrot.lane.b32.xlu0 %v3125, 64
      %v4840 = vpop.permute.xlu0 %4839
      %4841 = vrot.lane.b32.xlu0 %v3126, 64
      %v4842 = vpop.permute.xlu0 %4841
      %4843 = vrot.lane.b32.xlu0 %v3127, 64
      %v4844 = vpop.permute.xlu0 %4843
      %4845 = vrot.lane.b32.xlu0 %v3128, 64
      %v4846 = vpop.permute.xlu0 %4845
      %4847 = vrot.lane.b32.xlu0 %v3129, 64
      %v4848 = vpop.permute.xlu0 %4847
      %4849 = vrot.lane.b32.xlu0 %v3130, 64
      %v4850 = vpop.permute.xlu0 %4849
      %4851 = vrot.lane.b32.xlu0 %v3131, 64
      %v4852 = vpop.permute.xlu0 %4851
      %4853 = vrot.lane.b32.xlu0 %v3132, 64
      %v4854 = vpop.permute.xlu0 %4853
      %v4863 = vmul.f32 %v4351, %v4840
      %v4864 = vmul.f32 %v4357, %v4842
      %v4865 = vmul.f32 %v4363, %v4844
      %v4866 = vmul.f32 %v4369, %v4846
      %v4867 = vmul.f32 %v4375, %v4848
      %v4868 = vmul.f32 %v4381, %v4850
      %v4869 = vmul.f32 %v4387, %v4852
      %v4870 = vmul.f32 %v4393, %v4854
      %4879 = vrot.lane.b32.xlu0 %v4863, 32
      %v4880 = vpop.permute.xlu0 %4879
      %4881 = vrot.lane.b32.xlu0 %v4864, 32
      %v4882 = vpop.permute.xlu0 %4881
      %4883 = vrot.lane.b32.xlu0 %v4865, 32
      %v4884 = vpop.permute.xlu0 %4883
      %4885 = vrot.lane.b32.xlu0 %v4866, 32
      %v4886 = vpop.permute.xlu0 %4885
      %4887 = vrot.lane.b32.xlu0 %v4867, 32
      %v4888 = vpop.permute.xlu0 %4887
      %4889 = vrot.lane.b32.xlu0 %v4868, 32
      %v4890 = vpop.permute.xlu0 %4889
      %4891 = vrot.lane.b32.xlu0 %v4869, 32
      %v4892 = vpop.permute.xlu0 %4891
      %4893 = vrot.lane.b32.xlu0 %v4870, 32
      %v4894 = vpop.permute.xlu0 %4893
      %v4903 = vadd.f32 %v4823, %v4880
      %v4904 = vadd.f32 %v4824, %v4882
      %v4905 = vadd.f32 %v4825, %v4884
      %v4906 = vadd.f32 %v4826, %v4886
      %v4907 = vadd.f32 %v4827, %v4888
      %v4908 = vadd.f32 %v4828, %v4890
      %v4909 = vadd.f32 %v4829, %v4892
      %v4910 = vadd.f32 %v4830, %v4894
      %4919 = vrot.lane.b32.xlu0 %v3141, 96
      %v4920 = vpop.permute.xlu0 %4919
      %4921 = vrot.lane.b32.xlu0 %v3142, 96
      %v4922 = vpop.permute.xlu0 %4921
      %4923 = vrot.lane.b32.xlu0 %v3143, 96
      %v4924 = vpop.permute.xlu0 %4923
      %4925 = vrot.lane.b32.xlu0 %v3144, 96
      %v4926 = vpop.permute.xlu0 %4925
      %4927 = vrot.lane.b32.xlu0 %v3145, 96
      %v4928 = vpop.permute.xlu0 %4927
      %4929 = vrot.lane.b32.xlu0 %v3146, 96
      %v4930 = vpop.permute.xlu0 %4929
      %4931 = vrot.lane.b32.xlu0 %v3147, 96
      %v4932 = vpop.permute.xlu0 %4931
      %4933 = vrot.lane.b32.xlu0 %v3148, 96
      %v4934 = vpop.permute.xlu0 %4933
      %v4943 = vmul.f32 %v4353, %v4920
      %v4944 = vmul.f32 %v4359, %v4922
      %v4945 = vmul.f32 %v4365, %v4924
      %v4946 = vmul.f32 %v4371, %v4926
      %v4947 = vmul.f32 %v4377, %v4928
      %v4948 = vmul.f32 %v4383, %v4930
      %v4949 = vmul.f32 %v4389, %v4932
      %v4950 = vmul.f32 %v4395, %v4934
      %v4951 = vadd.f32 %v4903, %v4943
      %v4952 = vadd.f32 %v4904, %v4944
      %v4953 = vadd.f32 %v4905, %v4945
      %v4954 = vadd.f32 %v4906, %v4946
      %v4955 = vadd.f32 %v4907, %v4947
      %v4956 = vadd.f32 %v4908, %v4948
      %v4957 = vadd.f32 %v4909, %v4949
      %v4958 = vadd.f32 %v4910, %v4950
      %v4959 = vmul.f32 %v4353, %v3157
      %v4960 = vmul.f32 %v4359, %v3158
      %v4961 = vmul.f32 %v4365, %v3159
      %v4962 = vmul.f32 %v4371, %v3160
      %v4963 = vmul.f32 %v4377, %v3161
      %v4964 = vmul.f32 %v4383, %v3162
      %v4965 = vmul.f32 %v4389, %v3163
      %v4966 = vmul.f32 %v4395, %v3164
      %4975 = vrot.lane.b32.xlu0 %v4959, 96
      %v4976 = vpop.permute.xlu0 %4975
      %4977 = vrot.lane.b32.xlu0 %v4960, 96
      %v4978 = vpop.permute.xlu0 %4977
      %4979 = vrot.lane.b32.xlu0 %v4961, 96
      %v4980 = vpop.permute.xlu0 %4979
      %4981 = vrot.lane.b32.xlu0 %v4962, 96
      %v4982 = vpop.permute.xlu0 %4981
      %4983 = vrot.lane.b32.xlu0 %v4963, 96
      %v4984 = vpop.permute.xlu0 %4983
      %4985 = vrot.lane.b32.xlu0 %v4964, 96
      %v4986 = vpop.permute.xlu0 %4985
      %4987 = vrot.lane.b32.xlu0 %v4965, 96
      %v4988 = vpop.permute.xlu0 %4987
      %4989 = vrot.lane.b32.xlu0 %v4966, 96
      %v4990 = vpop.permute.xlu0 %4989
      %v4999 = vadd.f32 %v4951, %v4976
      %v5000 = vadd.f32 %v4952, %v4978
      %v5001 = vadd.f32 %v4953, %v4980
      %v5002 = vadd.f32 %v4954, %v4982
      %v5003 = vadd.f32 %v4955, %v4984
      %v5004 = vadd.f32 %v4956, %v4986
      %v5005 = vadd.f32 %v4957, %v4988
      %v5006 = vadd.f32 %v4958, %v4990
      %5015 = vrot.lane.b32.xlu0 %v3173, 32
      %v5016 = vpop.permute.xlu0 %5015
      %5017 = vrot.lane.b32.xlu0 %v3174, 32
      %v5018 = vpop.permute.xlu0 %5017
      %5019 = vrot.lane.b32.xlu0 %v3175, 32
      %v5020 = vpop.permute.xlu0 %5019
      %5021 = vrot.lane.b32.xlu0 %v3176, 32
      %v5022 = vpop.permute.xlu0 %5021
      %5023 = vrot.lane.b32.xlu0 %v3177, 32
      %v5024 = vpop.permute.xlu0 %5023
      %5025 = vrot.lane.b32.xlu0 %v3178, 32
      %v5026 = vpop.permute.xlu0 %5025
      %5027 = vrot.lane.b32.xlu0 %v3179, 32
      %v5028 = vpop.permute.xlu0 %5027
      %5029 = vrot.lane.b32.xlu0 %v3180, 32
      %v5030 = vpop.permute.xlu0 %5029
      %v5039 = vmul.f32 %v4353, %v5016
      %v5040 = vmul.f32 %v4359, %v5018
      %v5041 = vmul.f32 %v4365, %v5020
      %v5042 = vmul.f32 %v4371, %v5022
      %v5043 = vmul.f32 %v4377, %v5024
      %v5044 = vmul.f32 %v4383, %v5026
      %v5045 = vmul.f32 %v4389, %v5028
      %v5046 = vmul.f32 %v4395, %v5030
      %5055 = vrot.lane.b32.xlu0 %v5039, 64
      %v5056 = vpop.permute.xlu0 %5055
      %5057 = vrot.lane.b32.xlu0 %v5040, 64
      %v5058 = vpop.permute.xlu0 %5057
      %5059 = vrot.lane.b32.xlu0 %v5041, 64
      %v5060 = vpop.permute.xlu0 %5059
      %5061 = vrot.lane.b32.xlu0 %v5042, 64
      %v5062 = vpop.permute.xlu0 %5061
      %5063 = vrot.lane.b32.xlu0 %v5043, 64
      %v5064 = vpop.permute.xlu0 %5063
      %5065 = vrot.lane.b32.xlu0 %v5044, 64
      %v5066 = vpop.permute.xlu0 %5065
      %5067 = vrot.lane.b32.xlu0 %v5045, 64
      %v5068 = vpop.permute.xlu0 %5067
      %5069 = vrot.lane.b32.xlu0 %v5046, 64
      %v5070 = vpop.permute.xlu0 %5069
      %v5079 = vadd.f32 %v4999, %v5056
      %v5080 = vadd.f32 %v5000, %v5058
      %v5081 = vadd.f32 %v5001, %v5060
      %v5082 = vadd.f32 %v5002, %v5062
      %v5083 = vadd.f32 %v5003, %v5064
      %v5084 = vadd.f32 %v5004, %v5066
      %v5085 = vadd.f32 %v5005, %v5068
      %v5086 = vadd.f32 %v5006, %v5070
      %5095 = vrot.lane.b32.xlu0 %v3189, 64
      %v5096 = vpop.permute.xlu0 %5095
      %5097 = vrot.lane.b32.xlu0 %v3190, 64
      %v5098 = vpop.permute.xlu0 %5097
      %5099 = vrot.lane.b32.xlu0 %v3191, 64
      %v5100 = vpop.permute.xlu0 %5099
      %5101 = vrot.lane.b32.xlu0 %v3192, 64
      %v5102 = vpop.permute.xlu0 %5101
      %5103 = vrot.lane.b32.xlu0 %v3193, 64
      %v5104 = vpop.permute.xlu0 %5103
      %5105 = vrot.lane.b32.xlu0 %v3194, 64
      %v5106 = vpop.permute.xlu0 %5105
      %5107 = vrot.lane.b32.xlu0 %v3195, 64
      %v5108 = vpop.permute.xlu0 %5107
      %5109 = vrot.lane.b32.xlu0 %v3196, 64
      %v5110 = vpop.permute.xlu0 %5109
      %v5119 = vmul.f32 %v4353, %v5096
      %v5120 = vmul.f32 %v4359, %v5098
      %v5121 = vmul.f32 %v4365, %v5100
      %v5122 = vmul.f32 %v4371, %v5102
      %v5123 = vmul.f32 %v4377, %v5104
      %v5124 = vmul.f32 %v4383, %v5106
      %v5125 = vmul.f32 %v4389, %v5108
      %v5126 = vmul.f32 %v4395, %v5110
      %5135 = vrot.lane.b32.xlu0 %v5119, 32
      %v5136 = vpop.permute.xlu0 %5135
      %5137 = vrot.lane.b32.xlu0 %v5120, 32
      %v5138 = vpop.permute.xlu0 %5137
      %5139 = vrot.lane.b32.xlu0 %v5121, 32
      %v5140 = vpop.permute.xlu0 %5139
      %5141 = vrot.lane.b32.xlu0 %v5122, 32
      %v5142 = vpop.permute.xlu0 %5141
      %5143 = vrot.lane.b32.xlu0 %v5123, 32
      %v5144 = vpop.permute.xlu0 %5143
      %5145 = vrot.lane.b32.xlu0 %v5124, 32
      %v5146 = vpop.permute.xlu0 %5145
      %5147 = vrot.lane.b32.xlu0 %v5125, 32
      %v5148 = vpop.permute.xlu0 %5147
      %5149 = vrot.lane.b32.xlu0 %v5126, 32
      %v5150 = vpop.permute.xlu0 %5149
      %v5159 = vadd.f32 %v5079, %v5136
      %v5160 = vadd.f32 %v5080, %v5138
      %v5161 = vadd.f32 %v5081, %v5140
      %v5162 = vadd.f32 %v5082, %v5142
      %v5163 = vadd.f32 %v5083, %v5144
      %v5164 = vadd.f32 %v5084, %v5146
      %v5165 = vadd.f32 %v5085, %v5148
      %v5166 = vadd.f32 %v5086, %v5150
      %5175 = vrot.lane.b32.xlu0 %v3205, 96
      %v5176 = vpop.permute.xlu0 %5175
      %5177 = vrot.lane.b32.xlu0 %v3206, 96
      %v5178 = vpop.permute.xlu0 %5177
      %5179 = vrot.lane.b32.xlu0 %v3207, 96
      %v5180 = vpop.permute.xlu0 %5179
      %5181 = vrot.lane.b32.xlu0 %v3208, 96
      %v5182 = vpop.permute.xlu0 %5181
      %5183 = vrot.lane.b32.xlu0 %v3209, 96
      %v5184 = vpop.permute.xlu0 %5183
      %5185 = vrot.lane.b32.xlu0 %v3210, 96
      %v5186 = vpop.permute.xlu0 %5185
      %5187 = vrot.lane.b32.xlu0 %v3211, 96
      %v5188 = vpop.permute.xlu0 %5187
      %5189 = vrot.lane.b32.xlu0 %v3212, 96
      %v5190 = vpop.permute.xlu0 %5189
      %v5199 = vmul.f32 %v4464, %v5176
      %v5200 = vmul.f32 %v4469, %v5178
      %v5201 = vmul.f32 %v4474, %v5180
      %v5202 = vmul.f32 %v4479, %v5182
      %v5203 = vmul.f32 %v4484, %v5184
      %v5204 = vmul.f32 %v4489, %v5186
      %v5205 = vmul.f32 %v4494, %v5188
      %v5206 = vmul.f32 %v4499, %v5190
      %v5207 = vadd.f32 %v5159, %v5199
      %v5208 = vadd.f32 %v5160, %v5200
      %v5209 = vadd.f32 %v5161, %v5201
      %v5210 = vadd.f32 %v5162, %v5202
      %v5211 = vadd.f32 %v5163, %v5203
      %v5212 = vadd.f32 %v5164, %v5204
      %v5213 = vadd.f32 %v5165, %v5205
      %v5214 = vadd.f32 %v5166, %v5206
      %v5215 = vld [vmem:[%s840] sm:$0xff]
      %v5216 = vld [vmem:[%s840 + $0x8] sm:$0xff]
      %v5217 = vld [vmem:[%s840 + $0x10] sm:$0xff]
      %v5218 = vld [vmem:[%s840 + $0x18] sm:$0xff]
      %v5219 = vld [vmem:[%s840 + $0x20] sm:$0xff]
      %v5220 = vld [vmem:[%s840 + $0x28] sm:$0xff]
      %v5221 = vld [vmem:[%s840 + $0x30] sm:$0xff]
      %v5222 = vld [vmem:[%s840 + $0x38] sm:$0xff]
      %v5223 = vld [vmem:[%s6] sm:$0xff]
      %v5224 = vld [vmem:[%s6 + $0x8] sm:$0xff]
      %v5225 = vld [vmem:[%s6 + $0x10] sm:$0xff]
      %v5226 = vld [vmem:[%s6 + $0x18] sm:$0xff]
      %v5228 = vsel %vm855, %v5207, 0
      %v5231 = vsel %vm855, %v5208, 0
      %v5234 = vsel %vm855, %v5209, 0
      %v5237 = vsel %vm855, %v5210, 0
      %v5240 = vsel %vm855, %v5211, 0
      %v5243 = vsel %vm855, %v5212, 0
      %v5246 = vsel %vm855, %v5213, 0
      %v5249 = vsel %vm855, %v5214, 0
      %5251 = vmatprep.subr.mxu0 0.0
      %5252 = vmatpush1.msra.mxu0 %v5223
      %5253 = vmatprep.subr.mxu0 0.0
      %5254 = vmatpush1.msra.mxu0 %v5224
      %5255 = vmatprep.subr.mxu0 0.0
      %5256 = vmatpush1.msra.mxu0 %v5225
      %5257 = vmatprep.subr.mxu0 0.0
      %5258 = vmatpush1.msra.mxu0 %v5226
      %5259 = vmatprep.subr.mxu0 0.0
      %5260 = vmatpush1.msra.mxu0 0.0
      %5261 = vmatprep.subr.mxu0 0.0
      %5262 = vmatpush1.msra.mxu0 0.0
      %5263 = vmatprep.subr.mxu0 0.0
      %5264 = vmatpush1.msra.mxu0 0.0
      %5265 = vmatprep.subr.mxu0 0.0
      %5266 = vmatpush1.msra.mxu0 0.0
      %5267 = vmatprep.subr.mxu0 0.0
      %5268 = vmatpush1.msra.mxu0 0.0
      %5269 = vmatprep.subr.mxu0 0.0
      %5270 = vmatpush1.msra.mxu0 0.0
      %5271 = vmatprep.subr.mxu0 0.0
      %5272 = vmatpush1.msra.mxu0 0.0
      %5273 = vmatprep.subr.mxu0 0.0
      %5274 = vmatpush1.msra.mxu0 0.0
      %5275 = vmatprep.subr.mxu0 0.0
      %5276 = vmatpush1.msra.mxu0 0.0
      %5277 = vmatprep.subr.mxu0 0.0
      %5278 = vmatpush1.msra.mxu0 0.0
      %5279 = vmatprep.subr.mxu0 0.0
      %5280 = vmatpush1.msra.mxu0 0.0
      %5281 = vmatprep.subr.mxu0 0.0
      %5282 = vmatpush1.msra.mxu0 0.0
      %5283 = vmatprep.subr.mxu0 0.0
      %5284 = vmatpush1.msra.mxu0 0.0
      %5285 = vmatprep.subr.mxu0 0.0
      %5286 = vmatpush1.msra.mxu0 0.0
      %5287 = vmatprep.subr.mxu0 0.0
      %5288 = vmatpush1.msra.mxu0 0.0
      %5289 = vmatprep.subr.mxu0 0.0
      %5290 = vmatpush1.msra.mxu0 0.0
      %5291 = vmatprep.subr.mxu0 0.0
      %5292 = vmatpush1.msra.mxu0 0.0
      %5293 = vmatprep.subr.mxu0 0.0
      %5294 = vmatpush1.msra.mxu0 0.0
      %5295 = vmatprep.subr.mxu0 0.0
      %5296 = vmatpush1.msra.mxu0 0.0
      %5297 = vmatprep.subr.mxu0 0.0
      %5298 = vmatpush1.msra.mxu0 0.0
      %5299 = vmatprep.subr.mxu0 0.0
      %5300 = vmatpush1.msra.mxu0 0.0
      %5301 = vmatprep.subr.mxu0 0.0
      %5302 = vmatpush1.msra.mxu0 0.0
      %5303 = vmatprep.subr.mxu0 0.0
      %5304 = vmatpush1.msra.mxu0 0.0
      %5305 = vmatprep.subr.mxu0 0.0
      %5306 = vmatpush1.msra.mxu0 0.0
      %5307 = vmatprep.subr.mxu0 0.0
      %5308 = vmatpush1.msra.mxu0 0.0
      %5309 = vmatprep.subr.mxu0 0.0
      %5310 = vmatpush1.msra.mxu0 0.0
      %5311 = vmatprep.subr.mxu0 0.0
      %5312 = vmatpush1.msra.mxu0 0.0
      %5313 = vmatprep.subr.mxu0 0.0
      %5314 = vmatpush1.msra.mxu0 0.0
      %5315 = vmatprep.mubr.f32.mxu0 0.0
      %5316 = vmatmul.mubr.f32.gmra.mrb[0].mxu0 %v5228
      %v5317 = vpop.f32.mrb[0].mxu0
      %v5318 = vadd.f32 0.0, %v5317
      %v5319 = vpop.f32.mrb[0].mxu0
      %5320 = vmatprep.mubr.f32.mxu0 0.0
      %5321 = vmatmul.mubr.f32.gmra.mrb[0].mxu0 %v5231
      %v5322 = vpop.f32.mrb[0].mxu0
      %v5323 = vadd.f32 0.0, %v5322
      %v5324 = vpop.f32.mrb[0].mxu0
      %5325 = vmatprep.mubr.f32.mxu0 0.0
      %5326 = vmatmul.mubr.f32.gmra.mrb[0].mxu0 %v5234
      %v5327 = vpop.f32.mrb[0].mxu0
      %v5328 = vadd.f32 0.0, %v5327
      %v5329 = vpop.f32.mrb[0].mxu0
      %5330 = vmatprep.mubr.f32.mxu0 0.0
      %5331 = vmatmul.mubr.f32.gmra.mrb[0].mxu0 %v5237
      %v5332 = vpop.f32.mrb[0].mxu0
      %v5333 = vadd.f32 0.0, %v5332
      %v5334 = vpop.f32.mrb[0].mxu0
      %5335 = vmatprep.mubr.f32.mxu0 0.0
      %5336 = vmatmul.mubr.f32.gmra.mrb[0].mxu0 %v5240
      %v5337 = vpop.f32.mrb[0].mxu0
      %v5338 = vadd.f32 0.0, %v5337
      %v5339 = vpop.f32.mrb[0].mxu0
      %5340 = vmatprep.mubr.f32.mxu0 0.0
      %5341 = vmatmul.mubr.f32.gmra.mrb[0].mxu0 %v5243
      %v5342 = vpop.f32.mrb[0].mxu0
      %v5343 = vadd.f32 0.0, %v5342
      %v5344 = vpop.f32.mrb[0].mxu0
      %5345 = vmatprep.mubr.f32.mxu0 0.0
      %5346 = vmatmul.mubr.f32.gmra.mrb[0].mxu0 %v5246
      %v5347 = vpop.f32.mrb[0].mxu0
      %v5348 = vadd.f32 0.0, %v5347
      %v5349 = vpop.f32.mrb[0].mxu0
      %5350 = vmatprep.mubr.f32.mxu0 0.0
      %5351 = vmatmul.mubr.f32.gmra.mrb[0].mxu0 %v5249
      %v5352 = vpop.f32.mrb[0].mxu0
      %v5353 = vadd.f32 0.0, %v5352
      %v5354 = vpop.f32.mrb[0].mxu0
      %5355 = vdwg.mxu0
      %v5356 = vadd.f32 %v5215, %v5318
      %v5357 = vadd.f32 %v5216, %v5323
      %v5358 = vadd.f32 %v5217, %v5328
      %v5359 = vadd.f32 %v5218, %v5333
      %v5360 = vadd.f32 %v5219, %v5338
      %v5361 = vadd.f32 %v5220, %v5343
      %v5362 = vadd.f32 %v5221, %v5348
      %v5363 = vadd.f32 %v5222, %v5353
      %v5364 = vld [vmem:[%s7] sm:$0x1]
      %v5366 = vlaneseq
      %v5367 = vshrl.u32 %v5366, 7
      %v5368 = vsub.s32 0, %v5367
      %v5369 = vrot.slane %v5364, %v5368
      %v5371 = vadd.f32 %v5356, %v5369
      %v5372 = vadd.f32 %v5357, %v5369
      %v5373 = vadd.f32 %v5358, %v5369
      %v5374 = vadd.f32 %v5359, %v5369
      %v5375 = vadd.f32 %v5360, %v5369
      %v5376 = vadd.f32 %v5361, %v5369
      %v5377 = vadd.f32 %v5362, %v5369
      %v5378 = vadd.f32 %v5363, %v5369
      %v5379 = vsel %vm855, %v5371, 0.0
      %5380 = vadd.xlane.f32.xlu0 %v5379
      %v5381 = vpop.xlane.xlu0 %5380
      %v5382 = vsel %vm855, %v5372, 0.0
      %5383 = vadd.xlane.f32.xlu0 %v5382
      %v5384 = vpop.xlane.xlu0 %5383
      %v5385 = vsel %vm855, %v5373, 0.0
      %5386 = vadd.xlane.f32.xlu0 %v5385
      %v5387 = vpop.xlane.xlu0 %5386
      %v5388 = vsel %vm855, %v5374, 0.0
      %5389 = vadd.xlane.f32.xlu0 %v5388
      %v5390 = vpop.xlane.xlu0 %5389
      %v5391 = vsel %vm855, %v5375, 0.0
      %5392 = vadd.xlane.f32.xlu0 %v5391
      %v5393 = vpop.xlane.xlu0 %5392
      %v5394 = vsel %vm855, %v5376, 0.0
      %5395 = vadd.xlane.f32.xlu0 %v5394
      %v5396 = vpop.xlane.xlu0 %5395
      %v5397 = vsel %vm855, %v5377, 0.0
      %5398 = vadd.xlane.f32.xlu0 %v5397
      %v5399 = vpop.xlane.xlu0 %5398
      %v5400 = vsel %vm855, %v5378, 0.0
      %5401 = vadd.xlane.f32.xlu0 %v5400
      %v5402 = vpop.xlane.xlu0 %5401
      %v5403 = vmul.f32 %v5381, %v880
      %v5404 = vmul.f32 %v5384, %v880
      %v5405 = vmul.f32 %v5387, %v880
      %v5406 = vmul.f32 %v5390, %v880
      %v5407 = vmul.f32 %v5393, %v880
      %v5408 = vmul.f32 %v5396, %v880
      %v5409 = vmul.f32 %v5399, %v880
      %v5410 = vmul.f32 %v5402, %v880
      %v5411 = vsub.f32 %v5371, %v5403
      %v5412 = vsub.f32 %v5372, %v5404
      %v5413 = vsub.f32 %v5373, %v5405
      %v5414 = vsub.f32 %v5374, %v5406
      %v5415 = vsub.f32 %v5375, %v5407
      %v5416 = vsub.f32 %v5376, %v5408
      %v5417 = vsub.f32 %v5377, %v5409
      %v5418 = vsub.f32 %v5378, %v5410
      %v5419 = vmul.f32 %v5411, %v5411
      %v5420 = vmul.f32 %v5412, %v5412
      %v5421 = vmul.f32 %v5413, %v5413
      %v5422 = vmul.f32 %v5414, %v5414
      %v5423 = vmul.f32 %v5415, %v5415
      %v5424 = vmul.f32 %v5416, %v5416
      %v5425 = vmul.f32 %v5417, %v5417
      %v5426 = vmul.f32 %v5418, %v5418
      %v5427 = vsel %vm855, %v5419, 0.0
      %5428 = vadd.xlane.f32.xlu0 %v5427
      %v5429 = vpop.xlane.xlu0 %5428
      %v5430 = vsel %vm855, %v5420, 0.0
      %5431 = vadd.xlane.f32.xlu0 %v5430
      %v5432 = vpop.xlane.xlu0 %5431
      %v5433 = vsel %vm855, %v5421, 0.0
      %5434 = vadd.xlane.f32.xlu0 %v5433
      %v5435 = vpop.xlane.xlu0 %5434
      %v5436 = vsel %vm855, %v5422, 0.0
      %5437 = vadd.xlane.f32.xlu0 %v5436
      %v5438 = vpop.xlane.xlu0 %5437
      %v5439 = vsel %vm855, %v5423, 0.0
      %5440 = vadd.xlane.f32.xlu0 %v5439
      %v5441 = vpop.xlane.xlu0 %5440
      %v5442 = vsel %vm855, %v5424, 0.0
      %5443 = vadd.xlane.f32.xlu0 %v5442
      %v5444 = vpop.xlane.xlu0 %5443
      %v5445 = vsel %vm855, %v5425, 0.0
      %5446 = vadd.xlane.f32.xlu0 %v5445
      %v5447 = vpop.xlane.xlu0 %5446
      %v5448 = vsel %vm855, %v5426, 0.0
      %5449 = vadd.xlane.f32.xlu0 %v5448
      %v5450 = vpop.xlane.xlu0 %5449
      %v5451 = vmul.f32 %v5429, %v880
      %v5452 = vmul.f32 %v5432, %v880
      %v5453 = vmul.f32 %v5435, %v880
      %v5454 = vmul.f32 %v5438, %v880
      %v5455 = vmul.f32 %v5441, %v880
      %v5456 = vmul.f32 %v5444, %v880
      %v5457 = vmul.f32 %v5447, %v880
      %v5458 = vmul.f32 %v5450, %v880
      %v5459 = vadd.f32 %v5451, 1e-05
      %v5460 = vadd.f32 %v5452, 1e-05
      %v5461 = vadd.f32 %v5453, 1e-05
      %v5462 = vadd.f32 %v5454, 1e-05
      %v5463 = vadd.f32 %v5455, 1e-05
      %v5464 = vadd.f32 %v5456, 1e-05
      %v5465 = vadd.f32 %v5457, 1e-05
      %v5466 = vadd.f32 %v5458, 1e-05
      %v5467 = vrsqrt.pop %v5459
      %v5468 = vrsqrt.pop %v5460
      %v5469 = vrsqrt.pop %v5461
      %v5470 = vrsqrt.pop %v5462
      %v5471 = vrsqrt.pop %v5463
      %v5472 = vrsqrt.pop %v5464
      %v5473 = vrsqrt.pop %v5465
      %v5474 = vrsqrt.pop %v5466
      %v5475 = vmul.f32 %v5411, %v5467
      %v5476 = vmul.f32 %v5412, %v5468
      %v5477 = vmul.f32 %v5413, %v5469
      %v5478 = vmul.f32 %v5414, %v5470
      %v5479 = vmul.f32 %v5415, %v5471
      %v5480 = vmul.f32 %v5416, %v5472
      %v5481 = vmul.f32 %v5417, %v5473
      %v5482 = vmul.f32 %v5418, %v5474
      %v5483 = vlaneseq
      %v5484 = vshrl.u32 %v5483, 7
      %v5485 = vsub.s32 4, %v5484
      %v5486 = vrot.slane %v846, %v5485
      %v5487 = vmul.f32 %v5475, %v5486
      %v5488 = vmul.f32 %v5476, %v5486
      %v5489 = vmul.f32 %v5477, %v5486
      %v5490 = vmul.f32 %v5478, %v5486
      %v5491 = vmul.f32 %v5479, %v5486
      %v5492 = vmul.f32 %v5480, %v5486
      %v5493 = vmul.f32 %v5481, %v5486
      %v5494 = vmul.f32 %v5482, %v5486
      %v5495 = vlaneseq
      %v5496 = vshrl.u32 %v5495, 7
      %v5497 = vsub.s32 5, %v5496
      %v5498 = vrot.slane %v846, %v5497
      %v5499 = vadd.f32 %v5487, %v5498
      %v5500 = vadd.f32 %v5488, %v5498
      %v5501 = vadd.f32 %v5489, %v5498
      %v5502 = vadd.f32 %v5490, %v5498
      %v5503 = vadd.f32 %v5491, %v5498
      %v5504 = vadd.f32 %v5492, %v5498
      %v5505 = vadd.f32 %v5493, %v5498
      %v5506 = vadd.f32 %v5494, %v5498
      %v5507 = vld [vmem:[%s8] sm:$0xff]
      %v5508 = vld [vmem:[%s8 + $0x8] sm:$0xff]
      %v5509 = vld [vmem:[%s8 + $0x10] sm:$0xff]
      %v5510 = vld [vmem:[%s8 + $0x18] sm:$0xff]
      %v5511 = vld [vmem:[%s9] sm:$0x1]
      %v5513 = vlaneseq
      %v5514 = vshrl.u32 %v5513, 7
      %v5515 = vsub.s32 0, %v5514
      %v5516 = vrot.slane %v5511, %v5515
      %v5519 = vsel %vm855, %v5499, 0
      %v5522 = vsel %vm855, %v5500, 0
      %v5525 = vsel %vm855, %v5501, 0
      %v5528 = vsel %vm855, %v5502, 0
      %v5531 = vsel %vm855, %v5503, 0
      %v5534 = vsel %vm855, %v5504, 0
      %v5537 = vsel %vm855, %v5505, 0
      %v5540 = vsel %vm855, %v5506, 0
      %5542 = vmatprep.subr.mxu0 0.0
      %5543 = vmatpush1.msra.mxu0 %v5507
      %5544 = vmatprep.subr.mxu0 0.0
      %5545 = vmatpush1.msra.mxu0 %v5508
      %5546 = vmatprep.subr.mxu0 0.0
      %5547 = vmatpush1.msra.mxu0 %v5509
      %5548 = vmatprep.subr.mxu0 0.0
      %5549 = vmatpush1.msra.mxu0 %v5510
      %5550 = vmatprep.subr.mxu0 0.0
      %5551 = vmatpush1.msra.mxu0 0.0
      %5552 = vmatprep.subr.mxu0 0.0
      %5553 = vmatpush1.msra.mxu0 0.0
      %5554 = vmatprep.subr.mxu0 0.0
      %5555 = vmatpush1.msra.mxu0 0.0
      %5556 = vmatprep.subr.mxu0 0.0
      %5557 = vmatpush1.msra.mxu0 0.0
      %5558 = vmatprep.subr.mxu0 0.0
      %5559 = vmatpush1.msra.mxu0 0.0
      %5560 = vmatprep.subr.mxu0 0.0
      %5561 = vmatpush1.msra.mxu0 0.0
      %5562 = vmatprep.subr.mxu0 0.0
      %5563 = vmatpush1.msra.mxu0 0.0
      %5564 = vmatprep.subr.mxu0 0.0
      %5565 = vmatpush1.msra.mxu0 0.0
      %5566 = vmatprep.subr.mxu0 0.0
      %5567 = vmatpush1.msra.mxu0 0.0
      %5568 = vmatprep.subr.mxu0 0.0
      %5569 = vmatpush1.msra.mxu0 0.0
      %5570 = vmatprep.subr.mxu0 0.0
      %5571 = vmatpush1.msra.mxu0 0.0
      %5572 = vmatprep.subr.mxu0 0.0
      %5573 = vmatpush1.msra.mxu0 0.0
      %5574 = vmatprep.subr.mxu0 0.0
      %5575 = vmatpush1.msra.mxu0 0.0
      %5576 = vmatprep.subr.mxu0 0.0
      %5577 = vmatpush1.msra.mxu0 0.0
      %5578 = vmatprep.subr.mxu0 0.0
      %5579 = vmatpush1.msra.mxu0 0.0
      %5580 = vmatprep.subr.mxu0 0.0
      %5581 = vmatpush1.msra.mxu0 0.0
      %5582 = vmatprep.subr.mxu0 0.0
      %5583 = vmatpush1.msra.mxu0 0.0
      %5584 = vmatprep.subr.mxu0 0.0
      %5585 = vmatpush1.msra.mxu0 0.0
      %5586 = vmatprep.subr.mxu0 0.0
      %5587 = vmatpush1.msra.mxu0 0.0
      %5588 = vmatprep.subr.mxu0 0.0
      %5589 = vmatpush1.msra.mxu0 0.0
      %5590 = vmatprep.subr.mxu0 0.0
      %5591 = vmatpush1.msra.mxu0 0.0
      %5592 = vmatprep.subr.mxu0 0.0
      %5593 = vmatpush1.msra.mxu0 0.0
      %5594 = vmatprep.subr.mxu0 0.0
      %5595 = vmatpush1.msra.mxu0 0.0
      %5596 = vmatprep.subr.mxu0 0.0
      %5597 = vmatpush1.msra.mxu0 0.0
      %5598 = vmatprep.subr.mxu0 0.0
      %5599 = vmatpush1.msra.mxu0 0.0
      %5600 = vmatprep.subr.mxu0 0.0
      %5601 = vmatpush1.msra.mxu0 0.0
      %5602 = vmatprep.subr.mxu0 0.0
      %5603 = vmatpush1.msra.mxu0 0.0
      %5604 = vmatprep.subr.mxu0 0.0
      %5605 = vmatpush1.msra.mxu0 0.0
      %5606 = vmatprep.mubr.f32.mxu0 0.0
      %5607 = vmatmul.mubr.f32.gmra.mrb[0].mxu0 %v5519
      %v5608 = vpop.f32.mrb[0].mxu0
      %v5609 = vadd.f32 %v5516, %v5608
      %v5610 = vpop.f32.mrb[0].mxu0
      %5611 = vmatprep.mubr.f32.mxu0 0.0
      %5612 = vmatmul.mubr.f32.gmra.mrb[0].mxu0 %v5522
      %v5613 = vpop.f32.mrb[0].mxu0
      %v5614 = vadd.f32 %v5516, %v5613
      %v5615 = vpop.f32.mrb[0].mxu0
      %5616 = vmatprep.mubr.f32.mxu0 0.0
      %5617 = vmatmul.mubr.f32.gmra.mrb[0].mxu0 %v5525
      %v5618 = vpop.f32.mrb[0].mxu0
      %v5619 = vadd.f32 %v5516, %v5618
      %v5620 = vpop.f32.mrb[0].mxu0
      %5621 = vmatprep.mubr.f32.mxu0 0.0
      %5622 = vmatmul.mubr.f32.gmra.mrb[0].mxu0 %v5528
      %v5623 = vpop.f32.mrb[0].mxu0
      %v5624 = vadd.f32 %v5516, %v5623
      %v5625 = vpop.f32.mrb[0].mxu0
      %5626 = vmatprep.mubr.f32.mxu0 0.0
      %5627 = vmatmul.mubr.f32.gmra.mrb[0].mxu0 %v5531
      %v5628 = vpop.f32.mrb[0].mxu0
      %v5629 = vadd.f32 %v5516, %v5628
      %v5630 = vpop.f32.mrb[0].mxu0
      %5631 = vmatprep.mubr.f32.mxu0 0.0
      %5632 = vmatmul.mubr.f32.gmra.mrb[0].mxu0 %v5534
      %v5633 = vpop.f32.mrb[0].mxu0
      %v5634 = vadd.f32 %v5516, %v5633
      %v5635 = vpop.f32.mrb[0].mxu0
      %5636 = vmatprep.mubr.f32.mxu0 0.0
      %5637 = vmatmul.mubr.f32.gmra.mrb[0].mxu0 %v5537
      %v5638 = vpop.f32.mrb[0].mxu0
      %v5639 = vadd.f32 %v5516, %v5638
      %v5640 = vpop.f32.mrb[0].mxu0
      %5641 = vmatprep.mubr.f32.mxu0 0.0
      %5642 = vmatmul.mubr.f32.gmra.mrb[0].mxu0 %v5540
      %v5643 = vpop.f32.mrb[0].mxu0
      %v5644 = vadd.f32 %v5516, %v5643
      %v5645 = vpop.f32.mrb[0].mxu0
      %5646 = vdwg.mxu0
      %v5647 = vld [vmem:[%s20] sm:$0xff]
      %v5648 = vld [vmem:[%s20 + $0x8] sm:$0xff]
      %v5649 = vld [vmem:[%s20 + $0x10] sm:$0xff]
      %v5650 = vld [vmem:[%s20 + $0x18] sm:$0xff]
      %v5651 = vld [vmem:[%s20 + $0x20] sm:$0xff]
      %v5652 = vld [vmem:[%s20 + $0x28] sm:$0xff]
      %v5653 = vld [vmem:[%s20 + $0x30] sm:$0xff]
      %v5654 = vld [vmem:[%s20 + $0x38] sm:$0xff]
      %v5655 = vld [vmem:[%s20 + $0x40] sm:$0xff]
      %v5656 = vld [vmem:[%s20 + $0x48] sm:$0xff]
      %v5657 = vld [vmem:[%s20 + $0x50] sm:$0xff]
      %v5658 = vld [vmem:[%s20 + $0x58] sm:$0xff]
      %v5659 = vld [vmem:[%s20 + $0x60] sm:$0xff]
      %v5660 = vld [vmem:[%s20 + $0x68] sm:$0xff]
      %v5661 = vld [vmem:[%s20 + $0x70] sm:$0xff]
      %v5662 = vld [vmem:[%s20 + $0x78] sm:$0xff]
      %v5663 = vld [vmem:[%s20 + $0x80] sm:$0xff]
      %v5664 = vld [vmem:[%s20 + $0x88] sm:$0xff]
      %v5665 = vld [vmem:[%s20 + $0x90] sm:$0xff]
      %v5666 = vld [vmem:[%s20 + $0x98] sm:$0xff]
      %v5667 = vld [vmem:[%s20 + $0xa0] sm:$0xff]
      %v5668 = vld [vmem:[%s20 + $0xa8] sm:$0xff]
      %v5669 = vld [vmem:[%s20 + $0xb0] sm:$0xff]
      %v5670 = vld [vmem:[%s20 + $0xb8] sm:$0xff]
      %v5672 = vsel %vm1141, %v5647, 0
      %v5675 = vsel %vm1141, %v5648, 0
      %v5678 = vsel %vm1141, %v5649, 0
      %v5681 = vsel %vm1141, %v5650, 0
      %v5684 = vsel %vm1141, %v5651, 0
      %v5687 = vsel %vm1141, %v5652, 0
      %v5690 = vsel %vm1141, %v5653, 0
      %v5693 = vsel %vm1141, %v5654, 0
      %v5696 = vsel %vm1141, %v5655, 0
      %v5699 = vsel %vm1141, %v5656, 0
      %v5702 = vsel %vm1141, %v5657, 0
      %v5705 = vsel %vm1141, %v5658, 0
      %v5708 = vsel %vm1141, %v5659, 0
      %v5711 = vsel %vm1141, %v5660, 0
      %v5714 = vsel %vm1141, %v5661, 0
      %v5717 = vsel %vm1141, %v5662, 0
      %v5720 = vsel %vm1141, %v5663, 0
      %v5723 = vsel %vm1141, %v5664, 0
      %v5726 = vsel %vm1141, %v5665, 0
      %v5729 = vsel %vm1141, %v5666, 0
      %v5732 = vsel %vm1141, %v5667, 0
      %v5735 = vsel %vm1141, %v5668, 0
      %v5738 = vsel %vm1141, %v5669, 0
      %v5741 = vsel %vm1141, %v5670, 0
      %5743 = vmatprep.subr.mxu0 0.0
      %5744 = vmatpush1.msra.mxu0 %v5609
      %5745 = vmatprep.subr.mxu0 0.0
      %5746 = vmatpush1.msra.mxu0 %v5614
      %5747 = vmatprep.subr.mxu0 0.0
      %5748 = vmatpush1.msra.mxu0 %v5619
      %5749 = vmatprep.subr.mxu0 0.0
      %5750 = vmatpush1.msra.mxu0 %v5624
      %5751 = vmatprep.subr.mxu0 0.0
      %5752 = vmatpush1.msra.mxu0 %v5629
      %5753 = vmatprep.subr.mxu0 0.0
      %5754 = vmatpush1.msra.mxu0 %v5634
      %5755 = vmatprep.subr.mxu0 0.0
      %5756 = vmatpush1.msra.mxu0 %v5639
      %5757 = vmatprep.subr.mxu0 0.0
      %5758 = vmatpush1.msra.mxu0 %v5644
      %5759 = vmatprep.subr.mxu0 0.0
      %5760 = vmatpush1.msra.mxu0 0.0
      %5761 = vmatprep.subr.mxu0 0.0
      %5762 = vmatpush1.msra.mxu0 0.0
      %5763 = vmatprep.subr.mxu0 0.0
      %5764 = vmatpush1.msra.mxu0 0.0
      %5765 = vmatprep.subr.mxu0 0.0
      %5766 = vmatpush1.msra.mxu0 0.0
      %5767 = vmatprep.subr.mxu0 0.0
      %5768 = vmatpush1.msra.mxu0 0.0
      %5769 = vmatprep.subr.mxu0 0.0
      %5770 = vmatpush1.msra.mxu0 0.0
      %5771 = vmatprep.subr.mxu0 0.0
      %5772 = vmatpush1.msra.mxu0 0.0
      %5773 = vmatprep.subr.mxu0 0.0
      %5774 = vmatpush1.msra.mxu0 0.0
      %5775 = vmatprep.subr.mxu0 0.0
      %5776 = vmatpush1.msra.mxu0 0.0
      %5777 = vmatprep.subr.mxu0 0.0
      %5778 = vmatpush1.msra.mxu0 0.0
      %5779 = vmatprep.subr.mxu0 0.0
      %5780 = vmatpush1.msra.mxu0 0.0
      %5781 = vmatprep.subr.mxu0 0.0
      %5782 = vmatpush1.msra.mxu0 0.0
      %5783 = vmatprep.subr.mxu0 0.0
      %5784 = vmatpush1.msra.mxu0 0.0
      %5785 = vmatprep.subr.mxu0 0.0
      %5786 = vmatpush1.msra.mxu0 0.0
      %5787 = vmatprep.subr.mxu0 0.0
      %5788 = vmatpush1.msra.mxu0 0.0
      %5789 = vmatprep.subr.mxu0 0.0
      %5790 = vmatpush1.msra.mxu0 0.0
      %5791 = vmatprep.subr.mxu0 0.0
      %5792 = vmatpush1.msra.mxu0 0.0
      %5793 = vmatprep.subr.mxu0 0.0
      %5794 = vmatpush1.msra.mxu0 0.0
      %5795 = vmatprep.subr.mxu0 0.0
      %5796 = vmatpush1.msra.mxu0 0.0
      %5797 = vmatprep.subr.mxu0 0.0
      %5798 = vmatpush1.msra.mxu0 0.0
      %5799 = vmatprep.subr.mxu0 0.0
      %5800 = vmatpush1.msra.mxu0 0.0
      %5801 = vmatprep.subr.mxu0 0.0
      %5802 = vmatpush1.msra.mxu0 0.0
      %5803 = vmatprep.subr.mxu0 0.0
      %5804 = vmatpush1.msra.mxu0 0.0
      %5805 = vmatprep.subr.mxu0 0.0
      %5806 = vmatpush1.msra.mxu0 0.0
      %5807 = vmatprep.mubr.f32.mxu0 0.0
      %5808 = vmatmul.mubr.f32.gmra.mrb[0].mxu0 %v5672
      %v5809 = vpop.f32.mrb[0].mxu0
      %v5810 = vadd.f32 0.0, %v5809
      %v5811 = vpop.f32.mrb[0].mxu0
      %5812 = vmatprep.mubr.f32.mxu0 0.0
      %5813 = vmatmul.mubr.f32.gmra.mrb[0].mxu0 %v5675
      %v5814 = vpop.f32.mrb[0].mxu0
      %v5815 = vadd.f32 0.0, %v5814
      %v5816 = vpop.f32.mrb[0].mxu0
      %5817 = vmatprep.mubr.f32.mxu0 0.0
      %5818 = vmatmul.mubr.f32.gmra.mrb[0].mxu0 %v5678
      %v5819 = vpop.f32.mrb[0].mxu0
      %v5820 = vadd.f32 0.0, %v5819
      %v5821 = vpop.f32.mrb[0].mxu0
      %5822 = vmatprep.mubr.f32.mxu0 0.0
      %5823 = vmatmul.mubr.f32.gmra.mrb[0].mxu0 %v5681
      %v5824 = vpop.f32.mrb[0].mxu0
      %v5825 = vadd.f32 0.0, %v5824
      %v5826 = vpop.f32.mrb[0].mxu0
      %5827 = vmatprep.mubr.f32.mxu0 0.0
      %5828 = vmatmul.mubr.f32.gmra.mrb[0].mxu0 %v5684
      %v5829 = vpop.f32.mrb[0].mxu0
      %v5830 = vadd.f32 0.0, %v5829
      %v5831 = vpop.f32.mrb[0].mxu0
      %5832 = vmatprep.mubr.f32.mxu0 0.0
      %5833 = vmatmul.mubr.f32.gmra.mrb[0].mxu0 %v5687
      %v5834 = vpop.f32.mrb[0].mxu0
      %v5835 = vadd.f32 0.0, %v5834
      %v5836 = vpop.f32.mrb[0].mxu0
      %5837 = vmatprep.mubr.f32.mxu0 0.0
      %5838 = vmatmul.mubr.f32.gmra.mrb[0].mxu0 %v5690
      %v5839 = vpop.f32.mrb[0].mxu0
      %v5840 = vadd.f32 0.0, %v5839
      %v5841 = vpop.f32.mrb[0].mxu0
      %5842 = vmatprep.mubr.f32.mxu0 0.0
      %5843 = vmatmul.mubr.f32.gmra.mrb[0].mxu0 %v5693
      %v5844 = vpop.f32.mrb[0].mxu0
      %v5845 = vadd.f32 0.0, %v5844
      %v5846 = vpop.f32.mrb[0].mxu0
      %5847 = vmatprep.mubr.f32.mxu0 0.0
      %5848 = vmatmul.mubr.f32.gmra.mrb[0].mxu0 %v5696
      %v5849 = vpop.f32.mrb[0].mxu0
      %v5850 = vadd.f32 0.0, %v5849
      %v5851 = vpop.f32.mrb[0].mxu0
      %5852 = vmatprep.mubr.f32.mxu0 0.0
      %5853 = vmatmul.mubr.f32.gmra.mrb[0].mxu0 %v5699
      %v5854 = vpop.f32.mrb[0].mxu0
      %v5855 = vadd.f32 0.0, %v5854
      %v5856 = vpop.f32.mrb[0].mxu0
      %5857 = vmatprep.mubr.f32.mxu0 0.0
      %5858 = vmatmul.mubr.f32.gmra.mrb[0].mxu0 %v5702
      %v5859 = vpop.f32.mrb[0].mxu0
      %v5860 = vadd.f32 0.0, %v5859
      %v5861 = vpop.f32.mrb[0].mxu0
      %5862 = vmatprep.mubr.f32.mxu0 0.0
      %5863 = vmatmul.mubr.f32.gmra.mrb[0].mxu0 %v5705
      %v5864 = vpop.f32.mrb[0].mxu0
      %v5865 = vadd.f32 0.0, %v5864
      %v5866 = vpop.f32.mrb[0].mxu0
      %5867 = vmatprep.mubr.f32.mxu0 0.0
      %5868 = vmatmul.mubr.f32.gmra.mrb[0].mxu0 %v5708
      %v5869 = vpop.f32.mrb[0].mxu0
      %v5870 = vadd.f32 0.0, %v5869
      %v5871 = vpop.f32.mrb[0].mxu0
      %5872 = vmatprep.mubr.f32.mxu0 0.0
      %5873 = vmatmul.mubr.f32.gmra.mrb[0].mxu0 %v5711
      %v5874 = vpop.f32.mrb[0].mxu0
      %v5875 = vadd.f32 0.0, %v5874
      %v5876 = vpop.f32.mrb[0].mxu0
      %5877 = vmatprep.mubr.f32.mxu0 0.0
      %5878 = vmatmul.mubr.f32.gmra.mrb[0].mxu0 %v5714
      %v5879 = vpop.f32.mrb[0].mxu0
      %v5880 = vadd.f32 0.0, %v5879
      %v5881 = vpop.f32.mrb[0].mxu0
      %5882 = vmatprep.mubr.f32.mxu0 0.0
      %5883 = vmatmul.mubr.f32.gmra.mrb[0].mxu0 %v5717
      %v5884 = vpop.f32.mrb[0].mxu0
      %v5885 = vadd.f32 0.0, %v5884
      %v5886 = vpop.f32.mrb[0].mxu0
      %5887 = vmatprep.mubr.f32.mxu0 0.0
      %5888 = vmatmul.mubr.f32.gmra.mrb[0].mxu0 %v5720
      %v5889 = vpop.f32.mrb[0].mxu0
      %v5890 = vadd.f32 0.0, %v5889
      %v5891 = vpop.f32.mrb[0].mxu0
      %5892 = vmatprep.mubr.f32.mxu0 0.0
      %5893 = vmatmul.mubr.f32.gmra.mrb[0].mxu0 %v5723
      %v5894 = vpop.f32.mrb[0].mxu0
      %v5895 = vadd.f32 0.0, %v5894
      %v5896 = vpop.f32.mrb[0].mxu0
      %5897 = vmatprep.mubr.f32.mxu0 0.0
      %5898 = vmatmul.mubr.f32.gmra.mrb[0].mxu0 %v5726
      %v5899 = vpop.f32.mrb[0].mxu0
      %v5900 = vadd.f32 0.0, %v5899
      %v5901 = vpop.f32.mrb[0].mxu0
      %5902 = vmatprep.mubr.f32.mxu0 0.0
      %5903 = vmatmul.mubr.f32.gmra.mrb[0].mxu0 %v5729
      %v5904 = vpop.f32.mrb[0].mxu0
      %v5905 = vadd.f32 0.0, %v5904
      %v5906 = vpop.f32.mrb[0].mxu0
      %5907 = vmatprep.mubr.f32.mxu0 0.0
      %5908 = vmatmul.mubr.f32.gmra.mrb[0].mxu0 %v5732
      %v5909 = vpop.f32.mrb[0].mxu0
      %v5910 = vadd.f32 0.0, %v5909
      %v5911 = vpop.f32.mrb[0].mxu0
      %5912 = vmatprep.mubr.f32.mxu0 0.0
      %5913 = vmatmul.mubr.f32.gmra.mrb[0].mxu0 %v5735
      %v5914 = vpop.f32.mrb[0].mxu0
      %v5915 = vadd.f32 0.0, %v5914
      %v5916 = vpop.f32.mrb[0].mxu0
      %5917 = vmatprep.mubr.f32.mxu0 0.0
      %5918 = vmatmul.mubr.f32.gmra.mrb[0].mxu0 %v5738
      %v5919 = vpop.f32.mrb[0].mxu0
      %v5920 = vadd.f32 0.0, %v5919
      %v5921 = vpop.f32.mrb[0].mxu0
      %5922 = vmatprep.mubr.f32.mxu0 0.0
      %5923 = vmatmul.mubr.f32.gmra.mrb[0].mxu0 %v5741
      %v5924 = vpop.f32.mrb[0].mxu0
      %v5925 = vadd.f32 0.0, %v5924
      %v5926 = vpop.f32.mrb[0].mxu0
      %5927 = vdwg.mxu0
      %5928 = vst.msk [vmem:[#allocation2] sm:$0xff] %vm1141, %v5810
      %5929 = vst.msk [vmem:[#allocation2 + $0x8] sm:$0xff] %vm1141, %v5815
      %5930 = vst.msk [vmem:[#allocation2 + $0x10] sm:$0xff] %vm1141, %v5820
      %5931 = vst.msk [vmem:[#allocation2 + $0x18] sm:$0xff] %vm1141, %v5825
      %5932 = vst.msk [vmem:[#allocation2 + $0x20] sm:$0xff] %vm1141, %v5830
      %5933 = vst.msk [vmem:[#allocation2 + $0x28] sm:$0xff] %vm1141, %v5835
      %5934 = vst.msk [vmem:[#allocation2 + $0x30] sm:$0xff] %vm1141, %v5840
      %5935 = vst.msk [vmem:[#allocation2 + $0x38] sm:$0xff] %vm1141, %v5845
      %5936 = vst.msk [vmem:[#allocation2 + $0x40] sm:$0xff] %vm1141, %v5850
      %5937 = vst.msk [vmem:[#allocation2 + $0x48] sm:$0xff] %vm1141, %v5855
      %5938 = vst.msk [vmem:[#allocation2 + $0x50] sm:$0xff] %vm1141, %v5860
      %5939 = vst.msk [vmem:[#allocation2 + $0x58] sm:$0xff] %vm1141, %v5865
      %5940 = vst.msk [vmem:[#allocation2 + $0x60] sm:$0xff] %vm1141, %v5870
      %5941 = vst.msk [vmem:[#allocation2 + $0x68] sm:$0xff] %vm1141, %v5875
      %5942 = vst.msk [vmem:[#allocation2 + $0x70] sm:$0xff] %vm1141, %v5880
      %5943 = vst.msk [vmem:[#allocation2 + $0x78] sm:$0xff] %vm1141, %v5885
      %5944 = vst.msk [vmem:[#allocation2 + $0x80] sm:$0xff] %vm1141, %v5890
      %5945 = vst.msk [vmem:[#allocation2 + $0x88] sm:$0xff] %vm1141, %v5895
      %5946 = vst.msk [vmem:[#allocation2 + $0x90] sm:$0xff] %vm1141, %v5900
      %5947 = vst.msk [vmem:[#allocation2 + $0x98] sm:$0xff] %vm1141, %v5905
      %5948 = vst.msk [vmem:[#allocation2 + $0xa0] sm:$0xff] %vm1141, %v5910
      %5949 = vst.msk [vmem:[#allocation2 + $0xa8] sm:$0xff] %vm1141, %v5915
      %5950 = vst.msk [vmem:[#allocation2 + $0xb0] sm:$0xff] %vm1141, %v5920
      %5951 = vst.msk [vmem:[#allocation2 + $0xb8] sm:$0xff] %vm1141, %v5925
      %v5952 = vld [vmem:[%s20 + $0xc0] sm:$0xff]
      %v5953 = vld [vmem:[%s20 + $0xc8] sm:$0xff]
      %v5954 = vld [vmem:[%s20 + $0xd0] sm:$0xff]
      %v5955 = vld [vmem:[%s20 + $0xd8] sm:$0xff]
      %v5956 = vld [vmem:[%s20 + $0xe0] sm:$0xff]
      %v5957 = vld [vmem:[%s20 + $0xe8] sm:$0xff]
      %v5958 = vld [vmem:[%s20 + $0xf0] sm:$0xff]
      %v5959 = vld [vmem:[%s20 + $0xf8] sm:$0xff]
      %v5960 = vld [vmem:[%s20 + $0x100] sm:$0xff]
      %v5961 = vld [vmem:[%s20 + $0x108] sm:$0xff]
      %v5962 = vld [vmem:[%s20 + $0x110] sm:$0xff]
      %v5963 = vld [vmem:[%s20 + $0x118] sm:$0xff]
      %v5964 = vld [vmem:[%s20 + $0x120] sm:$0xff]
      %v5965 = vld [vmem:[%s20 + $0x128] sm:$0xff]
      %v5966 = vld [vmem:[%s20 + $0x130] sm:$0xff]
      %v5967 = vld [vmem:[%s20 + $0x138] sm:$0xff]
      %v5968 = vld [vmem:[%s20 + $0x140] sm:$0xff]
      %v5969 = vld [vmem:[%s20 + $0x148] sm:$0xff]
      %v5970 = vld [vmem:[%s20 + $0x150] sm:$0xff]
      %v5971 = vld [vmem:[%s20 + $0x158] sm:$0xff]
      %v5972 = vld [vmem:[%s20 + $0x160] sm:$0xff]
      %v5973 = vld [vmem:[%s20 + $0x168] sm:$0xff]
      %v5974 = vld [vmem:[%s20 + $0x170] sm:$0xff]
      %v5975 = vld [vmem:[%s20 + $0x178] sm:$0xff]
      %v5977 = vsel %vm1141, %v5952, 0
      %v5980 = vsel %vm1141, %v5953, 0
      %v5983 = vsel %vm1141, %v5954, 0
      %v5986 = vsel %vm1141, %v5955, 0
      %v5989 = vsel %vm1141, %v5956, 0
      %v5992 = vsel %vm1141, %v5957, 0
      %v5995 = vsel %vm1141, %v5958, 0
      %v5998 = vsel %vm1141, %v5959, 0
      %v6001 = vsel %vm1141, %v5960, 0
      %v6004 = vsel %vm1141, %v5961, 0
      %v6007 = vsel %vm1141, %v5962, 0
      %v6010 = vsel %vm1141, %v5963, 0
      %v6013 = vsel %vm1141, %v5964, 0
      %v6016 = vsel %vm1141, %v5965, 0
      %v6019 = vsel %vm1141, %v5966, 0
      %v6022 = vsel %vm1141, %v5967, 0
      %v6025 = vsel %vm1141, %v5968, 0
      %v6028 = vsel %vm1141, %v5969, 0
      %v6031 = vsel %vm1141, %v5970, 0
      %v6034 = vsel %vm1141, %v5971, 0
      %v6037 = vsel %vm1141, %v5972, 0
      %v6040 = vsel %vm1141, %v5973, 0
      %v6043 = vsel %vm1141, %v5974, 0
      %v6046 = vsel %vm1141, %v5975, 0
      %6048 = vmatprep.subr.mxu0 0.0
      %6049 = vmatpush1.msra.mxu0 %v5609
      %6050 = vmatprep.subr.mxu0 0.0
      %6051 = vmatpush1.msra.mxu0 %v5614
      %6052 = vmatprep.subr.mxu0 0.0
      %6053 = vmatpush1.msra.mxu0 %v5619
      %6054 = vmatprep.subr.mxu0 0.0
      %6055 = vmatpush1.msra.mxu0 %v5624
      %6056 = vmatprep.subr.mxu0 0.0
      %6057 = vmatpush1.msra.mxu0 %v5629
      %6058 = vmatprep.subr.mxu0 0.0
      %6059 = vmatpush1.msra.mxu0 %v5634
      %6060 = vmatprep.subr.mxu0 0.0
      %6061 = vmatpush1.msra.mxu0 %v5639
      %6062 = vmatprep.subr.mxu0 0.0
      %6063 = vmatpush1.msra.mxu0 %v5644
      %6064 = vmatprep.subr.mxu0 0.0
      %6065 = vmatpush1.msra.mxu0 0.0
      %6066 = vmatprep.subr.mxu0 0.0
      %6067 = vmatpush1.msra.mxu0 0.0
      %6068 = vmatprep.subr.mxu0 0.0
      %6069 = vmatpush1.msra.mxu0 0.0
      %6070 = vmatprep.subr.mxu0 0.0
      %6071 = vmatpush1.msra.mxu0 0.0
      %6072 = vmatprep.subr.mxu0 0.0
      %6073 = vmatpush1.msra.mxu0 0.0
      %6074 = vmatprep.subr.mxu0 0.0
      %6075 = vmatpush1.msra.mxu0 0.0
      %6076 = vmatprep.subr.mxu0 0.0
      %6077 = vmatpush1.msra.mxu0 0.0
      %6078 = vmatprep.subr.mxu0 0.0
      %6079 = vmatpush1.msra.mxu0 0.0
      %6080 = vmatprep.subr.mxu0 0.0
      %6081 = vmatpush1.msra.mxu0 0.0
      %6082 = vmatprep.subr.mxu0 0.0
      %6083 = vmatpush1.msra.mxu0 0.0
      %6084 = vmatprep.subr.mxu0 0.0
      %6085 = vmatpush1.msra.mxu0 0.0
      %6086 = vmatprep.subr.mxu0 0.0
      %6087 = vmatpush1.msra.mxu0 0.0
      %6088 = vmatprep.subr.mxu0 0.0
      %6089 = vmatpush1.msra.mxu0 0.0
      %6090 = vmatprep.subr.mxu0 0.0
      %6091 = vmatpush1.msra.mxu0 0.0
      %6092 = vmatprep.subr.mxu0 0.0
      %6093 = vmatpush1.msra.mxu0 0.0
      %6094 = vmatprep.subr.mxu0 0.0
      %6095 = vmatpush1.msra.mxu0 0.0
      %6096 = vmatprep.subr.mxu0 0.0
      %6097 = vmatpush1.msra.mxu0 0.0
      %6098 = vmatprep.subr.mxu0 0.0
      %6099 = vmatpush1.msra.mxu0 0.0
      %6100 = vmatprep.subr.mxu0 0.0
      %6101 = vmatpush1.msra.mxu0 0.0
      %6102 = vmatprep.subr.mxu0 0.0
      %6103 = vmatpush1.msra.mxu0 0.0
      %6104 = vmatprep.subr.mxu0 0.0
      %6105 = vmatpush1.msra.mxu0 0.0
      %6106 = vmatprep.subr.mxu0 0.0
      %6107 = vmatpush1.msra.mxu0 0.0
      %6108 = vmatprep.subr.mxu0 0.0
      %6109 = vmatpush1.msra.mxu0 0.0
      %6110 = vmatprep.subr.mxu0 0.0
      %6111 = vmatpush1.msra.mxu0 0.0
      %6112 = vmatprep.mubr.f32.mxu0 0.0
      %6113 = vmatmul.mubr.f32.gmra.mrb[0].mxu0 %v5977
      %v6114 = vpop.f32.mrb[0].mxu0
      %v6115 = vadd.f32 0.0, %v6114
      %v6116 = vpop.f32.mrb[0].mxu0
      %6117 = vmatprep.mubr.f32.mxu0 0.0
      %6118 = vmatmul.mubr.f32.gmra.mrb[0].mxu0 %v5980
      %v6119 = vpop.f32.mrb[0].mxu0
      %v6120 = vadd.f32 0.0, %v6119
      %v6121 = vpop.f32.mrb[0].mxu0
      %6122 = vmatprep.mubr.f32.mxu0 0.0
      %6123 = vmatmul.mubr.f32.gmra.mrb[0].mxu0 %v5983
      %v6124 = vpop.f32.mrb[0].mxu0
      %v6125 = vadd.f32 0.0, %v6124
      %v6126 = vpop.f32.mrb[0].mxu0
      %6127 = vmatprep.mubr.f32.mxu0 0.0
      %6128 = vmatmul.mubr.f32.gmra.mrb[0].mxu0 %v5986
      %v6129 = vpop.f32.mrb[0].mxu0
      %v6130 = vadd.f32 0.0, %v6129
      %v6131 = vpop.f32.mrb[0].mxu0
      %6132 = vmatprep.mubr.f32.mxu0 0.0
      %6133 = vmatmul.mubr.f32.gmra.mrb[0].mxu0 %v5989
      %v6134 = vpop.f32.mrb[0].mxu0
      %v6135 = vadd.f32 0.0, %v6134
      %v6136 = vpop.f32.mrb[0].mxu0
      %6137 = vmatprep.mubr.f32.mxu0 0.0
      %6138 = vmatmul.mubr.f32.gmra.mrb[0].mxu0 %v5992
      %v6139 = vpop.f32.mrb[0].mxu0
      %v6140 = vadd.f32 0.0, %v6139
      %v6141 = vpop.f32.mrb[0].mxu0
      %6142 = vmatprep.mubr.f32.mxu0 0.0
      %6143 = vmatmul.mubr.f32.gmra.mrb[0].mxu0 %v5995
      %v6144 = vpop.f32.mrb[0].mxu0
      %v6145 = vadd.f32 0.0, %v6144
      %v6146 = vpop.f32.mrb[0].mxu0
      %6147 = vmatprep.mubr.f32.mxu0 0.0
      %6148 = vmatmul.mubr.f32.gmra.mrb[0].mxu0 %v5998
      %v6149 = vpop.f32.mrb[0].mxu0
      %v6150 = vadd.f32 0.0, %v6149
      %v6151 = vpop.f32.mrb[0].mxu0
      %6152 = vmatprep.mubr.f32.mxu0 0.0
      %6153 = vmatmul.mubr.f32.gmra.mrb[0].mxu0 %v6001
      %v6154 = vpop.f32.mrb[0].mxu0
      %v6155 = vadd.f32 0.0, %v6154
      %v6156 = vpop.f32.mrb[0].mxu0
      %6157 = vmatprep.mubr.f32.mxu0 0.0
      %6158 = vmatmul.mubr.f32.gmra.mrb[0].mxu0 %v6004
      %v6159 = vpop.f32.mrb[0].mxu0
      %v6160 = vadd.f32 0.0, %v6159
      %v6161 = vpop.f32.mrb[0].mxu0
      %6162 = vmatprep.mubr.f32.mxu0 0.0
      %6163 = vmatmul.mubr.f32.gmra.mrb[0].mxu0 %v6007
      %v6164 = vpop.f32.mrb[0].mxu0
      %v6165 = vadd.f32 0.0, %v6164
      %v6166 = vpop.f32.mrb[0].mxu0
      %6167 = vmatprep.mubr.f32.mxu0 0.0
      %6168 = vmatmul.mubr.f32.gmra.mrb[0].mxu0 %v6010
      %v6169 = vpop.f32.mrb[0].mxu0
      %v6170 = vadd.f32 0.0, %v6169
      %v6171 = vpop.f32.mrb[0].mxu0
      %6172 = vmatprep.mubr.f32.mxu0 0.0
      %6173 = vmatmul.mubr.f32.gmra.mrb[0].mxu0 %v6013
      %v6174 = vpop.f32.mrb[0].mxu0
      %v6175 = vadd.f32 0.0, %v6174
      %v6176 = vpop.f32.mrb[0].mxu0
      %6177 = vmatprep.mubr.f32.mxu0 0.0
      %6178 = vmatmul.mubr.f32.gmra.mrb[0].mxu0 %v6016
      %v6179 = vpop.f32.mrb[0].mxu0
      %v6180 = vadd.f32 0.0, %v6179
      %v6181 = vpop.f32.mrb[0].mxu0
      %6182 = vmatprep.mubr.f32.mxu0 0.0
      %6183 = vmatmul.mubr.f32.gmra.mrb[0].mxu0 %v6019
      %v6184 = vpop.f32.mrb[0].mxu0
      %v6185 = vadd.f32 0.0, %v6184
      %v6186 = vpop.f32.mrb[0].mxu0
      %6187 = vmatprep.mubr.f32.mxu0 0.0
      %6188 = vmatmul.mubr.f32.gmra.mrb[0].mxu0 %v6022
      %v6189 = vpop.f32.mrb[0].mxu0
      %v6190 = vadd.f32 0.0, %v6189
      %v6191 = vpop.f32.mrb[0].mxu0
      %6192 = vmatprep.mubr.f32.mxu0 0.0
      %6193 = vmatmul.mubr.f32.gmra.mrb[0].mxu0 %v6025
      %v6194 = vpop.f32.mrb[0].mxu0
      %v6195 = vadd.f32 0.0, %v6194
      %v6196 = vpop.f32.mrb[0].mxu0
      %6197 = vmatprep.mubr.f32.mxu0 0.0
      %6198 = vmatmul.mubr.f32.gmra.mrb[0].mxu0 %v6028
      %v6199 = vpop.f32.mrb[0].mxu0
      %v6200 = vadd.f32 0.0, %v6199
      %v6201 = vpop.f32.mrb[0].mxu0
      %6202 = vmatprep.mubr.f32.mxu0 0.0
      %6203 = vmatmul.mubr.f32.gmra.mrb[0].mxu0 %v6031
      %v6204 = vpop.f32.mrb[0].mxu0
      %v6205 = vadd.f32 0.0, %v6204
      %v6206 = vpop.f32.mrb[0].mxu0
      %6207 = vmatprep.mubr.f32.mxu0 0.0
      %6208 = vmatmul.mubr.f32.gmra.mrb[0].mxu0 %v6034
      %v6209 = vpop.f32.mrb[0].mxu0
      %v6210 = vadd.f32 0.0, %v6209
      %v6211 = vpop.f32.mrb[0].mxu0
      %6212 = vmatprep.mubr.f32.mxu0 0.0
      %6213 = vmatmul.mubr.f32.gmra.mrb[0].mxu0 %v6037
      %v6214 = vpop.f32.mrb[0].mxu0
      %v6215 = vadd.f32 0.0, %v6214
      %v6216 = vpop.f32.mrb[0].mxu0
      %6217 = vmatprep.mubr.f32.mxu0 0.0
      %6218 = vmatmul.mubr.f32.gmra.mrb[0].mxu0 %v6040
      %v6219 = vpop.f32.mrb[0].mxu0
      %v6220 = vadd.f32 0.0, %v6219
      %v6221 = vpop.f32.mrb[0].mxu0
      %6222 = vmatprep.mubr.f32.mxu0 0.0
      %6223 = vmatmul.mubr.f32.gmra.mrb[0].mxu0 %v6043
      %v6224 = vpop.f32.mrb[0].mxu0
      %v6225 = vadd.f32 0.0, %v6224
      %v6226 = vpop.f32.mrb[0].mxu0
      %6227 = vmatprep.mubr.f32.mxu0 0.0
      %6228 = vmatmul.mubr.f32.gmra.mrb[0].mxu0 %v6046
      %v6229 = vpop.f32.mrb[0].mxu0
      %v6230 = vadd.f32 0.0, %v6229
      %v6231 = vpop.f32.mrb[0].mxu0
      %6232 = vdwg.mxu0
      %6233 = vst.msk [vmem:[#allocation2 + $0xc0] sm:$0xff] %vm1141, %v6115
      %6234 = vst.msk [vmem:[#allocation2 + $0xc8] sm:$0xff] %vm1141, %v6120
      %6235 = vst.msk [vmem:[#allocation2 + $0xd0] sm:$0xff] %vm1141, %v6125
      %6236 = vst.msk [vmem:[#allocation2 + $0xd8] sm:$0xff] %vm1141, %v6130
      %6237 = vst.msk [vmem:[#allocation2 + $0xe0] sm:$0xff] %vm1141, %v6135
      %6238 = vst.msk [vmem:[#allocation2 + $0xe8] sm:$0xff] %vm1141, %v6140
      %6239 = vst.msk [vmem:[#allocation2 + $0xf0] sm:$0xff] %vm1141, %v6145
      %6240 = vst.msk [vmem:[#allocation2 + $0xf8] sm:$0xff] %vm1141, %v6150
      %6241 = vst.msk [vmem:[#allocation2 + $0x100] sm:$0xff] %vm1141, %v6155
      %6242 = vst.msk [vmem:[#allocation2 + $0x108] sm:$0xff] %vm1141, %v6160
      %6243 = vst.msk [vmem:[#allocation2 + $0x110] sm:$0xff] %vm1141, %v6165
      %6244 = vst.msk [vmem:[#allocation2 + $0x118] sm:$0xff] %vm1141, %v6170
      %6245 = vst.msk [vmem:[#allocation2 + $0x120] sm:$0xff] %vm1141, %v6175
      %6246 = vst.msk [vmem:[#allocation2 + $0x128] sm:$0xff] %vm1141, %v6180
      %6247 = vst.msk [vmem:[#allocation2 + $0x130] sm:$0xff] %vm1141, %v6185
      %6248 = vst.msk [vmem:[#allocation2 + $0x138] sm:$0xff] %vm1141, %v6190
      %6249 = vst.msk [vmem:[#allocation2 + $0x140] sm:$0xff] %vm1141, %v6195
      %6250 = vst.msk [vmem:[#allocation2 + $0x148] sm:$0xff] %vm1141, %v6200
      %6251 = vst.msk [vmem:[#allocation2 + $0x150] sm:$0xff] %vm1141, %v6205
      %6252 = vst.msk [vmem:[#allocation2 + $0x158] sm:$0xff] %vm1141, %v6210
      %6253 = vst.msk [vmem:[#allocation2 + $0x160] sm:$0xff] %vm1141, %v6215
      %6254 = vst.msk [vmem:[#allocation2 + $0x168] sm:$0xff] %vm1141, %v6220
      %6255 = vst.msk [vmem:[#allocation2 + $0x170] sm:$0xff] %vm1141, %v6225
      %6256 = vst.msk [vmem:[#allocation2 + $0x178] sm:$0xff] %vm1141, %v6230
      %v6257 = vld [vmem:[%s20 + $0x180] sm:$0xff]
      %v6258 = vld [vmem:[%s20 + $0x188] sm:$0xff]
      %v6259 = vld [vmem:[%s20 + $0x190] sm:$0xff]
      %v6260 = vld [vmem:[%s20 + $0x198] sm:$0xff]
      %v6261 = vld [vmem:[%s20 + $0x1a0] sm:$0xff]
      %v6262 = vld [vmem:[%s20 + $0x1a8] sm:$0xff]
      %v6263 = vld [vmem:[%s20 + $0x1b0] sm:$0xff]
      %v6264 = vld [vmem:[%s20 + $0x1b8] sm:$0xff]
      %v6265 = vld [vmem:[%s20 + $0x1c0] sm:$0xff]
      %v6266 = vld [vmem:[%s20 + $0x1c8] sm:$0xff]
      %v6267 = vld [vmem:[%s20 + $0x1d0] sm:$0xff]
      %v6268 = vld [vmem:[%s20 + $0x1d8] sm:$0xff]
      %v6269 = vld [vmem:[%s20 + $0x1e0] sm:$0xff]
      %v6270 = vld [vmem:[%s20 + $0x1e8] sm:$0xff]
      %v6271 = vld [vmem:[%s20 + $0x1f0] sm:$0xff]
      %v6272 = vld [vmem:[%s20 + $0x1f8] sm:$0xff]
      %v6273 = vld [vmem:[%s20 + $0x200] sm:$0xff]
      %v6274 = vld [vmem:[%s20 + $0x208] sm:$0xff]
      %v6275 = vld [vmem:[%s20 + $0x210] sm:$0xff]
      %v6276 = vld [vmem:[%s20 + $0x218] sm:$0xff]
      %v6277 = vld [vmem:[%s20 + $0x220] sm:$0xff]
      %v6278 = vld [vmem:[%s20 + $0x228] sm:$0xff]
      %v6279 = vld [vmem:[%s20 + $0x230] sm:$0xff]
      %v6280 = vld [vmem:[%s20 + $0x238] sm:$0xff]
      %v6282 = vsel %vm1141, %v6257, 0
      %v6285 = vsel %vm1141, %v6258, 0
      %v6288 = vsel %vm1141, %v6259, 0
      %v6291 = vsel %vm1141, %v6260, 0
      %v6294 = vsel %vm1141, %v6261, 0
      %v6297 = vsel %vm1141, %v6262, 0
      %v6300 = vsel %vm1141, %v6263, 0
      %v6303 = vsel %vm1141, %v6264, 0
      %v6306 = vsel %vm1141, %v6265, 0
      %v6309 = vsel %vm1141, %v6266, 0
      %v6312 = vsel %vm1141, %v6267, 0
      %v6315 = vsel %vm1141, %v6268, 0
      %v6318 = vsel %vm1141, %v6269, 0
      %v6321 = vsel %vm1141, %v6270, 0
      %v6324 = vsel %vm1141, %v6271, 0
      %v6327 = vsel %vm1141, %v6272, 0
      %v6330 = vsel %vm1141, %v6273, 0
      %v6333 = vsel %vm1141, %v6274, 0
      %v6336 = vsel %vm1141, %v6275, 0
      %v6339 = vsel %vm1141, %v6276, 0
      %v6342 = vsel %vm1141, %v6277, 0
      %v6345 = vsel %vm1141, %v6278, 0
      %v6348 = vsel %vm1141, %v6279, 0
      %v6351 = vsel %vm1141, %v6280, 0
      %6353 = vmatprep.subr.mxu0 0.0
      %6354 = vmatpush1.msra.mxu0 %v5609
      %6355 = vmatprep.subr.mxu0 0.0
      %6356 = vmatpush1.msra.mxu0 %v5614
      %6357 = vmatprep.subr.mxu0 0.0
      %6358 = vmatpush1.msra.mxu0 %v5619
      %6359 = vmatprep.subr.mxu0 0.0
      %6360 = vmatpush1.msra.mxu0 %v5624
      %6361 = vmatprep.subr.mxu0 0.0
      %6362 = vmatpush1.msra.mxu0 %v5629
      %6363 = vmatprep.subr.mxu0 0.0
      %6364 = vmatpush1.msra.mxu0 %v5634
      %6365 = vmatprep.subr.mxu0 0.0
      %6366 = vmatpush1.msra.mxu0 %v5639
      %6367 = vmatprep.subr.mxu0 0.0
      %6368 = vmatpush1.msra.mxu0 %v5644
      %6369 = vmatprep.subr.mxu0 0.0
      %6370 = vmatpush1.msra.mxu0 0.0
      %6371 = vmatprep.subr.mxu0 0.0
      %6372 = vmatpush1.msra.mxu0 0.0
      %6373 = vmatprep.subr.mxu0 0.0
      %6374 = vmatpush1.msra.mxu0 0.0
      %6375 = vmatprep.subr.mxu0 0.0
      %6376 = vmatpush1.msra.mxu0 0.0
      %6377 = vmatprep.subr.mxu0 0.0
      %6378 = vmatpush1.msra.mxu0 0.0
      %6379 = vmatprep.subr.mxu0 0.0
      %6380 = vmatpush1.msra.mxu0 0.0
      %6381 = vmatprep.subr.mxu0 0.0
      %6382 = vmatpush1.msra.mxu0 0.0
      %6383 = vmatprep.subr.mxu0 0.0
      %6384 = vmatpush1.msra.mxu0 0.0
      %6385 = vmatprep.subr.mxu0 0.0
      %6386 = vmatpush1.msra.mxu0 0.0
      %6387 = vmatprep.subr.mxu0 0.0
      %6388 = vmatpush1.msra.mxu0 0.0
      %6389 = vmatprep.subr.mxu0 0.0
      %6390 = vmatpush1.msra.mxu0 0.0
      %6391 = vmatprep.subr.mxu0 0.0
      %6392 = vmatpush1.msra.mxu0 0.0
      %6393 = vmatprep.subr.mxu0 0.0
      %6394 = vmatpush1.msra.mxu0 0.0
      %6395 = vmatprep.subr.mxu0 0.0
      %6396 = vmatpush1.msra.mxu0 0.0
      %6397 = vmatprep.subr.mxu0 0.0
      %6398 = vmatpush1.msra.mxu0 0.0
      %6399 = vmatprep.subr.mxu0 0.0
      %6400 = vmatpush1.msra.mxu0 0.0
      %6401 = vmatprep.subr.mxu0 0.0
      %6402 = vmatpush1.msra.mxu0 0.0
      %6403 = vmatprep.subr.mxu0 0.0
      %6404 = vmatpush1.msra.mxu0 0.0
      %6405 = vmatprep.subr.mxu0 0.0
      %6406 = vmatpush1.msra.mxu0 0.0
      %6407 = vmatprep.subr.mxu0 0.0
      %6408 = vmatpush1.msra.mxu0 0.0
      %6409 = vmatprep.subr.mxu0 0.0
      %6410 = vmatpush1.msra.mxu0 0.0
      %6411 = vmatprep.subr.mxu0 0.0
      %6412 = vmatpush1.msra.mxu0 0.0
      %6413 = vmatprep.subr.mxu0 0.0
      %6414 = vmatpush1.msra.mxu0 0.0
      %6415 = vmatprep.subr.mxu0 0.0
      %6416 = vmatpush1.msra.mxu0 0.0
      %6417 = vmatprep.mubr.f32.mxu0 0.0
      %6418 = vmatmul.mubr.f32.gmra.mrb[0].mxu0 %v6282
      %v6419 = vpop.f32.mrb[0].mxu0
      %v6420 = vadd.f32 0.0, %v6419
      %v6421 = vpop.f32.mrb[0].mxu0
      %6422 = vmatprep.mubr.f32.mxu0 0.0
      %6423 = vmatmul.mubr.f32.gmra.mrb[0].mxu0 %v6285
      %v6424 = vpop.f32.mrb[0].mxu0
      %v6425 = vadd.f32 0.0, %v6424
      %v6426 = vpop.f32.mrb[0].mxu0
      %6427 = vmatprep.mubr.f32.mxu0 0.0
      %6428 = vmatmul.mubr.f32.gmra.mrb[0].mxu0 %v6288
      %v6429 = vpop.f32.mrb[0].mxu0
      %v6430 = vadd.f32 0.0, %v6429
      %v6431 = vpop.f32.mrb[0].mxu0
      %6432 = vmatprep.mubr.f32.mxu0 0.0
      %6433 = vmatmul.mubr.f32.gmra.mrb[0].mxu0 %v6291
      %v6434 = vpop.f32.mrb[0].mxu0
      %v6435 = vadd.f32 0.0, %v6434
      %v6436 = vpop.f32.mrb[0].mxu0
      %6437 = vmatprep.mubr.f32.mxu0 0.0
      %6438 = vmatmul.mubr.f32.gmra.mrb[0].mxu0 %v6294
      %v6439 = vpop.f32.mrb[0].mxu0
      %v6440 = vadd.f32 0.0, %v6439
      %v6441 = vpop.f32.mrb[0].mxu0
      %6442 = vmatprep.mubr.f32.mxu0 0.0
      %6443 = vmatmul.mubr.f32.gmra.mrb[0].mxu0 %v6297
      %v6444 = vpop.f32.mrb[0].mxu0
      %v6445 = vadd.f32 0.0, %v6444
      %v6446 = vpop.f32.mrb[0].mxu0
      %6447 = vmatprep.mubr.f32.mxu0 0.0
      %6448 = vmatmul.mubr.f32.gmra.mrb[0].mxu0 %v6300
      %v6449 = vpop.f32.mrb[0].mxu0
      %v6450 = vadd.f32 0.0, %v6449
      %v6451 = vpop.f32.mrb[0].mxu0
      %6452 = vmatprep.mubr.f32.mxu0 0.0
      %6453 = vmatmul.mubr.f32.gmra.mrb[0].mxu0 %v6303
      %v6454 = vpop.f32.mrb[0].mxu0
      %v6455 = vadd.f32 0.0, %v6454
      %v6456 = vpop.f32.mrb[0].mxu0
      %6457 = vmatprep.mubr.f32.mxu0 0.0
      %6458 = vmatmul.mubr.f32.gmra.mrb[0].mxu0 %v6306
      %v6459 = vpop.f32.mrb[0].mxu0
      %v6460 = vadd.f32 0.0, %v6459
      %v6461 = vpop.f32.mrb[0].mxu0
      %6462 = vmatprep.mubr.f32.mxu0 0.0
      %6463 = vmatmul.mubr.f32.gmra.mrb[0].mxu0 %v6309
      %v6464 = vpop.f32.mrb[0].mxu0
      %v6465 = vadd.f32 0.0, %v6464
      %v6466 = vpop.f32.mrb[0].mxu0
      %6467 = vmatprep.mubr.f32.mxu0 0.0
      %6468 = vmatmul.mubr.f32.gmra.mrb[0].mxu0 %v6312
      %v6469 = vpop.f32.mrb[0].mxu0
      %v6470 = vadd.f32 0.0, %v6469
      %v6471 = vpop.f32.mrb[0].mxu0
      %6472 = vmatprep.mubr.f32.mxu0 0.0
      %6473 = vmatmul.mubr.f32.gmra.mrb[0].mxu0 %v6315
      %v6474 = vpop.f32.mrb[0].mxu0
      %v6475 = vadd.f32 0.0, %v6474
      %v6476 = vpop.f32.mrb[0].mxu0
      %6477 = vmatprep.mubr.f32.mxu0 0.0
      %6478 = vmatmul.mubr.f32.gmra.mrb[0].mxu0 %v6318
      %v6479 = vpop.f32.mrb[0].mxu0
      %v6480 = vadd.f32 0.0, %v6479
      %v6481 = vpop.f32.mrb[0].mxu0
      %6482 = vmatprep.mubr.f32.mxu0 0.0
      %6483 = vmatmul.mubr.f32.gmra.mrb[0].mxu0 %v6321
      %v6484 = vpop.f32.mrb[0].mxu0
      %v6485 = vadd.f32 0.0, %v6484
      %v6486 = vpop.f32.mrb[0].mxu0
      %6487 = vmatprep.mubr.f32.mxu0 0.0
      %6488 = vmatmul.mubr.f32.gmra.mrb[0].mxu0 %v6324
      %v6489 = vpop.f32.mrb[0].mxu0
      %v6490 = vadd.f32 0.0, %v6489
      %v6491 = vpop.f32.mrb[0].mxu0
      %6492 = vmatprep.mubr.f32.mxu0 0.0
      %6493 = vmatmul.mubr.f32.gmra.mrb[0].mxu0 %v6327
      %v6494 = vpop.f32.mrb[0].mxu0
      %v6495 = vadd.f32 0.0, %v6494
      %v6496 = vpop.f32.mrb[0].mxu0
      %6497 = vmatprep.mubr.f32.mxu0 0.0
      %6498 = vmatmul.mubr.f32.gmra.mrb[0].mxu0 %v6330
      %v6499 = vpop.f32.mrb[0].mxu0
      %v6500 = vadd.f32 0.0, %v6499
      %v6501 = vpop.f32.mrb[0].mxu0
      %6502 = vmatprep.mubr.f32.mxu0 0.0
      %6503 = vmatmul.mubr.f32.gmra.mrb[0].mxu0 %v6333
      %v6504 = vpop.f32.mrb[0].mxu0
      %v6505 = vadd.f32 0.0, %v6504
      %v6506 = vpop.f32.mrb[0].mxu0
      %6507 = vmatprep.mubr.f32.mxu0 0.0
      %6508 = vmatmul.mubr.f32.gmra.mrb[0].mxu0 %v6336
      %v6509 = vpop.f32.mrb[0].mxu0
      %v6510 = vadd.f32 0.0, %v6509
      %v6511 = vpop.f32.mrb[0].mxu0
      %6512 = vmatprep.mubr.f32.mxu0 0.0
      %6513 = vmatmul.mubr.f32.gmra.mrb[0].mxu0 %v6339
      %v6514 = vpop.f32.mrb[0].mxu0
      %v6515 = vadd.f32 0.0, %v6514
      %v6516 = vpop.f32.mrb[0].mxu0
      %6517 = vmatprep.mubr.f32.mxu0 0.0
      %6518 = vmatmul.mubr.f32.gmra.mrb[0].mxu0 %v6342
      %v6519 = vpop.f32.mrb[0].mxu0
      %v6520 = vadd.f32 0.0, %v6519
      %v6521 = vpop.f32.mrb[0].mxu0
      %6522 = vmatprep.mubr.f32.mxu0 0.0
      %6523 = vmatmul.mubr.f32.gmra.mrb[0].mxu0 %v6345
      %v6524 = vpop.f32.mrb[0].mxu0
      %v6525 = vadd.f32 0.0, %v6524
      %v6526 = vpop.f32.mrb[0].mxu0
      %6527 = vmatprep.mubr.f32.mxu0 0.0
      %6528 = vmatmul.mubr.f32.gmra.mrb[0].mxu0 %v6348
      %v6529 = vpop.f32.mrb[0].mxu0
      %v6530 = vadd.f32 0.0, %v6529
      %v6531 = vpop.f32.mrb[0].mxu0
      %6532 = vmatprep.mubr.f32.mxu0 0.0
      %6533 = vmatmul.mubr.f32.gmra.mrb[0].mxu0 %v6351
      %v6534 = vpop.f32.mrb[0].mxu0
      %v6535 = vadd.f32 0.0, %v6534
      %v6536 = vpop.f32.mrb[0].mxu0
      %6537 = vdwg.mxu0
      %6538 = vst.msk [vmem:[#allocation2 + $0x180] sm:$0xff] %vm1141, %v6420
      %6539 = vst.msk [vmem:[#allocation2 + $0x188] sm:$0xff] %vm1141, %v6425
      %6540 = vst.msk [vmem:[#allocation2 + $0x190] sm:$0xff] %vm1141, %v6430
      %6541 = vst.msk [vmem:[#allocation2 + $0x198] sm:$0xff] %vm1141, %v6435
      %6542 = vst.msk [vmem:[#allocation2 + $0x1a0] sm:$0xff] %vm1141, %v6440
      %6543 = vst.msk [vmem:[#allocation2 + $0x1a8] sm:$0xff] %vm1141, %v6445
      %6544 = vst.msk [vmem:[#allocation2 + $0x1b0] sm:$0xff] %vm1141, %v6450
      %6545 = vst.msk [vmem:[#allocation2 + $0x1b8] sm:$0xff] %vm1141, %v6455
      %6546 = vst.msk [vmem:[#allocation2 + $0x1c0] sm:$0xff] %vm1141, %v6460
      %6547 = vst.msk [vmem:[#allocation2 + $0x1c8] sm:$0xff] %vm1141, %v6465
      %6548 = vst.msk [vmem:[#allocation2 + $0x1d0] sm:$0xff] %vm1141, %v6470
      %6549 = vst.msk [vmem:[#allocation2 + $0x1d8] sm:$0xff] %vm1141, %v6475
      %6550 = vst.msk [vmem:[#allocation2 + $0x1e0] sm:$0xff] %vm1141, %v6480
      %6551 = vst.msk [vmem:[#allocation2 + $0x1e8] sm:$0xff] %vm1141, %v6485
      %6552 = vst.msk [vmem:[#allocation2 + $0x1f0] sm:$0xff] %vm1141, %v6490
      %6553 = vst.msk [vmem:[#allocation2 + $0x1f8] sm:$0xff] %vm1141, %v6495
      %6554 = vst.msk [vmem:[#allocation2 + $0x200] sm:$0xff] %vm1141, %v6500
      %6555 = vst.msk [vmem:[#allocation2 + $0x208] sm:$0xff] %vm1141, %v6505
      %6556 = vst.msk [vmem:[#allocation2 + $0x210] sm:$0xff] %vm1141, %v6510
      %6557 = vst.msk [vmem:[#allocation2 + $0x218] sm:$0xff] %vm1141, %v6515
      %6558 = vst.msk [vmem:[#allocation2 + $0x220] sm:$0xff] %vm1141, %v6520
      %6559 = vst.msk [vmem:[#allocation2 + $0x228] sm:$0xff] %vm1141, %v6525
      %6560 = vst.msk [vmem:[#allocation2 + $0x230] sm:$0xff] %vm1141, %v6530
      %6561 = vst.msk [vmem:[#allocation2 + $0x238] sm:$0xff] %vm1141, %v6535
      %v6562 = vld [vmem:[%s10] sm:$0xff]
      %v6563 = vld [vmem:[%s10 + $0x8] sm:$0x1]
      %v6564 = vld [vmem:[%s11] sm:$0x1]
      %v6566 = vlaneseq
      %v6567 = vshrl.u32 %v6566, 7
      %v6568 = vsub.s32 0, %v6567
      %v6569 = vrot.slane %v6564, %v6568
      %v6571 = vadd.f32 %v6569, 0.0
      %v6572 = vld [vmem:[#allocation2] sm:$0xff]
      %v6573 = vld [vmem:[#allocation2 + $0x8] sm:$0xff]
      %v6574 = vld [vmem:[#allocation2 + $0x10] sm:$0xff]
      %v6575 = vld [vmem:[#allocation2 + $0x18] sm:$0xff]
      %v6576 = vld [vmem:[#allocation2 + $0x20] sm:$0xff]
      %v6577 = vld [vmem:[#allocation2 + $0x28] sm:$0xff]
      %v6578 = vld [vmem:[#allocation2 + $0x30] sm:$0xff]
      %v6579 = vld [vmem:[#allocation2 + $0x38] sm:$0xff]
      %v6580 = vlaneseq
      %v6581 = vshrl.u32 %v6580, 7
      %v6582 = vsub.s32 0, %v6581
      %v6583 = vrot.slane %v6562, %v6582
      %v6584 = vmul.f32 %v6572, %v6583
      %v6585 = vmul.f32 %v6573, %v6583
      %v6586 = vmul.f32 %v6574, %v6583
      %v6587 = vmul.f32 %v6575, %v6583
      %v6588 = vmul.f32 %v6576, %v6583
      %v6589 = vmul.f32 %v6577, %v6583
      %v6590 = vmul.f32 %v6578, %v6583
      %v6591 = vmul.f32 %v6579, %v6583
      %v6592 = vadd.f32 %v6571, %v6584
      %v6593 = vadd.f32 %v6571, %v6585
      %v6594 = vadd.f32 %v6571, %v6586
      %v6595 = vadd.f32 %v6571, %v6587
      %v6596 = vadd.f32 %v6571, %v6588
      %v6597 = vadd.f32 %v6571, %v6589
      %v6598 = vadd.f32 %v6571, %v6590
      %v6599 = vadd.f32 %v6571, %v6591
      %v6600 = vld [vmem:[#allocation2 + $0x40] sm:$0xff]
      %v6601 = vld [vmem:[#allocation2 + $0x48] sm:$0xff]
      %v6602 = vld [vmem:[#allocation2 + $0x50] sm:$0xff]
      %v6603 = vld [vmem:[#allocation2 + $0x58] sm:$0xff]
      %v6604 = vld [vmem:[#allocation2 + $0x60] sm:$0xff]
      %v6605 = vld [vmem:[#allocation2 + $0x68] sm:$0xff]
      %v6606 = vld [vmem:[#allocation2 + $0x70] sm:$0xff]
      %v6607 = vld [vmem:[#allocation2 + $0x78] sm:$0xff]
      %v6608 = vlaneseq
      %v6609 = vshrl.u32 %v6608, 7
      %v6610 = vsub.s32 1, %v6609
      %v6611 = vrot.slane %v6562, %v6610
      %v6612 = vmul.f32 %v6600, %v6611
      %v6613 = vmul.f32 %v6601, %v6611
      %v6614 = vmul.f32 %v6602, %v6611
      %v6615 = vmul.f32 %v6603, %v6611
      %v6616 = vmul.f32 %v6604, %v6611
      %v6617 = vmul.f32 %v6605, %v6611
      %v6618 = vmul.f32 %v6606, %v6611
      %v6619 = vmul.f32 %v6607, %v6611
      %v6620 = vadd.f32 %v6592, %v6612
      %v6621 = vadd.f32 %v6593, %v6613
      %v6622 = vadd.f32 %v6594, %v6614
      %v6623 = vadd.f32 %v6595, %v6615
      %v6624 = vadd.f32 %v6596, %v6616
      %v6625 = vadd.f32 %v6597, %v6617
      %v6626 = vadd.f32 %v6598, %v6618
      %v6627 = vadd.f32 %v6599, %v6619
      %v6628 = vld [vmem:[#allocation2 + $0x80] sm:$0xff]
      %v6629 = vld [vmem:[#allocation2 + $0x88] sm:$0xff]
      %v6630 = vld [vmem:[#allocation2 + $0x90] sm:$0xff]
      %v6631 = vld [vmem:[#allocation2 + $0x98] sm:$0xff]
      %v6632 = vld [vmem:[#allocation2 + $0xa0] sm:$0xff]
      %v6633 = vld [vmem:[#allocation2 + $0xa8] sm:$0xff]
      %v6634 = vld [vmem:[#allocation2 + $0xb0] sm:$0xff]
      %v6635 = vld [vmem:[#allocation2 + $0xb8] sm:$0xff]
      %v6636 = vlaneseq
      %v6637 = vshrl.u32 %v6636, 7
      %v6638 = vsub.s32 2, %v6637
      %v6639 = vrot.slane %v6562, %v6638
      %v6640 = vmul.f32 %v6628, %v6639
      %v6641 = vmul.f32 %v6629, %v6639
      %v6642 = vmul.f32 %v6630, %v6639
      %v6643 = vmul.f32 %v6631, %v6639
      %v6644 = vmul.f32 %v6632, %v6639
      %v6645 = vmul.f32 %v6633, %v6639
      %v6646 = vmul.f32 %v6634, %v6639
      %v6647 = vmul.f32 %v6635, %v6639
      %v6648 = vadd.f32 %v6620, %v6640
      %v6649 = vadd.f32 %v6621, %v6641
      %v6650 = vadd.f32 %v6622, %v6642
      %v6651 = vadd.f32 %v6623, %v6643
      %v6652 = vadd.f32 %v6624, %v6644
      %v6653 = vadd.f32 %v6625, %v6645
      %v6654 = vadd.f32 %v6626, %v6646
      %v6655 = vadd.f32 %v6627, %v6647
      %v6656 = vld [vmem:[#allocation2 + $0xc0] sm:$0xff]
      %v6657 = vld [vmem:[#allocation2 + $0xc8] sm:$0xff]
      %v6658 = vld [vmem:[#allocation2 + $0xd0] sm:$0xff]
      %v6659 = vld [vmem:[#allocation2 + $0xd8] sm:$0xff]
      %v6660 = vld [vmem:[#allocation2 + $0xe0] sm:$0xff]
      %v6661 = vld [vmem:[#allocation2 + $0xe8] sm:$0xff]
      %v6662 = vld [vmem:[#allocation2 + $0xf0] sm:$0xff]
      %v6663 = vld [vmem:[#allocation2 + $0xf8] sm:$0xff]
      %v6664 = vlaneseq
      %v6665 = vshrl.u32 %v6664, 7
      %v6666 = vsub.s32 3, %v6665
      %v6667 = vrot.slane %v6562, %v6666
      %v6668 = vmul.f32 %v6656, %v6667
      %v6669 = vmul.f32 %v6657, %v6667
      %v6670 = vmul.f32 %v6658, %v6667
      %v6671 = vmul.f32 %v6659, %v6667
      %v6672 = vmul.f32 %v6660, %v6667
      %v6673 = vmul.f32 %v6661, %v6667
      %v6674 = vmul.f32 %v6662, %v6667
      %v6675 = vmul.f32 %v6663, %v6667
      %v6676 = vadd.f32 %v6648, %v6668
      %v6677 = vadd.f32 %v6649, %v6669
      %v6678 = vadd.f32 %v6650, %v6670
      %v6679 = vadd.f32 %v6651, %v6671
      %v6680 = vadd.f32 %v6652, %v6672
      %v6681 = vadd.f32 %v6653, %v6673
      %v6682 = vadd.f32 %v6654, %v6674
      %v6683 = vadd.f32 %v6655, %v6675
      %v6684 = vld [vmem:[#allocation2 + $0x100] sm:$0xff]
      %v6685 = vld [vmem:[#allocation2 + $0x108] sm:$0xff]
      %v6686 = vld [vmem:[#allocation2 + $0x110] sm:$0xff]
      %v6687 = vld [vmem:[#allocation2 + $0x118] sm:$0xff]
      %v6688 = vld [vmem:[#allocation2 + $0x120] sm:$0xff]
      %v6689 = vld [vmem:[#allocation2 + $0x128] sm:$0xff]
      %v6690 = vld [vmem:[#allocation2 + $0x130] sm:$0xff]
      %v6691 = vld [vmem:[#allocation2 + $0x138] sm:$0xff]
      %v6692 = vlaneseq
      %v6693 = vshrl.u32 %v6692, 7
      %v6694 = vsub.s32 4, %v6693
      %v6695 = vrot.slane %v6562, %v6694
      %v6696 = vmul.f32 %v6684, %v6695
      %v6697 = vmul.f32 %v6685, %v6695
      %v6698 = vmul.f32 %v6686, %v6695
      %v6699 = vmul.f32 %v6687, %v6695
      %v6700 = vmul.f32 %v6688, %v6695
      %v6701 = vmul.f32 %v6689, %v6695
      %v6702 = vmul.f32 %v6690, %v6695
      %v6703 = vmul.f32 %v6691, %v6695
      %v6704 = vadd.f32 %v6676, %v6696
      %v6705 = vadd.f32 %v6677, %v6697
      %v6706 = vadd.f32 %v6678, %v6698
      %v6707 = vadd.f32 %v6679, %v6699
      %v6708 = vadd.f32 %v6680, %v6700
      %v6709 = vadd.f32 %v6681, %v6701
      %v6710 = vadd.f32 %v6682, %v6702
      %v6711 = vadd.f32 %v6683, %v6703
      %v6712 = vld [vmem:[#allocation2 + $0x140] sm:$0xff]
      %v6713 = vld [vmem:[#allocation2 + $0x148] sm:$0xff]
      %v6714 = vld [vmem:[#allocation2 + $0x150] sm:$0xff]
      %v6715 = vld [vmem:[#allocation2 + $0x158] sm:$0xff]
      %v6716 = vld [vmem:[#allocation2 + $0x160] sm:$0xff]
      %v6717 = vld [vmem:[#allocation2 + $0x168] sm:$0xff]
      %v6718 = vld [vmem:[#allocation2 + $0x170] sm:$0xff]
      %v6719 = vld [vmem:[#allocation2 + $0x178] sm:$0xff]
      %v6720 = vlaneseq
      %v6721 = vshrl.u32 %v6720, 7
      %v6722 = vsub.s32 5, %v6721
      %v6723 = vrot.slane %v6562, %v6722
      %v6724 = vmul.f32 %v6712, %v6723
      %v6725 = vmul.f32 %v6713, %v6723
      %v6726 = vmul.f32 %v6714, %v6723
      %v6727 = vmul.f32 %v6715, %v6723
      %v6728 = vmul.f32 %v6716, %v6723
      %v6729 = vmul.f32 %v6717, %v6723
      %v6730 = vmul.f32 %v6718, %v6723
      %v6731 = vmul.f32 %v6719, %v6723
      %v6732 = vadd.f32 %v6704, %v6724
      %v6733 = vadd.f32 %v6705, %v6725
      %v6734 = vadd.f32 %v6706, %v6726
      %v6735 = vadd.f32 %v6707, %v6727
      %v6736 = vadd.f32 %v6708, %v6728
      %v6737 = vadd.f32 %v6709, %v6729
      %v6738 = vadd.f32 %v6710, %v6730
      %v6739 = vadd.f32 %v6711, %v6731
      %v6740 = vld [vmem:[#allocation2 + $0x180] sm:$0xff]
      %v6741 = vld [vmem:[#allocation2 + $0x188] sm:$0xff]
      %v6742 = vld [vmem:[#allocation2 + $0x190] sm:$0xff]
      %v6743 = vld [vmem:[#allocation2 + $0x198] sm:$0xff]
      %v6744 = vld [vmem:[#allocation2 + $0x1a0] sm:$0xff]
      %v6745 = vld [vmem:[#allocation2 + $0x1a8] sm:$0xff]
      %v6746 = vld [vmem:[#allocation2 + $0x1b0] sm:$0xff]
      %v6747 = vld [vmem:[#allocation2 + $0x1b8] sm:$0xff]
      %v6748 = vlaneseq
      %v6749 = vshrl.u32 %v6748, 7
      %v6750 = vsub.s32 6, %v6749
      %v6751 = vrot.slane %v6562, %v6750
      %v6752 = vmul.f32 %v6740, %v6751
      %v6753 = vmul.f32 %v6741, %v6751
      %v6754 = vmul.f32 %v6742, %v6751
      %v6755 = vmul.f32 %v6743, %v6751
      %v6756 = vmul.f32 %v6744, %v6751
      %v6757 = vmul.f32 %v6745, %v6751
      %v6758 = vmul.f32 %v6746, %v6751
      %v6759 = vmul.f32 %v6747, %v6751
      %v6760 = vadd.f32 %v6732, %v6752
      %v6761 = vadd.f32 %v6733, %v6753
      %v6762 = vadd.f32 %v6734, %v6754
      %v6763 = vadd.f32 %v6735, %v6755
      %v6764 = vadd.f32 %v6736, %v6756
      %v6765 = vadd.f32 %v6737, %v6757
      %v6766 = vadd.f32 %v6738, %v6758
      %v6767 = vadd.f32 %v6739, %v6759
      %v6768 = vld [vmem:[#allocation2 + $0x1c0] sm:$0xff]
      %v6769 = vld [vmem:[#allocation2 + $0x1c8] sm:$0xff]
      %v6770 = vld [vmem:[#allocation2 + $0x1d0] sm:$0xff]
      %v6771 = vld [vmem:[#allocation2 + $0x1d8] sm:$0xff]
      %v6772 = vld [vmem:[#allocation2 + $0x1e0] sm:$0xff]
      %v6773 = vld [vmem:[#allocation2 + $0x1e8] sm:$0xff]
      %v6774 = vld [vmem:[#allocation2 + $0x1f0] sm:$0xff]
      %v6775 = vld [vmem:[#allocation2 + $0x1f8] sm:$0xff]
      %v6776 = vlaneseq
      %v6777 = vshrl.u32 %v6776, 7
      %v6778 = vsub.s32 7, %v6777
      %v6779 = vrot.slane %v6562, %v6778
      %v6780 = vmul.f32 %v6768, %v6779
      %v6781 = vmul.f32 %v6769, %v6779
      %v6782 = vmul.f32 %v6770, %v6779
      %v6783 = vmul.f32 %v6771, %v6779
      %v6784 = vmul.f32 %v6772, %v6779
      %v6785 = vmul.f32 %v6773, %v6779
      %v6786 = vmul.f32 %v6774, %v6779
      %v6787 = vmul.f32 %v6775, %v6779
      %v6788 = vadd.f32 %v6760, %v6780
      %v6789 = vadd.f32 %v6761, %v6781
      %v6790 = vadd.f32 %v6762, %v6782
      %v6791 = vadd.f32 %v6763, %v6783
      %v6792 = vadd.f32 %v6764, %v6784
      %v6793 = vadd.f32 %v6765, %v6785
      %v6794 = vadd.f32 %v6766, %v6786
      %v6795 = vadd.f32 %v6767, %v6787
      %v6796 = vld [vmem:[#allocation2 + $0x200] sm:$0xff]
      %v6797 = vld [vmem:[#allocation2 + $0x208] sm:$0xff]
      %v6798 = vld [vmem:[#allocation2 + $0x210] sm:$0xff]
      %v6799 = vld [vmem:[#allocation2 + $0x218] sm:$0xff]
      %v6800 = vld [vmem:[#allocation2 + $0x220] sm:$0xff]
      %v6801 = vld [vmem:[#allocation2 + $0x228] sm:$0xff]
      %v6802 = vld [vmem:[#allocation2 + $0x230] sm:$0xff]
      %v6803 = vld [vmem:[#allocation2 + $0x238] sm:$0xff]
      %v6804 = vlaneseq
      %v6805 = vshrl.u32 %v6804, 7
      %v6806 = vsub.s32 0, %v6805
      %v6807 = vrot.slane %v6563, %v6806
      %v6808 = vmul.f32 %v6796, %v6807
      %v6809 = vmul.f32 %v6797, %v6807
      %v6810 = vmul.f32 %v6798, %v6807
      %v6811 = vmul.f32 %v6799, %v6807
      %v6812 = vmul.f32 %v6800, %v6807
      %v6813 = vmul.f32 %v6801, %v6807
      %v6814 = vmul.f32 %v6802, %v6807
      %v6815 = vmul.f32 %v6803, %v6807
      %v6816 = vadd.f32 %v6788, %v6808
      %v6817 = vadd.f32 %v6789, %v6809
      %v6818 = vadd.f32 %v6790, %v6810
      %v6819 = vadd.f32 %v6791, %v6811
      %v6820 = vadd.f32 %v6792, %v6812
      %v6821 = vadd.f32 %v6793, %v6813
      %v6822 = vadd.f32 %v6794, %v6814
      %v6823 = vadd.f32 %v6795, %v6815
      %v6824 = vand.u32 2147483647, %v6816
      %v6825 = vand.u32 2147483647, %v6817
      %v6826 = vand.u32 2147483647, %v6818
      %v6827 = vand.u32 2147483647, %v6819
      %v6828 = vand.u32 2147483647, %v6820
      %v6829 = vand.u32 2147483647, %v6821
      %v6830 = vand.u32 2147483647, %v6822
      %v6831 = vand.u32 2147483647, %v6823
      %v6832 = vmul.f32 %v6824, 0.70710677
      %v6833 = vmul.f32 %v6825, 0.70710677
      %v6834 = vmul.f32 %v6826, 0.70710677
      %v6835 = vmul.f32 %v6827, 0.70710677
      %v6836 = vmul.f32 %v6828, 0.70710677
      %v6837 = vmul.f32 %v6829, 0.70710677
      %v6838 = vmul.f32 %v6830, 0.70710677
      %v6839 = vmul.f32 %v6831, 0.70710677
      %v6840 = vmul.f32 %v6832, 0.3275911
      %v6841 = vmul.f32 %v6833, 0.3275911
      %v6842 = vmul.f32 %v6834, 0.3275911
      %v6843 = vmul.f32 %v6835, 0.3275911
      %v6844 = vmul.f32 %v6836, 0.3275911
      %v6845 = vmul.f32 %v6837, 0.3275911
      %v6846 = vmul.f32 %v6838, 0.3275911
      %v6847 = vmul.f32 %v6839, 0.3275911
      %v6848 = vadd.f32 %v6840, 1.0
      %v6849 = vadd.f32 %v6841, 1.0
      %v6850 = vadd.f32 %v6842, 1.0
      %v6851 = vadd.f32 %v6843, 1.0
      %v6852 = vadd.f32 %v6844, 1.0
      %v6853 = vadd.f32 %v6845, 1.0
      %v6854 = vadd.f32 %v6846, 1.0
      %v6855 = vadd.f32 %v6847, 1.0
      %v6856 = vrcp.pop %v6848
      %v6857 = vrcp.pop %v6849
      %v6858 = vrcp.pop %v6850
      %v6859 = vrcp.pop %v6851
      %v6860 = vrcp.pop %v6852
      %v6861 = vrcp.pop %v6853
      %v6862 = vrcp.pop %v6854
      %v6863 = vrcp.pop %v6855
      %v6864 = vmul.f32 %v6856, 1.0614054
      %v6865 = vmul.f32 %v6857, 1.0614054
      %v6866 = vmul.f32 %v6858, 1.0614054
      %v6867 = vmul.f32 %v6859, 1.0614054
      %v6868 = vmul.f32 %v6860, 1.0614054
      %v6869 = vmul.f32 %v6861, 1.0614054
      %v6870 = vmul.f32 %v6862, 1.0614054
      %v6871 = vmul.f32 %v6863, 1.0614054
      %v6872 = vadd.f32 %v6864, -1.4531521
      %v6873 = vadd.f32 %v6865, -1.4531521
      %v6874 = vadd.f32 %v6866, -1.4531521
      %v6875 = vadd.f32 %v6867, -1.4531521
      %v6876 = vadd.f32 %v6868, -1.4531521
      %v6877 = vadd.f32 %v6869, -1.4531521
      %v6878 = vadd.f32 %v6870, -1.4531521
      %v6879 = vadd.f32 %v6871, -1.4531521
      %v6880 = vmul.f32 %v6856, %v6872
      %v6881 = vmul.f32 %v6857, %v6873
      %v6882 = vmul.f32 %v6858, %v6874
      %v6883 = vmul.f32 %v6859, %v6875
      %v6884 = vmul.f32 %v6860, %v6876
      %v6885 = vmul.f32 %v6861, %v6877
      %v6886 = vmul.f32 %v6862, %v6878
      %v6887 = vmul.f32 %v6863, %v6879
      %v6888 = vadd.f32 %v6880, 1.4214138
      %v6889 = vadd.f32 %v6881, 1.4214138
      %v6890 = vadd.f32 %v6882, 1.4214138
      %v6891 = vadd.f32 %v6883, 1.4214138
      %v6892 = vadd.f32 %v6884, 1.4214138
      %v6893 = vadd.f32 %v6885, 1.4214138
      %v6894 = vadd.f32 %v6886, 1.4214138
      %v6895 = vadd.f32 %v6887, 1.4214138
      %v6896 = vmul.f32 %v6856, %v6888
      %v6897 = vmul.f32 %v6857, %v6889
      %v6898 = vmul.f32 %v6858, %v6890
      %v6899 = vmul.f32 %v6859, %v6891
      %v6900 = vmul.f32 %v6860, %v6892
      %v6901 = vmul.f32 %v6861, %v6893
      %v6902 = vmul.f32 %v6862, %v6894
      %v6903 = vmul.f32 %v6863, %v6895
      %v6904 = vadd.f32 %v6896, -0.28449672
      %v6905 = vadd.f32 %v6897, -0.28449672
      %v6906 = vadd.f32 %v6898, -0.28449672
      %v6907 = vadd.f32 %v6899, -0.28449672
      %v6908 = vadd.f32 %v6900, -0.28449672
      %v6909 = vadd.f32 %v6901, -0.28449672
      %v6910 = vadd.f32 %v6902, -0.28449672
      %v6911 = vadd.f32 %v6903, -0.28449672
      %v6912 = vmul.f32 %v6856, %v6904
      %v6913 = vmul.f32 %v6857, %v6905
      %v6914 = vmul.f32 %v6858, %v6906
      %v6915 = vmul.f32 %v6859, %v6907
      %v6916 = vmul.f32 %v6860, %v6908
      %v6917 = vmul.f32 %v6861, %v6909
      %v6918 = vmul.f32 %v6862, %v6910
      %v6919 = vmul.f32 %v6863, %v6911
      %v6920 = vadd.f32 %v6912, 0.2548296
      %v6921 = vadd.f32 %v6913, 0.2548296
      %v6922 = vadd.f32 %v6914, 0.2548296
      %v6923 = vadd.f32 %v6915, 0.2548296
      %v6924 = vadd.f32 %v6916, 0.2548296
      %v6925 = vadd.f32 %v6917, 0.2548296
      %v6926 = vadd.f32 %v6918, 0.2548296
      %v6927 = vadd.f32 %v6919, 0.2548296
      %v6928 = vmul.f32 %v6856, %v6920
      %v6929 = vmul.f32 %v6857, %v6921
      %v6930 = vmul.f32 %v6858, %v6922
      %v6931 = vmul.f32 %v6859, %v6923
      %v6932 = vmul.f32 %v6860, %v6924
      %v6933 = vmul.f32 %v6861, %v6925
      %v6934 = vmul.f32 %v6862, %v6926
      %v6935 = vmul.f32 %v6863, %v6927
      %v6936 = vsub.f32 0.0, %v6832
      %v6937 = vsub.f32 0.0, %v6833
      %v6938 = vsub.f32 0.0, %v6834
      %v6939 = vsub.f32 0.0, %v6835
      %v6940 = vsub.f32 0.0, %v6836
      %v6941 = vsub.f32 0.0, %v6837
      %v6942 = vsub.f32 0.0, %v6838
      %v6943 = vsub.f32 0.0, %v6839
      %v6944 = vmul.f32 %v6936, %v6832
      %v6945 = vmul.f32 %v6937, %v6833
      %v6946 = vmul.f32 %v6938, %v6834
      %v6947 = vmul.f32 %v6939, %v6835
      %v6948 = vmul.f32 %v6940, %v6836
      %v6949 = vmul.f32 %v6941, %v6837
      %v6950 = vmul.f32 %v6942, %v6838
      %v6951 = vmul.f32 %v6943, %v6839
      %v6952 = vmul.f32 %v6944, 1.442695
      %v6953 = vpow.pop %v6952
      %v6954 = vmul.f32 %v6945, 1.442695
      %v6955 = vpow.pop %v6954
      %v6956 = vmul.f32 %v6946, 1.442695
      %v6957 = vpow.pop %v6956
      %v6958 = vmul.f32 %v6947, 1.442695
      %v6959 = vpow.pop %v6958
      %v6960 = vmul.f32 %v6948, 1.442695
      %v6961 = vpow.pop %v6960
      %v6962 = vmul.f32 %v6949, 1.442695
      %v6963 = vpow.pop %v6962
      %v6964 = vmul.f32 %v6950, 1.442695
      %v6965 = vpow.pop %v6964
      %v6966 = vmul.f32 %v6951, 1.442695
      %v6967 = vpow.pop %v6966
      %v6968 = vmul.f32 %v6928, %v6953
      %v6969 = vmul.f32 %v6929, %v6955
      %v6970 = vmul.f32 %v6930, %v6957
      %v6971 = vmul.f32 %v6931, %v6959
      %v6972 = vmul.f32 %v6932, %v6961
      %v6973 = vmul.f32 %v6933, %v6963
      %v6974 = vmul.f32 %v6934, %v6965
      %v6975 = vmul.f32 %v6935, %v6967
      %v6976 = vsub.f32 1.0, %v6968
      %v6977 = vsub.f32 1.0, %v6969
      %v6978 = vsub.f32 1.0, %v6970
      %v6979 = vsub.f32 1.0, %v6971
      %v6980 = vsub.f32 1.0, %v6972
      %v6981 = vsub.f32 1.0, %v6973
      %v6982 = vsub.f32 1.0, %v6974
      %v6983 = vsub.f32 1.0, %v6975
      %vm6984 = vcmp.ge.f32.partialorder %v6816, 0.0
      %vm6985 = vcmp.ge.f32.partialorder %v6817, 0.0
      %vm6986 = vcmp.ge.f32.partialorder %v6818, 0.0
      %vm6987 = vcmp.ge.f32.partialorder %v6819, 0.0
      %vm6988 = vcmp.ge.f32.partialorder %v6820, 0.0
      %vm6989 = vcmp.ge.f32.partialorder %v6821, 0.0
      %vm6990 = vcmp.ge.f32.partialorder %v6822, 0.0
      %vm6991 = vcmp.ge.f32.partialorder %v6823, 0.0
      %v6992 = vsub.f32 0.0, %v6976
      %v6993 = vsub.f32 0.0, %v6977
      %v6994 = vsub.f32 0.0, %v6978
      %v6995 = vsub.f32 0.0, %v6979
      %v6996 = vsub.f32 0.0, %v6980
      %v6997 = vsub.f32 0.0, %v6981
      %v6998 = vsub.f32 0.0, %v6982
      %v6999 = vsub.f32 0.0, %v6983
      %v7000 = vsel %vm6984, %v6976, %v6992
      %v7001 = vsel %vm6985, %v6977, %v6993
      %v7002 = vsel %vm6986, %v6978, %v6994
      %v7003 = vsel %vm6987, %v6979, %v6995
      %v7004 = vsel %vm6988, %v6980, %v6996
      %v7005 = vsel %vm6989, %v6981, %v6997
      %v7006 = vsel %vm6990, %v6982, %v6998
      %v7007 = vsel %vm6991, %v6983, %v6999
      %v7008 = vmul.f32 %v6816, 0.5
      %v7009 = vmul.f32 %v6817, 0.5
      %v7010 = vmul.f32 %v6818, 0.5
      %v7011 = vmul.f32 %v6819, 0.5
      %v7012 = vmul.f32 %v6820, 0.5
      %v7013 = vmul.f32 %v6821, 0.5
      %v7014 = vmul.f32 %v6822, 0.5
      %v7015 = vmul.f32 %v6823, 0.5
      %v7016 = vadd.f32 %v7000, 1.0
      %v7017 = vadd.f32 %v7001, 1.0
      %v7018 = vadd.f32 %v7002, 1.0
      %v7019 = vadd.f32 %v7003, 1.0
      %v7020 = vadd.f32 %v7004, 1.0
      %v7021 = vadd.f32 %v7005, 1.0
      %v7022 = vadd.f32 %v7006, 1.0
      %v7023 = vadd.f32 %v7007, 1.0
      %v7024 = vmul.f32 %v7008, %v7016
      %v7025 = vmul.f32 %v7009, %v7017
      %v7026 = vmul.f32 %v7010, %v7018
      %v7027 = vmul.f32 %v7011, %v7019
      %v7028 = vmul.f32 %v7012, %v7020
      %v7029 = vmul.f32 %v7013, %v7021
      %v7030 = vmul.f32 %v7014, %v7022
      %v7031 = vmul.f32 %v7015, %v7023
      %7040 = vrot.lane.b32.xlu0 %v5609, 64
      %v7041 = vpop.permute.xlu0 %7040
      %7042 = vrot.lane.b32.xlu0 %v5614, 64
      %v7043 = vpop.permute.xlu0 %7042
      %7044 = vrot.lane.b32.xlu0 %v5619, 64
      %v7045 = vpop.permute.xlu0 %7044
      %7046 = vrot.lane.b32.xlu0 %v5624, 64
      %v7047 = vpop.permute.xlu0 %7046
      %7048 = vrot.lane.b32.xlu0 %v5629, 64
      %v7049 = vpop.permute.xlu0 %7048
      %7050 = vrot.lane.b32.xlu0 %v5634, 64
      %v7051 = vpop.permute.xlu0 %7050
      %7052 = vrot.lane.b32.xlu0 %v5639, 64
      %v7053 = vpop.permute.xlu0 %7052
      %7054 = vrot.lane.b32.xlu0 %v5644, 64
      %v7055 = vpop.permute.xlu0 %7054
      %v7064 = vmul.f32 %v7024, %v7041
      %v7065 = vmul.f32 %v7025, %v7043
      %v7066 = vmul.f32 %v7026, %v7045
      %v7067 = vmul.f32 %v7027, %v7047
      %v7068 = vmul.f32 %v7028, %v7049
      %v7069 = vmul.f32 %v7029, %v7051
      %v7070 = vmul.f32 %v7030, %v7053
      %v7071 = vmul.f32 %v7031, %v7055
      %v7072 = vld [vmem:[%s12] sm:$0xff]
      %v7073 = vld [vmem:[%s12 + $0x8] sm:$0xff]
      %v7074 = vld [vmem:[%s12 + $0x10] sm:$0xff]
      %v7075 = vld [vmem:[%s12 + $0x18] sm:$0xff]
      %v7076 = vld [vmem:[%s12 + $0x20] sm:$0xff]
      %v7077 = vld [vmem:[%s12 + $0x28] sm:$0xff]
      %v7078 = vld [vmem:[%s12 + $0x30] sm:$0xff]
      %v7079 = vld [vmem:[%s12 + $0x38] sm:$0xff]
      %v7080 = vld [vmem:[%s13] sm:$0x1]
      %v7082 = vlaneseq
      %v7083 = vshrl.u32 %v7082, 7
      %v7084 = vsub.s32 0, %v7083
      %v7085 = vrot.slane %v7080, %v7084
      %v7088 = vsel %vm1141, %v7064, 0
      %v7091 = vsel %vm1141, %v7065, 0
      %v7094 = vsel %vm1141, %v7066, 0
      %v7097 = vsel %vm1141, %v7067, 0
      %v7100 = vsel %vm1141, %v7068, 0
      %v7103 = vsel %vm1141, %v7069, 0
      %v7106 = vsel %vm1141, %v7070, 0
      %v7109 = vsel %vm1141, %v7071, 0
      %7111 = vmatprep.subr.mxu0 0.0
      %7112 = vmatpush1.msra.mxu0 %v7072
      %7113 = vmatprep.subr.mxu0 0.0
      %7114 = vmatpush1.msra.mxu0 %v7073
      %7115 = vmatprep.subr.mxu0 0.0
      %7116 = vmatpush1.msra.mxu0 %v7074
      %7117 = vmatprep.subr.mxu0 0.0
      %7118 = vmatpush1.msra.mxu0 %v7075
      %7119 = vmatprep.subr.mxu0 0.0
      %7120 = vmatpush1.msra.mxu0 %v7076
      %7121 = vmatprep.subr.mxu0 0.0
      %7122 = vmatpush1.msra.mxu0 %v7077
      %7123 = vmatprep.subr.mxu0 0.0
      %7124 = vmatpush1.msra.mxu0 %v7078
      %7125 = vmatprep.subr.mxu0 0.0
      %7126 = vmatpush1.msra.mxu0 %v7079
      %7127 = vmatprep.subr.mxu0 0.0
      %7128 = vmatpush1.msra.mxu0 0.0
      %7129 = vmatprep.subr.mxu0 0.0
      %7130 = vmatpush1.msra.mxu0 0.0
      %7131 = vmatprep.subr.mxu0 0.0
      %7132 = vmatpush1.msra.mxu0 0.0
      %7133 = vmatprep.subr.mxu0 0.0
      %7134 = vmatpush1.msra.mxu0 0.0
      %7135 = vmatprep.subr.mxu0 0.0
      %7136 = vmatpush1.msra.mxu0 0.0
      %7137 = vmatprep.subr.mxu0 0.0
      %7138 = vmatpush1.msra.mxu0 0.0
      %7139 = vmatprep.subr.mxu0 0.0
      %7140 = vmatpush1.msra.mxu0 0.0
      %7141 = vmatprep.subr.mxu0 0.0
      %7142 = vmatpush1.msra.mxu0 0.0
      %7143 = vmatprep.subr.mxu0 0.0
      %7144 = vmatpush1.msra.mxu0 0.0
      %7145 = vmatprep.subr.mxu0 0.0
      %7146 = vmatpush1.msra.mxu0 0.0
      %7147 = vmatprep.subr.mxu0 0.0
      %7148 = vmatpush1.msra.mxu0 0.0
      %7149 = vmatprep.subr.mxu0 0.0
      %7150 = vmatpush1.msra.mxu0 0.0
      %7151 = vmatprep.subr.mxu0 0.0
      %7152 = vmatpush1.msra.mxu0 0.0
      %7153 = vmatprep.subr.mxu0 0.0
      %7154 = vmatpush1.msra.mxu0 0.0
      %7155 = vmatprep.subr.mxu0 0.0
      %7156 = vmatpush1.msra.mxu0 0.0
      %7157 = vmatprep.subr.mxu0 0.0
      %7158 = vmatpush1.msra.mxu0 0.0
      %7159 = vmatprep.subr.mxu0 0.0
      %7160 = vmatpush1.msra.mxu0 0.0
      %7161 = vmatprep.subr.mxu0 0.0
      %7162 = vmatpush1.msra.mxu0 0.0
      %7163 = vmatprep.subr.mxu0 0.0
      %7164 = vmatpush1.msra.mxu0 0.0
      %7165 = vmatprep.subr.mxu0 0.0
      %7166 = vmatpush1.msra.mxu0 0.0
      %7167 = vmatprep.subr.mxu0 0.0
      %7168 = vmatpush1.msra.mxu0 0.0
      %7169 = vmatprep.subr.mxu0 0.0
      %7170 = vmatpush1.msra.mxu0 0.0
      %7171 = vmatprep.subr.mxu0 0.0
      %7172 = vmatpush1.msra.mxu0 0.0
      %7173 = vmatprep.subr.mxu0 0.0
      %7174 = vmatpush1.msra.mxu0 0.0
      %7175 = vmatprep.mubr.f32.mxu0 0.0
      %7176 = vmatmul.mubr.f32.gmra.mrb[0].mxu0 %v7088
      %v7177 = vpop.f32.mrb[0].mxu0
      %v7178 = vadd.f32 %v7085, %v7177
      %v7179 = vpop.f32.mrb[0].mxu0
      %7180 = vmatprep.mubr.f32.mxu0 0.0
      %7181 = vmatmul.mubr.f32.gmra.mrb[0].mxu0 %v7091
      %v7182 = vpop.f32.mrb[0].mxu0
      %v7183 = vadd.f32 %v7085, %v7182
      %v7184 = vpop.f32.mrb[0].mxu0
      %7185 = vmatprep.mubr.f32.mxu0 0.0
      %7186 = vmatmul.mubr.f32.gmra.mrb[0].mxu0 %v7094
      %v7187 = vpop.f32.mrb[0].mxu0
      %v7188 = vadd.f32 %v7085, %v7187
      %v7189 = vpop.f32.mrb[0].mxu0
      %7190 = vmatprep.mubr.f32.mxu0 0.0
      %7191 = vmatmul.mubr.f32.gmra.mrb[0].mxu0 %v7097
      %v7192 = vpop.f32.mrb[0].mxu0
      %v7193 = vadd.f32 %v7085, %v7192
      %v7194 = vpop.f32.mrb[0].mxu0
      %7195 = vmatprep.mubr.f32.mxu0 0.0
      %7196 = vmatmul.mubr.f32.gmra.mrb[0].mxu0 %v7100
      %v7197 = vpop.f32.mrb[0].mxu0
      %v7198 = vadd.f32 %v7085, %v7197
      %v7199 = vpop.f32.mrb[0].mxu0
      %7200 = vmatprep.mubr.f32.mxu0 0.0
      %7201 = vmatmul.mubr.f32.gmra.mrb[0].mxu0 %v7103
      %v7202 = vpop.f32.mrb[0].mxu0
      %v7203 = vadd.f32 %v7085, %v7202
      %v7204 = vpop.f32.mrb[0].mxu0
      %7205 = vmatprep.mubr.f32.mxu0 0.0
      %7206 = vmatmul.mubr.f32.gmra.mrb[0].mxu0 %v7106
      %v7207 = vpop.f32.mrb[0].mxu0
      %v7208 = vadd.f32 %v7085, %v7207
      %v7209 = vpop.f32.mrb[0].mxu0
      %7210 = vmatprep.mubr.f32.mxu0 0.0
      %7211 = vmatmul.mubr.f32.gmra.mrb[0].mxu0 %v7109
      %v7212 = vpop.f32.mrb[0].mxu0
      %v7213 = vadd.f32 %v7085, %v7212
      %v7214 = vpop.f32.mrb[0].mxu0
      %7215 = vdwg.mxu0
      %v7216 = vadd.f32 %v5371, %v7178
      %v7217 = vadd.f32 %v5372, %v7183
      %v7218 = vadd.f32 %v5373, %v7188
      %v7219 = vadd.f32 %v5374, %v7193
      %v7220 = vadd.f32 %v5375, %v7198
      %v7221 = vadd.f32 %v5376, %v7203
      %v7222 = vadd.f32 %v5377, %v7208
      %v7223 = vadd.f32 %v5378, %v7213
      %7224 = vst.msk [vmem:[%s845] sm:$0xff] %vm855, %v7216
      %7225 = vst.msk [vmem:[%s845 + $0x8] sm:$0xff] %vm855, %v7217
      %7226 = vst.msk [vmem:[%s845 + $0x10] sm:$0xff] %vm855, %v7218
      %7227 = vst.msk [vmem:[%s845 + $0x18] sm:$0xff] %vm855, %v7219
      %7228 = vst.msk [vmem:[%s845 + $0x20] sm:$0xff] %vm855, %v7220
      %7229 = vst.msk [vmem:[%s845 + $0x28] sm:$0xff] %vm855, %v7221
      %7230 = vst.msk [vmem:[%s845 + $0x30] sm:$0xff] %vm855, %v7222
      %7231 = vst.msk [vmem:[%s845 + $0x38] sm:$0xff] %vm855, %v7223
      %p7232 = scmp.lt.s32.totalorder %s39, 1
      %s7233 = scalar_select %p7232, %s39, 1
      %s7234 = smul.addr %s7233, 8
      %s7235 = smul.addr %s7234, 8
      %s7236 = scalar_lea.vmem %s28, %s7235
      // Predicated region
      $region133: #{block_forward_pallas.1} parent=131 // pred_check
        %p7237 = pneg %p650
      $region134: #{block_forward_pallas.1} parent=131 // pred_check_branch
        %7239 = sbr.rel (%p7237) target = $region136
      $region135: #{block_forward_pallas.1} parent=131 // pred_region
        _
      $region136: #{block_forward_pallas.1} parent=131 // pred_fallthru
        _
    $region132: #{block_forward_pallas.1} parent=5 // pred_fallthru
      _
    %p7240 = scmp.le.s32.totalorder 2, %s34
    // Predicated region
    $region137: #{block_forward_pallas.1} parent=5 // pred_check
      %p7241 = pneg %p7240
    $region138: #{block_forward_pallas.1} parent=5 // pred_check_branch
      %7243 = sbr.rel (%p7241) target = $region140
    $region139: #{block_forward_pallas.1} parent=5 // pred_region
      %s7244 = ssub.s32 %s34, 2
      // Predicated region
      $region141: #{block_forward_pallas.1} parent=139 // pred_check
        %p7245 = pneg %p656
      $region142: #{block_forward_pallas.1} parent=139 // pred_check_branch
        %7247 = sbr.rel (%p7245) target = $region144
      $region143: #{block_forward_pallas.1} parent=139 // pred_region
        %p7248 = scmp.lt.s32.totalorder %s40, 1
        %s7249 = scalar_select %p7248, %s40, 1
        %s7250 = smul.addr %s7249, 8
        %s7251 = smul.addr %s7250, 8
        %s7252 = scalar_lea.vmem %s28, %s7251
      $region144: #{block_forward_pallas.1} parent=139 // pred_fallthru
        _
    $region140: #{block_forward_pallas.1} parent=5 // pred_fallthru
      _
  $region6: #{block_forward_pallas.1} parent=0 // loop_footer
    %s38 = sadd.s32 1, %s34
  $region7: #{block_forward_pallas.1} parent=0 // loop_footer_branch
    %33 = sbr.rel target = $region3
  $region8: #{block_forward_pallas.1} parent=0 // loop_exit
    _

</llo_original>
